<compile_context>
chip_gen: v7x
topology: tpu7x:2x2x1
jax: 0.10.0
libtpu: 0.0.40
codegen_flags: <defaults>
</compile_context>

<pallas_src>
import math
from functools import partial

import jax
import jax.numpy as jnp
import numpy as np
from jax import lax
from jax.experimental import pallas as pl
from jax.experimental.pallas import tpu as pltpu

DIVNORM_FSIZE = 5
EXC_FSIZE = 7
INH_FSIZE = 5
BN_EPS = 1e-5
DIV_EPS = 1e-5
PAD = (EXC_FSIZE - 1) // 2  # max halo needed by any conv (=3)


# ----------------------------------------------------------------------------
# One-time hardware-convention probes (tiny kernels, run eagerly once)
# ----------------------------------------------------------------------------
def _detect_roll_mode():
    """0: pltpu.roll == jnp.roll; 1: opposite direction; 2: use 2-slice concat."""
    try:
        def k(x_ref, o_ref):
            o_ref[...] = pltpu.roll(x_ref[...], shift=3, axis=1)

        vmem = pl.BlockSpec(memory_space=pltpu.MemorySpace.VMEM)
        x = jnp.tile(jnp.arange(128, dtype=jnp.float32)[None, :], (8, 1))
        y = np.asarray(pl.pallas_call(
            k, out_shape=jax.ShapeDtypeStruct((8, 128), jnp.float32),
            in_specs=[vmem], out_specs=vmem)(x))
        if np.array_equal(y, np.asarray(jnp.roll(x, 3, axis=1))):
            return 0
        if np.array_equal(y, np.asarray(jnp.roll(x, -3, axis=1))):
            return 1
    except Exception:
        pass
    return 2


def _detect_bcast_stride0():
    """True iff stride-0 dslice sublane-broadcast loads are supported."""
    try:
        def k(x_ref, o_ref):
            o_ref[...] = x_ref[pl.ds(2, 8, stride=0), :]

        vmem = pl.BlockSpec(memory_space=pltpu.MemorySpace.VMEM)
        x = jnp.tile(jnp.arange(16, dtype=jnp.float32)[:, None], (1, 128))
        y = np.asarray(pl.pallas_call(
            k, out_shape=jax.ShapeDtypeStruct((8, 128), jnp.float32),
            in_specs=[vmem], out_specs=vmem)(x))
        return bool(np.all(y == 2.0))
    except Exception:
        return False


_KERNEL_MODES = None


def _kernel_modes():
    global _KERNEL_MODES
    if _KERNEL_MODES is None:
        _KERNEL_MODES = (_detect_roll_mode(), _detect_bcast_stride0())
    return _KERNEL_MODES


# ----------------------------------------------------------------------------
# Pallas kernel
# ----------------------------------------------------------------------------
def _divnorm_kernel(xp_ref, xres_ref, dw_ref, ew_ref, sig2_ref, brow_ref,
                    cmask_ref, gamma_ref, beta_ref, out_ref, a_ref, sc_ref,
                    *, C, N, H, W, SW, roll_mode, bcast_stride0):
    S = C * N
    LW = S * SW                      # packed lane width (multiple of 128)
    NSW = N * SW
    KD = DIVNORM_FSIZE
    KE = EXC_FSIZE
    f32 = jnp.float32

    def bcast_row(ref, idx):
        """One (LW,) weight row broadcast across the H sublanes."""
        if bcast_stride0:
            return ref[pl.ds(idx, H, stride=0), :]       # sublane-bcast vld
        return ref[idx]                                   # (LW,) implicit bcast

    def lane_roll(v, sh):
        """Logical jnp.roll(v, sh, axis=1), independent of HW roll convention."""
        sh = sh % LW
        if sh == 0:
            return v
        if roll_mode == 0:
            return pltpu.roll(v, shift=sh, axis=1)
        if roll_mode == 1:
            return pltpu.roll(v, shift=LW - sh, axis=1)
        return jnp.concatenate([v[:, LW - sh:], v[:, :LW - sh]], axis=1)

    # ---- Stage 0: squared simple cells into the padded base slab -----------
    xpad = xp_ref[...]                                    # (Hp, LW + 2*PAD)
    a_ref[...] = xpad * xpad                              # zero halo rides in

    # ---- Stage 1: depthwise 5x5 divisive normalization ---------------------
    off = PAD - (KD - 1) // 2                             # = 1
    acc = None
    for kx in range(KD):                                  # ky innermost: vld reuse
        for ky in range(KD):
            w = bcast_row(dw_ref, ky * KD + kx)
            t = w * a_ref[pl.ds(ky + off, H), pl.ds(kx + off, LW)]
            acc = t if acc is None else acc + t
    norm = acc + sig2_ref[...]                            # sigma^2 + eps > 0 everywhere
    inv = pl.reciprocal(norm, approx=True)                # EUP seed (vrcp)
    inv = inv * (2.0 - norm * inv)                        # Newton step 1
    inv = inv * (2.0 - norm * inv)                        # Newton step 2 -> f32 exact
    sq_win = a_ref[pl.ds(PAD, H), pl.ds(PAD, LW)]         # output-frame squares
    sc = sq_win * inv                                     # already 0 on non-data lanes

    # stash sc lane-aligned in the output frame; only the row halo needs zeroing
    zrows = jnp.zeros((PAD, LW), f32)
    sc_ref[pl.ds(0, PAD), :] = zrows
    sc_ref[pl.ds(PAD + H, PAD), :] = zrows
    sc_ref[pl.ds(PAD, H), :] = sc

    # ---- Stage 2: fused excitation - inhibition (7x7 full channel mix) ------
    # Per (channel-offset d, lane tap kx): 7-tap ky MAC with lane-ALIGNED reads
    # and host-pre-rolled weight rows, then ONE lane roll of the partial.
    rows = [sc_ref[pl.ds(ky, H), :] for ky in range(KE)]  # 7 slabs, reused 28x
    acc2 = None
    for d in range(C):
        for kx in range(KE):
            p = None
            for ky in range(KE):
                w = bcast_row(ew_ref, (d * KE + kx) * KE + ky)
                t = w * rows[ky]
                p = t if p is None else p + t
            p = lane_roll(p, d * NSW + PAD - kx)
            acc2 = p if acc2 is None else acc2 + p

    # ---- Stage 3: BN (batch stats) + residual + ReLU -------------------------
    sc_win = sc_ref[pl.ds(PAD, H), :]
    pre = sc_win + acc2 + brow_ref[...]                   # bias pre-masked host-side
    sum_r = jnp.sum(pre, axis=0)                          # (LW,)
    sq_r = jnp.sum(pre * pre, axis=0)                     # (LW,)
    inv_cnt = 1.0 / float(N * H * W)
    scale_row = jnp.zeros((LW,), f32)
    shift_row = jnp.zeros((LW,), f32)
    for co in range(C):                                   # 2*C cheap lane reductions
        m = cmask_ref[co]
        mean = jnp.sum(sum_r * m) * inv_cnt
        ex2 = jnp.sum(sq_r * m) * inv_cnt
        var = ex2 - mean * mean
        s_co = gamma_ref[co] * lax.rsqrt(var + BN_EPS)
        scale_row = scale_row + s_co * m
        shift_row = shift_row + (beta_ref[co] - mean * s_co) * m
    out = pre * scale_row + shift_row + xres_ref[...]     # BN + residual
    out_ref[...] = jnp.maximum(out, 0.0)                  # ReLU


# ----------------------------------------------------------------------------
# Wrapper: host-side packing (layout plumbing) + pallas_call + unpacking
# ----------------------------------------------------------------------------
@partial(jax.jit, static_argnames=("roll_mode", "bcast_stride0"))
def _divnorm_impl(x, div_w, e_w, e_b, i_w, i_b, sigma, bn_gamma, bn_beta, *,
                  roll_mode, bcast_stride0):
    N, C, H, W = x.shape
    S = C * N
    # pad the stripe width so the packed lane width LW = S*SW is a multiple of 128
    step = 128 // math.gcd(S, 128)
    SW = -(-(W + 2 * PAD) // step) * step
    LW = S * SW
    NSW = N * SW
    Hp = H + 2 * PAD
    KE = EXC_FSIZE
    f32 = jnp.float32

    # static invariants the modular lane roll relies on (halo covers 7-tap reach)
    assert PAD == (EXC_FSIZE - 1) // 2 and PAD >= (DIVNORM_FSIZE - 1) // 2
    assert SW >= W + 2 * PAD and LW % 128 == 0

    x = x.astype(f32)
    xt = jnp.transpose(x, (1, 0, 2, 3)).reshape(S, H, W)   # stripe s = c*N + n

    # residual / output-frame packing: data at column x of each stripe
    xres = jnp.pad(xt, ((0, 0), (0, 0), (0, SW - W)))
    xres = jnp.transpose(xres, (1, 0, 2)).reshape(H, LW)

    # padded-frame packing that feeds the convolutions (zero halo included)
    xp = jnp.pad(xt, ((0, 0), (PAD, PAD), (PAD, SW - W - PAD)))   # (S, Hp, SW)
    xp = jnp.transpose(xp, (1, 0, 2)).reshape(Hp, LW)
    xp = jnp.pad(xp, ((0, 0), (0, 2 * PAD)))                      # (Hp, LW+2*PAD)

    # fuse inhibition into excitation (5x5 sits inside the 7x7), fold biases
    ctr = (EXC_FSIZE - INH_FSIZE) // 2
    w_comb = e_w.astype(f32).at[:, :, ctr:ctr + INH_FSIZE,
                                ctr:ctr + INH_FSIZE].add(-i_w.astype(f32))
    b_comb = (e_b - i_b).astype(f32)

    def per_stripe_rows(per_channel):                      # (K, C) -> (K, LW)
        r = jnp.repeat(per_channel.astype(f32), N, axis=1)
        return jnp.repeat(r, SW, axis=1)

    # depthwise divisive-norm weights -> per-lane rows (row index = ky*KD + kx);
    # padded with H zero rows so stride-0 broadcast loads stay in bounds
    dwrow = per_stripe_rows(div_w.reshape(C, -1).astype(f32).T)    # (25, LW)
    dwrow = jnp.concatenate([dwrow, jnp.zeros((H, LW), f32)], axis=0)

    # combined exc-inh weights, PRE-ROLLED into the read frame of each (d, kx)
    # partial sum; row index = (d*KE + kx)*KE + ky
    ew_rows = []
    for d in range(C):
        sel = jnp.stack([w_comb[co, (co - d) % C] for co in range(C)], axis=0)
        base = per_stripe_rows(sel.reshape(C, -1).T).reshape(KE, KE, LW)
        for kx in range(KE):
            sh = (d * NSW + PAD - kx) % LW
            ew_rows.append(jnp.roll(base[:, kx, :], -sh, axis=1))  # (KE, LW)
    ew_rows.append(jnp.zeros((H, LW), f32))                # stride-0 bounds pad
    ewrow = jnp.concatenate(ew_rows, axis=0)

    sig2row = jnp.broadcast_to(
        per_stripe_rows((sigma.reshape(C).astype(f32) ** 2 + DIV_EPS)[None, :]),
        (H, LW))

    # per-output-channel lane masks over the useful columns of each stripe
    col_valid = (jnp.arange(SW) < W).astype(f32)
    stripe_ch = jnp.repeat(jnp.arange(C), N)
    cmask = ((stripe_ch[None, :] == jnp.arange(C)[:, None]).astype(f32)[:, :, None]
             * col_valid[None, None, :]).reshape(C, LW)
    combmask = jnp.sum(cmask, axis=0, keepdims=True)       # (1, LW)
    brow = jnp.broadcast_to(per_stripe_rows(b_comb[None, :]) * combmask, (H, LW))

    vmem = pl.BlockSpec(memory_space=pltpu.MemorySpace.VMEM)
    smem = pl.BlockSpec(memory_space=pltpu.MemorySpace.SMEM)

    out_packed = pl.pallas_call(
        partial(_divnorm_kernel, C=C, N=N, H=H, W=W, SW=SW,
                roll_mode=roll_mode, bcast_stride0=bcast_stride0),
        out_shape=jax.ShapeDtypeStruct((H, LW), f32),
        in_specs=[vmem, vmem, vmem, vmem, vmem, vmem, vmem, smem, smem],
        out_specs=vmem,
        scratch_shapes=[
            pltpu.VMEM((Hp, LW + 2 * PAD), f32),           # squared padded slab
            pltpu.VMEM((Hp, LW), f32),                     # normalized (sc) slab
        ],
    )(xp, xres, dwrow, ewrow, sig2row, brow, cmask,
      bn_gamma.astype(f32), bn_beta.astype(f32))

    # unpack: (H, LW) -> (N, C, H, W)
    o = out_packed.reshape(H, S, SW)[:, :, :W]
    o = jnp.transpose(o, (1, 0, 2)).reshape(C, N, H, W)
    return jnp.transpose(o, (1, 0, 2, 3))


def divnorm_exc_inh(x, div_w, e_w, e_b, i_w, i_b, sigma, bn_gamma, bn_beta):
    roll_mode, bcast_stride0 = _kernel_modes()
    return _divnorm_impl(x, div_w, e_w, e_b, i_w, i_b, sigma, bn_gamma, bn_beta,
                         roll_mode=roll_mode, bcast_stride0=bcast_stride0)


# ----------------------------------------------------------------------------
# Deterministic parameter initialization (mirrors the module's __init__ shapes)
# ----------------------------------------------------------------------------
def _gaussian_filterbank(n_filters, f_sz):
    """Deterministic port of get_gaussian_filterbank (permutation omitted)."""
    def gaus2d(x, y, sx, sy):
        return (1.0 / (2.0 * np.pi * sx * sy)
                * np.exp(-(x ** 2 / (2.0 * sx ** 2) + y ** 2 / (2.0 * sy ** 2))))

    def normalize(z):
        return z / z[f_sz // 2, f_sz // 2]

    xs = np.linspace(-1, 1, num=f_sz)
    x, y = np.meshgrid(xs, xs)
    bank = [normalize(gaus2d(x, y, 0.5, 0.5)),
            normalize(gaus2d(x, y, 1.0, 1.0)),
            normalize(gaus2d(x, y, 2.0, 2.0)),
            normalize(gaus2d(x, y, 3.0, 3.0))]
    # TODO(synk): original applies np.random.permutation over filters; omitted
    # here so parameter init is deterministic.
    filters = (bank[0:1] * (n_filters // 4) + bank[1:2] * (n_filters // 4)
               + bank[2:3] * (n_filters // 4) + bank[3:4] * (n_filters // 4))
    return np.stack(filters).reshape(n_filters, 1, f_sz, f_sz).astype(np.float32)


# ----------------------------------------------------------------------------
# Pure-JAX reference (for correctness check)
# ----------------------------------------------------------------------------
def reference_forward(x, div_w, e_w, e_b, i_w, i_b, sigma, bn_gamma, bn_beta):
    C = x.shape[1]
    dn = ('NCHW', 'OIHW', 'NCHW')
    sq = x * x
    norm = lax.conv_general_dilated(sq, div_w, (1, 1), ((2, 2), (2, 2)),
                                    dimension_numbers=dn, feature_group_count=C)
    norm = norm + sigma.reshape(1, C, 1, 1) ** 2 + DIV_EPS
    sc = sq / norm
    exc = lax.conv_general_dilated(sc, e_w, (1, 1), ((3, 3), (3, 3)),
                                   dimension_numbers=dn) + e_b.reshape(1, C, 1, 1)
    inh = lax.conv_general_dilated(sc, i_w, (1, 1), ((2, 2), (2, 2)),
                                   dimension_numbers=dn) + i_b.reshape(1, C, 1, 1)
    pre = sc + exc - inh
    mean = jnp.mean(pre, axis=(0, 2, 3), keepdims=True)
    var = jnp.mean((pre - mean) ** 2, axis=(0, 2, 3), keepdims=True)
    bn = ((pre - mean) / jnp.sqrt(var + BN_EPS)
          * bn_gamma.reshape(1, C, 1, 1) + bn_beta.reshape(1, C, 1, 1))
    return jnp.maximum(bn + x, 0.0)


# ----------------------------------------------------------------------------
# Main
# ----------------------------------------------------------------------------
if __name__ == "__main__":
    N, C, H, W = 2, 4, 16, 16      # in_channels > 3  ->  identity simple cells

    key = jax.random.PRNGKey(0)
    kx, ke_w, ke_b, ki_w, ki_b = jax.random.split(key, 5)

    x = jax.random.normal(kx, (N, C, H, W), jnp.float32)

    # self.div: depthwise gaussian filterbank weights, bias=False
    div_w = jnp.asarray(_gaussian_filterbank(C, DIVNORM_FSIZE))    # (C,1,5,5)

    # self.e_e / self.i_e: Conv2d-style deterministic uniform init
    fan_e = C * EXC_FSIZE * EXC_FSIZE
    be = 1.0 / math.sqrt(fan_e)
    e_w = jax.random.uniform(ke_w, (C, C, EXC_FSIZE, EXC_FSIZE),
                             jnp.float32, -be, be)
    e_b = jax.random.uniform(ke_b, (C,), jnp.float32, -be, be)

    fan_i = C * INH_FSIZE * INH_FSIZE
    bi = 1.0 / math.sqrt(fan_i)
    i_w = jax.random.uniform(ki_w, (C, C, INH_FSIZE, INH_FSIZE),
                             jnp.float32, -bi, bi)
    i_b = jax.random.uniform(ki_b, (C,), jnp.float32, -bi, bi)

    sigma = jnp.ones((C,), jnp.float32)        # nn.Parameter(torch.ones([1,C,1,1]))
    bn_gamma = jnp.ones((C,), jnp.float32)     # BatchNorm2d default affine init
    bn_beta = jnp.zeros((C,), jnp.float32)

    out = divnorm_exc_inh(x, div_w, e_w, e_b, i_w, i_b,
                          sigma, bn_gamma, bn_beta)
    out = jax.block_until_ready(out)

    ref = reference_forward(x, div_w, e_w, e_b, i_w, i_b,
                            sigma, bn_gamma, bn_beta)
    np.testing.assert_allclose(np.asarray(out), np.asarray(ref),
                               rtol=2e-4, atol=2e-4)

    print("KERNEL_OK")
</pallas_src>

<mosaic_0001>
module attributes {stable_mosaic.version = 11 : i64} {
  func.func @k(%arg0: memref<8x128xf32, #tpu.memory_space<vmem>>, %arg1: memref<8x128xf32, #tpu.memory_space<vmem>>) attributes {dimension_semantics = [], scalar_prefetch = 0 : i64, scratch_operands = 0 : i64, tpu.core_type = #tpu.core_type<tc>} {
    %c0 = arith.constant 0 : index
    %c0_0 = arith.constant 0 : index
    %0 = vector.load %arg0[%c0, %c0_0] : memref<8x128xf32, #tpu.memory_space<vmem>>, vector<8x128xf32>
    %c3_i32 = arith.constant 3 : i32
    %1 = tpu.dynamic_rotate %0 by %c3_i32 dim 1 : vector<8x128xf32>, i32 -> vector<8x128xf32>
    %c0_1 = arith.constant 0 : index
    %c0_2 = arith.constant 0 : index
    %2 = vector.load %arg1[%c0_1, %c0_2] : memref<8x128xf32, #tpu.memory_space<vmem>>, vector<8x128xf32>
    tpu.vector_store %arg1[%c0_1, %c0_2], %1 {strides = array<i32>} : memref<8x128xf32, #tpu.memory_space<vmem>>, vector<8x128xf32>,
    return
  }
}

module attributes {stable_mosaic.version = 11 : i64} {
  func.func @k(%arg0: memref<16x128xf32, #tpu.memory_space<vmem>>, %arg1: memref<8x128xf32, #tpu.memory_space<vmem>>) attributes {dimension_semantics = [], scalar_prefetch = 0 : i64, scratch_operands = 0 : i64, tpu.core_type = #tpu.core_type<tc>} {
    %c2 = arith.constant 2 : index
    %c0 = arith.constant 0 : index
    %0 = tpu.strided_load %arg0[%c2, %c0] {strides = array<i32: 0, 1>} : memref<16x128xf32, #tpu.memory_space<vmem>>, vector<8x128xf32>
    %c0_0 = arith.constant 0 : index
    %c0_1 = arith.constant 0 : index
    %1 = vector.load %arg1[%c0_0, %c0_1] : memref<8x128xf32, #tpu.memory_space<vmem>>, vector<8x128xf32>
    tpu.vector_store %arg1[%c0_0, %c0_1], %0 {strides = array<i32>} : memref<8x128xf32, #tpu.memory_space<vmem>>, vector<8x128xf32>,
    return
  }
}

module attributes {stable_mosaic.version = 11 : i64} {
  func.func @_divnorm_kernel(%arg0: memref<22x262xf32, #tpu.memory_space<vmem>>, %arg1: memref<16x256xf32, #tpu.memory_space<vmem>>, %arg2: memref<41x256xf32, #tpu.memory_space<vmem>>, %arg3: memref<212x256xf32, #tpu.memory_space<vmem>>, %arg4: memref<16x256xf32, #tpu.memory_space<vmem>>, %arg5: memref<16x256xf32, #tpu.memory_space<vmem>>, %arg6: memref<4x256xf32, #tpu.memory_space<vmem>>, %arg7: memref<4xf32, #tpu.memory_space<smem>>, %arg8: memref<4xf32, #tpu.memory_space<smem>>, %arg9: memref<16x256xf32, #tpu.memory_space<vmem>>, %arg10: memref<22x262xf32, #tpu.memory_space<vmem>>, %arg11: memref<22x256xf32, #tpu.memory_space<vmem>>) attributes {dimension_semantics = [], scalar_prefetch = 0 : i64, scratch_operands = 2 : i64, tpu.core_type = #tpu.core_type<tc>} {
    %c0 = arith.constant 0 : index
    %c0_0 = arith.constant 0 : index
    %0 = vector.load %arg0[%c0, %c0_0] : memref<22x262xf32, #tpu.memory_space<vmem>>, vector<22x262xf32>
    %1 = arith.mulf %0, %0 : vector<22x262xf32>
    %c0_1 = arith.constant 0 : index
    %c0_2 = arith.constant 0 : index
    %2 = vector.load %arg10[%c0_1, %c0_2] : memref<22x262xf32, #tpu.memory_space<vmem>>, vector<22x262xf32>
    tpu.vector_store %arg10[%c0_1, %c0_2], %1 {strides = array<i32>} : memref<22x262xf32, #tpu.memory_space<vmem>>, vector<22x262xf32>,
    %c0_3 = arith.constant 0 : index
    %c0_4 = arith.constant 0 : index
    %3 = vector.load %arg2[%c0_3, %c0_4] : memref<41x256xf32, #tpu.memory_space<vmem>>, vector<1x256xf32>
    %4 = vector.shape_cast %3 : vector<1x256xf32> to vector<256xf32>
    %c1 = arith.constant 1 : index
    %c1_5 = arith.constant 1 : index
    %5 = vector.load %arg10[%c1, %c1_5] : memref<22x262xf32, #tpu.memory_space<vmem>>, vector<16x256xf32>
    %6 = vector.shape_cast %4 : vector<256xf32> to vector<1x256xf32>
    %7 = vector.broadcast %6 : vector<1x256xf32> to vector<16x256xf32>
    %8 = arith.mulf %7, %5 : vector<16x256xf32>
    %c5 = arith.constant 5 : index
    %c0_6 = arith.constant 0 : index
    %9 = vector.load %arg2[%c5, %c0_6] : memref<41x256xf32, #tpu.memory_space<vmem>>, vector<1x256xf32>
    %10 = vector.shape_cast %9 : vector<1x256xf32> to vector<256xf32>
    %c2 = arith.constant 2 : index
    %c1_7 = arith.constant 1 : index
    %11 = vector.load %arg10[%c2, %c1_7] : memref<22x262xf32, #tpu.memory_space<vmem>>, vector<16x256xf32>
    %12 = vector.shape_cast %10 : vector<256xf32> to vector<1x256xf32>
    %13 = vector.broadcast %12 : vector<1x256xf32> to vector<16x256xf32>
    %14 = arith.mulf %13, %11 : vector<16x256xf32>
    %15 = arith.addf %8, %14 : vector<16x256xf32>
    %c10 = arith.constant 10 : index
    %c0_8 = arith.constant 0 : index
    %16 = vector.load %arg2[%c10, %c0_8] : memref<41x256xf32, #tpu.memory_space<vmem>>, vector<1x256xf32>
    %17 = vector.shape_cast %16 : vector<1x256xf32> to vector<256xf32>
    %c3 = arith.constant 3 : index
    %c1_9 = arith.constant 1 : index
    %18 = vector.load %arg10[%c3, %c1_9] : memref<22x262xf32, #tpu.memory_space<vmem>>, vector<16x256xf32>
    %19 = vector.shape_cast %17 : vector<256xf32> to vector<1x256xf32>
    %20 = vector.broadcast %19 : vector<1x256xf32> to vector<16x256xf32>
    %21 = arith.mulf %20, %18 : vector<16x256xf32>
    %22 = arith.addf %15, %21 : vector<16x256xf32>
    %c15 = arith.constant 15 : index
    %c0_10 = arith.constant 0 : index
    %23 = vector.load %arg2[%c15, %c0_10] : memref<41x256xf32, #tpu.memory_space<vmem>>, vector<1x256xf32>
    %24 = vector.shape_cast %23 : vector<1x256xf32> to vector<256xf32>
    %c4 = arith.constant 4 : index
    %c1_11 = arith.constant 1 : index
    %25 = vector.load %arg10[%c4, %c1_11] : memref<22x262xf32, #tpu.memory_space<vmem>>, vector<16x256xf32>
    %26 = vector.shape_cast %24 : vector<256xf32> to vector<1x256xf32>
    %27 = vector.broadcast %26 : vector<1x256xf32> to vector<16x256xf32>
    %28 = arith.mulf %27, %25 : vector<16x256xf32>
    %29 = arith.addf %22, %28 : vector<16x256xf32>
    %c20 = arith.constant 20 : index
    %c0_12 = arith.constant 0 : index
    %30 = vector.load %arg2[%c20, %c0_12] : memref<41x256xf32, #tpu.memory_space<vmem>>, vector<1x256xf32>
    %31 = vector.shape_cast %30 : vector<1x256xf32> to vector<256xf32>
    %c5_13 = arith.constant 5 : index
    %c1_14 = arith.constant 1 : index
    %32 = vector.load %arg10[%c5_13, %c1_14] : memref<22x262xf32, #tpu.memory_space<vmem>>, vector<16x256xf32>
    %33 = vector.shape_cast %31 : vector<256xf32> to vector<1x256xf32>
    %34 = vector.broadcast %33 : vector<1x256xf32> to vector<16x256xf32>
    %35 = arith.mulf %34, %32 : vector<16x256xf32>
    %36 = arith.addf %29, %35 : vector<16x256xf32>
    %c1_15 = arith.constant 1 : index
    %c0_16 = arith.constant 0 : index
    %37 = vector.load %arg2[%c1_15, %c0_16] : memref<41x256xf32, #tpu.memory_space<vmem>>, vector<1x256xf32>
    %38 = vector.shape_cast %37 : vector<1x256xf32> to vector<256xf32>
    %c1_17 = arith.constant 1 : index
    %c2_18 = arith.constant 2 : index
    %39 = vector.load %arg10[%c1_17, %c2_18] : memref<22x262xf32, #tpu.memory_space<vmem>>, vector<16x256xf32>
    %40 = vector.shape_cast %38 : vector<256xf32> to vector<1x256xf32>
    %41 = vector.broadcast %40 : vector<1x256xf32> to vector<16x256xf32>
    %42 = arith.mulf %41, %39 : vector<16x256xf32>
    %43 = arith.addf %36, %42 : vector<16x256xf32>
    %c6 = arith.constant 6 : index
    %c0_19 = arith.constant 0 : index
    %44 = vector.load %arg2[%c6, %c0_19] : memref<41x256xf32, #tpu.memory_space<vmem>>, vector<1x256xf32>
    %45 = vector.shape_cast %44 : vector<1x256xf32> to vector<256xf32>
    %c2_20 = arith.constant 2 : index
    %c2_21 = arith.constant 2 : index
    %46 = vector.load %arg10[%c2_20, %c2_21] : memref<22x262xf32, #tpu.memory_space<vmem>>, vector<16x256xf32>
    %47 = vector.shape_cast %45 : vector<256xf32> to vector<1x256xf32>
    %48 = vector.broadcast %47 : vector<1x256xf32> to vector<16x256xf32>
    %49 = arith.mulf %48, %46 : vector<16x256xf32>
    %50 = arith.addf %43, %49 : vector<16x256xf32>
    %c11 = arith.constant 11 : index
    %c0_22 = arith.constant 0 : index
    %51 = vector.load %arg2[%c11, %c0_22] : memref<41x256xf32, #tpu.memory_space<vmem>>, vector<1x256xf32>
    %52 = vector.shape_cast %51 : vector<1x256xf32> to vector<256xf32>
    %c3_23 = arith.constant 3 : index
    %c2_24 = arith.constant 2 : index
    %53 = vector.load %arg10[%c3_23, %c2_24] : memref<22x262xf32, #tpu.memory_space<vmem>>, vector<16x256xf32>
    %54 = vector.shape_cast %52 : vector<256xf32> to vector<1x256xf32>
    %55 = vector.broadcast %54 : vector<1x256xf32> to vector<16x256xf32>
    %56 = arith.mulf %55, %53 : vector<16x256xf32>
    %57 = arith.addf %50, %56 : vector<16x256xf32>
    %c16 = arith.constant 16 : index
    %c0_25 = arith.constant 0 : index
    %58 = vector.load %arg2[%c16, %c0_25] : memref<41x256xf32, #tpu.memory_space<vmem>>, vector<1x256xf32>
    %59 = vector.shape_cast %58 : vector<1x256xf32> to vector<256xf32>
    %c4_26 = arith.constant 4 : index
    %c2_27 = arith.constant 2 : index
    %60 = vector.load %arg10[%c4_26, %c2_27] : memref<22x262xf32, #tpu.memory_space<vmem>>, vector<16x256xf32>
    %61 = vector.shape_cast %59 : vector<256xf32> to vector<1x256xf32>
    %62 = vector.broadcast %61 : vector<1x256xf32> to vector<16x256xf32>
    %63 = arith.mulf %62, %60 : vector<16x256xf32>
    %64 = arith.addf %57, %63 : vector<16x256xf32>
    %c21 = arith.constant 21 : index
    %c0_28 = arith.constant 0 : index
    %65 = vector.load %arg2[%c21, %c0_28] : memref<41x256xf32, #tpu.memory_space<vmem>>, vector<1x256xf32>
    %66 = vector.shape_cast %65 : vector<1x256xf32> to vector<256xf32>
    %c5_29 = arith.constant 5 : index
    %c2_30 = arith.constant 2 : index
    %67 = vector.load %arg10[%c5_29, %c2_30] : memref<22x262xf32, #tpu.memory_space<vmem>>, vector<16x256xf32>
    %68 = vector.shape_cast %66 : vector<256xf32> to vector<1x256xf32>
    %69 = vector.broadcast %68 : vector<1x256xf32> to vector<16x256xf32>
    %70 = arith.mulf %69, %67 : vector<16x256xf32>
    %71 = arith.addf %64, %70 : vector<16x256xf32>
    %c2_31 = arith.constant 2 : index
    %c0_32 = arith.constant 0 : index
    %72 = vector.load %arg2[%c2_31, %c0_32] : memref<41x256xf32, #tpu.memory_space<vmem>>, vector<1x256xf32>
    %73 = vector.shape_cast %72 : vector<1x256xf32> to vector<256xf32>
    %c1_33 = arith.constant 1 : index
    %c3_34 = arith.constant 3 : index
    %74 = vector.load %arg10[%c1_33, %c3_34] : memref<22x262xf32, #tpu.memory_space<vmem>>, vector<16x256xf32>
    %75 = vector.shape_cast %73 : vector<256xf32> to vector<1x256xf32>
    %76 = vector.broadcast %75 : vector<1x256xf32> to vector<16x256xf32>
    %77 = arith.mulf %76, %74 : vector<16x256xf32>
    %78 = arith.addf %71, %77 : vector<16x256xf32>
    %c7 = arith.constant 7 : index
    %c0_35 = arith.constant 0 : index
    %79 = vector.load %arg2[%c7, %c0_35] : memref<41x256xf32, #tpu.memory_space<vmem>>, vector<1x256xf32>
    %80 = vector.shape_cast %79 : vector<1x256xf32> to vector<256xf32>
    %c2_36 = arith.constant 2 : index
    %c3_37 = arith.constant 3 : index
    %81 = vector.load %arg10[%c2_36, %c3_37] : memref<22x262xf32, #tpu.memory_space<vmem>>, vector<16x256xf32>
    %82 = vector.shape_cast %80 : vector<256xf32> to vector<1x256xf32>
    %83 = vector.broadcast %82 : vector<1x256xf32> to vector<16x256xf32>
    %84 = arith.mulf %83, %81 : vector<16x256xf32>
    %85 = arith.addf %78, %84 : vector<16x256xf32>
    %c12 = arith.constant 12 : index
    %c0_38 = arith.constant 0 : index
    %86 = vector.load %arg2[%c12, %c0_38] : memref<41x256xf32, #tpu.memory_space<vmem>>, vector<1x256xf32>
    %87 = vector.shape_cast %86 : vector<1x256xf32> to vector<256xf32>
    %c3_39 = arith.constant 3 : index
    %c3_40 = arith.constant 3 : index
    %88 = vector.load %arg10[%c3_39, %c3_40] : memref<22x262xf32, #tpu.memory_space<vmem>>, vector<16x256xf32>
    %89 = vector.shape_cast %87 : vector<256xf32> to vector<1x256xf32>
    %90 = vector.broadcast %89 : vector<1x256xf32> to vector<16x256xf32>
    %91 = arith.mulf %90, %88 : vector<16x256xf32>
    %92 = arith.addf %85, %91 : vector<16x256xf32>
    %c17 = arith.constant 17 : index
    %c0_41 = arith.constant 0 : index
    %93 = vector.load %arg2[%c17, %c0_41] : memref<41x256xf32, #tpu.memory_space<vmem>>, vector<1x256xf32>
    %94 = vector.shape_cast %93 : vector<1x256xf32> to vector<256xf32>
    %c4_42 = arith.constant 4 : index
    %c3_43 = arith.constant 3 : index
    %95 = vector.load %arg10[%c4_42, %c3_43] : memref<22x262xf32, #tpu.memory_space<vmem>>, vector<16x256xf32>
    %96 = vector.shape_cast %94 : vector<256xf32> to vector<1x256xf32>
    %97 = vector.broadcast %96 : vector<1x256xf32> to vector<16x256xf32>
    %98 = arith.mulf %97, %95 : vector<16x256xf32>
    %99 = arith.addf %92, %98 : vector<16x256xf32>
    %c22 = arith.constant 22 : index
    %c0_44 = arith.constant 0 : index
    %100 = vector.load %arg2[%c22, %c0_44] : memref<41x256xf32, #tpu.memory_space<vmem>>, vector<1x256xf32>
    %101 = vector.shape_cast %100 : vector<1x256xf32> to vector<256xf32>
    %c5_45 = arith.constant 5 : index
    %c3_46 = arith.constant 3 : index
    %102 = vector.load %arg10[%c5_45, %c3_46] : memref<22x262xf32, #tpu.memory_space<vmem>>, vector<16x256xf32>
    %103 = vector.shape_cast %101 : vector<256xf32> to vector<1x256xf32>
    %104 = vector.broadcast %103 : vector<1x256xf32> to vector<16x256xf32>
    %105 = arith.mulf %104, %102 : vector<16x256xf32>
    %106 = arith.addf %99, %105 : vector<16x256xf32>
    %c3_47 = arith.constant 3 : index
    %c0_48 = arith.constant 0 : index
    %107 = vector.load %arg2[%c3_47, %c0_48] : memref<41x256xf32, #tpu.memory_space<vmem>>, vector<1x256xf32>
    %108 = vector.shape_cast %107 : vector<1x256xf32> to vector<256xf32>
    %c1_49 = arith.constant 1 : index
    %c4_50 = arith.constant 4 : index
    %109 = vector.load %arg10[%c1_49, %c4_50] : memref<22x262xf32, #tpu.memory_space<vmem>>, vector<16x256xf32>
    %110 = vector.shape_cast %108 : vector<256xf32> to vector<1x256xf32>
    %111 = vector.broadcast %110 : vector<1x256xf32> to vector<16x256xf32>
    %112 = arith.mulf %111, %109 : vector<16x256xf32>
    %113 = arith.addf %106, %112 : vector<16x256xf32>
    %c8 = arith.constant 8 : index
    %c0_51 = arith.constant 0 : index
    %114 = vector.load %arg2[%c8, %c0_51] : memref<41x256xf32, #tpu.memory_space<vmem>>, vector<1x256xf32>
    %115 = vector.shape_cast %114 : vector<1x256xf32> to vector<256xf32>
    %c2_52 = arith.constant 2 : index
    %c4_53 = arith.constant 4 : index
    %116 = vector.load %arg10[%c2_52, %c4_53] : memref<22x262xf32, #tpu.memory_space<vmem>>, vector<16x256xf32>
    %117 = vector.shape_cast %115 : vector<256xf32> to vector<1x256xf32>
    %118 = vector.broadcast %117 : vector<1x256xf32> to vector<16x256xf32>
    %119 = arith.mulf %118, %116 : vector<16x256xf32>
    %120 = arith.addf %113, %119 : vector<16x256xf32>
    %c13 = arith.constant 13 : index
    %c0_54 = arith.constant 0 : index
    %121 = vector.load %arg2[%c13, %c0_54] : memref<41x256xf32, #tpu.memory_space<vmem>>, vector<1x256xf32>
    %122 = vector.shape_cast %121 : vector<1x256xf32> to vector<256xf32>
    %c3_55 = arith.constant 3 : index
    %c4_56 = arith.constant 4 : index
    %123 = vector.load %arg10[%c3_55, %c4_56] : memref<22x262xf32, #tpu.memory_space<vmem>>, vector<16x256xf32>
    %124 = vector.shape_cast %122 : vector<256xf32> to vector<1x256xf32>
    %125 = vector.broadcast %124 : vector<1x256xf32> to vector<16x256xf32>
    %126 = arith.mulf %125, %123 : vector<16x256xf32>
    %127 = arith.addf %120, %126 : vector<16x256xf32>
    %c18 = arith.constant 18 : index
    %c0_57 = arith.constant 0 : index
    %128 = vector.load %arg2[%c18, %c0_57] : memref<41x256xf32, #tpu.memory_space<vmem>>, vector<1x256xf32>
    %129 = vector.shape_cast %128 : vector<1x256xf32> to vector<256xf32>
    %c4_58 = arith.constant 4 : index
    %c4_59 = arith.constant 4 : index
    %130 = vector.load %arg10[%c4_58, %c4_59] : memref<22x262xf32, #tpu.memory_space<vmem>>, vector<16x256xf32>
    %131 = vector.shape_cast %129 : vector<256xf32> to vector<1x256xf32>
    %132 = vector.broadcast %131 : vector<1x256xf32> to vector<16x256xf32>
    %133 = arith.mulf %132, %130 : vector<16x256xf32>
    %134 = arith.addf %127, %133 : vector<16x256xf32>
    %c23 = arith.constant 23 : index
    %c0_60 = arith.constant 0 : index
    %135 = vector.load %arg2[%c23, %c0_60] : memref<41x256xf32, #tpu.memory_space<vmem>>, vector<1x256xf32>
    %136 = vector.shape_cast %135 : vector<1x256xf32> to vector<256xf32>
    %c5_61 = arith.constant 5 : index
    %c4_62 = arith.constant 4 : index
    %137 = vector.load %arg10[%c5_61, %c4_62] : memref<22x262xf32, #tpu.memory_space<vmem>>, vector<16x256xf32>
    %138 = vector.shape_cast %136 : vector<256xf32> to vector<1x256xf32>
    %139 = vector.broadcast %138 : vector<1x256xf32> to vector<16x256xf32>
    %140 = arith.mulf %139, %137 : vector<16x256xf32>
    %141 = arith.addf %134, %140 : vector<16x256xf32>
    %c4_63 = arith.constant 4 : index
    %c0_64 = arith.constant 0 : index
    %142 = vector.load %arg2[%c4_63, %c0_64] : memref<41x256xf32, #tpu.memory_space<vmem>>, vector<1x256xf32>
    %143 = vector.shape_cast %142 : vector<1x256xf32> to vector<256xf32>
    %c1_65 = arith.constant 1 : index
    %c5_66 = arith.constant 5 : index
    %144 = vector.load %arg10[%c1_65, %c5_66] : memref<22x262xf32, #tpu.memory_space<vmem>>, vector<16x256xf32>
    %145 = vector.shape_cast %143 : vector<256xf32> to vector<1x256xf32>
    %146 = vector.broadcast %145 : vector<1x256xf32> to vector<16x256xf32>
    %147 = arith.mulf %146, %144 : vector<16x256xf32>
    %148 = arith.addf %141, %147 : vector<16x256xf32>
    %c9 = arith.constant 9 : index
    %c0_67 = arith.constant 0 : index
    %149 = vector.load %arg2[%c9, %c0_67] : memref<41x256xf32, #tpu.memory_space<vmem>>, vector<1x256xf32>
    %150 = vector.shape_cast %149 : vector<1x256xf32> to vector<256xf32>
    %c2_68 = arith.constant 2 : index
    %c5_69 = arith.constant 5 : index
    %151 = vector.load %arg10[%c2_68, %c5_69] : memref<22x262xf32, #tpu.memory_space<vmem>>, vector<16x256xf32>
    %152 = vector.shape_cast %150 : vector<256xf32> to vector<1x256xf32>
    %153 = vector.broadcast %152 : vector<1x256xf32> to vector<16x256xf32>
    %154 = arith.mulf %153, %151 : vector<16x256xf32>
    %155 = arith.addf %148, %154 : vector<16x256xf32>
    %c14 = arith.constant 14 : index
    %c0_70 = arith.constant 0 : index
    %156 = vector.load %arg2[%c14, %c0_70] : memref<41x256xf32, #tpu.memory_space<vmem>>, vector<1x256xf32>
    %157 = vector.shape_cast %156 : vector<1x256xf32> to vector<256xf32>
    %c3_71 = arith.constant 3 : index
    %c5_72 = arith.constant 5 : index
    %158 = vector.load %arg10[%c3_71, %c5_72] : memref<22x262xf32, #tpu.memory_space<vmem>>, vector<16x256xf32>
    %159 = vector.shape_cast %157 : vector<256xf32> to vector<1x256xf32>
    %160 = vector.broadcast %159 : vector<1x256xf32> to vector<16x256xf32>
    %161 = arith.mulf %160, %158 : vector<16x256xf32>
    %162 = arith.addf %155, %161 : vector<16x256xf32>
    %c19 = arith.constant 19 : index
    %c0_73 = arith.constant 0 : index
    %163 = vector.load %arg2[%c19, %c0_73] : memref<41x256xf32, #tpu.memory_space<vmem>>, vector<1x256xf32>
    %164 = vector.shape_cast %163 : vector<1x256xf32> to vector<256xf32>
    %c4_74 = arith.constant 4 : index
    %c5_75 = arith.constant 5 : index
    %165 = vector.load %arg10[%c4_74, %c5_75] : memref<22x262xf32, #tpu.memory_space<vmem>>, vector<16x256xf32>
    %166 = vector.shape_cast %164 : vector<256xf32> to vector<1x256xf32>
    %167 = vector.broadcast %166 : vector<1x256xf32> to vector<16x256xf32>
    %168 = arith.mulf %167, %165 : vector<16x256xf32>
    %169 = arith.addf %162, %168 : vector<16x256xf32>
    %c24 = arith.constant 24 : index
    %c0_76 = arith.constant 0 : index
    %170 = vector.load %arg2[%c24, %c0_76] : memref<41x256xf32, #tpu.memory_space<vmem>>, vector<1x256xf32>
    %171 = vector.shape_cast %170 : vector<1x256xf32> to vector<256xf32>
    %c5_77 = arith.constant 5 : index
    %c5_78 = arith.constant 5 : index
    %172 = vector.load %arg10[%c5_77, %c5_78] : memref<22x262xf32, #tpu.memory_space<vmem>>, vector<16x256xf32>
    %173 = vector.shape_cast %171 : vector<256xf32> to vector<1x256xf32>
    %174 = vector.broadcast %173 : vector<1x256xf32> to vector<16x256xf32>
    %175 = arith.mulf %174, %172 : vector<16x256xf32>
    %176 = arith.addf %169, %175 : vector<16x256xf32>
    %c0_79 = arith.constant 0 : index
    %c0_80 = arith.constant 0 : index
    %177 = vector.load %arg4[%c0_79, %c0_80] : memref<16x256xf32, #tpu.memory_space<vmem>>, vector<16x256xf32>
    %178 = arith.addf %176, %177 : vector<16x256xf32>
    %179 = tpu.reciprocal %178 {approx = true} : vector<16x256xf32> -> vector<16x256xf32>
    %180 = arith.mulf %178, %179 : vector<16x256xf32>
    %cst = arith.constant 2.000000e+00 : f32
    %181 = vector.broadcast %cst : f32 to vector<16x256xf32>
    %182 = arith.subf %181, %180 : vector<16x256xf32>
    %183 = arith.mulf %179, %182 : vector<16x256xf32>
    %184 = arith.mulf %178, %183 : vector<16x256xf32>
    %cst_81 = arith.constant 2.000000e+00 : f32
    %185 = vector.broadcast %cst_81 : f32 to vector<16x256xf32>
    %186 = arith.subf %185, %184 : vector<16x256xf32>
    %187 = arith.mulf %183, %186 : vector<16x256xf32>
    %c3_82 = arith.constant 3 : index
    %c3_83 = arith.constant 3 : index
    %188 = vector.load %arg10[%c3_82, %c3_83] : memref<22x262xf32, #tpu.memory_space<vmem>>, vector<16x256xf32>
    %189 = arith.mulf %188, %187 : vector<16x256xf32>
    %cst_84 = arith.constant 0.000000e+00 : f32
    %190 = vector.broadcast %cst_84 : f32 to vector<3x256xf32>
    %c0_85 = arith.constant 0 : index
    %c0_86 = arith.constant 0 : index
    %191 = vector.load %arg11[%c0_85, %c0_86] : memref<22x256xf32, #tpu.memory_space<vmem>>, vector<3x256xf32>
    tpu.vector_store %arg11[%c0_85, %c0_86], %190 {strides = array<i32>} : memref<22x256xf32, #tpu.memory_space<vmem>>, vector<3x256xf32>,
    %c19_87 = arith.constant 19 : index
    %c0_88 = arith.constant 0 : index
    %192 = vector.load %arg11[%c19_87, %c0_88] : memref<22x256xf32, #tpu.memory_space<vmem>>, vector<3x256xf32>
    tpu.vector_store %arg11[%c19_87, %c0_88], %190 {strides = array<i32>} : memref<22x256xf32, #tpu.memory_space<vmem>>, vector<3x256xf32>,
    %c3_89 = arith.constant 3 : index
    %c0_90 = arith.constant 0 : index
    %193 = vector.load %arg11[%c3_89, %c0_90] : memref<22x256xf32, #tpu.memory_space<vmem>>, vector<16x256xf32>
    tpu.vector_store %arg11[%c3_89, %c0_90], %189 {strides = array<i32>} : memref<22x256xf32, #tpu.memory_space<vmem>>, vector<16x256xf32>,
    %c0_91 = arith.constant 0 : index
    %c0_92 = arith.constant 0 : index
    %194 = vector.load %arg11[%c0_91, %c0_92] : memref<22x256xf32, #tpu.memory_space<vmem>>, vector<16x256xf32>
    %c1_93 = arith.constant 1 : index
    %c0_94 = arith.constant 0 : index
    %195 = vector.load %arg11[%c1_93, %c0_94] : memref<22x256xf32, #tpu.memory_space<vmem>>, vector<16x256xf32>
    %c2_95 = arith.constant 2 : index
    %c0_96 = arith.constant 0 : index
    %196 = vector.load %arg11[%c2_95, %c0_96] : memref<22x256xf32, #tpu.memory_space<vmem>>, vector<16x256xf32>
    %c3_97 = arith.constant 3 : index
    %c0_98 = arith.constant 0 : index
    %197 = vector.load %arg11[%c3_97, %c0_98] : memref<22x256xf32, #tpu.memory_space<vmem>>, vector<16x256xf32>
    %c4_99 = arith.constant 4 : index
    %c0_100 = arith.constant 0 : index
    %198 = vector.load %arg11[%c4_99, %c0_100] : memref<22x256xf32, #tpu.memory_space<vmem>>, vector<16x256xf32>
    %c5_101 = arith.constant 5 : index
    %c0_102 = arith.constant 0 : index
    %199 = vector.load %arg11[%c5_101, %c0_102] : memref<22x256xf32, #tpu.memory_space<vmem>>, vector<16x256xf32>
    %c6_103 = arith.constant 6 : index
    %c0_104 = arith.constant 0 : index
    %200 = vector.load %arg11[%c6_103, %c0_104] : memref<22x256xf32, #tpu.memory_space<vmem>>, vector<16x256xf32>
    %c0_105 = arith.constant 0 : index
    %c0_106 = arith.constant 0 : index
    %201 = vector.load %arg3[%c0_105, %c0_106] : memref<212x256xf32, #tpu.memory_space<vmem>>, vector<1x256xf32>
    %202 = vector.shape_cast %201 : vector<1x256xf32> to vector<256xf32>
    %203 = vector.shape_cast %202 : vector<256xf32> to vector<1x256xf32>
    %204 = vector.broadcast %203 : vector<1x256xf32> to vector<16x256xf32>
    %205 = arith.mulf %204, %194 : vector<16x256xf32>
    %c1_107 = arith.constant 1 : index
    %c0_108 = arith.constant 0 : index
    %206 = vector.load %arg3[%c1_107, %c0_108] : memref<212x256xf32, #tpu.memory_space<vmem>>, vector<1x256xf32>
    %207 = vector.shape_cast %206 : vector<1x256xf32> to vector<256xf32>
    %208 = vector.shape_cast %207 : vector<256xf32> to vector<1x256xf32>
    %209 = vector.broadcast %208 : vector<1x256xf32> to vector<16x256xf32>
    %210 = arith.mulf %209, %195 : vector<16x256xf32>
    %211 = arith.addf %205, %210 : vector<16x256xf32>
    %c2_109 = arith.constant 2 : index
    %c0_110 = arith.constant 0 : index
    %212 = vector.load %arg3[%c2_109, %c0_110] : memref<212x256xf32, #tpu.memory_space<vmem>>, vector<1x256xf32>
    %213 = vector.shape_cast %212 : vector<1x256xf32> to vector<256xf32>
    %214 = vector.shape_cast %213 : vector<256xf32> to vector<1x256xf32>
    %215 = vector.broadcast %214 : vector<1x256xf32> to vector<16x256xf32>
    %216 = arith.mulf %215, %196 : vector<16x256xf32>
    %217 = arith.addf %211, %216 : vector<16x256xf32>
    %c3_111 = arith.constant 3 : index
    %c0_112 = arith.constant 0 : index
    %218 = vector.load %arg3[%c3_111, %c0_112] : memref<212x256xf32, #tpu.memory_space<vmem>>, vector<1x256xf32>
    %219 = vector.shape_cast %218 : vector<1x256xf32> to vector<256xf32>
    %220 = vector.shape_cast %219 : vector<256xf32> to vector<1x256xf32>
    %221 = vector.broadcast %220 : vector<1x256xf32> to vector<16x256xf32>
    %222 = arith.mulf %221, %197 : vector<16x256xf32>
    %223 = arith.addf %217, %222 : vector<16x256xf32>
    %c4_113 = arith.constant 4 : index
    %c0_114 = arith.constant 0 : index
    %224 = vector.load %arg3[%c4_113, %c0_114] : memref<212x256xf32, #tpu.memory_space<vmem>>, vector<1x256xf32>
    %225 = vector.shape_cast %224 : vector<1x256xf32> to vector<256xf32>
    %226 = vector.shape_cast %225 : vector<256xf32> to vector<1x256xf32>
    %227 = vector.broadcast %226 : vector<1x256xf32> to vector<16x256xf32>
    %228 = arith.mulf %227, %198 : vector<16x256xf32>
    %229 = arith.addf %223, %228 : vector<16x256xf32>
    %c5_115 = arith.constant 5 : index
    %c0_116 = arith.constant 0 : index
    %230 = vector.load %arg3[%c5_115, %c0_116] : memref<212x256xf32, #tpu.memory_space<vmem>>, vector<1x256xf32>
    %231 = vector.shape_cast %230 : vector<1x256xf32> to vector<256xf32>
    %232 = vector.shape_cast %231 : vector<256xf32> to vector<1x256xf32>
    %233 = vector.broadcast %232 : vector<1x256xf32> to vector<16x256xf32>
    %234 = arith.mulf %233, %199 : vector<16x256xf32>
    %235 = arith.addf %229, %234 : vector<16x256xf32>
    %c6_117 = arith.constant 6 : index
    %c0_118 = arith.constant 0 : index
    %236 = vector.load %arg3[%c6_117, %c0_118] : memref<212x256xf32, #tpu.memory_space<vmem>>, vector<1x256xf32>
    %237 = vector.shape_cast %236 : vector<1x256xf32> to vector<256xf32>
    %238 = vector.shape_cast %237 : vector<256xf32> to vector<1x256xf32>
    %239 = vector.broadcast %238 : vector<1x256xf32> to vector<16x256xf32>
    %240 = arith.mulf %239, %200 : vector<16x256xf32>
    %241 = arith.addf %235, %240 : vector<16x256xf32>
    %242 = vector.extract_strided_slice %241 {offsets = [0, 253], sizes = [16, 3], strides = [1, 1]} : vector<16x256xf32> to vector<16x3xf32>
    %243 = vector.extract_strided_slice %241 {offsets = [0, 0], sizes = [16, 253], strides = [1, 1]} : vector<16x256xf32> to vector<16x253xf32>
    %244 = tpu.concatenate %242, %243 in 1 : vector<16x3xf32>, vector<16x253xf32> -> vector<16x256xf32>
    %c7_119 = arith.constant 7 : index
    %c0_120 = arith.constant 0 : index
    %245 = vector.load %arg3[%c7_119, %c0_120] : memref<212x256xf32, #tpu.memory_space<vmem>>, vector<1x256xf32>
    %246 = vector.shape_cast %245 : vector<1x256xf32> to vector<256xf32>
    %247 = vector.shape_cast %246 : vector<256xf32> to vector<1x256xf32>
    %248 = vector.broadcast %247 : vector<1x256xf32> to vector<16x256xf32>
    %249 = arith.mulf %248, %194 : vector<16x256xf32>
    %c8_121 = arith.constant 8 : index
    %c0_122 = arith.constant 0 : index
    %250 = vector.load %arg3[%c8_121, %c0_122] : memref<212x256xf32, #tpu.memory_space<vmem>>, vector<1x256xf32>
    %251 = vector.shape_cast %250 : vector<1x256xf32> to vector<256xf32>
    %252 = vector.shape_cast %251 : vector<256xf32> to vector<1x256xf32>
    %253 = vector.broadcast %252 : vector<1x256xf32> to vector<16x256xf32>
    %254 = arith.mulf %253, %195 : vector<16x256xf32>
    %255 = arith.addf %249, %254 : vector<16x256xf32>
    %c9_123 = arith.constant 9 : index
    %c0_124 = arith.constant 0 : index
    %256 = vector.load %arg3[%c9_123, %c0_124] : memref<212x256xf32, #tpu.memory_space<vmem>>, vector<1x256xf32>
    %257 = vector.shape_cast %256 : vector<1x256xf32> to vector<256xf32>
    %258 = vector.shape_cast %257 : vector<256xf32> to vector<1x256xf32>
    %259 = vector.broadcast %258 : vector<1x256xf32> to vector<16x256xf32>
    %260 = arith.mulf %259, %196 : vector<16x256xf32>
    %261 = arith.addf %255, %260 : vector<16x256xf32>
    %c10_125 = arith.constant 10 : index
    %c0_126 = arith.constant 0 : index
    %262 = vector.load %arg3[%c10_125, %c0_126] : memref<212x256xf32, #tpu.memory_space<vmem>>, vector<1x256xf32>
    %263 = vector.shape_cast %262 : vector<1x256xf32> to vector<256xf32>
    %264 = vector.shape_cast %263 : vector<256xf32> to vector<1x256xf32>
    %265 = vector.broadcast %264 : vector<1x256xf32> to vector<16x256xf32>
    %266 = arith.mulf %265, %197 : vector<16x256xf32>
    %267 = arith.addf %261, %266 : vector<16x256xf32>
    %c11_127 = arith.constant 11 : index
    %c0_128 = arith.constant 0 : index
    %268 = vector.load %arg3[%c11_127, %c0_128] : memref<212x256xf32, #tpu.memory_space<vmem>>, vector<1x256xf32>
    %269 = vector.shape_cast %268 : vector<1x256xf32> to vector<256xf32>
    %270 = vector.shape_cast %269 : vector<256xf32> to vector<1x256xf32>
    %271 = vector.broadcast %270 : vector<1x256xf32> to vector<16x256xf32>
    %272 = arith.mulf %271, %198 : vector<16x256xf32>
    %273 = arith.addf %267, %272 : vector<16x256xf32>
    %c12_129 = arith.constant 12 : index
    %c0_130 = arith.constant 0 : index
    %274 = vector.load %arg3[%c12_129, %c0_130] : memref<212x256xf32, #tpu.memory_space<vmem>>, vector<1x256xf32>
    %275 = vector.shape_cast %274 : vector<1x256xf32> to vector<256xf32>
    %276 = vector.shape_cast %275 : vector<256xf32> to vector<1x256xf32>
    %277 = vector.broadcast %276 : vector<1x256xf32> to vector<16x256xf32>
    %278 = arith.mulf %277, %199 : vector<16x256xf32>
    %279 = arith.addf %273, %278 : vector<16x256xf32>
    %c13_131 = arith.constant 13 : index
    %c0_132 = arith.constant 0 : index
    %280 = vector.load %arg3[%c13_131, %c0_132] : memref<212x256xf32, #tpu.memory_space<vmem>>, vector<1x256xf32>
    %281 = vector.shape_cast %280 : vector<1x256xf32> to vector<256xf32>
    %282 = vector.shape_cast %281 : vector<256xf32> to vector<1x256xf32>
    %283 = vector.broadcast %282 : vector<1x256xf32> to vector<16x256xf32>
    %284 = arith.mulf %283, %200 : vector<16x256xf32>
    %285 = arith.addf %279, %284 : vector<16x256xf32>
    %286 = vector.extract_strided_slice %285 {offsets = [0, 254], sizes = [16, 2], strides = [1, 1]} : vector<16x256xf32> to vector<16x2xf32>
    %287 = vector.extract_strided_slice %285 {offsets = [0, 0], sizes = [16, 254], strides = [1, 1]} : vector<16x256xf32> to vector<16x254xf32>
    %288 = tpu.concatenate %286, %287 in 1 : vector<16x2xf32>, vector<16x254xf32> -> vector<16x256xf32>
    %289 = arith.addf %244, %288 : vector<16x256xf32>
    %c14_133 = arith.constant 14 : index
    %c0_134 = arith.constant 0 : index
    %290 = vector.load %arg3[%c14_133, %c0_134] : memref<212x256xf32, #tpu.memory_space<vmem>>, vector<1x256xf32>
    %291 = vector.shape_cast %290 : vector<1x256xf32> to vector<256xf32>
    %292 = vector.shape_cast %291 : vector<256xf32> to vector<1x256xf32>
    %293 = vector.broadcast %292 : vector<1x256xf32> to vector<16x256xf32>
    %294 = arith.mulf %293, %194 : vector<16x256xf32>
    %c15_135 = arith.constant 15 : index
    %c0_136 = arith.constant 0 : index
    %295 = vector.load %arg3[%c15_135, %c0_136] : memref<212x256xf32, #tpu.memory_space<vmem>>, vector<1x256xf32>
    %296 = vector.shape_cast %295 : vector<1x256xf32> to vector<256xf32>
    %297 = vector.shape_cast %296 : vector<256xf32> to vector<1x256xf32>
    %298 = vector.broadcast %297 : vector<1x256xf32> to vector<16x256xf32>
    %299 = arith.mulf %298, %195 : vector<16x256xf32>
    %300 = arith.addf %294, %299 : vector<16x256xf32>
    %c16_137 = arith.constant 16 : index
    %c0_138 = arith.constant 0 : index
    %301 = vector.load %arg3[%c16_137, %c0_138] : memref<212x256xf32, #tpu.memory_space<vmem>>, vector<1x256xf32>
    %302 = vector.shape_cast %301 : vector<1x256xf32> to vector<256xf32>
    %303 = vector.shape_cast %302 : vector<256xf32> to vector<1x256xf32>
    %304 = vector.broadcast %303 : vector<1x256xf32> to vector<16x256xf32>
    %305 = arith.mulf %304, %196 : vector<16x256xf32>
    %306 = arith.addf %300, %305 : vector<16x256xf32>
    %c17_139 = arith.constant 17 : index
    %c0_140 = arith.constant 0 : index
    %307 = vector.load %arg3[%c17_139, %c0_140] : memref<212x256xf32, #tpu.memory_space<vmem>>, vector<1x256xf32>
    %308 = vector.shape_cast %307 : vector<1x256xf32> to vector<256xf32>
    %309 = vector.shape_cast %308 : vector<256xf32> to vector<1x256xf32>
    %310 = vector.broadcast %309 : vector<1x256xf32> to vector<16x256xf32>
    %311 = arith.mulf %310, %197 : vector<16x256xf32>
    %312 = arith.addf %306, %311 : vector<16x256xf32>
    %c18_141 = arith.constant 18 : index
    %c0_142 = arith.constant 0 : index
    %313 = vector.load %arg3[%c18_141, %c0_142] : memref<212x256xf32, #tpu.memory_space<vmem>>, vector<1x256xf32>
    %314 = vector.shape_cast %313 : vector<1x256xf32> to vector<256xf32>
    %315 = vector.shape_cast %314 : vector<256xf32> to vector<1x256xf32>
    %316 = vector.broadcast %315 : vector<1x256xf32> to vector<16x256xf32>
    %317 = arith.mulf %316, %198 : vector<16x256xf32>
    %318 = arith.addf %312, %317 : vector<16x256xf32>
    %c19_143 = arith.constant 19 : index
    %c0_144 = arith.constant 0 : index
    %319 = vector.load %arg3[%c19_143, %c0_144] : memref<212x256xf32, #tpu.memory_space<vmem>>, vector<1x256xf32>
    %320 = vector.shape_cast %319 : vector<1x256xf32> to vector<256xf32>
    %321 = vector.shape_cast %320 : vector<256xf32> to vector<1x256xf32>
    %322 = vector.broadcast %321 : vector<1x256xf32> to vector<16x256xf32>
    %323 = arith.mulf %322, %199 : vector<16x256xf32>
    %324 = arith.addf %318, %323 : vector<16x256xf32>
    %c20_145 = arith.constant 20 : index
    %c0_146 = arith.constant 0 : index
    %325 = vector.load %arg3[%c20_145, %c0_146] : memref<212x256xf32, #tpu.memory_space<vmem>>, vector<1x256xf32>
    %326 = vector.shape_cast %325 : vector<1x256xf32> to vector<256xf32>
    %327 = vector.shape_cast %326 : vector<256xf32> to vector<1x256xf32>
    %328 = vector.broadcast %327 : vector<1x256xf32> to vector<16x256xf32>
    %329 = arith.mulf %328, %200 : vector<16x256xf32>
    %330 = arith.addf %324, %329 : vector<16x256xf32>
    %331 = vector.extract_strided_slice %330 {offsets = [0, 255], sizes = [16, 1], strides = [1, 1]} : vector<16x256xf32> to vector<16x1xf32>
    %332 = vector.extract_strided_slice %330 {offsets = [0, 0], sizes = [16, 255], strides = [1, 1]} : vector<16x256xf32> to vector<16x255xf32>
    %333 = tpu.concatenate %331, %332 in 1 : vector<16x1xf32>, vector<16x255xf32> -> vector<16x256xf32>
    %334 = arith.addf %289, %333 : vector<16x256xf32>
    %c21_147 = arith.constant 21 : index
    %c0_148 = arith.constant 0 : index
    %335 = vector.load %arg3[%c21_147, %c0_148] : memref<212x256xf32, #tpu.memory_space<vmem>>, vector<1x256xf32>
    %336 = vector.shape_cast %335 : vector<1x256xf32> to vector<256xf32>
    %337 = vector.shape_cast %336 : vector<256xf32> to vector<1x256xf32>
    %338 = vector.broadcast %337 : vector<1x256xf32> to vector<16x256xf32>
    %339 = arith.mulf %338, %194 : vector<16x256xf32>
    %c22_149 = arith.constant 22 : index
    %c0_150 = arith.constant 0 : index
    %340 = vector.load %arg3[%c22_149, %c0_150] : memref<212x256xf32, #tpu.memory_space<vmem>>, vector<1x256xf32>
    %341 = vector.shape_cast %340 : vector<1x256xf32> to vector<256xf32>
    %342 = vector.shape_cast %341 : vector<256xf32> to vector<1x256xf32>
    %343 = vector.broadcast %342 : vector<1x256xf32> to vector<16x256xf32>
    %344 = arith.mulf %343, %195 : vector<16x256xf32>
    %345 = arith.addf %339, %344 : vector<16x256xf32>
    %c23_151 = arith.constant 23 : index
    %c0_152 = arith.constant 0 : index
    %346 = vector.load %arg3[%c23_151, %c0_152] : memref<212x256xf32, #tpu.memory_space<vmem>>, vector<1x256xf32>
    %347 = vector.shape_cast %346 : vector<1x256xf32> to vector<256xf32>
    %348 = vector.shape_cast %347 : vector<256xf32> to vector<1x256xf32>
    %349 = vector.broadcast %348 : vector<1x256xf32> to vector<16x256xf32>
    %350 = arith.mulf %349, %196 : vector<16x256xf32>
    %351 = arith.addf %345, %350 : vector<16x256xf32>
    %c24_153 = arith.constant 24 : index
    %c0_154 = arith.constant 0 : index
    %352 = vector.load %arg3[%c24_153, %c0_154] : memref<212x256xf32, #tpu.memory_space<vmem>>, vector<1x256xf32>
    %353 = vector.shape_cast %352 : vector<1x256xf32> to vector<256xf32>
    %354 = vector.shape_cast %353 : vector<256xf32> to vector<1x256xf32>
    %355 = vector.broadcast %354 : vector<1x256xf32> to vector<16x256xf32>
    %356 = arith.mulf %355, %197 : vector<16x256xf32>
    %357 = arith.addf %351, %356 : vector<16x256xf32>
    %c25 = arith.constant 25 : index
    %c0_155 = arith.constant 0 : index
    %358 = vector.load %arg3[%c25, %c0_155] : memref<212x256xf32, #tpu.memory_space<vmem>>, vector<1x256xf32>
    %359 = vector.shape_cast %358 : vector<1x256xf32> to vector<256xf32>
    %360 = vector.shape_cast %359 : vector<256xf32> to vector<1x256xf32>
    %361 = vector.broadcast %360 : vector<1x256xf32> to vector<16x256xf32>
    %362 = arith.mulf %361, %198 : vector<16x256xf32>
    %363 = arith.addf %357, %362 : vector<16x256xf32>
    %c26 = arith.constant 26 : index
    %c0_156 = arith.constant 0 : index
    %364 = vector.load %arg3[%c26, %c0_156] : memref<212x256xf32, #tpu.memory_space<vmem>>, vector<1x256xf32>
    %365 = vector.shape_cast %364 : vector<1x256xf32> to vector<256xf32>
    %366 = vector.shape_cast %365 : vector<256xf32> to vector<1x256xf32>
    %367 = vector.broadcast %366 : vector<1x256xf32> to vector<16x256xf32>
    %368 = arith.mulf %367, %199 : vector<16x256xf32>
    %369 = arith.addf %363, %368 : vector<16x256xf32>
    %c27 = arith.constant 27 : index
    %c0_157 = arith.constant 0 : index
    %370 = vector.load %arg3[%c27, %c0_157] : memref<212x256xf32, #tpu.memory_space<vmem>>, vector<1x256xf32>
    %371 = vector.shape_cast %370 : vector<1x256xf32> to vector<256xf32>
    %372 = vector.shape_cast %371 : vector<256xf32> to vector<1x256xf32>
    %373 = vector.broadcast %372 : vector<1x256xf32> to vector<16x256xf32>
    %374 = arith.mulf %373, %200 : vector<16x256xf32>
    %375 = arith.addf %369, %374 : vector<16x256xf32>
    %376 = arith.addf %334, %375 : vector<16x256xf32>
    %c28 = arith.constant 28 : index
    %c0_158 = arith.constant 0 : index
    %377 = vector.load %arg3[%c28, %c0_158] : memref<212x256xf32, #tpu.memory_space<vmem>>, vector<1x256xf32>
    %378 = vector.shape_cast %377 : vector<1x256xf32> to vector<256xf32>
    %379 = vector.shape_cast %378 : vector<256xf32> to vector<1x256xf32>
    %380 = vector.broadcast %379 : vector<1x256xf32> to vector<16x256xf32>
    %381 = arith.mulf %380, %194 : vector<16x256xf32>
    %c29 = arith.constant 29 : index
    %c0_159 = arith.constant 0 : index
    %382 = vector.load %arg3[%c29, %c0_159] : memref<212x256xf32, #tpu.memory_space<vmem>>, vector<1x256xf32>
    %383 = vector.shape_cast %382 : vector<1x256xf32> to vector<256xf32>
    %384 = vector.shape_cast %383 : vector<256xf32> to vector<1x256xf32>
    %385 = vector.broadcast %384 : vector<1x256xf32> to vector<16x256xf32>
    %386 = arith.mulf %385, %195 : vector<16x256xf32>
    %387 = arith.addf %381, %386 : vector<16x256xf32>
    %c30 = arith.constant 30 : index
    %c0_160 = arith.constant 0 : index
    %388 = vector.load %arg3[%c30, %c0_160] : memref<212x256xf32, #tpu.memory_space<vmem>>, vector<1x256xf32>
    %389 = vector.shape_cast %388 : vector<1x256xf32> to vector<256xf32>
    %390 = vector.shape_cast %389 : vector<256xf32> to vector<1x256xf32>
    %391 = vector.broadcast %390 : vector<1x256xf32> to vector<16x256xf32>
    %392 = arith.mulf %391, %196 : vector<16x256xf32>
    %393 = arith.addf %387, %392 : vector<16x256xf32>
    %c31 = arith.constant 31 : index
    %c0_161 = arith.constant 0 : index
    %394 = vector.load %arg3[%c31, %c0_161] : memref<212x256xf32, #tpu.memory_space<vmem>>, vector<1x256xf32>
    %395 = vector.shape_cast %394 : vector<1x256xf32> to vector<256xf32>
    %396 = vector.shape_cast %395 : vector<256xf32> to vector<1x256xf32>
    %397 = vector.broadcast %396 : vector<1x256xf32> to vector<16x256xf32>
    %398 = arith.mulf %397, %197 : vector<16x256xf32>
    %399 = arith.addf %393, %398 : vector<16x256xf32>
    %c32 = arith.constant 32 : index
    %c0_162 = arith.constant 0 : index
    %400 = vector.load %arg3[%c32, %c0_162] : memref<212x256xf32, #tpu.memory_space<vmem>>, vector<1x256xf32>
    %401 = vector.shape_cast %400 : vector<1x256xf32> to vector<256xf32>
    %402 = vector.shape_cast %401 : vector<256xf32> to vector<1x256xf32>
    %403 = vector.broadcast %402 : vector<1x256xf32> to vector<16x256xf32>
    %404 = arith.mulf %403, %198 : vector<16x256xf32>
    %405 = arith.addf %399, %404 : vector<16x256xf32>
    %c33 = arith.constant 33 : index
    %c0_163 = arith.constant 0 : index
    %406 = vector.load %arg3[%c33, %c0_163] : memref<212x256xf32, #tpu.memory_space<vmem>>, vector<1x256xf32>
    %407 = vector.shape_cast %406 : vector<1x256xf32> to vector<256xf32>
    %408 = vector.shape_cast %407 : vector<256xf32> to vector<1x256xf32>
    %409 = vector.broadcast %408 : vector<1x256xf32> to vector<16x256xf32>
    %410 = arith.mulf %409, %199 : vector<16x256xf32>
    %411 = arith.addf %405, %410 : vector<16x256xf32>
    %c34 = arith.constant 34 : index
    %c0_164 = arith.constant 0 : index
    %412 = vector.load %arg3[%c34, %c0_164] : memref<212x256xf32, #tpu.memory_space<vmem>>, vector<1x256xf32>
    %413 = vector.shape_cast %412 : vector<1x256xf32> to vector<256xf32>
    %414 = vector.shape_cast %413 : vector<256xf32> to vector<1x256xf32>
    %415 = vector.broadcast %414 : vector<1x256xf32> to vector<16x256xf32>
    %416 = arith.mulf %415, %200 : vector<16x256xf32>
    %417 = arith.addf %411, %416 : vector<16x256xf32>
    %418 = vector.extract_strided_slice %417 {offsets = [0, 1], sizes = [16, 255], strides = [1, 1]} : vector<16x256xf32> to vector<16x255xf32>
    %419 = vector.extract_strided_slice %417 {offsets = [0, 0], sizes = [16, 1], strides = [1, 1]} : vector<16x256xf32> to vector<16x1xf32>
    %420 = tpu.concatenate %418, %419 in 1 : vector<16x255xf32>, vector<16x1xf32> -> vector<16x256xf32>
    %421 = arith.addf %376, %420 : vector<16x256xf32>
    %c35 = arith.constant 35 : index
    %c0_165 = arith.constant 0 : index
    %422 = vector.load %arg3[%c35, %c0_165] : memref<212x256xf32, #tpu.memory_space<vmem>>, vector<1x256xf32>
    %423 = vector.shape_cast %422 : vector<1x256xf32> to vector<256xf32>
    %424 = vector.shape_cast %423 : vector<256xf32> to vector<1x256xf32>
    %425 = vector.broadcast %424 : vector<1x256xf32> to vector<16x256xf32>
    %426 = arith.mulf %425, %194 : vector<16x256xf32>
    %c36 = arith.constant 36 : index
    %c0_166 = arith.constant 0 : index
    %427 = vector.load %arg3[%c36, %c0_166] : memref<212x256xf32, #tpu.memory_space<vmem>>, vector<1x256xf32>
    %428 = vector.shape_cast %427 : vector<1x256xf32> to vector<256xf32>
    %429 = vector.shape_cast %428 : vector<256xf32> to vector<1x256xf32>
    %430 = vector.broadcast %429 : vector<1x256xf32> to vector<16x256xf32>
    %431 = arith.mulf %430, %195 : vector<16x256xf32>
    %432 = arith.addf %426, %431 : vector<16x256xf32>
    %c37 = arith.constant 37 : index
    %c0_167 = arith.constant 0 : index
    %433 = vector.load %arg3[%c37, %c0_167] : memref<212x256xf32, #tpu.memory_space<vmem>>, vector<1x256xf32>
    %434 = vector.shape_cast %433 : vector<1x256xf32> to vector<256xf32>
    %435 = vector.shape_cast %434 : vector<256xf32> to vector<1x256xf32>
    %436 = vector.broadcast %435 : vector<1x256xf32> to vector<16x256xf32>
    %437 = arith.mulf %436, %196 : vector<16x256xf32>
    %438 = arith.addf %432, %437 : vector<16x256xf32>
    %c38 = arith.constant 38 : index
    %c0_168 = arith.constant 0 : index
    %439 = vector.load %arg3[%c38, %c0_168] : memref<212x256xf32, #tpu.memory_space<vmem>>, vector<1x256xf32>
    %440 = vector.shape_cast %439 : vector<1x256xf32> to vector<256xf32>
    %441 = vector.shape_cast %440 : vector<256xf32> to vector<1x256xf32>
    %442 = vector.broadcast %441 : vector<1x256xf32> to vector<16x256xf32>
    %443 = arith.mulf %442, %197 : vector<16x256xf32>
    %444 = arith.addf %438, %443 : vector<16x256xf32>
    %c39 = arith.constant 39 : index
    %c0_169 = arith.constant 0 : index
    %445 = vector.load %arg3[%c39, %c0_169] : memref<212x256xf32, #tpu.memory_space<vmem>>, vector<1x256xf32>
    %446 = vector.shape_cast %445 : vector<1x256xf32> to vector<256xf32>
    %447 = vector.shape_cast %446 : vector<256xf32> to vector<1x256xf32>
    %448 = vector.broadcast %447 : vector<1x256xf32> to vector<16x256xf32>
    %449 = arith.mulf %448, %198 : vector<16x256xf32>
    %450 = arith.addf %444, %449 : vector<16x256xf32>
    %c40 = arith.constant 40 : index
    %c0_170 = arith.constant 0 : index
    %451 = vector.load %arg3[%c40, %c0_170] : memref<212x256xf32, #tpu.memory_space<vmem>>, vector<1x256xf32>
    %452 = vector.shape_cast %451 : vector<1x256xf32> to vector<256xf32>
    %453 = vector.shape_cast %452 : vector<256xf32> to vector<1x256xf32>
    %454 = vector.broadcast %453 : vector<1x256xf32> to vector<16x256xf32>
    %455 = arith.mulf %454, %199 : vector<16x256xf32>
    %456 = arith.addf %450, %455 : vector<16x256xf32>
    %c41 = arith.constant 41 : index
    %c0_171 = arith.constant 0 : index
    %457 = vector.load %arg3[%c41, %c0_171] : memref<212x256xf32, #tpu.memory_space<vmem>>, vector<1x256xf32>
    %458 = vector.shape_cast %457 : vector<1x256xf32> to vector<256xf32>
    %459 = vector.shape_cast %458 : vector<256xf32> to vector<1x256xf32>
    %460 = vector.broadcast %459 : vector<1x256xf32> to vector<16x256xf32>
    %461 = arith.mulf %460, %200 : vector<16x256xf32>
    %462 = arith.addf %456, %461 : vector<16x256xf32>
    %463 = vector.extract_strided_slice %462 {offsets = [0, 2], sizes = [16, 254], strides = [1, 1]} : vector<16x256xf32> to vector<16x254xf32>
    %464 = vector.extract_strided_slice %462 {offsets = [0, 0], sizes = [16, 2], strides = [1, 1]} : vector<16x256xf32> to vector<16x2xf32>
    %465 = tpu.concatenate %463, %464 in 1 : vector<16x254xf32>, vector<16x2xf32> -> vector<16x256xf32>
    %466 = arith.addf %421, %465 : vector<16x256xf32>
    %c42 = arith.constant 42 : index
    %c0_172 = arith.constant 0 : index
    %467 = vector.load %arg3[%c42, %c0_172] : memref<212x256xf32, #tpu.memory_space<vmem>>, vector<1x256xf32>
    %468 = vector.shape_cast %467 : vector<1x256xf32> to vector<256xf32>
    %469 = vector.shape_cast %468 : vector<256xf32> to vector<1x256xf32>
    %470 = vector.broadcast %469 : vector<1x256xf32> to vector<16x256xf32>
    %471 = arith.mulf %470, %194 : vector<16x256xf32>
    %c43 = arith.constant 43 : index
    %c0_173 = arith.constant 0 : index
    %472 = vector.load %arg3[%c43, %c0_173] : memref<212x256xf32, #tpu.memory_space<vmem>>, vector<1x256xf32>
    %473 = vector.shape_cast %472 : vector<1x256xf32> to vector<256xf32>
    %474 = vector.shape_cast %473 : vector<256xf32> to vector<1x256xf32>
    %475 = vector.broadcast %474 : vector<1x256xf32> to vector<16x256xf32>
    %476 = arith.mulf %475, %195 : vector<16x256xf32>
    %477 = arith.addf %471, %476 : vector<16x256xf32>
    %c44 = arith.constant 44 : index
    %c0_174 = arith.constant 0 : index
    %478 = vector.load %arg3[%c44, %c0_174] : memref<212x256xf32, #tpu.memory_space<vmem>>, vector<1x256xf32>
    %479 = vector.shape_cast %478 : vector<1x256xf32> to vector<256xf32>
    %480 = vector.shape_cast %479 : vector<256xf32> to vector<1x256xf32>
    %481 = vector.broadcast %480 : vector<1x256xf32> to vector<16x256xf32>
    %482 = arith.mulf %481, %196 : vector<16x256xf32>
    %483 = arith.addf %477, %482 : vector<16x256xf32>
    %c45 = arith.constant 45 : index
    %c0_175 = arith.constant 0 : index
    %484 = vector.load %arg3[%c45, %c0_175] : memref<212x256xf32, #tpu.memory_space<vmem>>, vector<1x256xf32>
    %485 = vector.shape_cast %484 : vector<1x256xf32> to vector<256xf32>
    %486 = vector.shape_cast %485 : vector<256xf32> to vector<1x256xf32>
    %487 = vector.broadcast %486 : vector<1x256xf32> to vector<16x256xf32>
    %488 = arith.mulf %487, %197 : vector<16x256xf32>
    %489 = arith.addf %483, %488 : vector<16x256xf32>
    %c46 = arith.constant 46 : index
    %c0_176 = arith.constant 0 : index
    %490 = vector.load %arg3[%c46, %c0_176] : memref<212x256xf32, #tpu.memory_space<vmem>>, vector<1x256xf32>
    %491 = vector.shape_cast %490 : vector<1x256xf32> to vector<256xf32>
    %492 = vector.shape_cast %491 : vector<256xf32> to vector<1x256xf32>
    %493 = vector.broadcast %492 : vector<1x256xf32> to vector<16x256xf32>
    %494 = arith.mulf %493, %198 : vector<16x256xf32>
    %495 = arith.addf %489, %494 : vector<16x256xf32>
    %c47 = arith.constant 47 : index
    %c0_177 = arith.constant 0 : index
    %496 = vector.load %arg3[%c47, %c0_177] : memref<212x256xf32, #tpu.memory_space<vmem>>, vector<1x256xf32>
    %497 = vector.shape_cast %496 : vector<1x256xf32> to vector<256xf32>
    %498 = vector.shape_cast %497 : vector<256xf32> to vector<1x256xf32>
    %499 = vector.broadcast %498 : vector<1x256xf32> to vector<16x256xf32>
    %500 = arith.mulf %499, %199 : vector<16x256xf32>
    %501 = arith.addf %495, %500 : vector<16x256xf32>
    %c48 = arith.constant 48 : index
    %c0_178 = arith.constant 0 : index
    %502 = vector.load %arg3[%c48, %c0_178] : memref<212x256xf32, #tpu.memory_space<vmem>>, vector<1x256xf32>
    %503 = vector.shape_cast %502 : vector<1x256xf32> to vector<256xf32>
    %504 = vector.shape_cast %503 : vector<256xf32> to vector<1x256xf32>
    %505 = vector.broadcast %504 : vector<1x256xf32> to vector<16x256xf32>
    %506 = arith.mulf %505, %200 : vector<16x256xf32>
    %507 = arith.addf %501, %506 : vector<16x256xf32>
    %508 = vector.extract_strided_slice %507 {offsets = [0, 3], sizes = [16, 253], strides = [1, 1]} : vector<16x256xf32> to vector<16x253xf32>
    %509 = vector.extract_strided_slice %507 {offsets = [0, 0], sizes = [16, 3], strides = [1, 1]} : vector<16x256xf32> to vector<16x3xf32>
    %510 = tpu.concatenate %508, %509 in 1 : vector<16x253xf32>, vector<16x3xf32> -> vector<16x256xf32>
    %511 = arith.addf %466, %510 : vector<16x256xf32>
    %c49 = arith.constant 49 : index
    %c0_179 = arith.constant 0 : index
    %512 = vector.load %arg3[%c49, %c0_179] : memref<212x256xf32, #tpu.memory_space<vmem>>, vector<1x256xf32>
    %513 = vector.shape_cast %512 : vector<1x256xf32> to vector<256xf32>
    %514 = vector.shape_cast %513 : vector<256xf32> to vector<1x256xf32>
    %515 = vector.broadcast %514 : vector<1x256xf32> to vector<16x256xf32>
    %516 = arith.mulf %515, %194 : vector<16x256xf32>
    %c50 = arith.constant 50 : index
    %c0_180 = arith.constant 0 : index
    %517 = vector.load %arg3[%c50, %c0_180] : memref<212x256xf32, #tpu.memory_space<vmem>>, vector<1x256xf32>
    %518 = vector.shape_cast %517 : vector<1x256xf32> to vector<256xf32>
    %519 = vector.shape_cast %518 : vector<256xf32> to vector<1x256xf32>
    %520 = vector.broadcast %519 : vector<1x256xf32> to vector<16x256xf32>
    %521 = arith.mulf %520, %195 : vector<16x256xf32>
    %522 = arith.addf %516, %521 : vector<16x256xf32>
    %c51 = arith.constant 51 : index
    %c0_181 = arith.constant 0 : index
    %523 = vector.load %arg3[%c51, %c0_181] : memref<212x256xf32, #tpu.memory_space<vmem>>, vector<1x256xf32>
    %524 = vector.shape_cast %523 : vector<1x256xf32> to vector<256xf32>
    %525 = vector.shape_cast %524 : vector<256xf32> to vector<1x256xf32>
    %526 = vector.broadcast %525 : vector<1x256xf32> to vector<16x256xf32>
    %527 = arith.mulf %526, %196 : vector<16x256xf32>
    %528 = arith.addf %522, %527 : vector<16x256xf32>
    %c52 = arith.constant 52 : index
    %c0_182 = arith.constant 0 : index
    %529 = vector.load %arg3[%c52, %c0_182] : memref<212x256xf32, #tpu.memory_space<vmem>>, vector<1x256xf32>
    %530 = vector.shape_cast %529 : vector<1x256xf32> to vector<256xf32>
    %531 = vector.shape_cast %530 : vector<256xf32> to vector<1x256xf32>
    %532 = vector.broadcast %531 : vector<1x256xf32> to vector<16x256xf32>
    %533 = arith.mulf %532, %197 : vector<16x256xf32>
    %534 = arith.addf %528, %533 : vector<16x256xf32>
    %c53 = arith.constant 53 : index
    %c0_183 = arith.constant 0 : index
    %535 = vector.load %arg3[%c53, %c0_183] : memref<212x256xf32, #tpu.memory_space<vmem>>, vector<1x256xf32>
    %536 = vector.shape_cast %535 : vector<1x256xf32> to vector<256xf32>
    %537 = vector.shape_cast %536 : vector<256xf32> to vector<1x256xf32>
    %538 = vector.broadcast %537 : vector<1x256xf32> to vector<16x256xf32>
    %539 = arith.mulf %538, %198 : vector<16x256xf32>
    %540 = arith.addf %534, %539 : vector<16x256xf32>
    %c54 = arith.constant 54 : index
    %c0_184 = arith.constant 0 : index
    %541 = vector.load %arg3[%c54, %c0_184] : memref<212x256xf32, #tpu.memory_space<vmem>>, vector<1x256xf32>
    %542 = vector.shape_cast %541 : vector<1x256xf32> to vector<256xf32>
    %543 = vector.shape_cast %542 : vector<256xf32> to vector<1x256xf32>
    %544 = vector.broadcast %543 : vector<1x256xf32> to vector<16x256xf32>
    %545 = arith.mulf %544, %199 : vector<16x256xf32>
    %546 = arith.addf %540, %545 : vector<16x256xf32>
    %c55 = arith.constant 55 : index
    %c0_185 = arith.constant 0 : index
    %547 = vector.load %arg3[%c55, %c0_185] : memref<212x256xf32, #tpu.memory_space<vmem>>, vector<1x256xf32>
    %548 = vector.shape_cast %547 : vector<1x256xf32> to vector<256xf32>
    %549 = vector.shape_cast %548 : vector<256xf32> to vector<1x256xf32>
    %550 = vector.broadcast %549 : vector<1x256xf32> to vector<16x256xf32>
    %551 = arith.mulf %550, %200 : vector<16x256xf32>
    %552 = arith.addf %546, %551 : vector<16x256xf32>
    %553 = vector.extract_strided_slice %552 {offsets = [0, 189], sizes = [16, 67], strides = [1, 1]} : vector<16x256xf32> to vector<16x67xf32>
    %554 = vector.extract_strided_slice %552 {offsets = [0, 0], sizes = [16, 189], strides = [1, 1]} : vector<16x256xf32> to vector<16x189xf32>
    %555 = tpu.concatenate %553, %554 in 1 : vector<16x67xf32>, vector<16x189xf32> -> vector<16x256xf32>
    %556 = arith.addf %511, %555 : vector<16x256xf32>
    %c56 = arith.constant 56 : index
    %c0_186 = arith.constant 0 : index
    %557 = vector.load %arg3[%c56, %c0_186] : memref<212x256xf32, #tpu.memory_space<vmem>>, vector<1x256xf32>
    %558 = vector.shape_cast %557 : vector<1x256xf32> to vector<256xf32>
    %559 = vector.shape_cast %558 : vector<256xf32> to vector<1x256xf32>
    %560 = vector.broadcast %559 : vector<1x256xf32> to vector<16x256xf32>
    %561 = arith.mulf %560, %194 : vector<16x256xf32>
    %c57 = arith.constant 57 : index
    %c0_187 = arith.constant 0 : index
    %562 = vector.load %arg3[%c57, %c0_187] : memref<212x256xf32, #tpu.memory_space<vmem>>, vector<1x256xf32>
    %563 = vector.shape_cast %562 : vector<1x256xf32> to vector<256xf32>
    %564 = vector.shape_cast %563 : vector<256xf32> to vector<1x256xf32>
    %565 = vector.broadcast %564 : vector<1x256xf32> to vector<16x256xf32>
    %566 = arith.mulf %565, %195 : vector<16x256xf32>
    %567 = arith.addf %561, %566 : vector<16x256xf32>
    %c58 = arith.constant 58 : index
    %c0_188 = arith.constant 0 : index
    %568 = vector.load %arg3[%c58, %c0_188] : memref<212x256xf32, #tpu.memory_space<vmem>>, vector<1x256xf32>
    %569 = vector.shape_cast %568 : vector<1x256xf32> to vector<256xf32>
    %570 = vector.shape_cast %569 : vector<256xf32> to vector<1x256xf32>
    %571 = vector.broadcast %570 : vector<1x256xf32> to vector<16x256xf32>
    %572 = arith.mulf %571, %196 : vector<16x256xf32>
    %573 = arith.addf %567, %572 : vector<16x256xf32>
    %c59 = arith.constant 59 : index
    %c0_189 = arith.constant 0 : index
    %574 = vector.load %arg3[%c59, %c0_189] : memref<212x256xf32, #tpu.memory_space<vmem>>, vector<1x256xf32>
    %575 = vector.shape_cast %574 : vector<1x256xf32> to vector<256xf32>
    %576 = vector.shape_cast %575 : vector<256xf32> to vector<1x256xf32>
    %577 = vector.broadcast %576 : vector<1x256xf32> to vector<16x256xf32>
    %578 = arith.mulf %577, %197 : vector<16x256xf32>
    %579 = arith.addf %573, %578 : vector<16x256xf32>
    %c60 = arith.constant 60 : index
    %c0_190 = arith.constant 0 : index
    %580 = vector.load %arg3[%c60, %c0_190] : memref<212x256xf32, #tpu.memory_space<vmem>>, vector<1x256xf32>
    %581 = vector.shape_cast %580 : vector<1x256xf32> to vector<256xf32>
    %582 = vector.shape_cast %581 : vector<256xf32> to vector<1x256xf32>
    %583 = vector.broadcast %582 : vector<1x256xf32> to vector<16x256xf32>
    %584 = arith.mulf %583, %198 : vector<16x256xf32>
    %585 = arith.addf %579, %584 : vector<16x256xf32>
    %c61 = arith.constant 61 : index
    %c0_191 = arith.constant 0 : index
    %586 = vector.load %arg3[%c61, %c0_191] : memref<212x256xf32, #tpu.memory_space<vmem>>, vector<1x256xf32>
    %587 = vector.shape_cast %586 : vector<1x256xf32> to vector<256xf32>
    %588 = vector.shape_cast %587 : vector<256xf32> to vector<1x256xf32>
    %589 = vector.broadcast %588 : vector<1x256xf32> to vector<16x256xf32>
    %590 = arith.mulf %589, %199 : vector<16x256xf32>
    %591 = arith.addf %585, %590 : vector<16x256xf32>
    %c62 = arith.constant 62 : index
    %c0_192 = arith.constant 0 : index
    %592 = vector.load %arg3[%c62, %c0_192] : memref<212x256xf32, #tpu.memory_space<vmem>>, vector<1x256xf32>
    %593 = vector.shape_cast %592 : vector<1x256xf32> to vector<256xf32>
    %594 = vector.shape_cast %593 : vector<256xf32> to vector<1x256xf32>
    %595 = vector.broadcast %594 : vector<1x256xf32> to vector<16x256xf32>
    %596 = arith.mulf %595, %200 : vector<16x256xf32>
    %597 = arith.addf %591, %596 : vector<16x256xf32>
    %598 = vector.extract_strided_slice %597 {offsets = [0, 190], sizes = [16, 66], strides = [1, 1]} : vector<16x256xf32> to vector<16x66xf32>
    %599 = vector.extract_strided_slice %597 {offsets = [0, 0], sizes = [16, 190], strides = [1, 1]} : vector<16x256xf32> to vector<16x190xf32>
    %600 = tpu.concatenate %598, %599 in 1 : vector<16x66xf32>, vector<16x190xf32> -> vector<16x256xf32>
    %601 = arith.addf %556, %600 : vector<16x256xf32>
    %c63 = arith.constant 63 : index
    %c0_193 = arith.constant 0 : index
    %602 = vector.load %arg3[%c63, %c0_193] : memref<212x256xf32, #tpu.memory_space<vmem>>, vector<1x256xf32>
    %603 = vector.shape_cast %602 : vector<1x256xf32> to vector<256xf32>
    %604 = vector.shape_cast %603 : vector<256xf32> to vector<1x256xf32>
    %605 = vector.broadcast %604 : vector<1x256xf32> to vector<16x256xf32>
    %606 = arith.mulf %605, %194 : vector<16x256xf32>
    %c64 = arith.constant 64 : index
    %c0_194 = arith.constant 0 : index
    %607 = vector.load %arg3[%c64, %c0_194] : memref<212x256xf32, #tpu.memory_space<vmem>>, vector<1x256xf32>
    %608 = vector.shape_cast %607 : vector<1x256xf32> to vector<256xf32>
    %609 = vector.shape_cast %608 : vector<256xf32> to vector<1x256xf32>
    %610 = vector.broadcast %609 : vector<1x256xf32> to vector<16x256xf32>
    %611 = arith.mulf %610, %195 : vector<16x256xf32>
    %612 = arith.addf %606, %611 : vector<16x256xf32>
    %c65 = arith.constant 65 : index
    %c0_195 = arith.constant 0 : index
    %613 = vector.load %arg3[%c65, %c0_195] : memref<212x256xf32, #tpu.memory_space<vmem>>, vector<1x256xf32>
    %614 = vector.shape_cast %613 : vector<1x256xf32> to vector<256xf32>
    %615 = vector.shape_cast %614 : vector<256xf32> to vector<1x256xf32>
    %616 = vector.broadcast %615 : vector<1x256xf32> to vector<16x256xf32>
    %617 = arith.mulf %616, %196 : vector<16x256xf32>
    %618 = arith.addf %612, %617 : vector<16x256xf32>
    %c66 = arith.constant 66 : index
    %c0_196 = arith.constant 0 : index
    %619 = vector.load %arg3[%c66, %c0_196] : memref<212x256xf32, #tpu.memory_space<vmem>>, vector<1x256xf32>
    %620 = vector.shape_cast %619 : vector<1x256xf32> to vector<256xf32>
    %621 = vector.shape_cast %620 : vector<256xf32> to vector<1x256xf32>
    %622 = vector.broadcast %621 : vector<1x256xf32> to vector<16x256xf32>
    %623 = arith.mulf %622, %197 : vector<16x256xf32>
    %624 = arith.addf %618, %623 : vector<16x256xf32>
    %c67 = arith.constant 67 : index
    %c0_197 = arith.constant 0 : index
    %625 = vector.load %arg3[%c67, %c0_197] : memref<212x256xf32, #tpu.memory_space<vmem>>, vector<1x256xf32>
    %626 = vector.shape_cast %625 : vector<1x256xf32> to vector<256xf32>
    %627 = vector.shape_cast %626 : vector<256xf32> to vector<1x256xf32>
    %628 = vector.broadcast %627 : vector<1x256xf32> to vector<16x256xf32>
    %629 = arith.mulf %628, %198 : vector<16x256xf32>
    %630 = arith.addf %624, %629 : vector<16x256xf32>
    %c68 = arith.constant 68 : index
    %c0_198 = arith.constant 0 : index
    %631 = vector.load %arg3[%c68, %c0_198] : memref<212x256xf32, #tpu.memory_space<vmem>>, vector<1x256xf32>
    %632 = vector.shape_cast %631 : vector<1x256xf32> to vector<256xf32>
    %633 = vector.shape_cast %632 : vector<256xf32> to vector<1x256xf32>
    %634 = vector.broadcast %633 : vector<1x256xf32> to vector<16x256xf32>
    %635 = arith.mulf %634, %199 : vector<16x256xf32>
    %636 = arith.addf %630, %635 : vector<16x256xf32>
    %c69 = arith.constant 69 : index
    %c0_199 = arith.constant 0 : index
    %637 = vector.load %arg3[%c69, %c0_199] : memref<212x256xf32, #tpu.memory_space<vmem>>, vector<1x256xf32>
    %638 = vector.shape_cast %637 : vector<1x256xf32> to vector<256xf32>
    %639 = vector.shape_cast %638 : vector<256xf32> to vector<1x256xf32>
    %640 = vector.broadcast %639 : vector<1x256xf32> to vector<16x256xf32>
    %641 = arith.mulf %640, %200 : vector<16x256xf32>
    %642 = arith.addf %636, %641 : vector<16x256xf32>
    %643 = vector.extract_strided_slice %642 {offsets = [0, 191], sizes = [16, 65], strides = [1, 1]} : vector<16x256xf32> to vector<16x65xf32>
    %644 = vector.extract_strided_slice %642 {offsets = [0, 0], sizes = [16, 191], strides = [1, 1]} : vector<16x256xf32> to vector<16x191xf32>
    %645 = tpu.concatenate %643, %644 in 1 : vector<16x65xf32>, vector<16x191xf32> -> vector<16x256xf32>
    %646 = arith.addf %601, %645 : vector<16x256xf32>
    %c70 = arith.constant 70 : index
    %c0_200 = arith.constant 0 : index
    %647 = vector.load %arg3[%c70, %c0_200] : memref<212x256xf32, #tpu.memory_space<vmem>>, vector<1x256xf32>
    %648 = vector.shape_cast %647 : vector<1x256xf32> to vector<256xf32>
    %649 = vector.shape_cast %648 : vector<256xf32> to vector<1x256xf32>
    %650 = vector.broadcast %649 : vector<1x256xf32> to vector<16x256xf32>
    %651 = arith.mulf %650, %194 : vector<16x256xf32>
    %c71 = arith.constant 71 : index
    %c0_201 = arith.constant 0 : index
    %652 = vector.load %arg3[%c71, %c0_201] : memref<212x256xf32, #tpu.memory_space<vmem>>, vector<1x256xf32>
    %653 = vector.shape_cast %652 : vector<1x256xf32> to vector<256xf32>
    %654 = vector.shape_cast %653 : vector<256xf32> to vector<1x256xf32>
    %655 = vector.broadcast %654 : vector<1x256xf32> to vector<16x256xf32>
    %656 = arith.mulf %655, %195 : vector<16x256xf32>
    %657 = arith.addf %651, %656 : vector<16x256xf32>
    %c72 = arith.constant 72 : index
    %c0_202 = arith.constant 0 : index
    %658 = vector.load %arg3[%c72, %c0_202] : memref<212x256xf32, #tpu.memory_space<vmem>>, vector<1x256xf32>
    %659 = vector.shape_cast %658 : vector<1x256xf32> to vector<256xf32>
    %660 = vector.shape_cast %659 : vector<256xf32> to vector<1x256xf32>
    %661 = vector.broadcast %660 : vector<1x256xf32> to vector<16x256xf32>
    %662 = arith.mulf %661, %196 : vector<16x256xf32>
    %663 = arith.addf %657, %662 : vector<16x256xf32>
    %c73 = arith.constant 73 : index
    %c0_203 = arith.constant 0 : index
    %664 = vector.load %arg3[%c73, %c0_203] : memref<212x256xf32, #tpu.memory_space<vmem>>, vector<1x256xf32>
    %665 = vector.shape_cast %664 : vector<1x256xf32> to vector<256xf32>
    %666 = vector.shape_cast %665 : vector<256xf32> to vector<1x256xf32>
    %667 = vector.broadcast %666 : vector<1x256xf32> to vector<16x256xf32>
    %668 = arith.mulf %667, %197 : vector<16x256xf32>
    %669 = arith.addf %663, %668 : vector<16x256xf32>
    %c74 = arith.constant 74 : index
    %c0_204 = arith.constant 0 : index
    %670 = vector.load %arg3[%c74, %c0_204] : memref<212x256xf32, #tpu.memory_space<vmem>>, vector<1x256xf32>
    %671 = vector.shape_cast %670 : vector<1x256xf32> to vector<256xf32>
    %672 = vector.shape_cast %671 : vector<256xf32> to vector<1x256xf32>
    %673 = vector.broadcast %672 : vector<1x256xf32> to vector<16x256xf32>
    %674 = arith.mulf %673, %198 : vector<16x256xf32>
    %675 = arith.addf %669, %674 : vector<16x256xf32>
    %c75 = arith.constant 75 : index
    %c0_205 = arith.constant 0 : index
    %676 = vector.load %arg3[%c75, %c0_205] : memref<212x256xf32, #tpu.memory_space<vmem>>, vector<1x256xf32>
    %677 = vector.shape_cast %676 : vector<1x256xf32> to vector<256xf32>
    %678 = vector.shape_cast %677 : vector<256xf32> to vector<1x256xf32>
    %679 = vector.broadcast %678 : vector<1x256xf32> to vector<16x256xf32>
    %680 = arith.mulf %679, %199 : vector<16x256xf32>
    %681 = arith.addf %675, %680 : vector<16x256xf32>
    %c76 = arith.constant 76 : index
    %c0_206 = arith.constant 0 : index
    %682 = vector.load %arg3[%c76, %c0_206] : memref<212x256xf32, #tpu.memory_space<vmem>>, vector<1x256xf32>
    %683 = vector.shape_cast %682 : vector<1x256xf32> to vector<256xf32>
    %684 = vector.shape_cast %683 : vector<256xf32> to vector<1x256xf32>
    %685 = vector.broadcast %684 : vector<1x256xf32> to vector<16x256xf32>
    %686 = arith.mulf %685, %200 : vector<16x256xf32>
    %687 = arith.addf %681, %686 : vector<16x256xf32>
    %688 = vector.extract_strided_slice %687 {offsets = [0, 192], sizes = [16, 64], strides = [1, 1]} : vector<16x256xf32> to vector<16x64xf32>
    %689 = vector.extract_strided_slice %687 {offsets = [0, 0], sizes = [16, 192], strides = [1, 1]} : vector<16x256xf32> to vector<16x192xf32>
    %690 = tpu.concatenate %688, %689 in 1 : vector<16x64xf32>, vector<16x192xf32> -> vector<16x256xf32>
    %691 = arith.addf %646, %690 : vector<16x256xf32>
    %c77 = arith.constant 77 : index
    %c0_207 = arith.constant 0 : index
    %692 = vector.load %arg3[%c77, %c0_207] : memref<212x256xf32, #tpu.memory_space<vmem>>, vector<1x256xf32>
    %693 = vector.shape_cast %692 : vector<1x256xf32> to vector<256xf32>
    %694 = vector.shape_cast %693 : vector<256xf32> to vector<1x256xf32>
    %695 = vector.broadcast %694 : vector<1x256xf32> to vector<16x256xf32>
    %696 = arith.mulf %695, %194 : vector<16x256xf32>
    %c78 = arith.constant 78 : index
    %c0_208 = arith.constant 0 : index
    %697 = vector.load %arg3[%c78, %c0_208] : memref<212x256xf32, #tpu.memory_space<vmem>>, vector<1x256xf32>
    %698 = vector.shape_cast %697 : vector<1x256xf32> to vector<256xf32>
    %699 = vector.shape_cast %698 : vector<256xf32> to vector<1x256xf32>
    %700 = vector.broadcast %699 : vector<1x256xf32> to vector<16x256xf32>
    %701 = arith.mulf %700, %195 : vector<16x256xf32>
    %702 = arith.addf %696, %701 : vector<16x256xf32>
    %c79 = arith.constant 79 : index
    %c0_209 = arith.constant 0 : index
    %703 = vector.load %arg3[%c79, %c0_209] : memref<212x256xf32, #tpu.memory_space<vmem>>, vector<1x256xf32>
    %704 = vector.shape_cast %703 : vector<1x256xf32> to vector<256xf32>
    %705 = vector.shape_cast %704 : vector<256xf32> to vector<1x256xf32>
    %706 = vector.broadcast %705 : vector<1x256xf32> to vector<16x256xf32>
    %707 = arith.mulf %706, %196 : vector<16x256xf32>
    %708 = arith.addf %702, %707 : vector<16x256xf32>
    %c80 = arith.constant 80 : index
    %c0_210 = arith.constant 0 : index
    %709 = vector.load %arg3[%c80, %c0_210] : memref<212x256xf32, #tpu.memory_space<vmem>>, vector<1x256xf32>
    %710 = vector.shape_cast %709 : vector<1x256xf32> to vector<256xf32>
    %711 = vector.shape_cast %710 : vector<256xf32> to vector<1x256xf32>
    %712 = vector.broadcast %711 : vector<1x256xf32> to vector<16x256xf32>
    %713 = arith.mulf %712, %197 : vector<16x256xf32>
    %714 = arith.addf %708, %713 : vector<16x256xf32>
    %c81 = arith.constant 81 : index
    %c0_211 = arith.constant 0 : index
    %715 = vector.load %arg3[%c81, %c0_211] : memref<212x256xf32, #tpu.memory_space<vmem>>, vector<1x256xf32>
    %716 = vector.shape_cast %715 : vector<1x256xf32> to vector<256xf32>
    %717 = vector.shape_cast %716 : vector<256xf32> to vector<1x256xf32>
    %718 = vector.broadcast %717 : vector<1x256xf32> to vector<16x256xf32>
    %719 = arith.mulf %718, %198 : vector<16x256xf32>
    %720 = arith.addf %714, %719 : vector<16x256xf32>
    %c82 = arith.constant 82 : index
    %c0_212 = arith.constant 0 : index
    %721 = vector.load %arg3[%c82, %c0_212] : memref<212x256xf32, #tpu.memory_space<vmem>>, vector<1x256xf32>
    %722 = vector.shape_cast %721 : vector<1x256xf32> to vector<256xf32>
    %723 = vector.shape_cast %722 : vector<256xf32> to vector<1x256xf32>
    %724 = vector.broadcast %723 : vector<1x256xf32> to vector<16x256xf32>
    %725 = arith.mulf %724, %199 : vector<16x256xf32>
    %726 = arith.addf %720, %725 : vector<16x256xf32>
    %c83 = arith.constant 83 : index
    %c0_213 = arith.constant 0 : index
    %727 = vector.load %arg3[%c83, %c0_213] : memref<212x256xf32, #tpu.memory_space<vmem>>, vector<1x256xf32>
    %728 = vector.shape_cast %727 : vector<1x256xf32> to vector<256xf32>
    %729 = vector.shape_cast %728 : vector<256xf32> to vector<1x256xf32>
    %730 = vector.broadcast %729 : vector<1x256xf32> to vector<16x256xf32>
    %731 = arith.mulf %730, %200 : vector<16x256xf32>
    %732 = arith.addf %726, %731 : vector<16x256xf32>
    %733 = vector.extract_strided_slice %732 {offsets = [0, 193], sizes = [16, 63], strides = [1, 1]} : vector<16x256xf32> to vector<16x63xf32>
    %734 = vector.extract_strided_slice %732 {offsets = [0, 0], sizes = [16, 193], strides = [1, 1]} : vector<16x256xf32> to vector<16x193xf32>
    %735 = tpu.concatenate %733, %734 in 1 : vector<16x63xf32>, vector<16x193xf32> -> vector<16x256xf32>
    %736 = arith.addf %691, %735 : vector<16x256xf32>
    %c84 = arith.constant 84 : index
    %c0_214 = arith.constant 0 : index
    %737 = vector.load %arg3[%c84, %c0_214] : memref<212x256xf32, #tpu.memory_space<vmem>>, vector<1x256xf32>
    %738 = vector.shape_cast %737 : vector<1x256xf32> to vector<256xf32>
    %739 = vector.shape_cast %738 : vector<256xf32> to vector<1x256xf32>
    %740 = vector.broadcast %739 : vector<1x256xf32> to vector<16x256xf32>
    %741 = arith.mulf %740, %194 : vector<16x256xf32>
    %c85 = arith.constant 85 : index
    %c0_215 = arith.constant 0 : index
    %742 = vector.load %arg3[%c85, %c0_215] : memref<212x256xf32, #tpu.memory_space<vmem>>, vector<1x256xf32>
    %743 = vector.shape_cast %742 : vector<1x256xf32> to vector<256xf32>
    %744 = vector.shape_cast %743 : vector<256xf32> to vector<1x256xf32>
    %745 = vector.broadcast %744 : vector<1x256xf32> to vector<16x256xf32>
    %746 = arith.mulf %745, %195 : vector<16x256xf32>
    %747 = arith.addf %741, %746 : vector<16x256xf32>
    %c86 = arith.constant 86 : index
    %c0_216 = arith.constant 0 : index
    %748 = vector.load %arg3[%c86, %c0_216] : memref<212x256xf32, #tpu.memory_space<vmem>>, vector<1x256xf32>
    %749 = vector.shape_cast %748 : vector<1x256xf32> to vector<256xf32>
    %750 = vector.shape_cast %749 : vector<256xf32> to vector<1x256xf32>
    %751 = vector.broadcast %750 : vector<1x256xf32> to vector<16x256xf32>
    %752 = arith.mulf %751, %196 : vector<16x256xf32>
    %753 = arith.addf %747, %752 : vector<16x256xf32>
    %c87 = arith.constant 87 : index
    %c0_217 = arith.constant 0 : index
    %754 = vector.load %arg3[%c87, %c0_217] : memref<212x256xf32, #tpu.memory_space<vmem>>, vector<1x256xf32>
    %755 = vector.shape_cast %754 : vector<1x256xf32> to vector<256xf32>
    %756 = vector.shape_cast %755 : vector<256xf32> to vector<1x256xf32>
    %757 = vector.broadcast %756 : vector<1x256xf32> to vector<16x256xf32>
    %758 = arith.mulf %757, %197 : vector<16x256xf32>
    %759 = arith.addf %753, %758 : vector<16x256xf32>
    %c88 = arith.constant 88 : index
    %c0_218 = arith.constant 0 : index
    %760 = vector.load %arg3[%c88, %c0_218] : memref<212x256xf32, #tpu.memory_space<vmem>>, vector<1x256xf32>
    %761 = vector.shape_cast %760 : vector<1x256xf32> to vector<256xf32>
    %762 = vector.shape_cast %761 : vector<256xf32> to vector<1x256xf32>
    %763 = vector.broadcast %762 : vector<1x256xf32> to vector<16x256xf32>
    %764 = arith.mulf %763, %198 : vector<16x256xf32>
    %765 = arith.addf %759, %764 : vector<16x256xf32>
    %c89 = arith.constant 89 : index
    %c0_219 = arith.constant 0 : index
    %766 = vector.load %arg3[%c89, %c0_219] : memref<212x256xf32, #tpu.memory_space<vmem>>, vector<1x256xf32>
    %767 = vector.shape_cast %766 : vector<1x256xf32> to vector<256xf32>
    %768 = vector.shape_cast %767 : vector<256xf32> to vector<1x256xf32>
    %769 = vector.broadcast %768 : vector<1x256xf32> to vector<16x256xf32>
    %770 = arith.mulf %769, %199 : vector<16x256xf32>
    %771 = arith.addf %765, %770 : vector<16x256xf32>
    %c90 = arith.constant 90 : index
    %c0_220 = arith.constant 0 : index
    %772 = vector.load %arg3[%c90, %c0_220] : memref<212x256xf32, #tpu.memory_space<vmem>>, vector<1x256xf32>
    %773 = vector.shape_cast %772 : vector<1x256xf32> to vector<256xf32>
    %774 = vector.shape_cast %773 : vector<256xf32> to vector<1x256xf32>
    %775 = vector.broadcast %774 : vector<1x256xf32> to vector<16x256xf32>
    %776 = arith.mulf %775, %200 : vector<16x256xf32>
    %777 = arith.addf %771, %776 : vector<16x256xf32>
    %778 = vector.extract_strided_slice %777 {offsets = [0, 194], sizes = [16, 62], strides = [1, 1]} : vector<16x256xf32> to vector<16x62xf32>
    %779 = vector.extract_strided_slice %777 {offsets = [0, 0], sizes = [16, 194], strides = [1, 1]} : vector<16x256xf32> to vector<16x194xf32>
    %780 = tpu.concatenate %778, %779 in 1 : vector<16x62xf32>, vector<16x194xf32> -> vector<16x256xf32>
    %781 = arith.addf %736, %780 : vector<16x256xf32>
    %c91 = arith.constant 91 : index
    %c0_221 = arith.constant 0 : index
    %782 = vector.load %arg3[%c91, %c0_221] : memref<212x256xf32, #tpu.memory_space<vmem>>, vector<1x256xf32>
    %783 = vector.shape_cast %782 : vector<1x256xf32> to vector<256xf32>
    %784 = vector.shape_cast %783 : vector<256xf32> to vector<1x256xf32>
    %785 = vector.broadcast %784 : vector<1x256xf32> to vector<16x256xf32>
    %786 = arith.mulf %785, %194 : vector<16x256xf32>
    %c92 = arith.constant 92 : index
    %c0_222 = arith.constant 0 : index
    %787 = vector.load %arg3[%c92, %c0_222] : memref<212x256xf32, #tpu.memory_space<vmem>>, vector<1x256xf32>
    %788 = vector.shape_cast %787 : vector<1x256xf32> to vector<256xf32>
    %789 = vector.shape_cast %788 : vector<256xf32> to vector<1x256xf32>
    %790 = vector.broadcast %789 : vector<1x256xf32> to vector<16x256xf32>
    %791 = arith.mulf %790, %195 : vector<16x256xf32>
    %792 = arith.addf %786, %791 : vector<16x256xf32>
    %c93 = arith.constant 93 : index
    %c0_223 = arith.constant 0 : index
    %793 = vector.load %arg3[%c93, %c0_223] : memref<212x256xf32, #tpu.memory_space<vmem>>, vector<1x256xf32>
    %794 = vector.shape_cast %793 : vector<1x256xf32> to vector<256xf32>
    %795 = vector.shape_cast %794 : vector<256xf32> to vector<1x256xf32>
    %796 = vector.broadcast %795 : vector<1x256xf32> to vector<16x256xf32>
    %797 = arith.mulf %796, %196 : vector<16x256xf32>
    %798 = arith.addf %792, %797 : vector<16x256xf32>
    %c94 = arith.constant 94 : index
    %c0_224 = arith.constant 0 : index
    %799 = vector.load %arg3[%c94, %c0_224] : memref<212x256xf32, #tpu.memory_space<vmem>>, vector<1x256xf32>
    %800 = vector.shape_cast %799 : vector<1x256xf32> to vector<256xf32>
    %801 = vector.shape_cast %800 : vector<256xf32> to vector<1x256xf32>
    %802 = vector.broadcast %801 : vector<1x256xf32> to vector<16x256xf32>
    %803 = arith.mulf %802, %197 : vector<16x256xf32>
    %804 = arith.addf %798, %803 : vector<16x256xf32>
    %c95 = arith.constant 95 : index
    %c0_225 = arith.constant 0 : index
    %805 = vector.load %arg3[%c95, %c0_225] : memref<212x256xf32, #tpu.memory_space<vmem>>, vector<1x256xf32>
    %806 = vector.shape_cast %805 : vector<1x256xf32> to vector<256xf32>
    %807 = vector.shape_cast %806 : vector<256xf32> to vector<1x256xf32>
    %808 = vector.broadcast %807 : vector<1x256xf32> to vector<16x256xf32>
    %809 = arith.mulf %808, %198 : vector<16x256xf32>
    %810 = arith.addf %804, %809 : vector<16x256xf32>
    %c96 = arith.constant 96 : index
    %c0_226 = arith.constant 0 : index
    %811 = vector.load %arg3[%c96, %c0_226] : memref<212x256xf32, #tpu.memory_space<vmem>>, vector<1x256xf32>
    %812 = vector.shape_cast %811 : vector<1x256xf32> to vector<256xf32>
    %813 = vector.shape_cast %812 : vector<256xf32> to vector<1x256xf32>
    %814 = vector.broadcast %813 : vector<1x256xf32> to vector<16x256xf32>
    %815 = arith.mulf %814, %199 : vector<16x256xf32>
    %816 = arith.addf %810, %815 : vector<16x256xf32>
    %c97 = arith.constant 97 : index
    %c0_227 = arith.constant 0 : index
    %817 = vector.load %arg3[%c97, %c0_227] : memref<212x256xf32, #tpu.memory_space<vmem>>, vector<1x256xf32>
    %818 = vector.shape_cast %817 : vector<1x256xf32> to vector<256xf32>
    %819 = vector.shape_cast %818 : vector<256xf32> to vector<1x256xf32>
    %820 = vector.broadcast %819 : vector<1x256xf32> to vector<16x256xf32>
    %821 = arith.mulf %820, %200 : vector<16x256xf32>
    %822 = arith.addf %816, %821 : vector<16x256xf32>
    %823 = vector.extract_strided_slice %822 {offsets = [0, 195], sizes = [16, 61], strides = [1, 1]} : vector<16x256xf32> to vector<16x61xf32>
    %824 = vector.extract_strided_slice %822 {offsets = [0, 0], sizes = [16, 195], strides = [1, 1]} : vector<16x256xf32> to vector<16x195xf32>
    %825 = tpu.concatenate %823, %824 in 1 : vector<16x61xf32>, vector<16x195xf32> -> vector<16x256xf32>
    %826 = arith.addf %781, %825 : vector<16x256xf32>
    %c98 = arith.constant 98 : index
    %c0_228 = arith.constant 0 : index
    %827 = vector.load %arg3[%c98, %c0_228] : memref<212x256xf32, #tpu.memory_space<vmem>>, vector<1x256xf32>
    %828 = vector.shape_cast %827 : vector<1x256xf32> to vector<256xf32>
    %829 = vector.shape_cast %828 : vector<256xf32> to vector<1x256xf32>
    %830 = vector.broadcast %829 : vector<1x256xf32> to vector<16x256xf32>
    %831 = arith.mulf %830, %194 : vector<16x256xf32>
    %c99 = arith.constant 99 : index
    %c0_229 = arith.constant 0 : index
    %832 = vector.load %arg3[%c99, %c0_229] : memref<212x256xf32, #tpu.memory_space<vmem>>, vector<1x256xf32>
    %833 = vector.shape_cast %832 : vector<1x256xf32> to vector<256xf32>
    %834 = vector.shape_cast %833 : vector<256xf32> to vector<1x256xf32>
    %835 = vector.broadcast %834 : vector<1x256xf32> to vector<16x256xf32>
    %836 = arith.mulf %835, %195 : vector<16x256xf32>
    %837 = arith.addf %831, %836 : vector<16x256xf32>
    %c100 = arith.constant 100 : index
    %c0_230 = arith.constant 0 : index
    %838 = vector.load %arg3[%c100, %c0_230] : memref<212x256xf32, #tpu.memory_space<vmem>>, vector<1x256xf32>
    %839 = vector.shape_cast %838 : vector<1x256xf32> to vector<256xf32>
    %840 = vector.shape_cast %839 : vector<256xf32> to vector<1x256xf32>
    %841 = vector.broadcast %840 : vector<1x256xf32> to vector<16x256xf32>
    %842 = arith.mulf %841, %196 : vector<16x256xf32>
    %843 = arith.addf %837, %842 : vector<16x256xf32>
    %c101 = arith.constant 101 : index
    %c0_231 = arith.constant 0 : index
    %844 = vector.load %arg3[%c101, %c0_231] : memref<212x256xf32, #tpu.memory_space<vmem>>, vector<1x256xf32>
    %845 = vector.shape_cast %844 : vector<1x256xf32> to vector<256xf32>
    %846 = vector.shape_cast %845 : vector<256xf32> to vector<1x256xf32>
    %847 = vector.broadcast %846 : vector<1x256xf32> to vector<16x256xf32>
    %848 = arith.mulf %847, %197 : vector<16x256xf32>
    %849 = arith.addf %843, %848 : vector<16x256xf32>
    %c102 = arith.constant 102 : index
    %c0_232 = arith.constant 0 : index
    %850 = vector.load %arg3[%c102, %c0_232] : memref<212x256xf32, #tpu.memory_space<vmem>>, vector<1x256xf32>
    %851 = vector.shape_cast %850 : vector<1x256xf32> to vector<256xf32>
    %852 = vector.shape_cast %851 : vector<256xf32> to vector<1x256xf32>
    %853 = vector.broadcast %852 : vector<1x256xf32> to vector<16x256xf32>
    %854 = arith.mulf %853, %198 : vector<16x256xf32>
    %855 = arith.addf %849, %854 : vector<16x256xf32>
    %c103 = arith.constant 103 : index
    %c0_233 = arith.constant 0 : index
    %856 = vector.load %arg3[%c103, %c0_233] : memref<212x256xf32, #tpu.memory_space<vmem>>, vector<1x256xf32>
    %857 = vector.shape_cast %856 : vector<1x256xf32> to vector<256xf32>
    %858 = vector.shape_cast %857 : vector<256xf32> to vector<1x256xf32>
    %859 = vector.broadcast %858 : vector<1x256xf32> to vector<16x256xf32>
    %860 = arith.mulf %859, %199 : vector<16x256xf32>
    %861 = arith.addf %855, %860 : vector<16x256xf32>
    %c104 = arith.constant 104 : index
    %c0_234 = arith.constant 0 : index
    %862 = vector.load %arg3[%c104, %c0_234] : memref<212x256xf32, #tpu.memory_space<vmem>>, vector<1x256xf32>
    %863 = vector.shape_cast %862 : vector<1x256xf32> to vector<256xf32>
    %864 = vector.shape_cast %863 : vector<256xf32> to vector<1x256xf32>
    %865 = vector.broadcast %864 : vector<1x256xf32> to vector<16x256xf32>
    %866 = arith.mulf %865, %200 : vector<16x256xf32>
    %867 = arith.addf %861, %866 : vector<16x256xf32>
    %868 = vector.extract_strided_slice %867 {offsets = [0, 125], sizes = [16, 131], strides = [1, 1]} : vector<16x256xf32> to vector<16x131xf32>
    %869 = vector.extract_strided_slice %867 {offsets = [0, 0], sizes = [16, 125], strides = [1, 1]} : vector<16x256xf32> to vector<16x125xf32>
    %870 = tpu.concatenate %868, %869 in 1 : vector<16x131xf32>, vector<16x125xf32> -> vector<16x256xf32>
    %871 = arith.addf %826, %870 : vector<16x256xf32>
    %c105 = arith.constant 105 : index
    %c0_235 = arith.constant 0 : index
    %872 = vector.load %arg3[%c105, %c0_235] : memref<212x256xf32, #tpu.memory_space<vmem>>, vector<1x256xf32>
    %873 = vector.shape_cast %872 : vector<1x256xf32> to vector<256xf32>
    %874 = vector.shape_cast %873 : vector<256xf32> to vector<1x256xf32>
    %875 = vector.broadcast %874 : vector<1x256xf32> to vector<16x256xf32>
    %876 = arith.mulf %875, %194 : vector<16x256xf32>
    %c106 = arith.constant 106 : index
    %c0_236 = arith.constant 0 : index
    %877 = vector.load %arg3[%c106, %c0_236] : memref<212x256xf32, #tpu.memory_space<vmem>>, vector<1x256xf32>
    %878 = vector.shape_cast %877 : vector<1x256xf32> to vector<256xf32>
    %879 = vector.shape_cast %878 : vector<256xf32> to vector<1x256xf32>
    %880 = vector.broadcast %879 : vector<1x256xf32> to vector<16x256xf32>
    %881 = arith.mulf %880, %195 : vector<16x256xf32>
    %882 = arith.addf %876, %881 : vector<16x256xf32>
    %c107 = arith.constant 107 : index
    %c0_237 = arith.constant 0 : index
    %883 = vector.load %arg3[%c107, %c0_237] : memref<212x256xf32, #tpu.memory_space<vmem>>, vector<1x256xf32>
    %884 = vector.shape_cast %883 : vector<1x256xf32> to vector<256xf32>
    %885 = vector.shape_cast %884 : vector<256xf32> to vector<1x256xf32>
    %886 = vector.broadcast %885 : vector<1x256xf32> to vector<16x256xf32>
    %887 = arith.mulf %886, %196 : vector<16x256xf32>
    %888 = arith.addf %882, %887 : vector<16x256xf32>
    %c108 = arith.constant 108 : index
    %c0_238 = arith.constant 0 : index
    %889 = vector.load %arg3[%c108, %c0_238] : memref<212x256xf32, #tpu.memory_space<vmem>>, vector<1x256xf32>
    %890 = vector.shape_cast %889 : vector<1x256xf32> to vector<256xf32>
    %891 = vector.shape_cast %890 : vector<256xf32> to vector<1x256xf32>
    %892 = vector.broadcast %891 : vector<1x256xf32> to vector<16x256xf32>
    %893 = arith.mulf %892, %197 : vector<16x256xf32>
    %894 = arith.addf %888, %893 : vector<16x256xf32>
    %c109 = arith.constant 109 : index
    %c0_239 = arith.constant 0 : index
    %895 = vector.load %arg3[%c109, %c0_239] : memref<212x256xf32, #tpu.memory_space<vmem>>, vector<1x256xf32>
    %896 = vector.shape_cast %895 : vector<1x256xf32> to vector<256xf32>
    %897 = vector.shape_cast %896 : vector<256xf32> to vector<1x256xf32>
    %898 = vector.broadcast %897 : vector<1x256xf32> to vector<16x256xf32>
    %899 = arith.mulf %898, %198 : vector<16x256xf32>
    %900 = arith.addf %894, %899 : vector<16x256xf32>
    %c110 = arith.constant 110 : index
    %c0_240 = arith.constant 0 : index
    %901 = vector.load %arg3[%c110, %c0_240] : memref<212x256xf32, #tpu.memory_space<vmem>>, vector<1x256xf32>
    %902 = vector.shape_cast %901 : vector<1x256xf32> to vector<256xf32>
    %903 = vector.shape_cast %902 : vector<256xf32> to vector<1x256xf32>
    %904 = vector.broadcast %903 : vector<1x256xf32> to vector<16x256xf32>
    %905 = arith.mulf %904, %199 : vector<16x256xf32>
    %906 = arith.addf %900, %905 : vector<16x256xf32>
    %c111 = arith.constant 111 : index
    %c0_241 = arith.constant 0 : index
    %907 = vector.load %arg3[%c111, %c0_241] : memref<212x256xf32, #tpu.memory_space<vmem>>, vector<1x256xf32>
    %908 = vector.shape_cast %907 : vector<1x256xf32> to vector<256xf32>
    %909 = vector.shape_cast %908 : vector<256xf32> to vector<1x256xf32>
    %910 = vector.broadcast %909 : vector<1x256xf32> to vector<16x256xf32>
    %911 = arith.mulf %910, %200 : vector<16x256xf32>
    %912 = arith.addf %906, %911 : vector<16x256xf32>
    %913 = vector.extract_strided_slice %912 {offsets = [0, 126], sizes = [16, 130], strides = [1, 1]} : vector<16x256xf32> to vector<16x130xf32>
    %914 = vector.extract_strided_slice %912 {offsets = [0, 0], sizes = [16, 126], strides = [1, 1]} : vector<16x256xf32> to vector<16x126xf32>
    %915 = tpu.concatenate %913, %914 in 1 : vector<16x130xf32>, vector<16x126xf32> -> vector<16x256xf32>
    %916 = arith.addf %871, %915 : vector<16x256xf32>
    %c112 = arith.constant 112 : index
    %c0_242 = arith.constant 0 : index
    %917 = vector.load %arg3[%c112, %c0_242] : memref<212x256xf32, #tpu.memory_space<vmem>>, vector<1x256xf32>
    %918 = vector.shape_cast %917 : vector<1x256xf32> to vector<256xf32>
    %919 = vector.shape_cast %918 : vector<256xf32> to vector<1x256xf32>
    %920 = vector.broadcast %919 : vector<1x256xf32> to vector<16x256xf32>
    %921 = arith.mulf %920, %194 : vector<16x256xf32>
    %c113 = arith.constant 113 : index
    %c0_243 = arith.constant 0 : index
    %922 = vector.load %arg3[%c113, %c0_243] : memref<212x256xf32, #tpu.memory_space<vmem>>, vector<1x256xf32>
    %923 = vector.shape_cast %922 : vector<1x256xf32> to vector<256xf32>
    %924 = vector.shape_cast %923 : vector<256xf32> to vector<1x256xf32>
    %925 = vector.broadcast %924 : vector<1x256xf32> to vector<16x256xf32>
    %926 = arith.mulf %925, %195 : vector<16x256xf32>
    %927 = arith.addf %921, %926 : vector<16x256xf32>
    %c114 = arith.constant 114 : index
    %c0_244 = arith.constant 0 : index
    %928 = vector.load %arg3[%c114, %c0_244] : memref<212x256xf32, #tpu.memory_space<vmem>>, vector<1x256xf32>
    %929 = vector.shape_cast %928 : vector<1x256xf32> to vector<256xf32>
    %930 = vector.shape_cast %929 : vector<256xf32> to vector<1x256xf32>
    %931 = vector.broadcast %930 : vector<1x256xf32> to vector<16x256xf32>
    %932 = arith.mulf %931, %196 : vector<16x256xf32>
    %933 = arith.addf %927, %932 : vector<16x256xf32>
    %c115 = arith.constant 115 : index
    %c0_245 = arith.constant 0 : index
    %934 = vector.load %arg3[%c115, %c0_245] : memref<212x256xf32, #tpu.memory_space<vmem>>, vector<1x256xf32>
    %935 = vector.shape_cast %934 : vector<1x256xf32> to vector<256xf32>
    %936 = vector.shape_cast %935 : vector<256xf32> to vector<1x256xf32>
    %937 = vector.broadcast %936 : vector<1x256xf32> to vector<16x256xf32>
    %938 = arith.mulf %937, %197 : vector<16x256xf32>
    %939 = arith.addf %933, %938 : vector<16x256xf32>
    %c116 = arith.constant 116 : index
    %c0_246 = arith.constant 0 : index
    %940 = vector.load %arg3[%c116, %c0_246] : memref<212x256xf32, #tpu.memory_space<vmem>>, vector<1x256xf32>
    %941 = vector.shape_cast %940 : vector<1x256xf32> to vector<256xf32>
    %942 = vector.shape_cast %941 : vector<256xf32> to vector<1x256xf32>
    %943 = vector.broadcast %942 : vector<1x256xf32> to vector<16x256xf32>
    %944 = arith.mulf %943, %198 : vector<16x256xf32>
    %945 = arith.addf %939, %944 : vector<16x256xf32>
    %c117 = arith.constant 117 : index
    %c0_247 = arith.constant 0 : index
    %946 = vector.load %arg3[%c117, %c0_247] : memref<212x256xf32, #tpu.memory_space<vmem>>, vector<1x256xf32>
    %947 = vector.shape_cast %946 : vector<1x256xf32> to vector<256xf32>
    %948 = vector.shape_cast %947 : vector<256xf32> to vector<1x256xf32>
    %949 = vector.broadcast %948 : vector<1x256xf32> to vector<16x256xf32>
    %950 = arith.mulf %949, %199 : vector<16x256xf32>
    %951 = arith.addf %945, %950 : vector<16x256xf32>
    %c118 = arith.constant 118 : index
    %c0_248 = arith.constant 0 : index
    %952 = vector.load %arg3[%c118, %c0_248] : memref<212x256xf32, #tpu.memory_space<vmem>>, vector<1x256xf32>
    %953 = vector.shape_cast %952 : vector<1x256xf32> to vector<256xf32>
    %954 = vector.shape_cast %953 : vector<256xf32> to vector<1x256xf32>
    %955 = vector.broadcast %954 : vector<1x256xf32> to vector<16x256xf32>
    %956 = arith.mulf %955, %200 : vector<16x256xf32>
    %957 = arith.addf %951, %956 : vector<16x256xf32>
    %958 = vector.extract_strided_slice %957 {offsets = [0, 127], sizes = [16, 129], strides = [1, 1]} : vector<16x256xf32> to vector<16x129xf32>
    %959 = vector.extract_strided_slice %957 {offsets = [0, 0], sizes = [16, 127], strides = [1, 1]} : vector<16x256xf32> to vector<16x127xf32>
    %960 = tpu.concatenate %958, %959 in 1 : vector<16x129xf32>, vector<16x127xf32> -> vector<16x256xf32>
    %961 = arith.addf %916, %960 : vector<16x256xf32>
    %c119 = arith.constant 119 : index
    %c0_249 = arith.constant 0 : index
    %962 = vector.load %arg3[%c119, %c0_249] : memref<212x256xf32, #tpu.memory_space<vmem>>, vector<1x256xf32>
    %963 = vector.shape_cast %962 : vector<1x256xf32> to vector<256xf32>
    %964 = vector.shape_cast %963 : vector<256xf32> to vector<1x256xf32>
    %965 = vector.broadcast %964 : vector<1x256xf32> to vector<16x256xf32>
    %966 = arith.mulf %965, %194 : vector<16x256xf32>
    %c120 = arith.constant 120 : index
    %c0_250 = arith.constant 0 : index
    %967 = vector.load %arg3[%c120, %c0_250] : memref<212x256xf32, #tpu.memory_space<vmem>>, vector<1x256xf32>
    %968 = vector.shape_cast %967 : vector<1x256xf32> to vector<256xf32>
    %969 = vector.shape_cast %968 : vector<256xf32> to vector<1x256xf32>
    %970 = vector.broadcast %969 : vector<1x256xf32> to vector<16x256xf32>
    %971 = arith.mulf %970, %195 : vector<16x256xf32>
    %972 = arith.addf %966, %971 : vector<16x256xf32>
    %c121 = arith.constant 121 : index
    %c0_251 = arith.constant 0 : index
    %973 = vector.load %arg3[%c121, %c0_251] : memref<212x256xf32, #tpu.memory_space<vmem>>, vector<1x256xf32>
    %974 = vector.shape_cast %973 : vector<1x256xf32> to vector<256xf32>
    %975 = vector.shape_cast %974 : vector<256xf32> to vector<1x256xf32>
    %976 = vector.broadcast %975 : vector<1x256xf32> to vector<16x256xf32>
    %977 = arith.mulf %976, %196 : vector<16x256xf32>
    %978 = arith.addf %972, %977 : vector<16x256xf32>
    %c122 = arith.constant 122 : index
    %c0_252 = arith.constant 0 : index
    %979 = vector.load %arg3[%c122, %c0_252] : memref<212x256xf32, #tpu.memory_space<vmem>>, vector<1x256xf32>
    %980 = vector.shape_cast %979 : vector<1x256xf32> to vector<256xf32>
    %981 = vector.shape_cast %980 : vector<256xf32> to vector<1x256xf32>
    %982 = vector.broadcast %981 : vector<1x256xf32> to vector<16x256xf32>
    %983 = arith.mulf %982, %197 : vector<16x256xf32>
    %984 = arith.addf %978, %983 : vector<16x256xf32>
    %c123 = arith.constant 123 : index
    %c0_253 = arith.constant 0 : index
    %985 = vector.load %arg3[%c123, %c0_253] : memref<212x256xf32, #tpu.memory_space<vmem>>, vector<1x256xf32>
    %986 = vector.shape_cast %985 : vector<1x256xf32> to vector<256xf32>
    %987 = vector.shape_cast %986 : vector<256xf32> to vector<1x256xf32>
    %988 = vector.broadcast %987 : vector<1x256xf32> to vector<16x256xf32>
    %989 = arith.mulf %988, %198 : vector<16x256xf32>
    %990 = arith.addf %984, %989 : vector<16x256xf32>
    %c124 = arith.constant 124 : index
    %c0_254 = arith.constant 0 : index
    %991 = vector.load %arg3[%c124, %c0_254] : memref<212x256xf32, #tpu.memory_space<vmem>>, vector<1x256xf32>
    %992 = vector.shape_cast %991 : vector<1x256xf32> to vector<256xf32>
    %993 = vector.shape_cast %992 : vector<256xf32> to vector<1x256xf32>
    %994 = vector.broadcast %993 : vector<1x256xf32> to vector<16x256xf32>
    %995 = arith.mulf %994, %199 : vector<16x256xf32>
    %996 = arith.addf %990, %995 : vector<16x256xf32>
    %c125 = arith.constant 125 : index
    %c0_255 = arith.constant 0 : index
    %997 = vector.load %arg3[%c125, %c0_255] : memref<212x256xf32, #tpu.memory_space<vmem>>, vector<1x256xf32>
    %998 = vector.shape_cast %997 : vector<1x256xf32> to vector<256xf32>
    %999 = vector.shape_cast %998 : vector<256xf32> to vector<1x256xf32>
    %1000 = vector.broadcast %999 : vector<1x256xf32> to vector<16x256xf32>
    %1001 = arith.mulf %1000, %200 : vector<16x256xf32>
    %1002 = arith.addf %996, %1001 : vector<16x256xf32>
    %1003 = vector.extract_strided_slice %1002 {offsets = [0, 128], sizes = [16, 128], strides = [1, 1]} : vector<16x256xf32> to vector<16x128xf32>
    %1004 = vector.extract_strided_slice %1002 {offsets = [0, 0], sizes = [16, 128], strides = [1, 1]} : vector<16x256xf32> to vector<16x128xf32>
    %1005 = tpu.concatenate %1003, %1004 in 1 : vector<16x128xf32>, vector<16x128xf32> -> vector<16x256xf32>
    %1006 = arith.addf %961, %1005 : vector<16x256xf32>
    %c126 = arith.constant 126 : index
    %c0_256 = arith.constant 0 : index
    %1007 = vector.load %arg3[%c126, %c0_256] : memref<212x256xf32, #tpu.memory_space<vmem>>, vector<1x256xf32>
    %1008 = vector.shape_cast %1007 : vector<1x256xf32> to vector<256xf32>
    %1009 = vector.shape_cast %1008 : vector<256xf32> to vector<1x256xf32>
    %1010 = vector.broadcast %1009 : vector<1x256xf32> to vector<16x256xf32>
    %1011 = arith.mulf %1010, %194 : vector<16x256xf32>
    %c127 = arith.constant 127 : index
    %c0_257 = arith.constant 0 : index
    %1012 = vector.load %arg3[%c127, %c0_257] : memref<212x256xf32, #tpu.memory_space<vmem>>, vector<1x256xf32>
    %1013 = vector.shape_cast %1012 : vector<1x256xf32> to vector<256xf32>
    %1014 = vector.shape_cast %1013 : vector<256xf32> to vector<1x256xf32>
    %1015 = vector.broadcast %1014 : vector<1x256xf32> to vector<16x256xf32>
    %1016 = arith.mulf %1015, %195 : vector<16x256xf32>
    %1017 = arith.addf %1011, %1016 : vector<16x256xf32>
    %c128 = arith.constant 128 : index
    %c0_258 = arith.constant 0 : index
    %1018 = vector.load %arg3[%c128, %c0_258] : memref<212x256xf32, #tpu.memory_space<vmem>>, vector<1x256xf32>
    %1019 = vector.shape_cast %1018 : vector<1x256xf32> to vector<256xf32>
    %1020 = vector.shape_cast %1019 : vector<256xf32> to vector<1x256xf32>
    %1021 = vector.broadcast %1020 : vector<1x256xf32> to vector<16x256xf32>
    %1022 = arith.mulf %1021, %196 : vector<16x256xf32>
    %1023 = arith.addf %1017, %1022 : vector<16x256xf32>
    %c129 = arith.constant 129 : index
    %c0_259 = arith.constant 0 : index
    %1024 = vector.load %arg3[%c129, %c0_259] : memref<212x256xf32, #tpu.memory_space<vmem>>, vector<1x256xf32>
    %1025 = vector.shape_cast %1024 : vector<1x256xf32> to vector<256xf32>
    %1026 = vector.shape_cast %1025 : vector<256xf32> to vector<1x256xf32>
    %1027 = vector.broadcast %1026 : vector<1x256xf32> to vector<16x256xf32>
    %1028 = arith.mulf %1027, %197 : vector<16x256xf32>
    %1029 = arith.addf %1023, %1028 : vector<16x256xf32>
    %c130 = arith.constant 130 : index
    %c0_260 = arith.constant 0 : index
    %1030 = vector.load %arg3[%c130, %c0_260] : memref<212x256xf32, #tpu.memory_space<vmem>>, vector<1x256xf32>
    %1031 = vector.shape_cast %1030 : vector<1x256xf32> to vector<256xf32>
    %1032 = vector.shape_cast %1031 : vector<256xf32> to vector<1x256xf32>
    %1033 = vector.broadcast %1032 : vector<1x256xf32> to vector<16x256xf32>
    %1034 = arith.mulf %1033, %198 : vector<16x256xf32>
    %1035 = arith.addf %1029, %1034 : vector<16x256xf32>
    %c131 = arith.constant 131 : index
    %c0_261 = arith.constant 0 : index
    %1036 = vector.load %arg3[%c131, %c0_261] : memref<212x256xf32, #tpu.memory_space<vmem>>, vector<1x256xf32>
    %1037 = vector.shape_cast %1036 : vector<1x256xf32> to vector<256xf32>
    %1038 = vector.shape_cast %1037 : vector<256xf32> to vector<1x256xf32>
    %1039 = vector.broadcast %1038 : vector<1x256xf32> to vector<16x256xf32>
    %1040 = arith.mulf %1039, %199 : vector<16x256xf32>
    %1041 = arith.addf %1035, %1040 : vector<16x256xf32>
    %c132 = arith.constant 132 : index
    %c0_262 = arith.constant 0 : index
    %1042 = vector.load %arg3[%c132, %c0_262] : memref<212x256xf32, #tpu.memory_space<vmem>>, vector<1x256xf32>
    %1043 = vector.shape_cast %1042 : vector<1x256xf32> to vector<256xf32>
    %1044 = vector.shape_cast %1043 : vector<256xf32> to vector<1x256xf32>
    %1045 = vector.broadcast %1044 : vector<1x256xf32> to vector<16x256xf32>
    %1046 = arith.mulf %1045, %200 : vector<16x256xf32>
    %1047 = arith.addf %1041, %1046 : vector<16x256xf32>
    %1048 = vector.extract_strided_slice %1047 {offsets = [0, 129], sizes = [16, 127], strides = [1, 1]} : vector<16x256xf32> to vector<16x127xf32>
    %1049 = vector.extract_strided_slice %1047 {offsets = [0, 0], sizes = [16, 129], strides = [1, 1]} : vector<16x256xf32> to vector<16x129xf32>
    %1050 = tpu.concatenate %1048, %1049 in 1 : vector<16x127xf32>, vector<16x129xf32> -> vector<16x256xf32>
    %1051 = arith.addf %1006, %1050 : vector<16x256xf32>
    %c133 = arith.constant 133 : index
    %c0_263 = arith.constant 0 : index
    %1052 = vector.load %arg3[%c133, %c0_263] : memref<212x256xf32, #tpu.memory_space<vmem>>, vector<1x256xf32>
    %1053 = vector.shape_cast %1052 : vector<1x256xf32> to vector<256xf32>
    %1054 = vector.shape_cast %1053 : vector<256xf32> to vector<1x256xf32>
    %1055 = vector.broadcast %1054 : vector<1x256xf32> to vector<16x256xf32>
    %1056 = arith.mulf %1055, %194 : vector<16x256xf32>
    %c134 = arith.constant 134 : index
    %c0_264 = arith.constant 0 : index
    %1057 = vector.load %arg3[%c134, %c0_264] : memref<212x256xf32, #tpu.memory_space<vmem>>, vector<1x256xf32>
    %1058 = vector.shape_cast %1057 : vector<1x256xf32> to vector<256xf32>
    %1059 = vector.shape_cast %1058 : vector<256xf32> to vector<1x256xf32>
    %1060 = vector.broadcast %1059 : vector<1x256xf32> to vector<16x256xf32>
    %1061 = arith.mulf %1060, %195 : vector<16x256xf32>
    %1062 = arith.addf %1056, %1061 : vector<16x256xf32>
    %c135 = arith.constant 135 : index
    %c0_265 = arith.constant 0 : index
    %1063 = vector.load %arg3[%c135, %c0_265] : memref<212x256xf32, #tpu.memory_space<vmem>>, vector<1x256xf32>
    %1064 = vector.shape_cast %1063 : vector<1x256xf32> to vector<256xf32>
    %1065 = vector.shape_cast %1064 : vector<256xf32> to vector<1x256xf32>
    %1066 = vector.broadcast %1065 : vector<1x256xf32> to vector<16x256xf32>
    %1067 = arith.mulf %1066, %196 : vector<16x256xf32>
    %1068 = arith.addf %1062, %1067 : vector<16x256xf32>
    %c136 = arith.constant 136 : index
    %c0_266 = arith.constant 0 : index
    %1069 = vector.load %arg3[%c136, %c0_266] : memref<212x256xf32, #tpu.memory_space<vmem>>, vector<1x256xf32>
    %1070 = vector.shape_cast %1069 : vector<1x256xf32> to vector<256xf32>
    %1071 = vector.shape_cast %1070 : vector<256xf32> to vector<1x256xf32>
    %1072 = vector.broadcast %1071 : vector<1x256xf32> to vector<16x256xf32>
    %1073 = arith.mulf %1072, %197 : vector<16x256xf32>
    %1074 = arith.addf %1068, %1073 : vector<16x256xf32>
    %c137 = arith.constant 137 : index
    %c0_267 = arith.constant 0 : index
    %1075 = vector.load %arg3[%c137, %c0_267] : memref<212x256xf32, #tpu.memory_space<vmem>>, vector<1x256xf32>
    %1076 = vector.shape_cast %1075 : vector<1x256xf32> to vector<256xf32>
    %1077 = vector.shape_cast %1076 : vector<256xf32> to vector<1x256xf32>
    %1078 = vector.broadcast %1077 : vector<1x256xf32> to vector<16x256xf32>
    %1079 = arith.mulf %1078, %198 : vector<16x256xf32>
    %1080 = arith.addf %1074, %1079 : vector<16x256xf32>
    %c138 = arith.constant 138 : index
    %c0_268 = arith.constant 0 : index
    %1081 = vector.load %arg3[%c138, %c0_268] : memref<212x256xf32, #tpu.memory_space<vmem>>, vector<1x256xf32>
    %1082 = vector.shape_cast %1081 : vector<1x256xf32> to vector<256xf32>
    %1083 = vector.shape_cast %1082 : vector<256xf32> to vector<1x256xf32>
    %1084 = vector.broadcast %1083 : vector<1x256xf32> to vector<16x256xf32>
    %1085 = arith.mulf %1084, %199 : vector<16x256xf32>
    %1086 = arith.addf %1080, %1085 : vector<16x256xf32>
    %c139 = arith.constant 139 : index
    %c0_269 = arith.constant 0 : index
    %1087 = vector.load %arg3[%c139, %c0_269] : memref<212x256xf32, #tpu.memory_space<vmem>>, vector<1x256xf32>
    %1088 = vector.shape_cast %1087 : vector<1x256xf32> to vector<256xf32>
    %1089 = vector.shape_cast %1088 : vector<256xf32> to vector<1x256xf32>
    %1090 = vector.broadcast %1089 : vector<1x256xf32> to vector<16x256xf32>
    %1091 = arith.mulf %1090, %200 : vector<16x256xf32>
    %1092 = arith.addf %1086, %1091 : vector<16x256xf32>
    %1093 = vector.extract_strided_slice %1092 {offsets = [0, 130], sizes = [16, 126], strides = [1, 1]} : vector<16x256xf32> to vector<16x126xf32>
    %1094 = vector.extract_strided_slice %1092 {offsets = [0, 0], sizes = [16, 130], strides = [1, 1]} : vector<16x256xf32> to vector<16x130xf32>
    %1095 = tpu.concatenate %1093, %1094 in 1 : vector<16x126xf32>, vector<16x130xf32> -> vector<16x256xf32>
    %1096 = arith.addf %1051, %1095 : vector<16x256xf32>
    %c140 = arith.constant 140 : index
    %c0_270 = arith.constant 0 : index
    %1097 = vector.load %arg3[%c140, %c0_270] : memref<212x256xf32, #tpu.memory_space<vmem>>, vector<1x256xf32>
    %1098 = vector.shape_cast %1097 : vector<1x256xf32> to vector<256xf32>
    %1099 = vector.shape_cast %1098 : vector<256xf32> to vector<1x256xf32>
    %1100 = vector.broadcast %1099 : vector<1x256xf32> to vector<16x256xf32>
    %1101 = arith.mulf %1100, %194 : vector<16x256xf32>
    %c141 = arith.constant 141 : index
    %c0_271 = arith.constant 0 : index
    %1102 = vector.load %arg3[%c141, %c0_271] : memref<212x256xf32, #tpu.memory_space<vmem>>, vector<1x256xf32>
    %1103 = vector.shape_cast %1102 : vector<1x256xf32> to vector<256xf32>
    %1104 = vector.shape_cast %1103 : vector<256xf32> to vector<1x256xf32>
    %1105 = vector.broadcast %1104 : vector<1x256xf32> to vector<16x256xf32>
    %1106 = arith.mulf %1105, %195 : vector<16x256xf32>
    %1107 = arith.addf %1101, %1106 : vector<16x256xf32>
    %c142 = arith.constant 142 : index
    %c0_272 = arith.constant 0 : index
    %1108 = vector.load %arg3[%c142, %c0_272] : memref<212x256xf32, #tpu.memory_space<vmem>>, vector<1x256xf32>
    %1109 = vector.shape_cast %1108 : vector<1x256xf32> to vector<256xf32>
    %1110 = vector.shape_cast %1109 : vector<256xf32> to vector<1x256xf32>
    %1111 = vector.broadcast %1110 : vector<1x256xf32> to vector<16x256xf32>
    %1112 = arith.mulf %1111, %196 : vector<16x256xf32>
    %1113 = arith.addf %1107, %1112 : vector<16x256xf32>
    %c143 = arith.constant 143 : index
    %c0_273 = arith.constant 0 : index
    %1114 = vector.load %arg3[%c143, %c0_273] : memref<212x256xf32, #tpu.memory_space<vmem>>, vector<1x256xf32>
    %1115 = vector.shape_cast %1114 : vector<1x256xf32> to vector<256xf32>
    %1116 = vector.shape_cast %1115 : vector<256xf32> to vector<1x256xf32>
    %1117 = vector.broadcast %1116 : vector<1x256xf32> to vector<16x256xf32>
    %1118 = arith.mulf %1117, %197 : vector<16x256xf32>
    %1119 = arith.addf %1113, %1118 : vector<16x256xf32>
    %c144 = arith.constant 144 : index
    %c0_274 = arith.constant 0 : index
    %1120 = vector.load %arg3[%c144, %c0_274] : memref<212x256xf32, #tpu.memory_space<vmem>>, vector<1x256xf32>
    %1121 = vector.shape_cast %1120 : vector<1x256xf32> to vector<256xf32>
    %1122 = vector.shape_cast %1121 : vector<256xf32> to vector<1x256xf32>
    %1123 = vector.broadcast %1122 : vector<1x256xf32> to vector<16x256xf32>
    %1124 = arith.mulf %1123, %198 : vector<16x256xf32>
    %1125 = arith.addf %1119, %1124 : vector<16x256xf32>
    %c145 = arith.constant 145 : index
    %c0_275 = arith.constant 0 : index
    %1126 = vector.load %arg3[%c145, %c0_275] : memref<212x256xf32, #tpu.memory_space<vmem>>, vector<1x256xf32>
    %1127 = vector.shape_cast %1126 : vector<1x256xf32> to vector<256xf32>
    %1128 = vector.shape_cast %1127 : vector<256xf32> to vector<1x256xf32>
    %1129 = vector.broadcast %1128 : vector<1x256xf32> to vector<16x256xf32>
    %1130 = arith.mulf %1129, %199 : vector<16x256xf32>
    %1131 = arith.addf %1125, %1130 : vector<16x256xf32>
    %c146 = arith.constant 146 : index
    %c0_276 = arith.constant 0 : index
    %1132 = vector.load %arg3[%c146, %c0_276] : memref<212x256xf32, #tpu.memory_space<vmem>>, vector<1x256xf32>
    %1133 = vector.shape_cast %1132 : vector<1x256xf32> to vector<256xf32>
    %1134 = vector.shape_cast %1133 : vector<256xf32> to vector<1x256xf32>
    %1135 = vector.broadcast %1134 : vector<1x256xf32> to vector<16x256xf32>
    %1136 = arith.mulf %1135, %200 : vector<16x256xf32>
    %1137 = arith.addf %1131, %1136 : vector<16x256xf32>
    %1138 = vector.extract_strided_slice %1137 {offsets = [0, 131], sizes = [16, 125], strides = [1, 1]} : vector<16x256xf32> to vector<16x125xf32>
    %1139 = vector.extract_strided_slice %1137 {offsets = [0, 0], sizes = [16, 131], strides = [1, 1]} : vector<16x256xf32> to vector<16x131xf32>
    %1140 = tpu.concatenate %1138, %1139 in 1 : vector<16x125xf32>, vector<16x131xf32> -> vector<16x256xf32>
    %1141 = arith.addf %1096, %1140 : vector<16x256xf32>
    %c147 = arith.constant 147 : index
    %c0_277 = arith.constant 0 : index
    %1142 = vector.load %arg3[%c147, %c0_277] : memref<212x256xf32, #tpu.memory_space<vmem>>, vector<1x256xf32>
    %1143 = vector.shape_cast %1142 : vector<1x256xf32> to vector<256xf32>
    %1144 = vector.shape_cast %1143 : vector<256xf32> to vector<1x256xf32>
    %1145 = vector.broadcast %1144 : vector<1x256xf32> to vector<16x256xf32>
    %1146 = arith.mulf %1145, %194 : vector<16x256xf32>
    %c148 = arith.constant 148 : index
    %c0_278 = arith.constant 0 : index
    %1147 = vector.load %arg3[%c148, %c0_278] : memref<212x256xf32, #tpu.memory_space<vmem>>, vector<1x256xf32>
    %1148 = vector.shape_cast %1147 : vector<1x256xf32> to vector<256xf32>
    %1149 = vector.shape_cast %1148 : vector<256xf32> to vector<1x256xf32>
    %1150 = vector.broadcast %1149 : vector<1x256xf32> to vector<16x256xf32>
    %1151 = arith.mulf %1150, %195 : vector<16x256xf32>
    %1152 = arith.addf %1146, %1151 : vector<16x256xf32>
    %c149 = arith.constant 149 : index
    %c0_279 = arith.constant 0 : index
    %1153 = vector.load %arg3[%c149, %c0_279] : memref<212x256xf32, #tpu.memory_space<vmem>>, vector<1x256xf32>
    %1154 = vector.shape_cast %1153 : vector<1x256xf32> to vector<256xf32>
    %1155 = vector.shape_cast %1154 : vector<256xf32> to vector<1x256xf32>
    %1156 = vector.broadcast %1155 : vector<1x256xf32> to vector<16x256xf32>
    %1157 = arith.mulf %1156, %196 : vector<16x256xf32>
    %1158 = arith.addf %1152, %1157 : vector<16x256xf32>
    %c150 = arith.constant 150 : index
    %c0_280 = arith.constant 0 : index
    %1159 = vector.load %arg3[%c150, %c0_280] : memref<212x256xf32, #tpu.memory_space<vmem>>, vector<1x256xf32>
    %1160 = vector.shape_cast %1159 : vector<1x256xf32> to vector<256xf32>
    %1161 = vector.shape_cast %1160 : vector<256xf32> to vector<1x256xf32>
    %1162 = vector.broadcast %1161 : vector<1x256xf32> to vector<16x256xf32>
    %1163 = arith.mulf %1162, %197 : vector<16x256xf32>
    %1164 = arith.addf %1158, %1163 : vector<16x256xf32>
    %c151 = arith.constant 151 : index
    %c0_281 = arith.constant 0 : index
    %1165 = vector.load %arg3[%c151, %c0_281] : memref<212x256xf32, #tpu.memory_space<vmem>>, vector<1x256xf32>
    %1166 = vector.shape_cast %1165 : vector<1x256xf32> to vector<256xf32>
    %1167 = vector.shape_cast %1166 : vector<256xf32> to vector<1x256xf32>
    %1168 = vector.broadcast %1167 : vector<1x256xf32> to vector<16x256xf32>
    %1169 = arith.mulf %1168, %198 : vector<16x256xf32>
    %1170 = arith.addf %1164, %1169 : vector<16x256xf32>
    %c152 = arith.constant 152 : index
    %c0_282 = arith.constant 0 : index
    %1171 = vector.load %arg3[%c152, %c0_282] : memref<212x256xf32, #tpu.memory_space<vmem>>, vector<1x256xf32>
    %1172 = vector.shape_cast %1171 : vector<1x256xf32> to vector<256xf32>
    %1173 = vector.shape_cast %1172 : vector<256xf32> to vector<1x256xf32>
    %1174 = vector.broadcast %1173 : vector<1x256xf32> to vector<16x256xf32>
    %1175 = arith.mulf %1174, %199 : vector<16x256xf32>
    %1176 = arith.addf %1170, %1175 : vector<16x256xf32>
    %c153 = arith.constant 153 : index
    %c0_283 = arith.constant 0 : index
    %1177 = vector.load %arg3[%c153, %c0_283] : memref<212x256xf32, #tpu.memory_space<vmem>>, vector<1x256xf32>
    %1178 = vector.shape_cast %1177 : vector<1x256xf32> to vector<256xf32>
    %1179 = vector.shape_cast %1178 : vector<256xf32> to vector<1x256xf32>
    %1180 = vector.broadcast %1179 : vector<1x256xf32> to vector<16x256xf32>
    %1181 = arith.mulf %1180, %200 : vector<16x256xf32>
    %1182 = arith.addf %1176, %1181 : vector<16x256xf32>
    %1183 = vector.extract_strided_slice %1182 {offsets = [0, 61], sizes = [16, 195], strides = [1, 1]} : vector<16x256xf32> to vector<16x195xf32>
    %1184 = vector.extract_strided_slice %1182 {offsets = [0, 0], sizes = [16, 61], strides = [1, 1]} : vector<16x256xf32> to vector<16x61xf32>
    %1185 = tpu.concatenate %1183, %1184 in 1 : vector<16x195xf32>, vector<16x61xf32> -> vector<16x256xf32>
    %1186 = arith.addf %1141, %1185 : vector<16x256xf32>
    %c154 = arith.constant 154 : index
    %c0_284 = arith.constant 0 : index
    %1187 = vector.load %arg3[%c154, %c0_284] : memref<212x256xf32, #tpu.memory_space<vmem>>, vector<1x256xf32>
    %1188 = vector.shape_cast %1187 : vector<1x256xf32> to vector<256xf32>
    %1189 = vector.shape_cast %1188 : vector<256xf32> to vector<1x256xf32>
    %1190 = vector.broadcast %1189 : vector<1x256xf32> to vector<16x256xf32>
    %1191 = arith.mulf %1190, %194 : vector<16x256xf32>
    %c155 = arith.constant 155 : index
    %c0_285 = arith.constant 0 : index
    %1192 = vector.load %arg3[%c155, %c0_285] : memref<212x256xf32, #tpu.memory_space<vmem>>, vector<1x256xf32>
    %1193 = vector.shape_cast %1192 : vector<1x256xf32> to vector<256xf32>
    %1194 = vector.shape_cast %1193 : vector<256xf32> to vector<1x256xf32>
    %1195 = vector.broadcast %1194 : vector<1x256xf32> to vector<16x256xf32>
    %1196 = arith.mulf %1195, %195 : vector<16x256xf32>
    %1197 = arith.addf %1191, %1196 : vector<16x256xf32>
    %c156 = arith.constant 156 : index
    %c0_286 = arith.constant 0 : index
    %1198 = vector.load %arg3[%c156, %c0_286] : memref<212x256xf32, #tpu.memory_space<vmem>>, vector<1x256xf32>
    %1199 = vector.shape_cast %1198 : vector<1x256xf32> to vector<256xf32>
    %1200 = vector.shape_cast %1199 : vector<256xf32> to vector<1x256xf32>
    %1201 = vector.broadcast %1200 : vector<1x256xf32> to vector<16x256xf32>
    %1202 = arith.mulf %1201, %196 : vector<16x256xf32>
    %1203 = arith.addf %1197, %1202 : vector<16x256xf32>
    %c157 = arith.constant 157 : index
    %c0_287 = arith.constant 0 : index
    %1204 = vector.load %arg3[%c157, %c0_287] : memref<212x256xf32, #tpu.memory_space<vmem>>, vector<1x256xf32>
    %1205 = vector.shape_cast %1204 : vector<1x256xf32> to vector<256xf32>
    %1206 = vector.shape_cast %1205 : vector<256xf32> to vector<1x256xf32>
    %1207 = vector.broadcast %1206 : vector<1x256xf32> to vector<16x256xf32>
    %1208 = arith.mulf %1207, %197 : vector<16x256xf32>
    %1209 = arith.addf %1203, %1208 : vector<16x256xf32>
    %c158 = arith.constant 158 : index
    %c0_288 = arith.constant 0 : index
    %1210 = vector.load %arg3[%c158, %c0_288] : memref<212x256xf32, #tpu.memory_space<vmem>>, vector<1x256xf32>
    %1211 = vector.shape_cast %1210 : vector<1x256xf32> to vector<256xf32>
    %1212 = vector.shape_cast %1211 : vector<256xf32> to vector<1x256xf32>
    %1213 = vector.broadcast %1212 : vector<1x256xf32> to vector<16x256xf32>
    %1214 = arith.mulf %1213, %198 : vector<16x256xf32>
    %1215 = arith.addf %1209, %1214 : vector<16x256xf32>
    %c159 = arith.constant 159 : index
    %c0_289 = arith.constant 0 : index
    %1216 = vector.load %arg3[%c159, %c0_289] : memref<212x256xf32, #tpu.memory_space<vmem>>, vector<1x256xf32>
    %1217 = vector.shape_cast %1216 : vector<1x256xf32> to vector<256xf32>
    %1218 = vector.shape_cast %1217 : vector<256xf32> to vector<1x256xf32>
    %1219 = vector.broadcast %1218 : vector<1x256xf32> to vector<16x256xf32>
    %1220 = arith.mulf %1219, %199 : vector<16x256xf32>
    %1221 = arith.addf %1215, %1220 : vector<16x256xf32>
    %c160 = arith.constant 160 : index
    %c0_290 = arith.constant 0 : index
    %1222 = vector.load %arg3[%c160, %c0_290] : memref<212x256xf32, #tpu.memory_space<vmem>>, vector<1x256xf32>
    %1223 = vector.shape_cast %1222 : vector<1x256xf32> to vector<256xf32>
    %1224 = vector.shape_cast %1223 : vector<256xf32> to vector<1x256xf32>
    %1225 = vector.broadcast %1224 : vector<1x256xf32> to vector<16x256xf32>
    %1226 = arith.mulf %1225, %200 : vector<16x256xf32>
    %1227 = arith.addf %1221, %1226 : vector<16x256xf32>
    %1228 = vector.extract_strided_slice %1227 {offsets = [0, 62], sizes = [16, 194], strides = [1, 1]} : vector<16x256xf32> to vector<16x194xf32>
    %1229 = vector.extract_strided_slice %1227 {offsets = [0, 0], sizes = [16, 62], strides = [1, 1]} : vector<16x256xf32> to vector<16x62xf32>
    %1230 = tpu.concatenate %1228, %1229 in 1 : vector<16x194xf32>, vector<16x62xf32> -> vector<16x256xf32>
    %1231 = arith.addf %1186, %1230 : vector<16x256xf32>
    %c161 = arith.constant 161 : index
    %c0_291 = arith.constant 0 : index
    %1232 = vector.load %arg3[%c161, %c0_291] : memref<212x256xf32, #tpu.memory_space<vmem>>, vector<1x256xf32>
    %1233 = vector.shape_cast %1232 : vector<1x256xf32> to vector<256xf32>
    %1234 = vector.shape_cast %1233 : vector<256xf32> to vector<1x256xf32>
    %1235 = vector.broadcast %1234 : vector<1x256xf32> to vector<16x256xf32>
    %1236 = arith.mulf %1235, %194 : vector<16x256xf32>
    %c162 = arith.constant 162 : index
    %c0_292 = arith.constant 0 : index
    %1237 = vector.load %arg3[%c162, %c0_292] : memref<212x256xf32, #tpu.memory_space<vmem>>, vector<1x256xf32>
    %1238 = vector.shape_cast %1237 : vector<1x256xf32> to vector<256xf32>
    %1239 = vector.shape_cast %1238 : vector<256xf32> to vector<1x256xf32>
    %1240 = vector.broadcast %1239 : vector<1x256xf32> to vector<16x256xf32>
    %1241 = arith.mulf %1240, %195 : vector<16x256xf32>
    %1242 = arith.addf %1236, %1241 : vector<16x256xf32>
    %c163 = arith.constant 163 : index
    %c0_293 = arith.constant 0 : index
    %1243 = vector.load %arg3[%c163, %c0_293] : memref<212x256xf32, #tpu.memory_space<vmem>>, vector<1x256xf32>
    %1244 = vector.shape_cast %1243 : vector<1x256xf32> to vector<256xf32>
    %1245 = vector.shape_cast %1244 : vector<256xf32> to vector<1x256xf32>
    %1246 = vector.broadcast %1245 : vector<1x256xf32> to vector<16x256xf32>
    %1247 = arith.mulf %1246, %196 : vector<16x256xf32>
    %1248 = arith.addf %1242, %1247 : vector<16x256xf32>
    %c164 = arith.constant 164 : index
    %c0_294 = arith.constant 0 : index
    %1249 = vector.load %arg3[%c164, %c0_294] : memref<212x256xf32, #tpu.memory_space<vmem>>, vector<1x256xf32>
    %1250 = vector.shape_cast %1249 : vector<1x256xf32> to vector<256xf32>
    %1251 = vector.shape_cast %1250 : vector<256xf32> to vector<1x256xf32>
    %1252 = vector.broadcast %1251 : vector<1x256xf32> to vector<16x256xf32>
    %1253 = arith.mulf %1252, %197 : vector<16x256xf32>
    %1254 = arith.addf %1248, %1253 : vector<16x256xf32>
    %c165 = arith.constant 165 : index
    %c0_295 = arith.constant 0 : index
    %1255 = vector.load %arg3[%c165, %c0_295] : memref<212x256xf32, #tpu.memory_space<vmem>>, vector<1x256xf32>
    %1256 = vector.shape_cast %1255 : vector<1x256xf32> to vector<256xf32>
    %1257 = vector.shape_cast %1256 : vector<256xf32> to vector<1x256xf32>
    %1258 = vector.broadcast %1257 : vector<1x256xf32> to vector<16x256xf32>
    %1259 = arith.mulf %1258, %198 : vector<16x256xf32>
    %1260 = arith.addf %1254, %1259 : vector<16x256xf32>
    %c166 = arith.constant 166 : index
    %c0_296 = arith.constant 0 : index
    %1261 = vector.load %arg3[%c166, %c0_296] : memref<212x256xf32, #tpu.memory_space<vmem>>, vector<1x256xf32>
    %1262 = vector.shape_cast %1261 : vector<1x256xf32> to vector<256xf32>
    %1263 = vector.shape_cast %1262 : vector<256xf32> to vector<1x256xf32>
    %1264 = vector.broadcast %1263 : vector<1x256xf32> to vector<16x256xf32>
    %1265 = arith.mulf %1264, %199 : vector<16x256xf32>
    %1266 = arith.addf %1260, %1265 : vector<16x256xf32>
    %c167 = arith.constant 167 : index
    %c0_297 = arith.constant 0 : index
    %1267 = vector.load %arg3[%c167, %c0_297] : memref<212x256xf32, #tpu.memory_space<vmem>>, vector<1x256xf32>
    %1268 = vector.shape_cast %1267 : vector<1x256xf32> to vector<256xf32>
    %1269 = vector.shape_cast %1268 : vector<256xf32> to vector<1x256xf32>
    %1270 = vector.broadcast %1269 : vector<1x256xf32> to vector<16x256xf32>
    %1271 = arith.mulf %1270, %200 : vector<16x256xf32>
    %1272 = arith.addf %1266, %1271 : vector<16x256xf32>
    %1273 = vector.extract_strided_slice %1272 {offsets = [0, 63], sizes = [16, 193], strides = [1, 1]} : vector<16x256xf32> to vector<16x193xf32>
    %1274 = vector.extract_strided_slice %1272 {offsets = [0, 0], sizes = [16, 63], strides = [1, 1]} : vector<16x256xf32> to vector<16x63xf32>
    %1275 = tpu.concatenate %1273, %1274 in 1 : vector<16x193xf32>, vector<16x63xf32> -> vector<16x256xf32>
    %1276 = arith.addf %1231, %1275 : vector<16x256xf32>
    %c168 = arith.constant 168 : index
    %c0_298 = arith.constant 0 : index
    %1277 = vector.load %arg3[%c168, %c0_298] : memref<212x256xf32, #tpu.memory_space<vmem>>, vector<1x256xf32>
    %1278 = vector.shape_cast %1277 : vector<1x256xf32> to vector<256xf32>
    %1279 = vector.shape_cast %1278 : vector<256xf32> to vector<1x256xf32>
    %1280 = vector.broadcast %1279 : vector<1x256xf32> to vector<16x256xf32>
    %1281 = arith.mulf %1280, %194 : vector<16x256xf32>
    %c169 = arith.constant 169 : index
    %c0_299 = arith.constant 0 : index
    %1282 = vector.load %arg3[%c169, %c0_299] : memref<212x256xf32, #tpu.memory_space<vmem>>, vector<1x256xf32>
    %1283 = vector.shape_cast %1282 : vector<1x256xf32> to vector<256xf32>
    %1284 = vector.shape_cast %1283 : vector<256xf32> to vector<1x256xf32>
    %1285 = vector.broadcast %1284 : vector<1x256xf32> to vector<16x256xf32>
    %1286 = arith.mulf %1285, %195 : vector<16x256xf32>
    %1287 = arith.addf %1281, %1286 : vector<16x256xf32>
    %c170 = arith.constant 170 : index
    %c0_300 = arith.constant 0 : index
    %1288 = vector.load %arg3[%c170, %c0_300] : memref<212x256xf32, #tpu.memory_space<vmem>>, vector<1x256xf32>
    %1289 = vector.shape_cast %1288 : vector<1x256xf32> to vector<256xf32>
    %1290 = vector.shape_cast %1289 : vector<256xf32> to vector<1x256xf32>
    %1291 = vector.broadcast %1290 : vector<1x256xf32> to vector<16x256xf32>
    %1292 = arith.mulf %1291, %196 : vector<16x256xf32>
    %1293 = arith.addf %1287, %1292 : vector<16x256xf32>
    %c171 = arith.constant 171 : index
    %c0_301 = arith.constant 0 : index
    %1294 = vector.load %arg3[%c171, %c0_301] : memref<212x256xf32, #tpu.memory_space<vmem>>, vector<1x256xf32>
    %1295 = vector.shape_cast %1294 : vector<1x256xf32> to vector<256xf32>
    %1296 = vector.shape_cast %1295 : vector<256xf32> to vector<1x256xf32>
    %1297 = vector.broadcast %1296 : vector<1x256xf32> to vector<16x256xf32>
    %1298 = arith.mulf %1297, %197 : vector<16x256xf32>
    %1299 = arith.addf %1293, %1298 : vector<16x256xf32>
    %c172 = arith.constant 172 : index
    %c0_302 = arith.constant 0 : index
    %1300 = vector.load %arg3[%c172, %c0_302] : memref<212x256xf32, #tpu.memory_space<vmem>>, vector<1x256xf32>
    %1301 = vector.shape_cast %1300 : vector<1x256xf32> to vector<256xf32>
    %1302 = vector.shape_cast %1301 : vector<256xf32> to vector<1x256xf32>
    %1303 = vector.broadcast %1302 : vector<1x256xf32> to vector<16x256xf32>
    %1304 = arith.mulf %1303, %198 : vector<16x256xf32>
    %1305 = arith.addf %1299, %1304 : vector<16x256xf32>
    %c173 = arith.constant 173 : index
    %c0_303 = arith.constant 0 : index
    %1306 = vector.load %arg3[%c173, %c0_303] : memref<212x256xf32, #tpu.memory_space<vmem>>, vector<1x256xf32>
    %1307 = vector.shape_cast %1306 : vector<1x256xf32> to vector<256xf32>
    %1308 = vector.shape_cast %1307 : vector<256xf32> to vector<1x256xf32>
    %1309 = vector.broadcast %1308 : vector<1x256xf32> to vector<16x256xf32>
    %1310 = arith.mulf %1309, %199 : vector<16x256xf32>
    %1311 = arith.addf %1305, %1310 : vector<16x256xf32>
    %c174 = arith.constant 174 : index
    %c0_304 = arith.constant 0 : index
    %1312 = vector.load %arg3[%c174, %c0_304] : memref<212x256xf32, #tpu.memory_space<vmem>>, vector<1x256xf32>
    %1313 = vector.shape_cast %1312 : vector<1x256xf32> to vector<256xf32>
    %1314 = vector.shape_cast %1313 : vector<256xf32> to vector<1x256xf32>
    %1315 = vector.broadcast %1314 : vector<1x256xf32> to vector<16x256xf32>
    %1316 = arith.mulf %1315, %200 : vector<16x256xf32>
    %1317 = arith.addf %1311, %1316 : vector<16x256xf32>
    %1318 = vector.extract_strided_slice %1317 {offsets = [0, 64], sizes = [16, 192], strides = [1, 1]} : vector<16x256xf32> to vector<16x192xf32>
    %1319 = vector.extract_strided_slice %1317 {offsets = [0, 0], sizes = [16, 64], strides = [1, 1]} : vector<16x256xf32> to vector<16x64xf32>
    %1320 = tpu.concatenate %1318, %1319 in 1 : vector<16x192xf32>, vector<16x64xf32> -> vector<16x256xf32>
    %1321 = arith.addf %1276, %1320 : vector<16x256xf32>
    %c175 = arith.constant 175 : index
    %c0_305 = arith.constant 0 : index
    %1322 = vector.load %arg3[%c175, %c0_305] : memref<212x256xf32, #tpu.memory_space<vmem>>, vector<1x256xf32>
    %1323 = vector.shape_cast %1322 : vector<1x256xf32> to vector<256xf32>
    %1324 = vector.shape_cast %1323 : vector<256xf32> to vector<1x256xf32>
    %1325 = vector.broadcast %1324 : vector<1x256xf32> to vector<16x256xf32>
    %1326 = arith.mulf %1325, %194 : vector<16x256xf32>
    %c176 = arith.constant 176 : index
    %c0_306 = arith.constant 0 : index
    %1327 = vector.load %arg3[%c176, %c0_306] : memref<212x256xf32, #tpu.memory_space<vmem>>, vector<1x256xf32>
    %1328 = vector.shape_cast %1327 : vector<1x256xf32> to vector<256xf32>
    %1329 = vector.shape_cast %1328 : vector<256xf32> to vector<1x256xf32>
    %1330 = vector.broadcast %1329 : vector<1x256xf32> to vector<16x256xf32>
    %1331 = arith.mulf %1330, %195 : vector<16x256xf32>
    %1332 = arith.addf %1326, %1331 : vector<16x256xf32>
    %c177 = arith.constant 177 : index
    %c0_307 = arith.constant 0 : index
    %1333 = vector.load %arg3[%c177, %c0_307] : memref<212x256xf32, #tpu.memory_space<vmem>>, vector<1x256xf32>
    %1334 = vector.shape_cast %1333 : vector<1x256xf32> to vector<256xf32>
    %1335 = vector.shape_cast %1334 : vector<256xf32> to vector<1x256xf32>
    %1336 = vector.broadcast %1335 : vector<1x256xf32> to vector<16x256xf32>
    %1337 = arith.mulf %1336, %196 : vector<16x256xf32>
    %1338 = arith.addf %1332, %1337 : vector<16x256xf32>
    %c178 = arith.constant 178 : index
    %c0_308 = arith.constant 0 : index
    %1339 = vector.load %arg3[%c178, %c0_308] : memref<212x256xf32, #tpu.memory_space<vmem>>, vector<1x256xf32>
    %1340 = vector.shape_cast %1339 : vector<1x256xf32> to vector<256xf32>
    %1341 = vector.shape_cast %1340 : vector<256xf32> to vector<1x256xf32>
    %1342 = vector.broadcast %1341 : vector<1x256xf32> to vector<16x256xf32>
    %1343 = arith.mulf %1342, %197 : vector<16x256xf32>
    %1344 = arith.addf %1338, %1343 : vector<16x256xf32>
    %c179 = arith.constant 179 : index
    %c0_309 = arith.constant 0 : index
    %1345 = vector.load %arg3[%c179, %c0_309] : memref<212x256xf32, #tpu.memory_space<vmem>>, vector<1x256xf32>
    %1346 = vector.shape_cast %1345 : vector<1x256xf32> to vector<256xf32>
    %1347 = vector.shape_cast %1346 : vector<256xf32> to vector<1x256xf32>
    %1348 = vector.broadcast %1347 : vector<1x256xf32> to vector<16x256xf32>
    %1349 = arith.mulf %1348, %198 : vector<16x256xf32>
    %1350 = arith.addf %1344, %1349 : vector<16x256xf32>
    %c180 = arith.constant 180 : index
    %c0_310 = arith.constant 0 : index
    %1351 = vector.load %arg3[%c180, %c0_310] : memref<212x256xf32, #tpu.memory_space<vmem>>, vector<1x256xf32>
    %1352 = vector.shape_cast %1351 : vector<1x256xf32> to vector<256xf32>
    %1353 = vector.shape_cast %1352 : vector<256xf32> to vector<1x256xf32>
    %1354 = vector.broadcast %1353 : vector<1x256xf32> to vector<16x256xf32>
    %1355 = arith.mulf %1354, %199 : vector<16x256xf32>
    %1356 = arith.addf %1350, %1355 : vector<16x256xf32>
    %c181 = arith.constant 181 : index
    %c0_311 = arith.constant 0 : index
    %1357 = vector.load %arg3[%c181, %c0_311] : memref<212x256xf32, #tpu.memory_space<vmem>>, vector<1x256xf32>
    %1358 = vector.shape_cast %1357 : vector<1x256xf32> to vector<256xf32>
    %1359 = vector.shape_cast %1358 : vector<256xf32> to vector<1x256xf32>
    %1360 = vector.broadcast %1359 : vector<1x256xf32> to vector<16x256xf32>
    %1361 = arith.mulf %1360, %200 : vector<16x256xf32>
    %1362 = arith.addf %1356, %1361 : vector<16x256xf32>
    %1363 = vector.extract_strided_slice %1362 {offsets = [0, 65], sizes = [16, 191], strides = [1, 1]} : vector<16x256xf32> to vector<16x191xf32>
    %1364 = vector.extract_strided_slice %1362 {offsets = [0, 0], sizes = [16, 65], strides = [1, 1]} : vector<16x256xf32> to vector<16x65xf32>
    %1365 = tpu.concatenate %1363, %1364 in 1 : vector<16x191xf32>, vector<16x65xf32> -> vector<16x256xf32>
    %1366 = arith.addf %1321, %1365 : vector<16x256xf32>
    %c182 = arith.constant 182 : index
    %c0_312 = arith.constant 0 : index
    %1367 = vector.load %arg3[%c182, %c0_312] : memref<212x256xf32, #tpu.memory_space<vmem>>, vector<1x256xf32>
    %1368 = vector.shape_cast %1367 : vector<1x256xf32> to vector<256xf32>
    %1369 = vector.shape_cast %1368 : vector<256xf32> to vector<1x256xf32>
    %1370 = vector.broadcast %1369 : vector<1x256xf32> to vector<16x256xf32>
    %1371 = arith.mulf %1370, %194 : vector<16x256xf32>
    %c183 = arith.constant 183 : index
    %c0_313 = arith.constant 0 : index
    %1372 = vector.load %arg3[%c183, %c0_313] : memref<212x256xf32, #tpu.memory_space<vmem>>, vector<1x256xf32>
    %1373 = vector.shape_cast %1372 : vector<1x256xf32> to vector<256xf32>
    %1374 = vector.shape_cast %1373 : vector<256xf32> to vector<1x256xf32>
    %1375 = vector.broadcast %1374 : vector<1x256xf32> to vector<16x256xf32>
    %1376 = arith.mulf %1375, %195 : vector<16x256xf32>
    %1377 = arith.addf %1371, %1376 : vector<16x256xf32>
    %c184 = arith.constant 184 : index
    %c0_314 = arith.constant 0 : index
    %1378 = vector.load %arg3[%c184, %c0_314] : memref<212x256xf32, #tpu.memory_space<vmem>>, vector<1x256xf32>
    %1379 = vector.shape_cast %1378 : vector<1x256xf32> to vector<256xf32>
    %1380 = vector.shape_cast %1379 : vector<256xf32> to vector<1x256xf32>
    %1381 = vector.broadcast %1380 : vector<1x256xf32> to vector<16x256xf32>
    %1382 = arith.mulf %1381, %196 : vector<16x256xf32>
    %1383 = arith.addf %1377, %1382 : vector<16x256xf32>
    %c185 = arith.constant 185 : index
    %c0_315 = arith.constant 0 : index
    %1384 = vector.load %arg3[%c185, %c0_315] : memref<212x256xf32, #tpu.memory_space<vmem>>, vector<1x256xf32>
    %1385 = vector.shape_cast %1384 : vector<1x256xf32> to vector<256xf32>
    %1386 = vector.shape_cast %1385 : vector<256xf32> to vector<1x256xf32>
    %1387 = vector.broadcast %1386 : vector<1x256xf32> to vector<16x256xf32>
    %1388 = arith.mulf %1387, %197 : vector<16x256xf32>
    %1389 = arith.addf %1383, %1388 : vector<16x256xf32>
    %c186 = arith.constant 186 : index
    %c0_316 = arith.constant 0 : index
    %1390 = vector.load %arg3[%c186, %c0_316] : memref<212x256xf32, #tpu.memory_space<vmem>>, vector<1x256xf32>
    %1391 = vector.shape_cast %1390 : vector<1x256xf32> to vector<256xf32>
    %1392 = vector.shape_cast %1391 : vector<256xf32> to vector<1x256xf32>
    %1393 = vector.broadcast %1392 : vector<1x256xf32> to vector<16x256xf32>
    %1394 = arith.mulf %1393, %198 : vector<16x256xf32>
    %1395 = arith.addf %1389, %1394 : vector<16x256xf32>
    %c187 = arith.constant 187 : index
    %c0_317 = arith.constant 0 : index
    %1396 = vector.load %arg3[%c187, %c0_317] : memref<212x256xf32, #tpu.memory_space<vmem>>, vector<1x256xf32>
    %1397 = vector.shape_cast %1396 : vector<1x256xf32> to vector<256xf32>
    %1398 = vector.shape_cast %1397 : vector<256xf32> to vector<1x256xf32>
    %1399 = vector.broadcast %1398 : vector<1x256xf32> to vector<16x256xf32>
    %1400 = arith.mulf %1399, %199 : vector<16x256xf32>
    %1401 = arith.addf %1395, %1400 : vector<16x256xf32>
    %c188 = arith.constant 188 : index
    %c0_318 = arith.constant 0 : index
    %1402 = vector.load %arg3[%c188, %c0_318] : memref<212x256xf32, #tpu.memory_space<vmem>>, vector<1x256xf32>
    %1403 = vector.shape_cast %1402 : vector<1x256xf32> to vector<256xf32>
    %1404 = vector.shape_cast %1403 : vector<256xf32> to vector<1x256xf32>
    %1405 = vector.broadcast %1404 : vector<1x256xf32> to vector<16x256xf32>
    %1406 = arith.mulf %1405, %200 : vector<16x256xf32>
    %1407 = arith.addf %1401, %1406 : vector<16x256xf32>
    %1408 = vector.extract_strided_slice %1407 {offsets = [0, 66], sizes = [16, 190], strides = [1, 1]} : vector<16x256xf32> to vector<16x190xf32>
    %1409 = vector.extract_strided_slice %1407 {offsets = [0, 0], sizes = [16, 66], strides = [1, 1]} : vector<16x256xf32> to vector<16x66xf32>
    %1410 = tpu.concatenate %1408, %1409 in 1 : vector<16x190xf32>, vector<16x66xf32> -> vector<16x256xf32>
    %1411 = arith.addf %1366, %1410 : vector<16x256xf32>
    %c189 = arith.constant 189 : index
    %c0_319 = arith.constant 0 : index
    %1412 = vector.load %arg3[%c189, %c0_319] : memref<212x256xf32, #tpu.memory_space<vmem>>, vector<1x256xf32>
    %1413 = vector.shape_cast %1412 : vector<1x256xf32> to vector<256xf32>
    %1414 = vector.shape_cast %1413 : vector<256xf32> to vector<1x256xf32>
    %1415 = vector.broadcast %1414 : vector<1x256xf32> to vector<16x256xf32>
    %1416 = arith.mulf %1415, %194 : vector<16x256xf32>
    %c190 = arith.constant 190 : index
    %c0_320 = arith.constant 0 : index
    %1417 = vector.load %arg3[%c190, %c0_320] : memref<212x256xf32, #tpu.memory_space<vmem>>, vector<1x256xf32>
    %1418 = vector.shape_cast %1417 : vector<1x256xf32> to vector<256xf32>
    %1419 = vector.shape_cast %1418 : vector<256xf32> to vector<1x256xf32>
    %1420 = vector.broadcast %1419 : vector<1x256xf32> to vector<16x256xf32>
    %1421 = arith.mulf %1420, %195 : vector<16x256xf32>
    %1422 = arith.addf %1416, %1421 : vector<16x256xf32>
    %c191 = arith.constant 191 : index
    %c0_321 = arith.constant 0 : index
    %1423 = vector.load %arg3[%c191, %c0_321] : memref<212x256xf32, #tpu.memory_space<vmem>>, vector<1x256xf32>
    %1424 = vector.shape_cast %1423 : vector<1x256xf32> to vector<256xf32>
    %1425 = vector.shape_cast %1424 : vector<256xf32> to vector<1x256xf32>
    %1426 = vector.broadcast %1425 : vector<1x256xf32> to vector<16x256xf32>
    %1427 = arith.mulf %1426, %196 : vector<16x256xf32>
    %1428 = arith.addf %1422, %1427 : vector<16x256xf32>
    %c192 = arith.constant 192 : index
    %c0_322 = arith.constant 0 : index
    %1429 = vector.load %arg3[%c192, %c0_322] : memref<212x256xf32, #tpu.memory_space<vmem>>, vector<1x256xf32>
    %1430 = vector.shape_cast %1429 : vector<1x256xf32> to vector<256xf32>
    %1431 = vector.shape_cast %1430 : vector<256xf32> to vector<1x256xf32>
    %1432 = vector.broadcast %1431 : vector<1x256xf32> to vector<16x256xf32>
    %1433 = arith.mulf %1432, %197 : vector<16x256xf32>
    %1434 = arith.addf %1428, %1433 : vector<16x256xf32>
    %c193 = arith.constant 193 : index
    %c0_323 = arith.constant 0 : index
    %1435 = vector.load %arg3[%c193, %c0_323] : memref<212x256xf32, #tpu.memory_space<vmem>>, vector<1x256xf32>
    %1436 = vector.shape_cast %1435 : vector<1x256xf32> to vector<256xf32>
    %1437 = vector.shape_cast %1436 : vector<256xf32> to vector<1x256xf32>
    %1438 = vector.broadcast %1437 : vector<1x256xf32> to vector<16x256xf32>
    %1439 = arith.mulf %1438, %198 : vector<16x256xf32>
    %1440 = arith.addf %1434, %1439 : vector<16x256xf32>
    %c194 = arith.constant 194 : index
    %c0_324 = arith.constant 0 : index
    %1441 = vector.load %arg3[%c194, %c0_324] : memref<212x256xf32, #tpu.memory_space<vmem>>, vector<1x256xf32>
    %1442 = vector.shape_cast %1441 : vector<1x256xf32> to vector<256xf32>
    %1443 = vector.shape_cast %1442 : vector<256xf32> to vector<1x256xf32>
    %1444 = vector.broadcast %1443 : vector<1x256xf32> to vector<16x256xf32>
    %1445 = arith.mulf %1444, %199 : vector<16x256xf32>
    %1446 = arith.addf %1440, %1445 : vector<16x256xf32>
    %c195 = arith.constant 195 : index
    %c0_325 = arith.constant 0 : index
    %1447 = vector.load %arg3[%c195, %c0_325] : memref<212x256xf32, #tpu.memory_space<vmem>>, vector<1x256xf32>
    %1448 = vector.shape_cast %1447 : vector<1x256xf32> to vector<256xf32>
    %1449 = vector.shape_cast %1448 : vector<256xf32> to vector<1x256xf32>
    %1450 = vector.broadcast %1449 : vector<1x256xf32> to vector<16x256xf32>
    %1451 = arith.mulf %1450, %200 : vector<16x256xf32>
    %1452 = arith.addf %1446, %1451 : vector<16x256xf32>
    %1453 = vector.extract_strided_slice %1452 {offsets = [0, 67], sizes = [16, 189], strides = [1, 1]} : vector<16x256xf32> to vector<16x189xf32>
    %1454 = vector.extract_strided_slice %1452 {offsets = [0, 0], sizes = [16, 67], strides = [1, 1]} : vector<16x256xf32> to vector<16x67xf32>
    %1455 = tpu.concatenate %1453, %1454 in 1 : vector<16x189xf32>, vector<16x67xf32> -> vector<16x256xf32>
    %1456 = arith.addf %1411, %1455 : vector<16x256xf32>
    %c3_326 = arith.constant 3 : index
    %c0_327 = arith.constant 0 : index
    %1457 = vector.load %arg11[%c3_326, %c0_327] : memref<22x256xf32, #tpu.memory_space<vmem>>, vector<16x256xf32>
    %1458 = arith.addf %1457, %1456 : vector<16x256xf32>
    %c0_328 = arith.constant 0 : index
    %c0_329 = arith.constant 0 : index
    %1459 = vector.load %arg5[%c0_328, %c0_329] : memref<16x256xf32, #tpu.memory_space<vmem>>, vector<16x256xf32>
    %1460 = arith.addf %1458, %1459 : vector<16x256xf32>
    %cst_330 = arith.constant dense<0.000000e+00> : vector<256xf32>
    %1461 = vector.multi_reduction <add>, %1460, %cst_330 [0] : vector<16x256xf32> to vector<256xf32>
    %1462 = arith.mulf %1460, %1460 : vector<16x256xf32>
    %cst_331 = arith.constant dense<0.000000e+00> : vector<256xf32>
    %1463 = vector.multi_reduction <add>, %1462, %cst_331 [0] : vector<16x256xf32> to vector<256xf32>
    %cst_332 = arith.constant 0.000000e+00 : f32
    %1464 = vector.broadcast %cst_332 : f32 to vector<256xf32>
    %cst_333 = arith.constant 0.000000e+00 : f32
    %1465 = vector.broadcast %cst_333 : f32 to vector<256xf32>
    %c0_334 = arith.constant 0 : index
    %c0_335 = arith.constant 0 : index
    %1466 = vector.load %arg6[%c0_334, %c0_335] : memref<4x256xf32, #tpu.memory_space<vmem>>, vector<1x256xf32>
    %1467 = vector.shape_cast %1466 : vector<1x256xf32> to vector<256xf32>
    %1468 = arith.mulf %1461, %1467 : vector<256xf32>
    %1469 = vector.shape_cast %1468 : vector<256xf32> to vector<1x256xf32>
    %cst_336 = arith.constant dense<0.000000e+00> : vector<1xf32>
    %1470 = vector.multi_reduction <add>, %1469, %cst_336 [1] : vector<1x256xf32> to vector<1xf32>
    %1471 = vector.shape_cast %1470 : vector<1xf32> to vector<1x1xf32>
    %1472 = vector.extract %1471[0, 0] : f32 from vector<1x1xf32>
    %cst_337 = arith.constant 0.001953125 : f32
    %1473 = arith.mulf %1472, %cst_337 : f32
    %1474 = arith.mulf %1463, %1467 : vector<256xf32>
    %1475 = vector.shape_cast %1474 : vector<256xf32> to vector<1x256xf32>
    %cst_338 = arith.constant dense<0.000000e+00> : vector<1xf32>
    %1476 = vector.multi_reduction <add>, %1475, %cst_338 [1] : vector<1x256xf32> to vector<1xf32>
    %1477 = vector.shape_cast %1476 : vector<1xf32> to vector<1x1xf32>
    %1478 = vector.extract %1477[0, 0] : f32 from vector<1x1xf32>
    %cst_339 = arith.constant 0.001953125 : f32
    %1479 = arith.mulf %1478, %cst_339 : f32
    %1480 = arith.mulf %1473, %1473 : f32
    %1481 = arith.subf %1479, %1480 : f32
    %c0_340 = arith.constant 0 : index
    %1482 = memref.load %arg7[%c0_340] : memref<4xf32, #tpu.memory_space<smem>>
    %cst_341 = arith.constant 9.99999974E-6 : f32
    %1483 = arith.addf %1481, %cst_341 : f32
    %1484 = math.rsqrt %1483 : f32
    %1485 = arith.mulf %1482, %1484 : f32
    %1486 = vector.broadcast %1485 : f32 to vector<256xf32>
    %1487 = arith.mulf %1486, %1467 : vector<256xf32>
    %1488 = arith.addf %1464, %1487 : vector<256xf32>
    %c0_342 = arith.constant 0 : index
    %1489 = memref.load %arg8[%c0_342] : memref<4xf32, #tpu.memory_space<smem>>
    %1490 = arith.mulf %1473, %1485 : f32
    %1491 = arith.subf %1489, %1490 : f32
    %1492 = vector.broadcast %1491 : f32 to vector<256xf32>
    %1493 = arith.mulf %1492, %1467 : vector<256xf32>
    %1494 = arith.addf %1465, %1493 : vector<256xf32>
    %c1_343 = arith.constant 1 : index
    %c0_344 = arith.constant 0 : index
    %1495 = vector.load %arg6[%c1_343, %c0_344] : memref<4x256xf32, #tpu.memory_space<vmem>>, vector<1x256xf32>
    %1496 = vector.shape_cast %1495 : vector<1x256xf32> to vector<256xf32>
    %1497 = arith.mulf %1461, %1496 : vector<256xf32>
    %1498 = vector.shape_cast %1497 : vector<256xf32> to vector<1x256xf32>
    %cst_345 = arith.constant dense<0.000000e+00> : vector<1xf32>
    %1499 = vector.multi_reduction <add>, %1498, %cst_345 [1] : vector<1x256xf32> to vector<1xf32>
    %1500 = vector.shape_cast %1499 : vector<1xf32> to vector<1x1xf32>
    %1501 = vector.extract %1500[0, 0] : f32 from vector<1x1xf32>
    %cst_346 = arith.constant 0.001953125 : f32
    %1502 = arith.mulf %1501, %cst_346 : f32
    %1503 = arith.mulf %1463, %1496 : vector<256xf32>
    %1504 = vector.shape_cast %1503 : vector<256xf32> to vector<1x256xf32>
    %cst_347 = arith.constant dense<0.000000e+00> : vector<1xf32>
    %1505 = vector.multi_reduction <add>, %1504, %cst_347 [1] : vector<1x256xf32> to vector<1xf32>
    %1506 = vector.shape_cast %1505 : vector<1xf32> to vector<1x1xf32>
    %1507 = vector.extract %1506[0, 0] : f32 from vector<1x1xf32>
    %cst_348 = arith.constant 0.001953125 : f32
    %1508 = arith.mulf %1507, %cst_348 : f32
    %1509 = arith.mulf %1502, %1502 : f32
    %1510 = arith.subf %1508, %1509 : f32
    %c1_349 = arith.constant 1 : index
    %1511 = memref.load %arg7[%c1_349] : memref<4xf32, #tpu.memory_space<smem>>
    %cst_350 = arith.constant 9.99999974E-6 : f32
    %1512 = arith.addf %1510, %cst_350 : f32
    %1513 = math.rsqrt %1512 : f32
    %1514 = arith.mulf %1511, %1513 : f32
    %1515 = vector.broadcast %1514 : f32 to vector<256xf32>
    %1516 = arith.mulf %1515, %1496 : vector<256xf32>
    %1517 = arith.addf %1488, %1516 : vector<256xf32>
    %c1_351 = arith.constant 1 : index
    %1518 = memref.load %arg8[%c1_351] : memref<4xf32, #tpu.memory_space<smem>>
    %1519 = arith.mulf %1502, %1514 : f32
    %1520 = arith.subf %1518, %1519 : f32
    %1521 = vector.broadcast %1520 : f32 to vector<256xf32>
    %1522 = arith.mulf %1521, %1496 : vector<256xf32>
    %1523 = arith.addf %1494, %1522 : vector<256xf32>
    %c2_352 = arith.constant 2 : index
    %c0_353 = arith.constant 0 : index
    %1524 = vector.load %arg6[%c2_352, %c0_353] : memref<4x256xf32, #tpu.memory_space<vmem>>, vector<1x256xf32>
    %1525 = vector.shape_cast %1524 : vector<1x256xf32> to vector<256xf32>
    %1526 = arith.mulf %1461, %1525 : vector<256xf32>
    %1527 = vector.shape_cast %1526 : vector<256xf32> to vector<1x256xf32>
    %cst_354 = arith.constant dense<0.000000e+00> : vector<1xf32>
    %1528 = vector.multi_reduction <add>, %1527, %cst_354 [1] : vector<1x256xf32> to vector<1xf32>
    %1529 = vector.shape_cast %1528 : vector<1xf32> to vector<1x1xf32>
    %1530 = vector.extract %1529[0, 0] : f32 from vector<1x1xf32>
    %cst_355 = arith.constant 0.001953125 : f32
    %1531 = arith.mulf %1530, %cst_355 : f32
    %1532 = arith.mulf %1463, %1525 : vector<256xf32>
    %1533 = vector.shape_cast %1532 : vector<256xf32> to vector<1x256xf32>
    %cst_356 = arith.constant dense<0.000000e+00> : vector<1xf32>
    %1534 = vector.multi_reduction <add>, %1533, %cst_356 [1] : vector<1x256xf32> to vector<1xf32>
    %1535 = vector.shape_cast %1534 : vector<1xf32> to vector<1x1xf32>
    %1536 = vector.extract %1535[0, 0] : f32 from vector<1x1xf32>
    %cst_357 = arith.constant 0.001953125 : f32
    %1537 = arith.mulf %1536, %cst_357 : f32
    %1538 = arith.mulf %1531, %1531 : f32
    %1539 = arith.subf %1537, %1538 : f32
    %c2_358 = arith.constant 2 : index
    %1540 = memref.load %arg7[%c2_358] : memref<4xf32, #tpu.memory_space<smem>>
    %cst_359 = arith.constant 9.99999974E-6 : f32
    %1541 = arith.addf %1539, %cst_359 : f32
    %1542 = math.rsqrt %1541 : f32
    %1543 = arith.mulf %1540, %1542 : f32
    %1544 = vector.broadcast %1543 : f32 to vector<256xf32>
    %1545 = arith.mulf %1544, %1525 : vector<256xf32>
    %1546 = arith.addf %1517, %1545 : vector<256xf32>
    %c2_360 = arith.constant 2 : index
    %1547 = memref.load %arg8[%c2_360] : memref<4xf32, #tpu.memory_space<smem>>
    %1548 = arith.mulf %1531, %1543 : f32
    %1549 = arith.subf %1547, %1548 : f32
    %1550 = vector.broadcast %1549 : f32 to vector<256xf32>
    %1551 = arith.mulf %1550, %1525 : vector<256xf32>
    %1552 = arith.addf %1523, %1551 : vector<256xf32>
    %c3_361 = arith.constant 3 : index
    %c0_362 = arith.constant 0 : index
    %1553 = vector.load %arg6[%c3_361, %c0_362] : memref<4x256xf32, #tpu.memory_space<vmem>>, vector<1x256xf32>
    %1554 = vector.shape_cast %1553 : vector<1x256xf32> to vector<256xf32>
    %1555 = arith.mulf %1461, %1554 : vector<256xf32>
    %1556 = vector.shape_cast %1555 : vector<256xf32> to vector<1x256xf32>
    %cst_363 = arith.constant dense<0.000000e+00> : vector<1xf32>
    %1557 = vector.multi_reduction <add>, %1556, %cst_363 [1] : vector<1x256xf32> to vector<1xf32>
    %1558 = vector.shape_cast %1557 : vector<1xf32> to vector<1x1xf32>
    %1559 = vector.extract %1558[0, 0] : f32 from vector<1x1xf32>
    %cst_364 = arith.constant 0.001953125 : f32
    %1560 = arith.mulf %1559, %cst_364 : f32
    %1561 = arith.mulf %1463, %1554 : vector<256xf32>
    %1562 = vector.shape_cast %1561 : vector<256xf32> to vector<1x256xf32>
    %cst_365 = arith.constant dense<0.000000e+00> : vector<1xf32>
    %1563 = vector.multi_reduction <add>, %1562, %cst_365 [1] : vector<1x256xf32> to vector<1xf32>
    %1564 = vector.shape_cast %1563 : vector<1xf32> to vector<1x1xf32>
    %1565 = vector.extract %1564[0, 0] : f32 from vector<1x1xf32>
    %cst_366 = arith.constant 0.001953125 : f32
    %1566 = arith.mulf %1565, %cst_366 : f32
    %1567 = arith.mulf %1560, %1560 : f32
    %1568 = arith.subf %1566, %1567 : f32
    %c3_367 = arith.constant 3 : index
    %1569 = memref.load %arg7[%c3_367] : memref<4xf32, #tpu.memory_space<smem>>
    %cst_368 = arith.constant 9.99999974E-6 : f32
    %1570 = arith.addf %1568, %cst_368 : f32
    %1571 = math.rsqrt %1570 : f32
    %1572 = arith.mulf %1569, %1571 : f32
    %1573 = vector.broadcast %1572 : f32 to vector<256xf32>
    %1574 = arith.mulf %1573, %1554 : vector<256xf32>
    %1575 = arith.addf %1546, %1574 : vector<256xf32>
    %c3_369 = arith.constant 3 : index
    %1576 = memref.load %arg8[%c3_369] : memref<4xf32, #tpu.memory_space<smem>>
    %1577 = arith.mulf %1560, %1572 : f32
    %1578 = arith.subf %1576, %1577 : f32
    %1579 = vector.broadcast %1578 : f32 to vector<256xf32>
    %1580 = arith.mulf %1579, %1554 : vector<256xf32>
    %1581 = arith.addf %1552, %1580 : vector<256xf32>
    %1582 = vector.shape_cast %1575 : vector<256xf32> to vector<1x256xf32>
    %1583 = vector.broadcast %1582 : vector<1x256xf32> to vector<16x256xf32>
    %1584 = arith.mulf %1460, %1583 : vector<16x256xf32>
    %1585 = vector.shape_cast %1581 : vector<256xf32> to vector<1x256xf32>
    %1586 = vector.broadcast %1585 : vector<1x256xf32> to vector<16x256xf32>
    %1587 = arith.addf %1584, %1586 : vector<16x256xf32>
    %c0_370 = arith.constant 0 : index
    %c0_371 = arith.constant 0 : index
    %1588 = vector.load %arg1[%c0_370, %c0_371] : memref<16x256xf32, #tpu.memory_space<vmem>>, vector<16x256xf32>
    %1589 = arith.addf %1587, %1588 : vector<16x256xf32>
    %cst_372 = arith.constant 0.000000e+00 : f32
    %1590 = vector.broadcast %cst_372 : f32 to vector<16x256xf32>
    %1591 = arith.maximumf %1589, %1590 : vector<16x256xf32>
    %c0_373 = arith.constant 0 : index
    %c0_374 = arith.constant 0 : index
    %1592 = vector.load %arg9[%c0_373, %c0_374] : memref<16x256xf32, #tpu.memory_space<vmem>>, vector<16x256xf32>
    tpu.vector_store %arg9[%c0_373, %c0_374], %1591 {strides = array<i32>} : memref<16x256xf32, #tpu.memory_space<vmem>>, vector<16x256xf32>,
    return
  }
}

</mosaic_0001>

<llo_original>
// kernel: tpu_custom_call.1
$region0: #{tpu_custom_call.1}
  #allocation0 [shape = 'u32[]', space=smem, size = 0x4, offset = 0x4, fixed_abs, tag = 'smem constant byte address 0x4 - core index']
  #allocation1 [shape = 'u32[144,128]{1,0:T(1,128)}', space=vmem, size = 0x12000, scoped, tag = 'internal scratch']
  %s0 = inlined_call_operand.hbm [shape: f32[8,128], index: 0, kind: input, shape index: {}]
  %s1 = inlined_call_operand.hbm [shape: f32[8,128], index: 1, kind: output, shape index: {}]
  %s2 = sld [smem:[#allocation0]]
  $region18: #{tpu_custom_call.1} parent=0
    _
  %s4 = ssub.s32 1, %s2
  %s5 = scalar_select 0, %s4, %s2
  $region1: #{tpu_custom_call.1} parent=0
    #allocation2 [shape = 'u8[4096]{0}', space=vmem, size = 0x1000, scoped, tag = 'input window, operand 0, single buffered']
    #allocation3 [shape = 's32[1]{0}', space=sflag, size = 0x4, scoped, tag = 'scoped memory for tpu_custom_call.1']
    #allocation4 [shape = 's32[1]{0}', space=sflag, size = 0x4, scoped, tag = 'scoped memory for tpu_custom_call.1']
    #allocation5 [shape = 'u8[4096]{0}', space=vmem, size = 0x1000, scoped, tag = 'output window, operand 0, single buffered']
    %6 = vsyncpa [#allocation3], 0
    %7 = vsyncpa [#allocation4], 0
    // Predicated region
    $region2: #{tpu_custom_call.1} parent=1 // pred_check
      _
    $region3: #{tpu_custom_call.1} parent=1 // pred_check_branch
      %9 = sbr.rel (0) target = $region5
    $region4: #{tpu_custom_call.1} parent=1 // pred_region
      %s11 = ssub.s32 128, 128
      %12 = vsyncadd [#allocation3], %s11
      %s14 = sshll.u32 [#allocation2], 4
      %s15 = int_to_ptr.vmem [resolvable:$true] %s14
      %17 = dma.hbm_to_vmem [thread:$0]  %s0, 128, %s15, [#allocation3]
    $region5: #{tpu_custom_call.1} parent=1 // pred_fallthru
      _
    // Predicated region
    $region6: #{tpu_custom_call.1} parent=1 // pred_check
      _
    $region7: #{tpu_custom_call.1} parent=1 // pred_check_branch
      %19 = sbr.rel (0) target = $region9
    $region8: #{tpu_custom_call.1} parent=1 // pred_region
      %20 = dma.done [#allocation3], 128
    $region9: #{tpu_custom_call.1} parent=1 // pred_fallthru
      _
    %v21 = vld [vmem:[#allocation2] sm:$0xff]
    %22 = vrot.lane.b32.xlu0 %v21, 3
    %v23 = vpop.permute.xlu0 %22
    %24 = vst [vmem:[#allocation5] sm:$0xff] %v23
    // Predicated region
    $region10: #{tpu_custom_call.1} parent=1 // pred_check
      _
    $region11: #{tpu_custom_call.1} parent=1 // pred_check_branch
      %26 = sbr.rel (0) target = $region13
    $region12: #{tpu_custom_call.1} parent=1 // pred_region
      %s28 = ssub.s32 128, 128
      %29 = vsyncadd [#allocation4], %s28
      %s31 = sshll.u32 [#allocation5], 4
      %s32 = int_to_ptr.vmem [resolvable:$true] %s31
      %34 = dma.vmem_to_hbm [thread:$0]  %s32, 128, %s1, [#allocation4]
    $region13: #{tpu_custom_call.1} parent=1 // pred_fallthru
      _
    // Predicated region
    $region14: #{tpu_custom_call.1} parent=1 // pred_check
      _
    $region15: #{tpu_custom_call.1} parent=1 // pred_check_branch
      %36 = sbr.rel (0) target = $region17
    $region16: #{tpu_custom_call.1} parent=1 // pred_region
      %37 = dma.done [#allocation4], 128
    $region17: #{tpu_custom_call.1} parent=1 // pred_fallthru
      _
    %38 = vsyncpa [#allocation3], 1
    %39 = vsyncpa [#allocation4], 1

// kernel: tpu_custom_call.1
$region0: #{tpu_custom_call.1}
  #allocation0 [shape = 'u32[]', space=smem, size = 0x4, offset = 0x4, fixed_abs, tag = 'smem constant byte address 0x4 - core index']
  #allocation1 [shape = 'u32[144,128]{1,0:T(1,128)}', space=vmem, size = 0x12000, scoped, tag = 'internal scratch']
  %s0 = inlined_call_operand.hbm [shape: f32[16,128], index: 0, kind: input, shape index: {}]
  %s1 = inlined_call_operand.hbm [shape: f32[8,128], index: 1, kind: output, shape index: {}]
  %s2 = sld [smem:[#allocation0]]
  $region18: #{tpu_custom_call.1} parent=0
    _
  %s4 = ssub.s32 1, %s2
  %s5 = scalar_select 0, %s4, %s2
  $region1: #{tpu_custom_call.1} parent=0
    #allocation2 [shape = 'u8[8192]{0}', space=vmem, size = 0x2000, scoped, tag = 'input window, operand 0, single buffered']
    #allocation3 [shape = 's32[1]{0}', space=sflag, size = 0x4, scoped, tag = 'scoped memory for tpu_custom_call.1']
    #allocation4 [shape = 's32[1]{0}', space=sflag, size = 0x4, scoped, tag = 'scoped memory for tpu_custom_call.1']
    #allocation5 [shape = 'u8[4096]{0}', space=vmem, size = 0x1000, scoped, tag = 'output window, operand 0, single buffered']
    %6 = vsyncpa [#allocation3], 0
    %7 = vsyncpa [#allocation4], 0
    // Predicated region
    $region2: #{tpu_custom_call.1} parent=1 // pred_check
      _
    $region3: #{tpu_custom_call.1} parent=1 // pred_check_branch
      %9 = sbr.rel (0) target = $region5
    $region4: #{tpu_custom_call.1} parent=1 // pred_region
      %s11 = ssub.s32 256, 256
      %12 = vsyncadd [#allocation3], %s11
      %s13 = sshll.u32 [#allocation2], 4
      %s14 = int_to_ptr.vmem [resolvable:$true] %s13
      %19 = dma.hbm_to_vmem [thread:$0]  %s0, 256, %s14, [#allocation3], 128, 128, 8
    $region5: #{tpu_custom_call.1} parent=1 // pred_fallthru
      _
    // Predicated region
    $region6: #{tpu_custom_call.1} parent=1 // pred_check
      _
    $region7: #{tpu_custom_call.1} parent=1 // pred_check_branch
      %21 = sbr.rel (0) target = $region9
    $region8: #{tpu_custom_call.1} parent=1 // pred_region
      %22 = dma.done [#allocation3], 256
    $region9: #{tpu_custom_call.1} parent=1 // pred_fallthru
      _
    %v23 = vld [vmem:[#allocation2 + $0x2] ss:$0 sm:$0xff]
    %24 = vst [vmem:[#allocation5] sm:$0xff] %v23
    // Predicated region
    $region10: #{tpu_custom_call.1} parent=1 // pred_check
      _
    $region11: #{tpu_custom_call.1} parent=1 // pred_check_branch
      %26 = sbr.rel (0) target = $region13
    $region12: #{tpu_custom_call.1} parent=1 // pred_region
      %s28 = ssub.s32 128, 128
      %29 = vsyncadd [#allocation4], %s28
      %s31 = sshll.u32 [#allocation5], 4
      %s32 = int_to_ptr.vmem [resolvable:$true] %s31
      %34 = dma.vmem_to_hbm [thread:$0]  %s32, 128, %s1, [#allocation4]
    $region13: #{tpu_custom_call.1} parent=1 // pred_fallthru
      _
    // Predicated region
    $region14: #{tpu_custom_call.1} parent=1 // pred_check
      _
    $region15: #{tpu_custom_call.1} parent=1 // pred_check_branch
      %36 = sbr.rel (0) target = $region17
    $region16: #{tpu_custom_call.1} parent=1 // pred_region
      %37 = dma.done [#allocation4], 128
    $region17: #{tpu_custom_call.1} parent=1 // pred_fallthru
      _
    %38 = vsyncpa [#allocation3], 1
    %39 = vsyncpa [#allocation4], 1

// kernel: sub.1
$region0: #{sub.1}
  #allocation0 [shape = 's32[1]{0}', space=sflag, size = 0x4, scoped, tag = 'scoped memory for sub.1']
  %s0 = inlined_call_operand.vmem [shape: f32[4], index: 0, kind: input, shape index: {}]
  %s1 = inlined_call_operand.vmem [shape: f32[4], index: 1, kind: input, shape index: {}]
  %s2 = inlined_call_operand.vmem [shape: f32[4], index: 2, kind: output, shape index: {}]
  %v3 = vld [vmem:[%s0] sm:$0x1]
  %v4 = vld [vmem:[%s1] sm:$0x1]
  %5 = xla_tuple %v3, %v4
  %6 = xla_tuple %5
  %v7 = vsub.f32 %v3, %v4
  %8 = xla_tuple %v7
  %9 = vst [vmem:[%s2] sm:$0x1] %v7

// kernel: _divnorm_impl.1
$region0: #{_divnorm_impl.1}
  #allocation0 [shape = 'u32[]', space=smem, size = 0x4, offset = 0x4, fixed_abs, tag = 'smem constant byte address 0x4 - core index']
  #allocation1 [shape = 'u32[144,128]{1,0:T(1,128)}', space=vmem, size = 0x12000, scoped, tag = 'internal scratch']
  #allocation2 [shape = 'f32[22,262]{1,0:T(8,128)}', space=vmem, size = 0x9000, scoped, tag = 'scratch operand']
  #allocation3 [shape = 'f32[22,256]{1,0:T(8,128)}', space=vmem, size = 0x6000, scoped, tag = 'scratch operand']
  %s0 = inlined_call_operand.vmem [shape: f32[22,262], index: 0, kind: input, shape index: {}]
  %s1 = inlined_call_operand.vmem [shape: f32[16,256], index: 1, kind: input, shape index: {}]
  %s2 = inlined_call_operand.vmem [shape: f32[41,256], index: 2, kind: input, shape index: {}]
  %s3 = inlined_call_operand.vmem [shape: f32[212,256], index: 3, kind: input, shape index: {}]
  %s4 = inlined_call_operand.vmem [shape: f32[16,256], index: 4, kind: input, shape index: {}]
  %s5 = inlined_call_operand.vmem [shape: f32[16,256], index: 5, kind: input, shape index: {}]
  %s6 = inlined_call_operand.vmem [shape: f32[4,256], index: 6, kind: input, shape index: {}]
  %s7 = inlined_call_operand.vmem [shape: f32[4], index: 7, kind: input, shape index: {}]
  %s8 = inlined_call_operand.vmem [shape: f32[4], index: 8, kind: input, shape index: {}]
  %s9 = inlined_call_operand.vmem [shape: f32[16,256], index: 9, kind: output, shape index: {}]
  %s10 = sld [smem:[#allocation0]]
  $region54: #{_divnorm_impl.1} parent=0
    _
  %s12 = ssub.s32 1, %s10
  %s13 = scalar_select 0, %s12, %s10
  $region1: #{_divnorm_impl.1} parent=0
    #allocation4 [shape = 'u8[512]{0}', space=smem, size = 0x200, scoped, tag = 'input window, operand 7, single buffered']
    #allocation5 [shape = 's32[1]{0}', space=sflag, size = 0x4, scoped, tag = 'scoped memory for _divnorm_impl.1']
    #allocation6 [shape = 'u8[512]{0}', space=smem, size = 0x200, scoped, tag = 'input window, operand 8, single buffered']
    #allocation7 [shape = 's32[1]{0}', space=sflag, size = 0x4, scoped, tag = 'scoped memory for _divnorm_impl.1']
    %14 = vsyncpa [#allocation5], 0
    %15 = vsyncpa [#allocation7], 0
    // Predicated region
    $region2: #{_divnorm_impl.1} parent=1 // pred_check
      _
    $region3: #{_divnorm_impl.1} parent=1 // pred_check_branch
      %17 = sbr.rel (0) target = $region5
    $region4: #{_divnorm_impl.1} parent=1 // pred_region
      _
    $region5: #{_divnorm_impl.1} parent=1 // pred_fallthru
      _
    // Predicated region
    $region6: #{_divnorm_impl.1} parent=1 // pred_check
      _
    $region7: #{_divnorm_impl.1} parent=1 // pred_check_branch
      %19 = sbr.rel (0) target = $region9
    $region8: #{_divnorm_impl.1} parent=1 // pred_region
      _
    $region9: #{_divnorm_impl.1} parent=1 // pred_fallthru
      _
    // Predicated region
    $region10: #{_divnorm_impl.1} parent=1 // pred_check
      _
    $region11: #{_divnorm_impl.1} parent=1 // pred_check_branch
      %21 = sbr.rel (0) target = $region13
    $region12: #{_divnorm_impl.1} parent=1 // pred_region
      _
    $region13: #{_divnorm_impl.1} parent=1 // pred_fallthru
      _
    // Predicated region
    $region14: #{_divnorm_impl.1} parent=1 // pred_check
      _
    $region15: #{_divnorm_impl.1} parent=1 // pred_check_branch
      %23 = sbr.rel (0) target = $region17
    $region16: #{_divnorm_impl.1} parent=1 // pred_region
      _
    $region17: #{_divnorm_impl.1} parent=1 // pred_fallthru
      _
    // Predicated region
    $region18: #{_divnorm_impl.1} parent=1 // pred_check
      _
    $region19: #{_divnorm_impl.1} parent=1 // pred_check_branch
      %25 = sbr.rel (0) target = $region21
    $region20: #{_divnorm_impl.1} parent=1 // pred_region
      _
    $region21: #{_divnorm_impl.1} parent=1 // pred_fallthru
      _
    // Predicated region
    $region22: #{_divnorm_impl.1} parent=1 // pred_check
      _
    $region23: #{_divnorm_impl.1} parent=1 // pred_check_branch
      %27 = sbr.rel (0) target = $region25
    $region24: #{_divnorm_impl.1} parent=1 // pred_region
      _
    $region25: #{_divnorm_impl.1} parent=1 // pred_fallthru
      _
    // Predicated region
    $region26: #{_divnorm_impl.1} parent=1 // pred_check
      _
    $region27: #{_divnorm_impl.1} parent=1 // pred_check_branch
      %29 = sbr.rel (0) target = $region29
    $region28: #{_divnorm_impl.1} parent=1 // pred_region
      _
    $region29: #{_divnorm_impl.1} parent=1 // pred_fallthru
      _
    // Predicated region
    $region30: #{_divnorm_impl.1} parent=1 // pred_check
      _
    $region31: #{_divnorm_impl.1} parent=1 // pred_check_branch
      %31 = sbr.rel (0) target = $region33
    $region32: #{_divnorm_impl.1} parent=1 // pred_region
      %s33 = ssub.s32 16, 16
      %34 = vsyncadd [#allocation5], %s33
      %s36 = sshll.u32 %s7, 4
      %s37 = int_to_ptr.vmem [resolvable:$true] %s36
      %39 = dma.vmem_to_smem %s37, 16, [#allocation4], [#allocation5]
    $region33: #{_divnorm_impl.1} parent=1 // pred_fallthru
      _
    // Predicated region
    $region34: #{_divnorm_impl.1} parent=1 // pred_check
      _
    $region35: #{_divnorm_impl.1} parent=1 // pred_check_branch
      %41 = sbr.rel (0) target = $region37
    $region36: #{_divnorm_impl.1} parent=1 // pred_region
      %s43 = ssub.s32 16, 16
      %44 = vsyncadd [#allocation7], %s43
      %s46 = sshll.u32 %s8, 4
      %s47 = int_to_ptr.vmem [resolvable:$true] %s46
      %49 = dma.vmem_to_smem %s47, 16, [#allocation6], [#allocation7]
    $region37: #{_divnorm_impl.1} parent=1 // pred_fallthru
      _
    // Predicated region
    $region38: #{_divnorm_impl.1} parent=1 // pred_check
      _
    $region39: #{_divnorm_impl.1} parent=1 // pred_check_branch
      %51 = sbr.rel (0) target = $region41
    $region40: #{_divnorm_impl.1} parent=1 // pred_region
      %52 = dma.done [#allocation5], 16
    $region41: #{_divnorm_impl.1} parent=1 // pred_fallthru
      _
    // Predicated region
    $region42: #{_divnorm_impl.1} parent=1 // pred_check
      _
    $region43: #{_divnorm_impl.1} parent=1 // pred_check_branch
      %54 = sbr.rel (0) target = $region45
    $region44: #{_divnorm_impl.1} parent=1 // pred_region
      %55 = dma.done [#allocation7], 16
    $region45: #{_divnorm_impl.1} parent=1 // pred_fallthru
      _
    %56 = sfence
    %v57 = vld [vmem:[%s0] sm:$0xff]
    %v58 = vld [vmem:[%s0 + $0x8] sm:$0xff]
    %v59 = vld [vmem:[%s0 + $0x10] sm:$0xff]
    %v60 = vld [vmem:[%s0 + $0x18] sm:$0xff]
    %v61 = vld [vmem:[%s0 + $0x20] sm:$0xff]
    %v62 = vld [vmem:[%s0 + $0x28] sm:$0xff]
    %v63 = vld [vmem:[%s0 + $0x30] sm:$0x3f]
    %v64 = vld [vmem:[%s0 + $0x38] sm:$0x3f]
    %v65 = vld [vmem:[%s0 + $0x40] sm:$0x3f]
    %v66 = vmul.f32 %v57, %v57
    %v67 = vmul.f32 %v58, %v58
    %v68 = vmul.f32 %v59, %v59
    %v69 = vmul.f32 %v60, %v60
    %v70 = vmul.f32 %v61, %v61
    %v71 = vmul.f32 %v62, %v62
    %v72 = vmul.f32 %v63, %v63
    %v73 = vmul.f32 %v64, %v64
    %v74 = vmul.f32 %v65, %v65
    %75 = vst [vmem:[#allocation2] sm:$0xff] %v66
    %76 = vst [vmem:[#allocation2 + $0x8] sm:$0xff] %v67
    %vm77 = vcmask 48128
    %78 = vst.msk [vmem:[#allocation2 + $0x10] sm:$0xff] %vm77, %v68
    %79 = vst [vmem:[#allocation2 + $0x18] sm:$0xff] %v69
    %80 = vst [vmem:[#allocation2 + $0x20] sm:$0xff] %v70
    %81 = vst.msk [vmem:[#allocation2 + $0x28] sm:$0xff] %vm77, %v71
    %82 = vst [vmem:[#allocation2 + $0x30] sm:$0x3f] %v72
    %83 = vst [vmem:[#allocation2 + $0x38] sm:$0x3f] %v73
    %vm84 = vcmask 46080
    %85 = vst.msk [vmem:[#allocation2 + $0x40] sm:$0x3f] %vm84, %v74
    %v86 = vld [vmem:[%s2] ss:$8 sm:$0x3]
    %v87 = vld [vmem:[#allocation2] sm:$0xfe]
    %v88 = vld [vmem:[#allocation2 + $0x8] sm:$0xfe]
    %v89 = vld [vmem:[#allocation2 + $0x10] sm:$0xfe]
    %v90 = vld [vmem:[#allocation2 + $0x18] sm:$0xff]
    %v91 = vld [vmem:[#allocation2 + $0x20] sm:$0xff]
    %v92 = vld [vmem:[#allocation2 + $0x28] sm:$0xff]
    %v93 = vld [vmem:[#allocation2 + $0x30] sm:$0x1]
    %v94 = vld [vmem:[#allocation2 + $0x38] sm:$0x1]
    %v95 = vld [vmem:[#allocation2 + $0x40] sm:$0x1]
    %v97 = vlaneseq
    %v98 = vshrl.u32 %v97, 7
    %v99 = vsub.s32 0, %v98
    %v100 = vrot.slane %v86, %v99
    %v101 = vlaneseq
    %v102 = vshrl.u32 %v101, 7
    %v103 = vsub.s32 1, %v102
    %v104 = vrot.slane %v86, %v103
    %vm116 = vcmask 1046528
    %v117 = vrot.slane %v87, 1
    %v118 = vrot.slane %v90, 1
    %v119 = vsel %vm116, %v117, %v118
    %v120 = vrot.slane %v88, 1
    %v121 = vrot.slane %v91, 1
    %v122 = vsel %vm116, %v120, %v121
    %v123 = vrot.slane %v89, 1
    %v124 = vrot.slane %v92, 1
    %v125 = vsel %vm116, %v123, %v124
    %v126 = vrot.slane %v93, 1
    %v127 = vsel %vm116, %v118, %v126
    %v128 = vrot.slane %v94, 1
    %v129 = vsel %vm116, %v121, %v128
    %v130 = vrot.slane %v95, 1
    %v131 = vsel %vm116, %v124, %v130
    %132 = vrot.lane.b32.xlu0 %v119, 127
    %v133 = vpop.permute.xlu0 %132
    %134 = vrot.lane.b32.xlu0 %v122, 127
    %v135 = vpop.permute.xlu0 %134
    %136 = vrot.lane.b32.xlu0 %v125, 127
    %v137 = vpop.permute.xlu0 %136
    %138 = vrot.lane.b32.xlu0 %v127, 127
    %v139 = vpop.permute.xlu0 %138
    %140 = vrot.lane.b32.xlu0 %v129, 127
    %v141 = vpop.permute.xlu0 %140
    %142 = vrot.lane.b32.xlu0 %v131, 127
    %v143 = vpop.permute.xlu0 %142
    %vm144 = vcmask 1039360
    %v145 = vsel %vm144, %v133, %v135
    %v146 = vsel %vm144, %v135, %v137
    %v147 = vsel %vm144, %v139, %v141
    %v148 = vsel %vm144, %v141, %v143
    %v153 = vmul.f32 %v100, %v145
    %v154 = vmul.f32 %v104, %v146
    %v155 = vmul.f32 %v100, %v147
    %v156 = vmul.f32 %v104, %v148
    %s157 = scalar_lea.vmem %s2, 5
    %v158 = vld [vmem:[%s157] ss:$8 sm:$0x3]
    %v159 = vld [vmem:[#allocation2] sm:$0xfc]
    %v160 = vld [vmem:[#allocation2 + $0x8] sm:$0xfc]
    %v161 = vld [vmem:[#allocation2 + $0x10] sm:$0xfc]
    %v162 = vld [vmem:[#allocation2 + $0x30] sm:$0x3]
    %v163 = vld [vmem:[#allocation2 + $0x38] sm:$0x3]
    %v164 = vld [vmem:[#allocation2 + $0x40] sm:$0x3]
    %v166 = vlaneseq
    %v167 = vshrl.u32 %v166, 7
    %v168 = vsub.s32 0, %v167
    %v169 = vrot.slane %v158, %v168
    %v170 = vlaneseq
    %v171 = vshrl.u32 %v170, 7
    %v172 = vsub.s32 1, %v171
    %v173 = vrot.slane %v158, %v172
    %vm182 = vcmask 1045504
    %v183 = vrot.slane %v159, 2
    %v184 = vrot.slane %v90, 2
    %v185 = vsel %vm182, %v183, %v184
    %v186 = vrot.slane %v160, 2
    %v187 = vrot.slane %v91, 2
    %v188 = vsel %vm182, %v186, %v187
    %v189 = vrot.slane %v161, 2
    %v190 = vrot.slane %v92, 2
    %v191 = vsel %vm182, %v189, %v190
    %v192 = vrot.slane %v162, 2
    %v193 = vsel %vm182, %v184, %v192
    %v194 = vrot.slane %v163, 2
    %v195 = vsel %vm182, %v187, %v194
    %v196 = vrot.slane %v164, 2
    %v197 = vsel %vm182, %v190, %v196
    %198 = vrot.lane.b32.xlu0 %v185, 127
    %v199 = vpop.permute.xlu0 %198
    %200 = vrot.lane.b32.xlu0 %v188, 127
    %v201 = vpop.permute.xlu0 %200
    %202 = vrot.lane.b32.xlu0 %v191, 127
    %v203 = vpop.permute.xlu0 %202
    %204 = vrot.lane.b32.xlu0 %v193, 127
    %v205 = vpop.permute.xlu0 %204
    %206 = vrot.lane.b32.xlu0 %v195, 127
    %v207 = vpop.permute.xlu0 %206
    %208 = vrot.lane.b32.xlu0 %v197, 127
    %v209 = vpop.permute.xlu0 %208
    %v210 = vsel %vm144, %v199, %v201
    %v211 = vsel %vm144, %v201, %v203
    %v212 = vsel %vm144, %v205, %v207
    %v213 = vsel %vm144, %v207, %v209
    %v218 = vmul.f32 %v169, %v210
    %v219 = vmul.f32 %v173, %v211
    %v220 = vmul.f32 %v169, %v212
    %v221 = vmul.f32 %v173, %v213
    %v222 = vadd.f32 %v153, %v218
    %v223 = vadd.f32 %v154, %v219
    %v224 = vadd.f32 %v155, %v220
    %v225 = vadd.f32 %v156, %v221
    %s226 = scalar_lea.vmem %s2, 18
    %v227 = vld [vmem:[%s226] ss:$8 sm:$0x3]
    %v228 = vld [vmem:[#allocation2] sm:$0xf8]
    %v229 = vld [vmem:[#allocation2 + $0x8] sm:$0xf8]
    %v230 = vld [vmem:[#allocation2 + $0x10] sm:$0xf8]
    %v231 = vld [vmem:[#allocation2 + $0x30] sm:$0x7]
    %v232 = vld [vmem:[#allocation2 + $0x38] sm:$0x7]
    %v233 = vld [vmem:[#allocation2 + $0x40] sm:$0x7]
    %v235 = vlaneseq
    %v236 = vshrl.u32 %v235, 7
    %v237 = vsub.s32 0, %v236
    %v238 = vrot.slane %v227, %v237
    %v239 = vlaneseq
    %v240 = vshrl.u32 %v239, 7
    %v241 = vsub.s32 1, %v240
    %v242 = vrot.slane %v227, %v241
    %vm251 = vcmask 1044480
    %v252 = vrot.slane %v228, 3
    %v253 = vrot.slane %v90, 3
    %v254 = vsel %vm251, %v252, %v253
    %v255 = vrot.slane %v229, 3
    %v256 = vrot.slane %v91, 3
    %v257 = vsel %vm251, %v255, %v256
    %v258 = vrot.slane %v230, 3
    %v259 = vrot.slane %v92, 3
    %v260 = vsel %vm251, %v258, %v259
    %v261 = vrot.slane %v231, 3
    %v262 = vsel %vm251, %v253, %v261
    %v263 = vrot.slane %v232, 3
    %v264 = vsel %vm251, %v256, %v263
    %v265 = vrot.slane %v233, 3
    %v266 = vsel %vm251, %v259, %v265
    %267 = vrot.lane.b32.xlu0 %v254, 127
    %v268 = vpop.permute.xlu0 %267
    %269 = vrot.lane.b32.xlu0 %v257, 127
    %v270 = vpop.permute.xlu0 %269
    %271 = vrot.lane.b32.xlu0 %v260, 127
    %v272 = vpop.permute.xlu0 %271
    %273 = vrot.lane.b32.xlu0 %v262, 127
    %v274 = vpop.permute.xlu0 %273
    %275 = vrot.lane.b32.xlu0 %v264, 127
    %v276 = vpop.permute.xlu0 %275
    %277 = vrot.lane.b32.xlu0 %v266, 127
    %v278 = vpop.permute.xlu0 %277
    %v279 = vsel %vm144, %v268, %v270
    %v280 = vsel %vm144, %v270, %v272
    %v281 = vsel %vm144, %v274, %v276
    %v282 = vsel %vm144, %v276, %v278
    %v287 = vmul.f32 %v238, %v279
    %v288 = vmul.f32 %v242, %v280
    %v289 = vmul.f32 %v238, %v281
    %v290 = vmul.f32 %v242, %v282
    %v291 = vadd.f32 %v222, %v287
    %v292 = vadd.f32 %v223, %v288
    %v293 = vadd.f32 %v224, %v289
    %v294 = vadd.f32 %v225, %v290
    %s295 = scalar_lea.vmem %s2, 23
    %v296 = vld [vmem:[%s295] ss:$8 sm:$0x3]
    %v297 = vld [vmem:[#allocation2] sm:$0xf0]
    %v298 = vld [vmem:[#allocation2 + $0x8] sm:$0xf0]
    %v299 = vld [vmem:[#allocation2 + $0x10] sm:$0xf0]
    %v300 = vld [vmem:[#allocation2 + $0x30] sm:$0xf]
    %v301 = vld [vmem:[#allocation2 + $0x38] sm:$0xf]
    %v302 = vld [vmem:[#allocation2 + $0x40] sm:$0xf]
    %v304 = vlaneseq
    %v305 = vshrl.u32 %v304, 7
    %v306 = vsub.s32 0, %v305
    %v307 = vrot.slane %v296, %v306
    %v308 = vlaneseq
    %v309 = vshrl.u32 %v308, 7
    %v310 = vsub.s32 1, %v309
    %v311 = vrot.slane %v296, %v310
    %vm320 = vcmask 1043456
    %v321 = vrot.slane %v297, 4
    %v322 = vrot.slane %v90, 4
    %v323 = vsel %vm320, %v321, %v322
    %v324 = vrot.slane %v298, 4
    %v325 = vrot.slane %v91, 4
    %v326 = vsel %vm320, %v324, %v325
    %v327 = vrot.slane %v299, 4
    %v328 = vrot.slane %v92, 4
    %v329 = vsel %vm320, %v327, %v328
    %v330 = vrot.slane %v300, 4
    %v331 = vsel %vm320, %v322, %v330
    %v332 = vrot.slane %v301, 4
    %v333 = vsel %vm320, %v325, %v332
    %v334 = vrot.slane %v302, 4
    %v335 = vsel %vm320, %v328, %v334
    %336 = vrot.lane.b32.xlu0 %v323, 127
    %v337 = vpop.permute.xlu0 %336
    %338 = vrot.lane.b32.xlu0 %v326, 127
    %v339 = vpop.permute.xlu0 %338
    %340 = vrot.lane.b32.xlu0 %v329, 127
    %v341 = vpop.permute.xlu0 %340
    %342 = vrot.lane.b32.xlu0 %v331, 127
    %v343 = vpop.permute.xlu0 %342
    %344 = vrot.lane.b32.xlu0 %v333, 127
    %v345 = vpop.permute.xlu0 %344
    %346 = vrot.lane.b32.xlu0 %v335, 127
    %v347 = vpop.permute.xlu0 %346
    %v348 = vsel %vm144, %v337, %v339
    %v349 = vsel %vm144, %v339, %v341
    %v350 = vsel %vm144, %v343, %v345
    %v351 = vsel %vm144, %v345, %v347
    %v356 = vmul.f32 %v307, %v348
    %v357 = vmul.f32 %v311, %v349
    %v358 = vmul.f32 %v307, %v350
    %v359 = vmul.f32 %v311, %v351
    %v360 = vadd.f32 %v291, %v356
    %v361 = vadd.f32 %v292, %v357
    %v362 = vadd.f32 %v293, %v358
    %v363 = vadd.f32 %v294, %v359
    %s364 = scalar_lea.vmem %s2, 36
    %v365 = vld [vmem:[%s364] ss:$8 sm:$0x3]
    %v366 = vld [vmem:[#allocation2] sm:$0xe0]
    %v367 = vld [vmem:[#allocation2 + $0x8] sm:$0xe0]
    %v368 = vld [vmem:[#allocation2 + $0x10] sm:$0xe0]
    %v369 = vld [vmem:[#allocation2 + $0x30] sm:$0x1f]
    %v370 = vld [vmem:[#allocation2 + $0x38] sm:$0x1f]
    %v371 = vld [vmem:[#allocation2 + $0x40] sm:$0x1f]
    %v373 = vlaneseq
    %v374 = vshrl.u32 %v373, 7
    %v375 = vsub.s32 0, %v374
    %v376 = vrot.slane %v365, %v375
    %v377 = vlaneseq
    %v378 = vshrl.u32 %v377, 7
    %v379 = vsub.s32 1, %v378
    %v380 = vrot.slane %v365, %v379
    %vm389 = vcmask 1042432
    %v390 = vrot.slane %v366, 5
    %v391 = vrot.slane %v90, 5
    %v392 = vsel %vm389, %v390, %v391
    %v393 = vrot.slane %v367, 5
    %v394 = vrot.slane %v91, 5
    %v395 = vsel %vm389, %v393, %v394
    %v396 = vrot.slane %v368, 5
    %v397 = vrot.slane %v92, 5
    %v398 = vsel %vm389, %v396, %v397
    %v399 = vrot.slane %v369, 5
    %v400 = vsel %vm389, %v391, %v399
    %v401 = vrot.slane %v370, 5
    %v402 = vsel %vm389, %v394, %v401
    %v403 = vrot.slane %v371, 5
    %v404 = vsel %vm389, %v397, %v403
    %405 = vrot.lane.b32.xlu0 %v392, 127
    %v406 = vpop.permute.xlu0 %405
    %407 = vrot.lane.b32.xlu0 %v395, 127
    %v408 = vpop.permute.xlu0 %407
    %409 = vrot.lane.b32.xlu0 %v398, 127
    %v410 = vpop.permute.xlu0 %409
    %411 = vrot.lane.b32.xlu0 %v400, 127
    %v412 = vpop.permute.xlu0 %411
    %413 = vrot.lane.b32.xlu0 %v402, 127
    %v414 = vpop.permute.xlu0 %413
    %415 = vrot.lane.b32.xlu0 %v404, 127
    %v416 = vpop.permute.xlu0 %415
    %v417 = vsel %vm144, %v406, %v408
    %v418 = vsel %vm144, %v408, %v410
    %v419 = vsel %vm144, %v412, %v414
    %v420 = vsel %vm144, %v414, %v416
    %v425 = vmul.f32 %v376, %v417
    %v426 = vmul.f32 %v380, %v418
    %v427 = vmul.f32 %v376, %v419
    %v428 = vmul.f32 %v380, %v420
    %v429 = vadd.f32 %v360, %v425
    %v430 = vadd.f32 %v361, %v426
    %v431 = vadd.f32 %v362, %v427
    %v432 = vadd.f32 %v363, %v428
    %s433 = scalar_lea.vmem %s2, 1
    %v434 = vld [vmem:[%s433] ss:$8 sm:$0x3]
    %v436 = vlaneseq
    %v437 = vshrl.u32 %v436, 7
    %v438 = vsub.s32 0, %v437
    %v439 = vrot.slane %v434, %v438
    %v440 = vlaneseq
    %v441 = vshrl.u32 %v440, 7
    %v442 = vsub.s32 1, %v441
    %v443 = vrot.slane %v434, %v442
    %446 = vrot.lane.b32.xlu0 %v119, 126
    %v447 = vpop.permute.xlu0 %446
    %448 = vrot.lane.b32.xlu0 %v122, 126
    %v449 = vpop.permute.xlu0 %448
    %450 = vrot.lane.b32.xlu0 %v125, 126
    %v451 = vpop.permute.xlu0 %450
    %452 = vrot.lane.b32.xlu0 %v127, 126
    %v453 = vpop.permute.xlu0 %452
    %454 = vrot.lane.b32.xlu0 %v129, 126
    %v455 = vpop.permute.xlu0 %454
    %456 = vrot.lane.b32.xlu0 %v131, 126
    %v457 = vpop.permute.xlu0 %456
    %vm458 = vcmask 1031168
    %v459 = vsel %vm458, %v447, %v449
    %v460 = vsel %vm458, %v449, %v451
    %v461 = vsel %vm458, %v453, %v455
    %v462 = vsel %vm458, %v455, %v457
    %v467 = vmul.f32 %v439, %v459
    %v468 = vmul.f32 %v443, %v460
    %v469 = vmul.f32 %v439, %v461
    %v470 = vmul.f32 %v443, %v462
    %v471 = vadd.f32 %v429, %v467
    %v472 = vadd.f32 %v430, %v468
    %v473 = vadd.f32 %v431, %v469
    %v474 = vadd.f32 %v432, %v470
    %s475 = scalar_lea.vmem %s2, 6
    %v476 = vld [vmem:[%s475] ss:$8 sm:$0x3]
    %v478 = vlaneseq
    %v479 = vshrl.u32 %v478, 7
    %v480 = vsub.s32 0, %v479
    %v481 = vrot.slane %v476, %v480
    %v482 = vlaneseq
    %v483 = vshrl.u32 %v482, 7
    %v484 = vsub.s32 1, %v483
    %v485 = vrot.slane %v476, %v484
    %488 = vrot.lane.b32.xlu0 %v185, 126
    %v489 = vpop.permute.xlu0 %488
    %490 = vrot.lane.b32.xlu0 %v188, 126
    %v491 = vpop.permute.xlu0 %490
    %492 = vrot.lane.b32.xlu0 %v191, 126
    %v493 = vpop.permute.xlu0 %492
    %494 = vrot.lane.b32.xlu0 %v193, 126
    %v495 = vpop.permute.xlu0 %494
    %496 = vrot.lane.b32.xlu0 %v195, 126
    %v497 = vpop.permute.xlu0 %496
    %498 = vrot.lane.b32.xlu0 %v197, 126
    %v499 = vpop.permute.xlu0 %498
    %v500 = vsel %vm458, %v489, %v491
    %v501 = vsel %vm458, %v491, %v493
    %v502 = vsel %vm458, %v495, %v497
    %v503 = vsel %vm458, %v497, %v499
    %v508 = vmul.f32 %v481, %v500
    %v509 = vmul.f32 %v485, %v501
    %v510 = vmul.f32 %v481, %v502
    %v511 = vmul.f32 %v485, %v503
    %v512 = vadd.f32 %v471, %v508
    %v513 = vadd.f32 %v472, %v509
    %v514 = vadd.f32 %v473, %v510
    %v515 = vadd.f32 %v474, %v511
    %s516 = scalar_lea.vmem %s2, 19
    %v517 = vld [vmem:[%s516] ss:$8 sm:$0x3]
    %v519 = vlaneseq
    %v520 = vshrl.u32 %v519, 7
    %v521 = vsub.s32 0, %v520
    %v522 = vrot.slane %v517, %v521
    %v523 = vlaneseq
    %v524 = vshrl.u32 %v523, 7
    %v525 = vsub.s32 1, %v524
    %v526 = vrot.slane %v517, %v525
    %529 = vrot.lane.b32.xlu0 %v254, 126
    %v530 = vpop.permute.xlu0 %529
    %531 = vrot.lane.b32.xlu0 %v257, 126
    %v532 = vpop.permute.xlu0 %531
    %533 = vrot.lane.b32.xlu0 %v260, 126
    %v534 = vpop.permute.xlu0 %533
    %535 = vrot.lane.b32.xlu0 %v262, 126
    %v536 = vpop.permute.xlu0 %535
    %537 = vrot.lane.b32.xlu0 %v264, 126
    %v538 = vpop.permute.xlu0 %537
    %539 = vrot.lane.b32.xlu0 %v266, 126
    %v540 = vpop.permute.xlu0 %539
    %v541 = vsel %vm458, %v530, %v532
    %v542 = vsel %vm458, %v532, %v534
    %v543 = vsel %vm458, %v536, %v538
    %v544 = vsel %vm458, %v538, %v540
    %v549 = vmul.f32 %v522, %v541
    %v550 = vmul.f32 %v526, %v542
    %v551 = vmul.f32 %v522, %v543
    %v552 = vmul.f32 %v526, %v544
    %v553 = vadd.f32 %v512, %v549
    %v554 = vadd.f32 %v513, %v550
    %v555 = vadd.f32 %v514, %v551
    %v556 = vadd.f32 %v515, %v552
    %s557 = scalar_lea.vmem %s2, 32
    %v558 = vld [vmem:[%s557] ss:$8 sm:$0x3]
    %v560 = vlaneseq
    %v561 = vshrl.u32 %v560, 7
    %v562 = vsub.s32 0, %v561
    %v563 = vrot.slane %v558, %v562
    %v564 = vlaneseq
    %v565 = vshrl.u32 %v564, 7
    %v566 = vsub.s32 1, %v565
    %v567 = vrot.slane %v558, %v566
    %570 = vrot.lane.b32.xlu0 %v323, 126
    %v571 = vpop.permute.xlu0 %570
    %572 = vrot.lane.b32.xlu0 %v326, 126
    %v573 = vpop.permute.xlu0 %572
    %574 = vrot.lane.b32.xlu0 %v329, 126
    %v575 = vpop.permute.xlu0 %574
    %576 = vrot.lane.b32.xlu0 %v331, 126
    %v577 = vpop.permute.xlu0 %576
    %578 = vrot.lane.b32.xlu0 %v333, 126
    %v579 = vpop.permute.xlu0 %578
    %580 = vrot.lane.b32.xlu0 %v335, 126
    %v581 = vpop.permute.xlu0 %580
    %v582 = vsel %vm458, %v571, %v573
    %v583 = vsel %vm458, %v573, %v575
    %v584 = vsel %vm458, %v577, %v579
    %v585 = vsel %vm458, %v579, %v581
    %v590 = vmul.f32 %v563, %v582
    %v591 = vmul.f32 %v567, %v583
    %v592 = vmul.f32 %v563, %v584
    %v593 = vmul.f32 %v567, %v585
    %v594 = vadd.f32 %v553, %v590
    %v595 = vadd.f32 %v554, %v591
    %v596 = vadd.f32 %v555, %v592
    %v597 = vadd.f32 %v556, %v593
    %s598 = scalar_lea.vmem %s2, 37
    %v599 = vld [vmem:[%s598] ss:$8 sm:$0x3]
    %v601 = vlaneseq
    %v602 = vshrl.u32 %v601, 7
    %v603 = vsub.s32 0, %v602
    %v604 = vrot.slane %v599, %v603
    %v605 = vlaneseq
    %v606 = vshrl.u32 %v605, 7
    %v607 = vsub.s32 1, %v606
    %v608 = vrot.slane %v599, %v607
    %611 = vrot.lane.b32.xlu0 %v392, 126
    %v612 = vpop.permute.xlu0 %611
    %613 = vrot.lane.b32.xlu0 %v395, 126
    %v614 = vpop.permute.xlu0 %613
    %615 = vrot.lane.b32.xlu0 %v398, 126
    %v616 = vpop.permute.xlu0 %615
    %617 = vrot.lane.b32.xlu0 %v400, 126
    %v618 = vpop.permute.xlu0 %617
    %619 = vrot.lane.b32.xlu0 %v402, 126
    %v620 = vpop.permute.xlu0 %619
    %621 = vrot.lane.b32.xlu0 %v404, 126
    %v622 = vpop.permute.xlu0 %621
    %v623 = vsel %vm458, %v612, %v614
    %v624 = vsel %vm458, %v614, %v616
    %v625 = vsel %vm458, %v618, %v620
    %v626 = vsel %vm458, %v620, %v622
    %v631 = vmul.f32 %v604, %v623
    %v632 = vmul.f32 %v608, %v624
    %v633 = vmul.f32 %v604, %v625
    %v634 = vmul.f32 %v608, %v626
    %v635 = vadd.f32 %v594, %v631
    %v636 = vadd.f32 %v595, %v632
    %v637 = vadd.f32 %v596, %v633
    %v638 = vadd.f32 %v597, %v634
    %s639 = scalar_lea.vmem %s2, 2
    %v640 = vld [vmem:[%s639] ss:$8 sm:$0x3]
    %v642 = vlaneseq
    %v643 = vshrl.u32 %v642, 7
    %v644 = vsub.s32 0, %v643
    %v645 = vrot.slane %v640, %v644
    %v646 = vlaneseq
    %v647 = vshrl.u32 %v646, 7
    %v648 = vsub.s32 1, %v647
    %v649 = vrot.slane %v640, %v648
    %652 = vrot.lane.b32.xlu0 %v119, 125
    %v653 = vpop.permute.xlu0 %652
    %654 = vrot.lane.b32.xlu0 %v122, 125
    %v655 = vpop.permute.xlu0 %654
    %656 = vrot.lane.b32.xlu0 %v125, 125
    %v657 = vpop.permute.xlu0 %656
    %658 = vrot.lane.b32.xlu0 %v127, 125
    %v659 = vpop.permute.xlu0 %658
    %660 = vrot.lane.b32.xlu0 %v129, 125
    %v661 = vpop.permute.xlu0 %660
    %662 = vrot.lane.b32.xlu0 %v131, 125
    %v663 = vpop.permute.xlu0 %662
    %vm664 = vcmask 1022976
    %v665 = vsel %vm664, %v653, %v655
    %v666 = vsel %vm664, %v655, %v657
    %v667 = vsel %vm664, %v659, %v661
    %v668 = vsel %vm664, %v661, %v663
    %v673 = vmul.f32 %v645, %v665
    %v674 = vmul.f32 %v649, %v666
    %v675 = vmul.f32 %v645, %v667
    %v676 = vmul.f32 %v649, %v668
    %v677 = vadd.f32 %v635, %v673
    %v678 = vadd.f32 %v636, %v674
    %v679 = vadd.f32 %v637, %v675
    %v680 = vadd.f32 %v638, %v676
    %s681 = scalar_lea.vmem %s2, 7
    %v682 = vld [vmem:[%s681] ss:$8 sm:$0x3]
    %v684 = vlaneseq
    %v685 = vshrl.u32 %v684, 7
    %v686 = vsub.s32 0, %v685
    %v687 = vrot.slane %v682, %v686
    %v688 = vlaneseq
    %v689 = vshrl.u32 %v688, 7
    %v690 = vsub.s32 1, %v689
    %v691 = vrot.slane %v682, %v690
    %694 = vrot.lane.b32.xlu0 %v185, 125
    %v695 = vpop.permute.xlu0 %694
    %696 = vrot.lane.b32.xlu0 %v188, 125
    %v697 = vpop.permute.xlu0 %696
    %698 = vrot.lane.b32.xlu0 %v191, 125
    %v699 = vpop.permute.xlu0 %698
    %700 = vrot.lane.b32.xlu0 %v193, 125
    %v701 = vpop.permute.xlu0 %700
    %702 = vrot.lane.b32.xlu0 %v195, 125
    %v703 = vpop.permute.xlu0 %702
    %704 = vrot.lane.b32.xlu0 %v197, 125
    %v705 = vpop.permute.xlu0 %704
    %v706 = vsel %vm664, %v695, %v697
    %v707 = vsel %vm664, %v697, %v699
    %v708 = vsel %vm664, %v701, %v703
    %v709 = vsel %vm664, %v703, %v705
    %v714 = vmul.f32 %v687, %v706
    %v715 = vmul.f32 %v691, %v707
    %v716 = vmul.f32 %v687, %v708
    %v717 = vmul.f32 %v691, %v709
    %v718 = vadd.f32 %v677, %v714
    %v719 = vadd.f32 %v678, %v715
    %v720 = vadd.f32 %v679, %v716
    %v721 = vadd.f32 %v680, %v717
    %s722 = scalar_lea.vmem %s2, 20
    %v723 = vld [vmem:[%s722] ss:$8 sm:$0x3]
    %v725 = vlaneseq
    %v726 = vshrl.u32 %v725, 7
    %v727 = vsub.s32 0, %v726
    %v728 = vrot.slane %v723, %v727
    %v729 = vlaneseq
    %v730 = vshrl.u32 %v729, 7
    %v731 = vsub.s32 1, %v730
    %v732 = vrot.slane %v723, %v731
    %735 = vrot.lane.b32.xlu0 %v254, 125
    %v736 = vpop.permute.xlu0 %735
    %737 = vrot.lane.b32.xlu0 %v257, 125
    %v738 = vpop.permute.xlu0 %737
    %739 = vrot.lane.b32.xlu0 %v260, 125
    %v740 = vpop.permute.xlu0 %739
    %741 = vrot.lane.b32.xlu0 %v262, 125
    %v742 = vpop.permute.xlu0 %741
    %743 = vrot.lane.b32.xlu0 %v264, 125
    %v744 = vpop.permute.xlu0 %743
    %745 = vrot.lane.b32.xlu0 %v266, 125
    %v746 = vpop.permute.xlu0 %745
    %v747 = vsel %vm664, %v736, %v738
    %v748 = vsel %vm664, %v738, %v740
    %v749 = vsel %vm664, %v742, %v744
    %v750 = vsel %vm664, %v744, %v746
    %v755 = vmul.f32 %v728, %v747
    %v756 = vmul.f32 %v732, %v748
    %v757 = vmul.f32 %v728, %v749
    %v758 = vmul.f32 %v732, %v750
    %v759 = vadd.f32 %v718, %v755
    %v760 = vadd.f32 %v719, %v756
    %v761 = vadd.f32 %v720, %v757
    %v762 = vadd.f32 %v721, %v758
    %s763 = scalar_lea.vmem %s2, 33
    %v764 = vld [vmem:[%s763] ss:$8 sm:$0x3]
    %v766 = vlaneseq
    %v767 = vshrl.u32 %v766, 7
    %v768 = vsub.s32 0, %v767
    %v769 = vrot.slane %v764, %v768
    %v770 = vlaneseq
    %v771 = vshrl.u32 %v770, 7
    %v772 = vsub.s32 1, %v771
    %v773 = vrot.slane %v764, %v772
    %776 = vrot.lane.b32.xlu0 %v323, 125
    %v777 = vpop.permute.xlu0 %776
    %778 = vrot.lane.b32.xlu0 %v326, 125
    %v779 = vpop.permute.xlu0 %778
    %780 = vrot.lane.b32.xlu0 %v329, 125
    %v781 = vpop.permute.xlu0 %780
    %782 = vrot.lane.b32.xlu0 %v331, 125
    %v783 = vpop.permute.xlu0 %782
    %784 = vrot.lane.b32.xlu0 %v333, 125
    %v785 = vpop.permute.xlu0 %784
    %786 = vrot.lane.b32.xlu0 %v335, 125
    %v787 = vpop.permute.xlu0 %786
    %v788 = vsel %vm664, %v777, %v779
    %v789 = vsel %vm664, %v779, %v781
    %v790 = vsel %vm664, %v783, %v785
    %v791 = vsel %vm664, %v785, %v787
    %v796 = vmul.f32 %v769, %v788
    %v797 = vmul.f32 %v773, %v789
    %v798 = vmul.f32 %v769, %v790
    %v799 = vmul.f32 %v773, %v791
    %v800 = vadd.f32 %v759, %v796
    %v801 = vadd.f32 %v760, %v797
    %v802 = vadd.f32 %v761, %v798
    %v803 = vadd.f32 %v762, %v799
    %s804 = scalar_lea.vmem %s2, 38
    %v805 = vld [vmem:[%s804] ss:$8 sm:$0x3]
    %v807 = vlaneseq
    %v808 = vshrl.u32 %v807, 7
    %v809 = vsub.s32 0, %v808
    %v810 = vrot.slane %v805, %v809
    %v811 = vlaneseq
    %v812 = vshrl.u32 %v811, 7
    %v813 = vsub.s32 1, %v812
    %v814 = vrot.slane %v805, %v813
    %817 = vrot.lane.b32.xlu0 %v392, 125
    %v818 = vpop.permute.xlu0 %817
    %819 = vrot.lane.b32.xlu0 %v395, 125
    %v820 = vpop.permute.xlu0 %819
    %821 = vrot.lane.b32.xlu0 %v398, 125
    %v822 = vpop.permute.xlu0 %821
    %823 = vrot.lane.b32.xlu0 %v400, 125
    %v824 = vpop.permute.xlu0 %823
    %825 = vrot.lane.b32.xlu0 %v402, 125
    %v826 = vpop.permute.xlu0 %825
    %827 = vrot.lane.b32.xlu0 %v404, 125
    %v828 = vpop.permute.xlu0 %827
    %v829 = vsel %vm664, %v818, %v820
    %v830 = vsel %vm664, %v820, %v822
    %v831 = vsel %vm664, %v824, %v826
    %v832 = vsel %vm664, %v826, %v828
    %v837 = vmul.f32 %v810, %v829
    %v838 = vmul.f32 %v814, %v830
    %v839 = vmul.f32 %v810, %v831
    %v840 = vmul.f32 %v814, %v832
    %v841 = vadd.f32 %v800, %v837
    %v842 = vadd.f32 %v801, %v838
    %v843 = vadd.f32 %v802, %v839
    %v844 = vadd.f32 %v803, %v840
    %s845 = scalar_lea.vmem %s2, 3
    %v846 = vld [vmem:[%s845] ss:$8 sm:$0x3]
    %v848 = vlaneseq
    %v849 = vshrl.u32 %v848, 7
    %v850 = vsub.s32 0, %v849
    %v851 = vrot.slane %v846, %v850
    %v852 = vlaneseq
    %v853 = vshrl.u32 %v852, 7
    %v854 = vsub.s32 1, %v853
    %v855 = vrot.slane %v846, %v854
    %858 = vrot.lane.b32.xlu0 %v119, 124
    %v859 = vpop.permute.xlu0 %858
    %860 = vrot.lane.b32.xlu0 %v122, 124
    %v861 = vpop.permute.xlu0 %860
    %862 = vrot.lane.b32.xlu0 %v125, 124
    %v863 = vpop.permute.xlu0 %862
    %864 = vrot.lane.b32.xlu0 %v127, 124
    %v865 = vpop.permute.xlu0 %864
    %866 = vrot.lane.b32.xlu0 %v129, 124
    %v867 = vpop.permute.xlu0 %866
    %868 = vrot.lane.b32.xlu0 %v131, 124
    %v869 = vpop.permute.xlu0 %868
    %vm870 = vcmask 1014784
    %v871 = vsel %vm870, %v859, %v861
    %v872 = vsel %vm870, %v861, %v863
    %v873 = vsel %vm870, %v865, %v867
    %v874 = vsel %vm870, %v867, %v869
    %v879 = vmul.f32 %v851, %v871
    %v880 = vmul.f32 %v855, %v872
    %v881 = vmul.f32 %v851, %v873
    %v882 = vmul.f32 %v855, %v874
    %v883 = vadd.f32 %v841, %v879
    %v884 = vadd.f32 %v842, %v880
    %v885 = vadd.f32 %v843, %v881
    %v886 = vadd.f32 %v844, %v882
    %s887 = scalar_lea.vmem %s2, 16
    %v888 = vld [vmem:[%s887] ss:$8 sm:$0x3]
    %v890 = vlaneseq
    %v891 = vshrl.u32 %v890, 7
    %v892 = vsub.s32 0, %v891
    %v893 = vrot.slane %v888, %v892
    %v894 = vlaneseq
    %v895 = vshrl.u32 %v894, 7
    %v896 = vsub.s32 1, %v895
    %v897 = vrot.slane %v888, %v896
    %900 = vrot.lane.b32.xlu0 %v185, 124
    %v901 = vpop.permute.xlu0 %900
    %902 = vrot.lane.b32.xlu0 %v188, 124
    %v903 = vpop.permute.xlu0 %902
    %904 = vrot.lane.b32.xlu0 %v191, 124
    %v905 = vpop.permute.xlu0 %904
    %906 = vrot.lane.b32.xlu0 %v193, 124
    %v907 = vpop.permute.xlu0 %906
    %908 = vrot.lane.b32.xlu0 %v195, 124
    %v909 = vpop.permute.xlu0 %908
    %910 = vrot.lane.b32.xlu0 %v197, 124
    %v911 = vpop.permute.xlu0 %910
    %v912 = vsel %vm870, %v901, %v903
    %v913 = vsel %vm870, %v903, %v905
    %v914 = vsel %vm870, %v907, %v909
    %v915 = vsel %vm870, %v909, %v911
    %v920 = vmul.f32 %v893, %v912
    %v921 = vmul.f32 %v897, %v913
    %v922 = vmul.f32 %v893, %v914
    %v923 = vmul.f32 %v897, %v915
    %v924 = vadd.f32 %v883, %v920
    %v925 = vadd.f32 %v884, %v921
    %v926 = vadd.f32 %v885, %v922
    %v927 = vadd.f32 %v886, %v923
    %s928 = scalar_lea.vmem %s2, 21
    %v929 = vld [vmem:[%s928] ss:$8 sm:$0x3]
    %v931 = vlaneseq
    %v932 = vshrl.u32 %v931, 7
    %v933 = vsub.s32 0, %v932
    %v934 = vrot.slane %v929, %v933
    %v935 = vlaneseq
    %v936 = vshrl.u32 %v935, 7
    %v937 = vsub.s32 1, %v936
    %v938 = vrot.slane %v929, %v937
    %941 = vrot.lane.b32.xlu0 %v254, 124
    %v942 = vpop.permute.xlu0 %941
    %943 = vrot.lane.b32.xlu0 %v257, 124
    %v944 = vpop.permute.xlu0 %943
    %945 = vrot.lane.b32.xlu0 %v260, 124
    %v946 = vpop.permute.xlu0 %945
    %947 = vrot.lane.b32.xlu0 %v262, 124
    %v948 = vpop.permute.xlu0 %947
    %949 = vrot.lane.b32.xlu0 %v264, 124
    %v950 = vpop.permute.xlu0 %949
    %951 = vrot.lane.b32.xlu0 %v266, 124
    %v952 = vpop.permute.xlu0 %951
    %v953 = vsel %vm870, %v942, %v944
    %v954 = vsel %vm870, %v944, %v946
    %v955 = vsel %vm870, %v948, %v950
    %v956 = vsel %vm870, %v950, %v952
    %v961 = vmul.f32 %v934, %v953
    %v962 = vmul.f32 %v938, %v954
    %v963 = vmul.f32 %v934, %v955
    %v964 = vmul.f32 %v938, %v956
    %v965 = vadd.f32 %v924, %v961
    %v966 = vadd.f32 %v925, %v962
    %v967 = vadd.f32 %v926, %v963
    %v968 = vadd.f32 %v927, %v964
    %s969 = scalar_lea.vmem %s2, 34
    %v970 = vld [vmem:[%s969] ss:$8 sm:$0x3]
    %v972 = vlaneseq
    %v973 = vshrl.u32 %v972, 7
    %v974 = vsub.s32 0, %v973
    %v975 = vrot.slane %v970, %v974
    %v976 = vlaneseq
    %v977 = vshrl.u32 %v976, 7
    %v978 = vsub.s32 1, %v977
    %v979 = vrot.slane %v970, %v978
    %982 = vrot.lane.b32.xlu0 %v323, 124
    %v983 = vpop.permute.xlu0 %982
    %984 = vrot.lane.b32.xlu0 %v326, 124
    %v985 = vpop.permute.xlu0 %984
    %986 = vrot.lane.b32.xlu0 %v329, 124
    %v987 = vpop.permute.xlu0 %986
    %988 = vrot.lane.b32.xlu0 %v331, 124
    %v989 = vpop.permute.xlu0 %988
    %990 = vrot.lane.b32.xlu0 %v333, 124
    %v991 = vpop.permute.xlu0 %990
    %992 = vrot.lane.b32.xlu0 %v335, 124
    %v993 = vpop.permute.xlu0 %992
    %v994 = vsel %vm870, %v983, %v985
    %v995 = vsel %vm870, %v985, %v987
    %v996 = vsel %vm870, %v989, %v991
    %v997 = vsel %vm870, %v991, %v993
    %v1002 = vmul.f32 %v975, %v994
    %v1003 = vmul.f32 %v979, %v995
    %v1004 = vmul.f32 %v975, %v996
    %v1005 = vmul.f32 %v979, %v997
    %v1006 = vadd.f32 %v965, %v1002
    %v1007 = vadd.f32 %v966, %v1003
    %v1008 = vadd.f32 %v967, %v1004
    %v1009 = vadd.f32 %v968, %v1005
    %s1010 = scalar_lea.vmem %s2, 39
    %v1011 = vld [vmem:[%s1010] ss:$8 sm:$0x3]
    %v1013 = vlaneseq
    %v1014 = vshrl.u32 %v1013, 7
    %v1015 = vsub.s32 0, %v1014
    %v1016 = vrot.slane %v1011, %v1015
    %v1017 = vlaneseq
    %v1018 = vshrl.u32 %v1017, 7
    %v1019 = vsub.s32 1, %v1018
    %v1020 = vrot.slane %v1011, %v1019
    %1023 = vrot.lane.b32.xlu0 %v392, 124
    %v1024 = vpop.permute.xlu0 %1023
    %1025 = vrot.lane.b32.xlu0 %v395, 124
    %v1026 = vpop.permute.xlu0 %1025
    %1027 = vrot.lane.b32.xlu0 %v398, 124
    %v1028 = vpop.permute.xlu0 %1027
    %1029 = vrot.lane.b32.xlu0 %v400, 124
    %v1030 = vpop.permute.xlu0 %1029
    %1031 = vrot.lane.b32.xlu0 %v402, 124
    %v1032 = vpop.permute.xlu0 %1031
    %1033 = vrot.lane.b32.xlu0 %v404, 124
    %v1034 = vpop.permute.xlu0 %1033
    %v1035 = vsel %vm870, %v1024, %v1026
    %v1036 = vsel %vm870, %v1026, %v1028
    %v1037 = vsel %vm870, %v1030, %v1032
    %v1038 = vsel %vm870, %v1032, %v1034
    %v1043 = vmul.f32 %v1016, %v1035
    %v1044 = vmul.f32 %v1020, %v1036
    %v1045 = vmul.f32 %v1016, %v1037
    %v1046 = vmul.f32 %v1020, %v1038
    %v1047 = vadd.f32 %v1006, %v1043
    %v1048 = vadd.f32 %v1007, %v1044
    %v1049 = vadd.f32 %v1008, %v1045
    %v1050 = vadd.f32 %v1009, %v1046
    %s1051 = scalar_lea.vmem %s2, 4
    %v1052 = vld [vmem:[%s1051] ss:$8 sm:$0x3]
    %v1054 = vlaneseq
    %v1055 = vshrl.u32 %v1054, 7
    %v1056 = vsub.s32 0, %v1055
    %v1057 = vrot.slane %v1052, %v1056
    %v1058 = vlaneseq
    %v1059 = vshrl.u32 %v1058, 7
    %v1060 = vsub.s32 1, %v1059
    %v1061 = vrot.slane %v1052, %v1060
    %1064 = vrot.lane.b32.xlu0 %v119, 123
    %v1065 = vpop.permute.xlu0 %1064
    %1066 = vrot.lane.b32.xlu0 %v122, 123
    %v1067 = vpop.permute.xlu0 %1066
    %1068 = vrot.lane.b32.xlu0 %v125, 123
    %v1069 = vpop.permute.xlu0 %1068
    %1070 = vrot.lane.b32.xlu0 %v127, 123
    %v1071 = vpop.permute.xlu0 %1070
    %1072 = vrot.lane.b32.xlu0 %v129, 123
    %v1073 = vpop.permute.xlu0 %1072
    %1074 = vrot.lane.b32.xlu0 %v131, 123
    %v1075 = vpop.permute.xlu0 %1074
    %vm1076 = vcmask 1006592
    %v1077 = vsel %vm1076, %v1065, %v1067
    %v1078 = vsel %vm1076, %v1067, %v1069
    %v1079 = vsel %vm1076, %v1071, %v1073
    %v1080 = vsel %vm1076, %v1073, %v1075
    %v1085 = vmul.f32 %v1057, %v1077
    %v1086 = vmul.f32 %v1061, %v1078
    %v1087 = vmul.f32 %v1057, %v1079
    %v1088 = vmul.f32 %v1061, %v1080
    %v1089 = vadd.f32 %v1047, %v1085
    %v1090 = vadd.f32 %v1048, %v1086
    %v1091 = vadd.f32 %v1049, %v1087
    %v1092 = vadd.f32 %v1050, %v1088
    %s1093 = scalar_lea.vmem %s2, 17
    %v1094 = vld [vmem:[%s1093] ss:$8 sm:$0x3]
    %v1096 = vlaneseq
    %v1097 = vshrl.u32 %v1096, 7
    %v1098 = vsub.s32 0, %v1097
    %v1099 = vrot.slane %v1094, %v1098
    %v1100 = vlaneseq
    %v1101 = vshrl.u32 %v1100, 7
    %v1102 = vsub.s32 1, %v1101
    %v1103 = vrot.slane %v1094, %v1102
    %1106 = vrot.lane.b32.xlu0 %v185, 123
    %v1107 = vpop.permute.xlu0 %1106
    %1108 = vrot.lane.b32.xlu0 %v188, 123
    %v1109 = vpop.permute.xlu0 %1108
    %1110 = vrot.lane.b32.xlu0 %v191, 123
    %v1111 = vpop.permute.xlu0 %1110
    %1112 = vrot.lane.b32.xlu0 %v193, 123
    %v1113 = vpop.permute.xlu0 %1112
    %1114 = vrot.lane.b32.xlu0 %v195, 123
    %v1115 = vpop.permute.xlu0 %1114
    %1116 = vrot.lane.b32.xlu0 %v197, 123
    %v1117 = vpop.permute.xlu0 %1116
    %v1118 = vsel %vm1076, %v1107, %v1109
    %v1119 = vsel %vm1076, %v1109, %v1111
    %v1120 = vsel %vm1076, %v1113, %v1115
    %v1121 = vsel %vm1076, %v1115, %v1117
    %v1126 = vmul.f32 %v1099, %v1118
    %v1127 = vmul.f32 %v1103, %v1119
    %v1128 = vmul.f32 %v1099, %v1120
    %v1129 = vmul.f32 %v1103, %v1121
    %v1130 = vadd.f32 %v1089, %v1126
    %v1131 = vadd.f32 %v1090, %v1127
    %v1132 = vadd.f32 %v1091, %v1128
    %v1133 = vadd.f32 %v1092, %v1129
    %s1134 = scalar_lea.vmem %s2, 22
    %v1135 = vld [vmem:[%s1134] ss:$8 sm:$0x3]
    %v1137 = vlaneseq
    %v1138 = vshrl.u32 %v1137, 7
    %v1139 = vsub.s32 0, %v1138
    %v1140 = vrot.slane %v1135, %v1139
    %v1141 = vlaneseq
    %v1142 = vshrl.u32 %v1141, 7
    %v1143 = vsub.s32 1, %v1142
    %v1144 = vrot.slane %v1135, %v1143
    %1147 = vrot.lane.b32.xlu0 %v254, 123
    %v1148 = vpop.permute.xlu0 %1147
    %1149 = vrot.lane.b32.xlu0 %v257, 123
    %v1150 = vpop.permute.xlu0 %1149
    %1151 = vrot.lane.b32.xlu0 %v260, 123
    %v1152 = vpop.permute.xlu0 %1151
    %1153 = vrot.lane.b32.xlu0 %v262, 123
    %v1154 = vpop.permute.xlu0 %1153
    %1155 = vrot.lane.b32.xlu0 %v264, 123
    %v1156 = vpop.permute.xlu0 %1155
    %1157 = vrot.lane.b32.xlu0 %v266, 123
    %v1158 = vpop.permute.xlu0 %1157
    %v1159 = vsel %vm1076, %v1148, %v1150
    %v1160 = vsel %vm1076, %v1150, %v1152
    %v1161 = vsel %vm1076, %v1154, %v1156
    %v1162 = vsel %vm1076, %v1156, %v1158
    %v1167 = vmul.f32 %v1140, %v1159
    %v1168 = vmul.f32 %v1144, %v1160
    %v1169 = vmul.f32 %v1140, %v1161
    %v1170 = vmul.f32 %v1144, %v1162
    %v1171 = vadd.f32 %v1130, %v1167
    %v1172 = vadd.f32 %v1131, %v1168
    %v1173 = vadd.f32 %v1132, %v1169
    %v1174 = vadd.f32 %v1133, %v1170
    %s1175 = scalar_lea.vmem %s2, 35
    %v1176 = vld [vmem:[%s1175] ss:$8 sm:$0x3]
    %v1178 = vlaneseq
    %v1179 = vshrl.u32 %v1178, 7
    %v1180 = vsub.s32 0, %v1179
    %v1181 = vrot.slane %v1176, %v1180
    %v1182 = vlaneseq
    %v1183 = vshrl.u32 %v1182, 7
    %v1184 = vsub.s32 1, %v1183
    %v1185 = vrot.slane %v1176, %v1184
    %1188 = vrot.lane.b32.xlu0 %v323, 123
    %v1189 = vpop.permute.xlu0 %1188
    %1190 = vrot.lane.b32.xlu0 %v326, 123
    %v1191 = vpop.permute.xlu0 %1190
    %1192 = vrot.lane.b32.xlu0 %v329, 123
    %v1193 = vpop.permute.xlu0 %1192
    %1194 = vrot.lane.b32.xlu0 %v331, 123
    %v1195 = vpop.permute.xlu0 %1194
    %1196 = vrot.lane.b32.xlu0 %v333, 123
    %v1197 = vpop.permute.xlu0 %1196
    %1198 = vrot.lane.b32.xlu0 %v335, 123
    %v1199 = vpop.permute.xlu0 %1198
    %v1200 = vsel %vm1076, %v1189, %v1191
    %v1201 = vsel %vm1076, %v1191, %v1193
    %v1202 = vsel %vm1076, %v1195, %v1197
    %v1203 = vsel %vm1076, %v1197, %v1199
    %v1208 = vmul.f32 %v1181, %v1200
    %v1209 = vmul.f32 %v1185, %v1201
    %v1210 = vmul.f32 %v1181, %v1202
    %v1211 = vmul.f32 %v1185, %v1203
    %v1212 = vadd.f32 %v1171, %v1208
    %v1213 = vadd.f32 %v1172, %v1209
    %v1214 = vadd.f32 %v1173, %v1210
    %v1215 = vadd.f32 %v1174, %v1211
    %s1216 = scalar_lea.vmem %s2, 48
    %v1217 = vld [vmem:[%s1216] ss:$8 sm:$0x3]
    %v1219 = vlaneseq
    %v1220 = vshrl.u32 %v1219, 7
    %v1221 = vsub.s32 0, %v1220
    %v1222 = vrot.slane %v1217, %v1221
    %v1223 = vlaneseq
    %v1224 = vshrl.u32 %v1223, 7
    %v1225 = vsub.s32 1, %v1224
    %v1226 = vrot.slane %v1217, %v1225
    %1229 = vrot.lane.b32.xlu0 %v392, 123
    %v1230 = vpop.permute.xlu0 %1229
    %1231 = vrot.lane.b32.xlu0 %v395, 123
    %v1232 = vpop.permute.xlu0 %1231
    %1233 = vrot.lane.b32.xlu0 %v398, 123
    %v1234 = vpop.permute.xlu0 %1233
    %1235 = vrot.lane.b32.xlu0 %v400, 123
    %v1236 = vpop.permute.xlu0 %1235
    %1237 = vrot.lane.b32.xlu0 %v402, 123
    %v1238 = vpop.permute.xlu0 %1237
    %1239 = vrot.lane.b32.xlu0 %v404, 123
    %v1240 = vpop.permute.xlu0 %1239
    %v1241 = vsel %vm1076, %v1230, %v1232
    %v1242 = vsel %vm1076, %v1232, %v1234
    %v1243 = vsel %vm1076, %v1236, %v1238
    %v1244 = vsel %vm1076, %v1238, %v1240
    %v1249 = vmul.f32 %v1222, %v1241
    %v1250 = vmul.f32 %v1226, %v1242
    %v1251 = vmul.f32 %v1222, %v1243
    %v1252 = vmul.f32 %v1226, %v1244
    %v1253 = vadd.f32 %v1212, %v1249
    %v1254 = vadd.f32 %v1213, %v1250
    %v1255 = vadd.f32 %v1214, %v1251
    %v1256 = vadd.f32 %v1215, %v1252
    %v1257 = vld [vmem:[%s4] sm:$0xff]
    %v1258 = vld [vmem:[%s4 + $0x8] sm:$0xff]
    %v1259 = vld [vmem:[%s4 + $0x10] sm:$0xff]
    %v1260 = vld [vmem:[%s4 + $0x18] sm:$0xff]
    %v1261 = vadd.f32 %v1253, %v1257
    %v1262 = vadd.f32 %v1254, %v1258
    %v1263 = vadd.f32 %v1255, %v1259
    %v1264 = vadd.f32 %v1256, %v1260
    %v1265 = vrcp.pop %v1261
    %v1266 = vrcp.pop %v1262
    %v1267 = vrcp.pop %v1263
    %v1268 = vrcp.pop %v1264
    %v1269 = vmul.f32 %v1261, %v1265
    %v1270 = vmul.f32 %v1262, %v1266
    %v1271 = vmul.f32 %v1263, %v1267
    %v1272 = vmul.f32 %v1264, %v1268
    %v1273 = vsub.f32 2.0, %v1269
    %v1274 = vsub.f32 2.0, %v1270
    %v1275 = vsub.f32 2.0, %v1271
    %v1276 = vsub.f32 2.0, %v1272
    %v1277 = vmul.f32 %v1265, %v1273
    %v1278 = vmul.f32 %v1266, %v1274
    %v1279 = vmul.f32 %v1267, %v1275
    %v1280 = vmul.f32 %v1268, %v1276
    %v1281 = vmul.f32 %v1261, %v1277
    %v1282 = vmul.f32 %v1262, %v1278
    %v1283 = vmul.f32 %v1263, %v1279
    %v1284 = vmul.f32 %v1264, %v1280
    %v1285 = vsub.f32 2.0, %v1281
    %v1286 = vsub.f32 2.0, %v1282
    %v1287 = vsub.f32 2.0, %v1283
    %v1288 = vsub.f32 2.0, %v1284
    %v1289 = vmul.f32 %v1277, %v1285
    %v1290 = vmul.f32 %v1278, %v1286
    %v1291 = vmul.f32 %v1279, %v1287
    %v1292 = vmul.f32 %v1280, %v1288
    %v1297 = vrot.slane %v1289, 5
    %v1298 = vrot.slane %v1290, 5
    %v1299 = vrot.slane %v1291, 5
    %v1300 = vsel %vm389, %v1297, %v1299
    %v1301 = vrot.slane %v1292, 5
    %v1302 = vsel %vm389, %v1298, %v1301
    %1303 = vrot.lane.b32.xlu0 %v1297, 3
    %v1304 = vpop.permute.xlu0 %1303
    %1305 = vrot.lane.b32.xlu0 %v1298, 3
    %v1306 = vpop.permute.xlu0 %1305
    %1307 = vrot.lane.b32.xlu0 %v1300, 3
    %v1308 = vpop.permute.xlu0 %1307
    %1309 = vrot.lane.b32.xlu0 %v1302, 3
    %v1310 = vpop.permute.xlu0 %1309
    %1311 = vrot.lane.b32.xlu0 %v1299, 3
    %v1312 = vpop.permute.xlu0 %1311
    %1313 = vrot.lane.b32.xlu0 %v1301, 3
    %v1314 = vpop.permute.xlu0 %1313
    %vm1315 = vcmask 23552
    %v1316 = vsel %vm1315, %v1304, %v1306
    %v1317 = vsel %vm1315, %v1308, %v1310
    %v1318 = vsel %vm1315, %v1312, %v1314
    %v1328 = vmul.f32 %v228, %v1304
    %v1329 = vmul.f32 %v229, %v1316
    %v1330 = vmul.f32 %v230, %v1306
    %v1331 = vmul.f32 %v90, %v1308
    %v1332 = vmul.f32 %v91, %v1317
    %v1333 = vmul.f32 %v92, %v1310
    %v1334 = vmul.f32 %v231, %v1312
    %v1335 = vmul.f32 %v232, %v1318
    %v1336 = vmul.f32 %v233, %v1314
    %1337 = vst [vmem:[#allocation3] sm:$0x7] 0.0
    %1338 = vst [vmem:[#allocation3 + $0x8] sm:$0x7] 0.0
    %1339 = vst [vmem:[#allocation3 + $0x20] sm:$0x38] 0.0
    %1340 = vst [vmem:[#allocation3 + $0x28] sm:$0x38] 0.0
    %1350 = vrot.lane.b32.xlu0 %v1328, 125
    %v1351 = vpop.permute.xlu0 %1350
    %1352 = vrot.lane.b32.xlu0 %v1329, 125
    %v1353 = vpop.permute.xlu0 %1352
    %1354 = vrot.lane.b32.xlu0 %v1330, 125
    %v1355 = vpop.permute.xlu0 %1354
    %1356 = vrot.lane.b32.xlu0 %v1331, 125
    %v1357 = vpop.permute.xlu0 %1356
    %1358 = vrot.lane.b32.xlu0 %v1332, 125
    %v1359 = vpop.permute.xlu0 %1358
    %1360 = vrot.lane.b32.xlu0 %v1333, 125
    %v1361 = vpop.permute.xlu0 %1360
    %1362 = vrot.lane.b32.xlu0 %v1334, 125
    %v1363 = vpop.permute.xlu0 %1362
    %1364 = vrot.lane.b32.xlu0 %v1335, 125
    %v1365 = vpop.permute.xlu0 %1364
    %1366 = vrot.lane.b32.xlu0 %v1336, 125
    %v1367 = vpop.permute.xlu0 %1366
    %v1368 = vsel %vm664, %v1351, %v1353
    %v1369 = vsel %vm664, %v1353, %v1355
    %v1370 = vsel %vm664, %v1357, %v1359
    %v1371 = vsel %vm664, %v1359, %v1361
    %v1372 = vsel %vm664, %v1363, %v1365
    %v1373 = vsel %vm664, %v1365, %v1367
    %1380 = vst [vmem:[#allocation3] sm:$0xf8] %v1368
    %1381 = vst [vmem:[#allocation3 + $0x8] sm:$0xf8] %v1369
    %1382 = vst [vmem:[#allocation3 + $0x10] sm:$0xff] %v1370
    %1383 = vst [vmem:[#allocation3 + $0x18] sm:$0xff] %v1371
    %1384 = vst [vmem:[#allocation3 + $0x20] sm:$0x7] %v1372
    %1385 = vst [vmem:[#allocation3 + $0x28] sm:$0x7] %v1373
    %v1386 = vld [vmem:[#allocation3] sm:$0xff]
    %v1387 = vld [vmem:[#allocation3 + $0x8] sm:$0xff]
    %v1388 = vld [vmem:[#allocation3 + $0x10] sm:$0xff]
    %v1389 = vld [vmem:[#allocation3 + $0x18] sm:$0xff]
    %v1390 = vld [vmem:[#allocation3] sm:$0xfe]
    %v1391 = vld [vmem:[#allocation3 + $0x8] sm:$0xfe]
    %v1392 = vld [vmem:[#allocation3 + $0x20] sm:$0x1]
    %v1393 = vld [vmem:[#allocation3 + $0x28] sm:$0x1]
    %v1394 = vld [vmem:[#allocation3] sm:$0xfc]
    %v1395 = vld [vmem:[#allocation3 + $0x8] sm:$0xfc]
    %v1396 = vld [vmem:[#allocation3 + $0x20] sm:$0x3]
    %v1397 = vld [vmem:[#allocation3 + $0x28] sm:$0x3]
    %v1398 = vld [vmem:[#allocation3] sm:$0xf8]
    %v1399 = vld [vmem:[#allocation3 + $0x8] sm:$0xf8]
    %v1400 = vld [vmem:[#allocation3 + $0x20] sm:$0x7]
    %v1401 = vld [vmem:[#allocation3 + $0x28] sm:$0x7]
    %v1402 = vld [vmem:[#allocation3] sm:$0xf0]
    %v1403 = vld [vmem:[#allocation3 + $0x8] sm:$0xf0]
    %v1404 = vld [vmem:[#allocation3 + $0x20] sm:$0xf]
    %v1405 = vld [vmem:[#allocation3 + $0x28] sm:$0xf]
    %v1406 = vld [vmem:[#allocation3] sm:$0xe0]
    %v1407 = vld [vmem:[#allocation3 + $0x8] sm:$0xe0]
    %v1408 = vld [vmem:[#allocation3 + $0x20] sm:$0x1f]
    %v1409 = vld [vmem:[#allocation3 + $0x28] sm:$0x1f]
    %v1410 = vld [vmem:[#allocation3] sm:$0xc0]
    %v1411 = vld [vmem:[#allocation3 + $0x8] sm:$0xc0]
    %v1412 = vld [vmem:[#allocation3 + $0x20] sm:$0x3f]
    %v1413 = vld [vmem:[#allocation3 + $0x28] sm:$0x3f]
    %v1414 = vld [vmem:[%s3] ss:$8 sm:$0x3]
    %v1416 = vlaneseq
    %v1417 = vshrl.u32 %v1416, 7
    %v1418 = vsub.s32 0, %v1417
    %v1419 = vrot.slane %v1414, %v1418
    %v1420 = vlaneseq
    %v1421 = vshrl.u32 %v1420, 7
    %v1422 = vsub.s32 1, %v1421
    %v1423 = vrot.slane %v1414, %v1422
    %v1426 = vmul.f32 %v1419, %v1386
    %v1427 = vmul.f32 %v1423, %v1387
    %v1428 = vmul.f32 %v1419, %v1388
    %v1429 = vmul.f32 %v1423, %v1389
    %s1430 = scalar_lea.vmem %s3, 1
    %v1431 = vld [vmem:[%s1430] ss:$8 sm:$0x3]
    %v1433 = vlaneseq
    %v1434 = vshrl.u32 %v1433, 7
    %v1435 = vsub.s32 0, %v1434
    %v1436 = vrot.slane %v1431, %v1435
    %v1437 = vlaneseq
    %v1438 = vshrl.u32 %v1437, 7
    %v1439 = vsub.s32 1, %v1438
    %v1440 = vrot.slane %v1431, %v1439
    %v1443 = vmul.f32 %v1436, %v1390
    %v1444 = vmul.f32 %v1440, %v1391
    %v1445 = vmul.f32 %v1436, %v1388
    %v1446 = vmul.f32 %v1440, %v1389
    %v1447 = vmul.f32 %v1436, %v1392
    %v1448 = vmul.f32 %v1440, %v1393
    %v1455 = vrot.slane %v1443, 1
    %v1456 = vrot.slane %v1445, 1
    %v1457 = vsel %vm116, %v1455, %v1456
    %v1458 = vrot.slane %v1444, 1
    %v1459 = vrot.slane %v1446, 1
    %v1460 = vsel %vm116, %v1458, %v1459
    %v1461 = vrot.slane %v1447, 1
    %v1462 = vsel %vm116, %v1456, %v1461
    %v1463 = vrot.slane %v1448, 1
    %v1464 = vsel %vm116, %v1459, %v1463
    %v1469 = vadd.f32 %v1426, %v1457
    %v1470 = vadd.f32 %v1427, %v1460
    %v1471 = vadd.f32 %v1428, %v1462
    %v1472 = vadd.f32 %v1429, %v1464
    %s1473 = scalar_lea.vmem %s3, 2
    %v1474 = vld [vmem:[%s1473] ss:$8 sm:$0x3]
    %v1476 = vlaneseq
    %v1477 = vshrl.u32 %v1476, 7
    %v1478 = vsub.s32 0, %v1477
    %v1479 = vrot.slane %v1474, %v1478
    %v1480 = vlaneseq
    %v1481 = vshrl.u32 %v1480, 7
    %v1482 = vsub.s32 1, %v1481
    %v1483 = vrot.slane %v1474, %v1482
    %v1486 = vmul.f32 %v1479, %v1394
    %v1487 = vmul.f32 %v1483, %v1395
    %v1488 = vmul.f32 %v1479, %v1388
    %v1489 = vmul.f32 %v1483, %v1389
    %v1490 = vmul.f32 %v1479, %v1396
    %v1491 = vmul.f32 %v1483, %v1397
    %v1498 = vrot.slane %v1486, 2
    %v1499 = vrot.slane %v1488, 2
    %v1500 = vsel %vm182, %v1498, %v1499
    %v1501 = vrot.slane %v1487, 2
    %v1502 = vrot.slane %v1489, 2
    %v1503 = vsel %vm182, %v1501, %v1502
    %v1504 = vrot.slane %v1490, 2
    %v1505 = vsel %vm182, %v1499, %v1504
    %v1506 = vrot.slane %v1491, 2
    %v1507 = vsel %vm182, %v1502, %v1506
    %v1512 = vadd.f32 %v1469, %v1500
    %v1513 = vadd.f32 %v1470, %v1503
    %v1514 = vadd.f32 %v1471, %v1505
    %v1515 = vadd.f32 %v1472, %v1507
    %s1516 = scalar_lea.vmem %s3, 3
    %v1517 = vld [vmem:[%s1516] ss:$8 sm:$0x3]
    %v1519 = vlaneseq
    %v1520 = vshrl.u32 %v1519, 7
    %v1521 = vsub.s32 0, %v1520
    %v1522 = vrot.slane %v1517, %v1521
    %v1523 = vlaneseq
    %v1524 = vshrl.u32 %v1523, 7
    %v1525 = vsub.s32 1, %v1524
    %v1526 = vrot.slane %v1517, %v1525
    %v1529 = vmul.f32 %v1522, %v1398
    %v1530 = vmul.f32 %v1526, %v1399
    %v1531 = vmul.f32 %v1522, %v1388
    %v1532 = vmul.f32 %v1526, %v1389
    %v1533 = vmul.f32 %v1522, %v1400
    %v1534 = vmul.f32 %v1526, %v1401
    %v1541 = vrot.slane %v1529, 3
    %v1542 = vrot.slane %v1531, 3
    %v1543 = vsel %vm251, %v1541, %v1542
    %v1544 = vrot.slane %v1530, 3
    %v1545 = vrot.slane %v1532, 3
    %v1546 = vsel %vm251, %v1544, %v1545
    %v1547 = vrot.slane %v1533, 3
    %v1548 = vsel %vm251, %v1542, %v1547
    %v1549 = vrot.slane %v1534, 3
    %v1550 = vsel %vm251, %v1545, %v1549
    %v1555 = vadd.f32 %v1512, %v1543
    %v1556 = vadd.f32 %v1513, %v1546
    %v1557 = vadd.f32 %v1514, %v1548
    %v1558 = vadd.f32 %v1515, %v1550
    %s1559 = scalar_lea.vmem %s3, 4
    %v1560 = vld [vmem:[%s1559] ss:$8 sm:$0x3]
    %v1562 = vlaneseq
    %v1563 = vshrl.u32 %v1562, 7
    %v1564 = vsub.s32 0, %v1563
    %v1565 = vrot.slane %v1560, %v1564
    %v1566 = vlaneseq
    %v1567 = vshrl.u32 %v1566, 7
    %v1568 = vsub.s32 1, %v1567
    %v1569 = vrot.slane %v1560, %v1568
    %v1572 = vmul.f32 %v1565, %v1402
    %v1573 = vmul.f32 %v1569, %v1403
    %v1574 = vmul.f32 %v1565, %v1388
    %v1575 = vmul.f32 %v1569, %v1389
    %v1576 = vmul.f32 %v1565, %v1404
    %v1577 = vmul.f32 %v1569, %v1405
    %v1584 = vrot.slane %v1572, 4
    %v1585 = vrot.slane %v1574, 4
    %v1586 = vsel %vm320, %v1584, %v1585
    %v1587 = vrot.slane %v1573, 4
    %v1588 = vrot.slane %v1575, 4
    %v1589 = vsel %vm320, %v1587, %v1588
    %v1590 = vrot.slane %v1576, 4
    %v1591 = vsel %vm320, %v1585, %v1590
    %v1592 = vrot.slane %v1577, 4
    %v1593 = vsel %vm320, %v1588, %v1592
    %v1598 = vadd.f32 %v1555, %v1586
    %v1599 = vadd.f32 %v1556, %v1589
    %v1600 = vadd.f32 %v1557, %v1591
    %v1601 = vadd.f32 %v1558, %v1593
    %s1602 = scalar_lea.vmem %s3, 5
    %v1603 = vld [vmem:[%s1602] ss:$8 sm:$0x3]
    %v1605 = vlaneseq
    %v1606 = vshrl.u32 %v1605, 7
    %v1607 = vsub.s32 0, %v1606
    %v1608 = vrot.slane %v1603, %v1607
    %v1609 = vlaneseq
    %v1610 = vshrl.u32 %v1609, 7
    %v1611 = vsub.s32 1, %v1610
    %v1612 = vrot.slane %v1603, %v1611
    %v1615 = vmul.f32 %v1608, %v1406
    %v1616 = vmul.f32 %v1612, %v1407
    %v1617 = vmul.f32 %v1608, %v1388
    %v1618 = vmul.f32 %v1612, %v1389
    %v1619 = vmul.f32 %v1608, %v1408
    %v1620 = vmul.f32 %v1612, %v1409
    %v1627 = vrot.slane %v1615, 5
    %v1628 = vrot.slane %v1617, 5
    %v1629 = vsel %vm389, %v1627, %v1628
    %v1630 = vrot.slane %v1616, 5
    %v1631 = vrot.slane %v1618, 5
    %v1632 = vsel %vm389, %v1630, %v1631
    %v1633 = vrot.slane %v1619, 5
    %v1634 = vsel %vm389, %v1628, %v1633
    %v1635 = vrot.slane %v1620, 5
    %v1636 = vsel %vm389, %v1631, %v1635
    %v1641 = vadd.f32 %v1598, %v1629
    %v1642 = vadd.f32 %v1599, %v1632
    %v1643 = vadd.f32 %v1600, %v1634
    %v1644 = vadd.f32 %v1601, %v1636
    %s1645 = scalar_lea.vmem %s3, 6
    %v1646 = vld [vmem:[%s1645] ss:$8 sm:$0x3]
    %v1648 = vlaneseq
    %v1649 = vshrl.u32 %v1648, 7
    %v1650 = vsub.s32 0, %v1649
    %v1651 = vrot.slane %v1646, %v1650
    %v1652 = vlaneseq
    %v1653 = vshrl.u32 %v1652, 7
    %v1654 = vsub.s32 1, %v1653
    %v1655 = vrot.slane %v1646, %v1654
    %v1658 = vmul.f32 %v1651, %v1410
    %v1659 = vmul.f32 %v1655, %v1411
    %v1660 = vmul.f32 %v1651, %v1388
    %v1661 = vmul.f32 %v1655, %v1389
    %v1662 = vmul.f32 %v1651, %v1412
    %v1663 = vmul.f32 %v1655, %v1413
    %vm1670 = vcmask 1041408
    %v1671 = vrot.slane %v1658, 6
    %v1672 = vrot.slane %v1660, 6
    %v1673 = vsel %vm1670, %v1671, %v1672
    %v1674 = vrot.slane %v1659, 6
    %v1675 = vrot.slane %v1661, 6
    %v1676 = vsel %vm1670, %v1674, %v1675
    %v1677 = vrot.slane %v1662, 6
    %v1678 = vsel %vm1670, %v1672, %v1677
    %v1679 = vrot.slane %v1663, 6
    %v1680 = vsel %vm1670, %v1675, %v1679
    %v1685 = vadd.f32 %v1641, %v1673
    %v1686 = vadd.f32 %v1642, %v1676
    %v1687 = vadd.f32 %v1643, %v1678
    %v1688 = vadd.f32 %v1644, %v1680
    %1691 = vrot.lane.b32.xlu0 %v1686, 3
    %v1692 = vpop.permute.xlu0 %1691
    %1693 = vrot.lane.b32.xlu0 %v1688, 3
    %v1694 = vpop.permute.xlu0 %1693
    %1699 = vrot.lane.b32.xlu0 %v1685, 3
    %v1700 = vpop.permute.xlu0 %1699
    %1701 = vrot.lane.b32.xlu0 %v1687, 3
    %v1702 = vpop.permute.xlu0 %1701
    %v1703 = vsel %vm1315, %v1700, %v1692
    %v1704 = vsel %vm1315, %v1702, %v1694
    %v1709 = vsel %vm1315, %v1692, %v1700
    %v1710 = vsel %vm1315, %v1694, %v1702
    %s1711 = scalar_lea.vmem %s3, 7
    %v1712 = vld [vmem:[%s1711] ss:$8 sm:$0x3]
    %v1714 = vlaneseq
    %v1715 = vshrl.u32 %v1714, 7
    %v1716 = vsub.s32 0, %v1715
    %v1717 = vrot.slane %v1712, %v1716
    %v1718 = vlaneseq
    %v1719 = vshrl.u32 %v1718, 7
    %v1720 = vsub.s32 1, %v1719
    %v1721 = vrot.slane %v1712, %v1720
    %v1724 = vmul.f32 %v1717, %v1386
    %v1725 = vmul.f32 %v1721, %v1387
    %v1726 = vmul.f32 %v1717, %v1388
    %v1727 = vmul.f32 %v1721, %v1389
    %s1728 = scalar_lea.vmem %s3, 16
    %v1729 = vld [vmem:[%s1728] ss:$8 sm:$0x3]
    %v1731 = vlaneseq
    %v1732 = vshrl.u32 %v1731, 7
    %v1733 = vsub.s32 0, %v1732
    %v1734 = vrot.slane %v1729, %v1733
    %v1735 = vlaneseq
    %v1736 = vshrl.u32 %v1735, 7
    %v1737 = vsub.s32 1, %v1736
    %v1738 = vrot.slane %v1729, %v1737
    %v1741 = vmul.f32 %v1734, %v1390
    %v1742 = vmul.f32 %v1738, %v1391
    %v1743 = vmul.f32 %v1734, %v1388
    %v1744 = vmul.f32 %v1738, %v1389
    %v1745 = vmul.f32 %v1734, %v1392
    %v1746 = vmul.f32 %v1738, %v1393
    %v1753 = vrot.slane %v1741, 1
    %v1754 = vrot.slane %v1743, 1
    %v1755 = vsel %vm116, %v1753, %v1754
    %v1756 = vrot.slane %v1742, 1
    %v1757 = vrot.slane %v1744, 1
    %v1758 = vsel %vm116, %v1756, %v1757
    %v1759 = vrot.slane %v1745, 1
    %v1760 = vsel %vm116, %v1754, %v1759
    %v1761 = vrot.slane %v1746, 1
    %v1762 = vsel %vm116, %v1757, %v1761
    %v1767 = vadd.f32 %v1724, %v1755
    %v1768 = vadd.f32 %v1725, %v1758
    %v1769 = vadd.f32 %v1726, %v1760
    %v1770 = vadd.f32 %v1727, %v1762
    %s1771 = scalar_lea.vmem %s3, 17
    %v1772 = vld [vmem:[%s1771] ss:$8 sm:$0x3]
    %v1774 = vlaneseq
    %v1775 = vshrl.u32 %v1774, 7
    %v1776 = vsub.s32 0, %v1775
    %v1777 = vrot.slane %v1772, %v1776
    %v1778 = vlaneseq
    %v1779 = vshrl.u32 %v1778, 7
    %v1780 = vsub.s32 1, %v1779
    %v1781 = vrot.slane %v1772, %v1780
    %v1784 = vmul.f32 %v1777, %v1394
    %v1785 = vmul.f32 %v1781, %v1395
    %v1786 = vmul.f32 %v1777, %v1388
    %v1787 = vmul.f32 %v1781, %v1389
    %v1788 = vmul.f32 %v1777, %v1396
    %v1789 = vmul.f32 %v1781, %v1397
    %v1796 = vrot.slane %v1784, 2
    %v1797 = vrot.slane %v1786, 2
    %v1798 = vsel %vm182, %v1796, %v1797
    %v1799 = vrot.slane %v1785, 2
    %v1800 = vrot.slane %v1787, 2
    %v1801 = vsel %vm182, %v1799, %v1800
    %v1802 = vrot.slane %v1788, 2
    %v1803 = vsel %vm182, %v1797, %v1802
    %v1804 = vrot.slane %v1789, 2
    %v1805 = vsel %vm182, %v1800, %v1804
    %v1810 = vadd.f32 %v1767, %v1798
    %v1811 = vadd.f32 %v1768, %v1801
    %v1812 = vadd.f32 %v1769, %v1803
    %v1813 = vadd.f32 %v1770, %v1805
    %s1814 = scalar_lea.vmem %s3, 18
    %v1815 = vld [vmem:[%s1814] ss:$8 sm:$0x3]
    %v1817 = vlaneseq
    %v1818 = vshrl.u32 %v1817, 7
    %v1819 = vsub.s32 0, %v1818
    %v1820 = vrot.slane %v1815, %v1819
    %v1821 = vlaneseq
    %v1822 = vshrl.u32 %v1821, 7
    %v1823 = vsub.s32 1, %v1822
    %v1824 = vrot.slane %v1815, %v1823
    %v1827 = vmul.f32 %v1820, %v1398
    %v1828 = vmul.f32 %v1824, %v1399
    %v1829 = vmul.f32 %v1820, %v1388
    %v1830 = vmul.f32 %v1824, %v1389
    %v1831 = vmul.f32 %v1820, %v1400
    %v1832 = vmul.f32 %v1824, %v1401
    %v1839 = vrot.slane %v1827, 3
    %v1840 = vrot.slane %v1829, 3
    %v1841 = vsel %vm251, %v1839, %v1840
    %v1842 = vrot.slane %v1828, 3
    %v1843 = vrot.slane %v1830, 3
    %v1844 = vsel %vm251, %v1842, %v1843
    %v1845 = vrot.slane %v1831, 3
    %v1846 = vsel %vm251, %v1840, %v1845
    %v1847 = vrot.slane %v1832, 3
    %v1848 = vsel %vm251, %v1843, %v1847
    %v1853 = vadd.f32 %v1810, %v1841
    %v1854 = vadd.f32 %v1811, %v1844
    %v1855 = vadd.f32 %v1812, %v1846
    %v1856 = vadd.f32 %v1813, %v1848
    %s1857 = scalar_lea.vmem %s3, 19
    %v1858 = vld [vmem:[%s1857] ss:$8 sm:$0x3]
    %v1860 = vlaneseq
    %v1861 = vshrl.u32 %v1860, 7
    %v1862 = vsub.s32 0, %v1861
    %v1863 = vrot.slane %v1858, %v1862
    %v1864 = vlaneseq
    %v1865 = vshrl.u32 %v1864, 7
    %v1866 = vsub.s32 1, %v1865
    %v1867 = vrot.slane %v1858, %v1866
    %v1870 = vmul.f32 %v1863, %v1402
    %v1871 = vmul.f32 %v1867, %v1403
    %v1872 = vmul.f32 %v1863, %v1388
    %v1873 = vmul.f32 %v1867, %v1389
    %v1874 = vmul.f32 %v1863, %v1404
    %v1875 = vmul.f32 %v1867, %v1405
    %v1882 = vrot.slane %v1870, 4
    %v1883 = vrot.slane %v1872, 4
    %v1884 = vsel %vm320, %v1882, %v1883
    %v1885 = vrot.slane %v1871, 4
    %v1886 = vrot.slane %v1873, 4
    %v1887 = vsel %vm320, %v1885, %v1886
    %v1888 = vrot.slane %v1874, 4
    %v1889 = vsel %vm320, %v1883, %v1888
    %v1890 = vrot.slane %v1875, 4
    %v1891 = vsel %vm320, %v1886, %v1890
    %v1896 = vadd.f32 %v1853, %v1884
    %v1897 = vadd.f32 %v1854, %v1887
    %v1898 = vadd.f32 %v1855, %v1889
    %v1899 = vadd.f32 %v1856, %v1891
    %s1900 = scalar_lea.vmem %s3, 20
    %v1901 = vld [vmem:[%s1900] ss:$8 sm:$0x3]
    %v1903 = vlaneseq
    %v1904 = vshrl.u32 %v1903, 7
    %v1905 = vsub.s32 0, %v1904
    %v1906 = vrot.slane %v1901, %v1905
    %v1907 = vlaneseq
    %v1908 = vshrl.u32 %v1907, 7
    %v1909 = vsub.s32 1, %v1908
    %v1910 = vrot.slane %v1901, %v1909
    %v1913 = vmul.f32 %v1906, %v1406
    %v1914 = vmul.f32 %v1910, %v1407
    %v1915 = vmul.f32 %v1906, %v1388
    %v1916 = vmul.f32 %v1910, %v1389
    %v1917 = vmul.f32 %v1906, %v1408
    %v1918 = vmul.f32 %v1910, %v1409
    %v1925 = vrot.slane %v1913, 5
    %v1926 = vrot.slane %v1915, 5
    %v1927 = vsel %vm389, %v1925, %v1926
    %v1928 = vrot.slane %v1914, 5
    %v1929 = vrot.slane %v1916, 5
    %v1930 = vsel %vm389, %v1928, %v1929
    %v1931 = vrot.slane %v1917, 5
    %v1932 = vsel %vm389, %v1926, %v1931
    %v1933 = vrot.slane %v1918, 5
    %v1934 = vsel %vm389, %v1929, %v1933
    %v1939 = vadd.f32 %v1896, %v1927
    %v1940 = vadd.f32 %v1897, %v1930
    %v1941 = vadd.f32 %v1898, %v1932
    %v1942 = vadd.f32 %v1899, %v1934
    %s1943 = scalar_lea.vmem %s3, 21
    %v1944 = vld [vmem:[%s1943] ss:$8 sm:$0x3]
    %v1946 = vlaneseq
    %v1947 = vshrl.u32 %v1946, 7
    %v1948 = vsub.s32 0, %v1947
    %v1949 = vrot.slane %v1944, %v1948
    %v1950 = vlaneseq
    %v1951 = vshrl.u32 %v1950, 7
    %v1952 = vsub.s32 1, %v1951
    %v1953 = vrot.slane %v1944, %v1952
    %v1956 = vmul.f32 %v1949, %v1410
    %v1957 = vmul.f32 %v1953, %v1411
    %v1958 = vmul.f32 %v1949, %v1388
    %v1959 = vmul.f32 %v1953, %v1389
    %v1960 = vmul.f32 %v1949, %v1412
    %v1961 = vmul.f32 %v1953, %v1413
    %v1968 = vrot.slane %v1956, 6
    %v1969 = vrot.slane %v1958, 6
    %v1970 = vsel %vm1670, %v1968, %v1969
    %v1971 = vrot.slane %v1957, 6
    %v1972 = vrot.slane %v1959, 6
    %v1973 = vsel %vm1670, %v1971, %v1972
    %v1974 = vrot.slane %v1960, 6
    %v1975 = vsel %vm1670, %v1969, %v1974
    %v1976 = vrot.slane %v1961, 6
    %v1977 = vsel %vm1670, %v1972, %v1976
    %v1982 = vadd.f32 %v1939, %v1970
    %v1983 = vadd.f32 %v1940, %v1973
    %v1984 = vadd.f32 %v1941, %v1975
    %v1985 = vadd.f32 %v1942, %v1977
    %1988 = vrot.lane.b32.xlu0 %v1983, 2
    %v1989 = vpop.permute.xlu0 %1988
    %1990 = vrot.lane.b32.xlu0 %v1985, 2
    %v1991 = vpop.permute.xlu0 %1990
    %1996 = vrot.lane.b32.xlu0 %v1982, 2
    %v1997 = vpop.permute.xlu0 %1996
    %1998 = vrot.lane.b32.xlu0 %v1984, 2
    %v1999 = vpop.permute.xlu0 %1998
    %vm2000 = vcmask 15360
    %v2001 = vsel %vm2000, %v1997, %v1989
    %v2002 = vsel %vm2000, %v1999, %v1991
    %v2007 = vsel %vm2000, %v1989, %v1997
    %v2008 = vsel %vm2000, %v1991, %v1999
    %v2009 = vadd.f32 %v1709, %v2007
    %v2010 = vadd.f32 %v1703, %v2001
    %v2011 = vadd.f32 %v1710, %v2008
    %v2012 = vadd.f32 %v1704, %v2002
    %s2013 = scalar_lea.vmem %s3, 22
    %v2014 = vld [vmem:[%s2013] ss:$8 sm:$0x3]
    %v2016 = vlaneseq
    %v2017 = vshrl.u32 %v2016, 7
    %v2018 = vsub.s32 0, %v2017
    %v2019 = vrot.slane %v2014, %v2018
    %v2020 = vlaneseq
    %v2021 = vshrl.u32 %v2020, 7
    %v2022 = vsub.s32 1, %v2021
    %v2023 = vrot.slane %v2014, %v2022
    %v2026 = vmul.f32 %v2019, %v1386
    %v2027 = vmul.f32 %v2023, %v1387
    %v2028 = vmul.f32 %v2019, %v1388
    %v2029 = vmul.f32 %v2023, %v1389
    %s2030 = scalar_lea.vmem %s3, 23
    %v2031 = vld [vmem:[%s2030] ss:$8 sm:$0x3]
    %v2033 = vlaneseq
    %v2034 = vshrl.u32 %v2033, 7
    %v2035 = vsub.s32 0, %v2034
    %v2036 = vrot.slane %v2031, %v2035
    %v2037 = vlaneseq
    %v2038 = vshrl.u32 %v2037, 7
    %v2039 = vsub.s32 1, %v2038
    %v2040 = vrot.slane %v2031, %v2039
    %v2043 = vmul.f32 %v2036, %v1390
    %v2044 = vmul.f32 %v2040, %v1391
    %v2045 = vmul.f32 %v2036, %v1388
    %v2046 = vmul.f32 %v2040, %v1389
    %v2047 = vmul.f32 %v2036, %v1392
    %v2048 = vmul.f32 %v2040, %v1393
    %v2055 = vrot.slane %v2043, 1
    %v2056 = vrot.slane %v2045, 1
    %v2057 = vsel %vm116, %v2055, %v2056
    %v2058 = vrot.slane %v2044, 1
    %v2059 = vrot.slane %v2046, 1
    %v2060 = vsel %vm116, %v2058, %v2059
    %v2061 = vrot.slane %v2047, 1
    %v2062 = vsel %vm116, %v2056, %v2061
    %v2063 = vrot.slane %v2048, 1
    %v2064 = vsel %vm116, %v2059, %v2063
    %v2069 = vadd.f32 %v2026, %v2057
    %v2070 = vadd.f32 %v2027, %v2060
    %v2071 = vadd.f32 %v2028, %v2062
    %v2072 = vadd.f32 %v2029, %v2064
    %s2073 = scalar_lea.vmem %s3, 32
    %v2074 = vld [vmem:[%s2073] ss:$8 sm:$0x3]
    %v2076 = vlaneseq
    %v2077 = vshrl.u32 %v2076, 7
    %v2078 = vsub.s32 0, %v2077
    %v2079 = vrot.slane %v2074, %v2078
    %v2080 = vlaneseq
    %v2081 = vshrl.u32 %v2080, 7
    %v2082 = vsub.s32 1, %v2081
    %v2083 = vrot.slane %v2074, %v2082
    %v2086 = vmul.f32 %v2079, %v1394
    %v2087 = vmul.f32 %v2083, %v1395
    %v2088 = vmul.f32 %v2079, %v1388
    %v2089 = vmul.f32 %v2083, %v1389
    %v2090 = vmul.f32 %v2079, %v1396
    %v2091 = vmul.f32 %v2083, %v1397
    %v2098 = vrot.slane %v2086, 2
    %v2099 = vrot.slane %v2088, 2
    %v2100 = vsel %vm182, %v2098, %v2099
    %v2101 = vrot.slane %v2087, 2
    %v2102 = vrot.slane %v2089, 2
    %v2103 = vsel %vm182, %v2101, %v2102
    %v2104 = vrot.slane %v2090, 2
    %v2105 = vsel %vm182, %v2099, %v2104
    %v2106 = vrot.slane %v2091, 2
    %v2107 = vsel %vm182, %v2102, %v2106
    %v2112 = vadd.f32 %v2069, %v2100
    %v2113 = vadd.f32 %v2070, %v2103
    %v2114 = vadd.f32 %v2071, %v2105
    %v2115 = vadd.f32 %v2072, %v2107
    %s2116 = scalar_lea.vmem %s3, 33
    %v2117 = vld [vmem:[%s2116] ss:$8 sm:$0x3]
    %v2119 = vlaneseq
    %v2120 = vshrl.u32 %v2119, 7
    %v2121 = vsub.s32 0, %v2120
    %v2122 = vrot.slane %v2117, %v2121
    %v2123 = vlaneseq
    %v2124 = vshrl.u32 %v2123, 7
    %v2125 = vsub.s32 1, %v2124
    %v2126 = vrot.slane %v2117, %v2125
    %v2129 = vmul.f32 %v2122, %v1398
    %v2130 = vmul.f32 %v2126, %v1399
    %v2131 = vmul.f32 %v2122, %v1388
    %v2132 = vmul.f32 %v2126, %v1389
    %v2133 = vmul.f32 %v2122, %v1400
    %v2134 = vmul.f32 %v2126, %v1401
    %v2141 = vrot.slane %v2129, 3
    %v2142 = vrot.slane %v2131, 3
    %v2143 = vsel %vm251, %v2141, %v2142
    %v2144 = vrot.slane %v2130, 3
    %v2145 = vrot.slane %v2132, 3
    %v2146 = vsel %vm251, %v2144, %v2145
    %v2147 = vrot.slane %v2133, 3
    %v2148 = vsel %vm251, %v2142, %v2147
    %v2149 = vrot.slane %v2134, 3
    %v2150 = vsel %vm251, %v2145, %v2149
    %v2155 = vadd.f32 %v2112, %v2143
    %v2156 = vadd.f32 %v2113, %v2146
    %v2157 = vadd.f32 %v2114, %v2148
    %v2158 = vadd.f32 %v2115, %v2150
    %s2159 = scalar_lea.vmem %s3, 34
    %v2160 = vld [vmem:[%s2159] ss:$8 sm:$0x3]
    %v2162 = vlaneseq
    %v2163 = vshrl.u32 %v2162, 7
    %v2164 = vsub.s32 0, %v2163
    %v2165 = vrot.slane %v2160, %v2164
    %v2166 = vlaneseq
    %v2167 = vshrl.u32 %v2166, 7
    %v2168 = vsub.s32 1, %v2167
    %v2169 = vrot.slane %v2160, %v2168
    %v2172 = vmul.f32 %v2165, %v1402
    %v2173 = vmul.f32 %v2169, %v1403
    %v2174 = vmul.f32 %v2165, %v1388
    %v2175 = vmul.f32 %v2169, %v1389
    %v2176 = vmul.f32 %v2165, %v1404
    %v2177 = vmul.f32 %v2169, %v1405
    %v2184 = vrot.slane %v2172, 4
    %v2185 = vrot.slane %v2174, 4
    %v2186 = vsel %vm320, %v2184, %v2185
    %v2187 = vrot.slane %v2173, 4
    %v2188 = vrot.slane %v2175, 4
    %v2189 = vsel %vm320, %v2187, %v2188
    %v2190 = vrot.slane %v2176, 4
    %v2191 = vsel %vm320, %v2185, %v2190
    %v2192 = vrot.slane %v2177, 4
    %v2193 = vsel %vm320, %v2188, %v2192
    %v2198 = vadd.f32 %v2155, %v2186
    %v2199 = vadd.f32 %v2156, %v2189
    %v2200 = vadd.f32 %v2157, %v2191
    %v2201 = vadd.f32 %v2158, %v2193
    %s2202 = scalar_lea.vmem %s3, 35
    %v2203 = vld [vmem:[%s2202] ss:$8 sm:$0x3]
    %v2205 = vlaneseq
    %v2206 = vshrl.u32 %v2205, 7
    %v2207 = vsub.s32 0, %v2206
    %v2208 = vrot.slane %v2203, %v2207
    %v2209 = vlaneseq
    %v2210 = vshrl.u32 %v2209, 7
    %v2211 = vsub.s32 1, %v2210
    %v2212 = vrot.slane %v2203, %v2211
    %v2215 = vmul.f32 %v2208, %v1406
    %v2216 = vmul.f32 %v2212, %v1407
    %v2217 = vmul.f32 %v2208, %v1388
    %v2218 = vmul.f32 %v2212, %v1389
    %v2219 = vmul.f32 %v2208, %v1408
    %v2220 = vmul.f32 %v2212, %v1409
    %v2227 = vrot.slane %v2215, 5
    %v2228 = vrot.slane %v2217, 5
    %v2229 = vsel %vm389, %v2227, %v2228
    %v2230 = vrot.slane %v2216, 5
    %v2231 = vrot.slane %v2218, 5
    %v2232 = vsel %vm389, %v2230, %v2231
    %v2233 = vrot.slane %v2219, 5
    %v2234 = vsel %vm389, %v2228, %v2233
    %v2235 = vrot.slane %v2220, 5
    %v2236 = vsel %vm389, %v2231, %v2235
    %v2241 = vadd.f32 %v2198, %v2229
    %v2242 = vadd.f32 %v2199, %v2232
    %v2243 = vadd.f32 %v2200, %v2234
    %v2244 = vadd.f32 %v2201, %v2236
    %s2245 = scalar_lea.vmem %s3, 36
    %v2246 = vld [vmem:[%s2245] ss:$8 sm:$0x3]
    %v2248 = vlaneseq
    %v2249 = vshrl.u32 %v2248, 7
    %v2250 = vsub.s32 0, %v2249
    %v2251 = vrot.slane %v2246, %v2250
    %v2252 = vlaneseq
    %v2253 = vshrl.u32 %v2252, 7
    %v2254 = vsub.s32 1, %v2253
    %v2255 = vrot.slane %v2246, %v2254
    %v2258 = vmul.f32 %v2251, %v1410
    %v2259 = vmul.f32 %v2255, %v1411
    %v2260 = vmul.f32 %v2251, %v1388
    %v2261 = vmul.f32 %v2255, %v1389
    %v2262 = vmul.f32 %v2251, %v1412
    %v2263 = vmul.f32 %v2255, %v1413
    %v2270 = vrot.slane %v2258, 6
    %v2271 = vrot.slane %v2260, 6
    %v2272 = vsel %vm1670, %v2270, %v2271
    %v2273 = vrot.slane %v2259, 6
    %v2274 = vrot.slane %v2261, 6
    %v2275 = vsel %vm1670, %v2273, %v2274
    %v2276 = vrot.slane %v2262, 6
    %v2277 = vsel %vm1670, %v2271, %v2276
    %v2278 = vrot.slane %v2263, 6
    %v2279 = vsel %vm1670, %v2274, %v2278
    %v2284 = vadd.f32 %v2241, %v2272
    %v2285 = vadd.f32 %v2242, %v2275
    %v2286 = vadd.f32 %v2243, %v2277
    %v2287 = vadd.f32 %v2244, %v2279
    %2290 = vrot.lane.b32.xlu0 %v2285, 1
    %v2291 = vpop.permute.xlu0 %2290
    %2292 = vrot.lane.b32.xlu0 %v2287, 1
    %v2293 = vpop.permute.xlu0 %2292
    %2298 = vrot.lane.b32.xlu0 %v2284, 1
    %v2299 = vpop.permute.xlu0 %2298
    %2300 = vrot.lane.b32.xlu0 %v2286, 1
    %v2301 = vpop.permute.xlu0 %2300
    %vm2302 = vcmask 7168
    %v2303 = vsel %vm2302, %v2299, %v2291
    %v2304 = vsel %vm2302, %v2301, %v2293
    %v2309 = vsel %vm2302, %v2291, %v2299
    %v2310 = vsel %vm2302, %v2293, %v2301
    %v2311 = vadd.f32 %v2009, %v2309
    %v2312 = vadd.f32 %v2010, %v2303
    %v2313 = vadd.f32 %v2011, %v2310
    %v2314 = vadd.f32 %v2012, %v2304
    %s2315 = scalar_lea.vmem %s3, 37
    %v2316 = vld [vmem:[%s2315] ss:$8 sm:$0x3]
    %v2318 = vlaneseq
    %v2319 = vshrl.u32 %v2318, 7
    %v2320 = vsub.s32 0, %v2319
    %v2321 = vrot.slane %v2316, %v2320
    %v2322 = vlaneseq
    %v2323 = vshrl.u32 %v2322, 7
    %v2324 = vsub.s32 1, %v2323
    %v2325 = vrot.slane %v2316, %v2324
    %v2328 = vmul.f32 %v2321, %v1386
    %v2329 = vmul.f32 %v2325, %v1387
    %v2330 = vmul.f32 %v2321, %v1388
    %v2331 = vmul.f32 %v2325, %v1389
    %s2332 = scalar_lea.vmem %s3, 38
    %v2333 = vld [vmem:[%s2332] ss:$8 sm:$0x3]
    %v2335 = vlaneseq
    %v2336 = vshrl.u32 %v2335, 7
    %v2337 = vsub.s32 0, %v2336
    %v2338 = vrot.slane %v2333, %v2337
    %v2339 = vlaneseq
    %v2340 = vshrl.u32 %v2339, 7
    %v2341 = vsub.s32 1, %v2340
    %v2342 = vrot.slane %v2333, %v2341
    %v2345 = vmul.f32 %v2338, %v1390
    %v2346 = vmul.f32 %v2342, %v1391
    %v2347 = vmul.f32 %v2338, %v1388
    %v2348 = vmul.f32 %v2342, %v1389
    %v2349 = vmul.f32 %v2338, %v1392
    %v2350 = vmul.f32 %v2342, %v1393
    %v2357 = vrot.slane %v2345, 1
    %v2358 = vrot.slane %v2347, 1
    %v2359 = vsel %vm116, %v2357, %v2358
    %v2360 = vrot.slane %v2346, 1
    %v2361 = vrot.slane %v2348, 1
    %v2362 = vsel %vm116, %v2360, %v2361
    %v2363 = vrot.slane %v2349, 1
    %v2364 = vsel %vm116, %v2358, %v2363
    %v2365 = vrot.slane %v2350, 1
    %v2366 = vsel %vm116, %v2361, %v2365
    %v2371 = vadd.f32 %v2328, %v2359
    %v2372 = vadd.f32 %v2329, %v2362
    %v2373 = vadd.f32 %v2330, %v2364
    %v2374 = vadd.f32 %v2331, %v2366
    %s2375 = scalar_lea.vmem %s3, 39
    %v2376 = vld [vmem:[%s2375] ss:$8 sm:$0x3]
    %v2378 = vlaneseq
    %v2379 = vshrl.u32 %v2378, 7
    %v2380 = vsub.s32 0, %v2379
    %v2381 = vrot.slane %v2376, %v2380
    %v2382 = vlaneseq
    %v2383 = vshrl.u32 %v2382, 7
    %v2384 = vsub.s32 1, %v2383
    %v2385 = vrot.slane %v2376, %v2384
    %v2388 = vmul.f32 %v2381, %v1394
    %v2389 = vmul.f32 %v2385, %v1395
    %v2390 = vmul.f32 %v2381, %v1388
    %v2391 = vmul.f32 %v2385, %v1389
    %v2392 = vmul.f32 %v2381, %v1396
    %v2393 = vmul.f32 %v2385, %v1397
    %v2400 = vrot.slane %v2388, 2
    %v2401 = vrot.slane %v2390, 2
    %v2402 = vsel %vm182, %v2400, %v2401
    %v2403 = vrot.slane %v2389, 2
    %v2404 = vrot.slane %v2391, 2
    %v2405 = vsel %vm182, %v2403, %v2404
    %v2406 = vrot.slane %v2392, 2
    %v2407 = vsel %vm182, %v2401, %v2406
    %v2408 = vrot.slane %v2393, 2
    %v2409 = vsel %vm182, %v2404, %v2408
    %v2414 = vadd.f32 %v2371, %v2402
    %v2415 = vadd.f32 %v2372, %v2405
    %v2416 = vadd.f32 %v2373, %v2407
    %v2417 = vadd.f32 %v2374, %v2409
    %s2418 = scalar_lea.vmem %s3, 48
    %v2419 = vld [vmem:[%s2418] ss:$8 sm:$0x3]
    %v2421 = vlaneseq
    %v2422 = vshrl.u32 %v2421, 7
    %v2423 = vsub.s32 0, %v2422
    %v2424 = vrot.slane %v2419, %v2423
    %v2425 = vlaneseq
    %v2426 = vshrl.u32 %v2425, 7
    %v2427 = vsub.s32 1, %v2426
    %v2428 = vrot.slane %v2419, %v2427
    %v2431 = vmul.f32 %v2424, %v1398
    %v2432 = vmul.f32 %v2428, %v1399
    %v2433 = vmul.f32 %v2424, %v1388
    %v2434 = vmul.f32 %v2428, %v1389
    %v2435 = vmul.f32 %v2424, %v1400
    %v2436 = vmul.f32 %v2428, %v1401
    %v2443 = vrot.slane %v2431, 3
    %v2444 = vrot.slane %v2433, 3
    %v2445 = vsel %vm251, %v2443, %v2444
    %v2446 = vrot.slane %v2432, 3
    %v2447 = vrot.slane %v2434, 3
    %v2448 = vsel %vm251, %v2446, %v2447
    %v2449 = vrot.slane %v2435, 3
    %v2450 = vsel %vm251, %v2444, %v2449
    %v2451 = vrot.slane %v2436, 3
    %v2452 = vsel %vm251, %v2447, %v2451
    %v2457 = vadd.f32 %v2414, %v2445
    %v2458 = vadd.f32 %v2415, %v2448
    %v2459 = vadd.f32 %v2416, %v2450
    %v2460 = vadd.f32 %v2417, %v2452
    %s2461 = scalar_lea.vmem %s3, 49
    %v2462 = vld [vmem:[%s2461] ss:$8 sm:$0x3]
    %v2464 = vlaneseq
    %v2465 = vshrl.u32 %v2464, 7
    %v2466 = vsub.s32 0, %v2465
    %v2467 = vrot.slane %v2462, %v2466
    %v2468 = vlaneseq
    %v2469 = vshrl.u32 %v2468, 7
    %v2470 = vsub.s32 1, %v2469
    %v2471 = vrot.slane %v2462, %v2470
    %v2474 = vmul.f32 %v2467, %v1402
    %v2475 = vmul.f32 %v2471, %v1403
    %v2476 = vmul.f32 %v2467, %v1388
    %v2477 = vmul.f32 %v2471, %v1389
    %v2478 = vmul.f32 %v2467, %v1404
    %v2479 = vmul.f32 %v2471, %v1405
    %v2486 = vrot.slane %v2474, 4
    %v2487 = vrot.slane %v2476, 4
    %v2488 = vsel %vm320, %v2486, %v2487
    %v2489 = vrot.slane %v2475, 4
    %v2490 = vrot.slane %v2477, 4
    %v2491 = vsel %vm320, %v2489, %v2490
    %v2492 = vrot.slane %v2478, 4
    %v2493 = vsel %vm320, %v2487, %v2492
    %v2494 = vrot.slane %v2479, 4
    %v2495 = vsel %vm320, %v2490, %v2494
    %v2500 = vadd.f32 %v2457, %v2488
    %v2501 = vadd.f32 %v2458, %v2491
    %v2502 = vadd.f32 %v2459, %v2493
    %v2503 = vadd.f32 %v2460, %v2495
    %s2504 = scalar_lea.vmem %s3, 50
    %v2505 = vld [vmem:[%s2504] ss:$8 sm:$0x3]
    %v2507 = vlaneseq
    %v2508 = vshrl.u32 %v2507, 7
    %v2509 = vsub.s32 0, %v2508
    %v2510 = vrot.slane %v2505, %v2509
    %v2511 = vlaneseq
    %v2512 = vshrl.u32 %v2511, 7
    %v2513 = vsub.s32 1, %v2512
    %v2514 = vrot.slane %v2505, %v2513
    %v2517 = vmul.f32 %v2510, %v1406
    %v2518 = vmul.f32 %v2514, %v1407
    %v2519 = vmul.f32 %v2510, %v1388
    %v2520 = vmul.f32 %v2514, %v1389
    %v2521 = vmul.f32 %v2510, %v1408
    %v2522 = vmul.f32 %v2514, %v1409
    %v2529 = vrot.slane %v2517, 5
    %v2530 = vrot.slane %v2519, 5
    %v2531 = vsel %vm389, %v2529, %v2530
    %v2532 = vrot.slane %v2518, 5
    %v2533 = vrot.slane %v2520, 5
    %v2534 = vsel %vm389, %v2532, %v2533
    %v2535 = vrot.slane %v2521, 5
    %v2536 = vsel %vm389, %v2530, %v2535
    %v2537 = vrot.slane %v2522, 5
    %v2538 = vsel %vm389, %v2533, %v2537
    %v2543 = vadd.f32 %v2500, %v2531
    %v2544 = vadd.f32 %v2501, %v2534
    %v2545 = vadd.f32 %v2502, %v2536
    %v2546 = vadd.f32 %v2503, %v2538
    %s2547 = scalar_lea.vmem %s3, 51
    %v2548 = vld [vmem:[%s2547] ss:$8 sm:$0x3]
    %v2550 = vlaneseq
    %v2551 = vshrl.u32 %v2550, 7
    %v2552 = vsub.s32 0, %v2551
    %v2553 = vrot.slane %v2548, %v2552
    %v2554 = vlaneseq
    %v2555 = vshrl.u32 %v2554, 7
    %v2556 = vsub.s32 1, %v2555
    %v2557 = vrot.slane %v2548, %v2556
    %v2560 = vmul.f32 %v2553, %v1410
    %v2561 = vmul.f32 %v2557, %v1411
    %v2562 = vmul.f32 %v2553, %v1388
    %v2563 = vmul.f32 %v2557, %v1389
    %v2564 = vmul.f32 %v2553, %v1412
    %v2565 = vmul.f32 %v2557, %v1413
    %v2572 = vrot.slane %v2560, 6
    %v2573 = vrot.slane %v2562, 6
    %v2574 = vsel %vm1670, %v2572, %v2573
    %v2575 = vrot.slane %v2561, 6
    %v2576 = vrot.slane %v2563, 6
    %v2577 = vsel %vm1670, %v2575, %v2576
    %v2578 = vrot.slane %v2564, 6
    %v2579 = vsel %vm1670, %v2573, %v2578
    %v2580 = vrot.slane %v2565, 6
    %v2581 = vsel %vm1670, %v2576, %v2580
    %v2586 = vadd.f32 %v2543, %v2574
    %v2587 = vadd.f32 %v2544, %v2577
    %v2588 = vadd.f32 %v2545, %v2579
    %v2589 = vadd.f32 %v2546, %v2581
    %v2590 = vadd.f32 %v2311, %v2586
    %v2591 = vadd.f32 %v2312, %v2587
    %v2592 = vadd.f32 %v2313, %v2588
    %v2593 = vadd.f32 %v2314, %v2589
    %s2594 = scalar_lea.vmem %s3, 52
    %v2595 = vld [vmem:[%s2594] ss:$8 sm:$0x3]
    %v2597 = vlaneseq
    %v2598 = vshrl.u32 %v2597, 7
    %v2599 = vsub.s32 0, %v2598
    %v2600 = vrot.slane %v2595, %v2599
    %v2601 = vlaneseq
    %v2602 = vshrl.u32 %v2601, 7
    %v2603 = vsub.s32 1, %v2602
    %v2604 = vrot.slane %v2595, %v2603
    %v2607 = vmul.f32 %v2600, %v1386
    %v2608 = vmul.f32 %v2604, %v1387
    %v2609 = vmul.f32 %v2600, %v1388
    %v2610 = vmul.f32 %v2604, %v1389
    %s2611 = scalar_lea.vmem %s3, 53
    %v2612 = vld [vmem:[%s2611] ss:$8 sm:$0x3]
    %v2614 = vlaneseq
    %v2615 = vshrl.u32 %v2614, 7
    %v2616 = vsub.s32 0, %v2615
    %v2617 = vrot.slane %v2612, %v2616
    %v2618 = vlaneseq
    %v2619 = vshrl.u32 %v2618, 7
    %v2620 = vsub.s32 1, %v2619
    %v2621 = vrot.slane %v2612, %v2620
    %v2624 = vmul.f32 %v2617, %v1390
    %v2625 = vmul.f32 %v2621, %v1391
    %v2626 = vmul.f32 %v2617, %v1388
    %v2627 = vmul.f32 %v2621, %v1389
    %v2628 = vmul.f32 %v2617, %v1392
    %v2629 = vmul.f32 %v2621, %v1393
    %v2636 = vrot.slane %v2624, 1
    %v2637 = vrot.slane %v2626, 1
    %v2638 = vsel %vm116, %v2636, %v2637
    %v2639 = vrot.slane %v2625, 1
    %v2640 = vrot.slane %v2627, 1
    %v2641 = vsel %vm116, %v2639, %v2640
    %v2642 = vrot.slane %v2628, 1
    %v2643 = vsel %vm116, %v2637, %v2642
    %v2644 = vrot.slane %v2629, 1
    %v2645 = vsel %vm116, %v2640, %v2644
    %v2650 = vadd.f32 %v2607, %v2638
    %v2651 = vadd.f32 %v2608, %v2641
    %v2652 = vadd.f32 %v2609, %v2643
    %v2653 = vadd.f32 %v2610, %v2645
    %s2654 = scalar_lea.vmem %s3, 54
    %v2655 = vld [vmem:[%s2654] ss:$8 sm:$0x3]
    %v2657 = vlaneseq
    %v2658 = vshrl.u32 %v2657, 7
    %v2659 = vsub.s32 0, %v2658
    %v2660 = vrot.slane %v2655, %v2659
    %v2661 = vlaneseq
    %v2662 = vshrl.u32 %v2661, 7
    %v2663 = vsub.s32 1, %v2662
    %v2664 = vrot.slane %v2655, %v2663
    %v2667 = vmul.f32 %v2660, %v1394
    %v2668 = vmul.f32 %v2664, %v1395
    %v2669 = vmul.f32 %v2660, %v1388
    %v2670 = vmul.f32 %v2664, %v1389
    %v2671 = vmul.f32 %v2660, %v1396
    %v2672 = vmul.f32 %v2664, %v1397
    %v2679 = vrot.slane %v2667, 2
    %v2680 = vrot.slane %v2669, 2
    %v2681 = vsel %vm182, %v2679, %v2680
    %v2682 = vrot.slane %v2668, 2
    %v2683 = vrot.slane %v2670, 2
    %v2684 = vsel %vm182, %v2682, %v2683
    %v2685 = vrot.slane %v2671, 2
    %v2686 = vsel %vm182, %v2680, %v2685
    %v2687 = vrot.slane %v2672, 2
    %v2688 = vsel %vm182, %v2683, %v2687
    %v2693 = vadd.f32 %v2650, %v2681
    %v2694 = vadd.f32 %v2651, %v2684
    %v2695 = vadd.f32 %v2652, %v2686
    %v2696 = vadd.f32 %v2653, %v2688
    %s2697 = scalar_lea.vmem %s3, 55
    %v2698 = vld [vmem:[%s2697] ss:$8 sm:$0x3]
    %v2700 = vlaneseq
    %v2701 = vshrl.u32 %v2700, 7
    %v2702 = vsub.s32 0, %v2701
    %v2703 = vrot.slane %v2698, %v2702
    %v2704 = vlaneseq
    %v2705 = vshrl.u32 %v2704, 7
    %v2706 = vsub.s32 1, %v2705
    %v2707 = vrot.slane %v2698, %v2706
    %v2710 = vmul.f32 %v2703, %v1398
    %v2711 = vmul.f32 %v2707, %v1399
    %v2712 = vmul.f32 %v2703, %v1388
    %v2713 = vmul.f32 %v2707, %v1389
    %v2714 = vmul.f32 %v2703, %v1400
    %v2715 = vmul.f32 %v2707, %v1401
    %v2722 = vrot.slane %v2710, 3
    %v2723 = vrot.slane %v2712, 3
    %v2724 = vsel %vm251, %v2722, %v2723
    %v2725 = vrot.slane %v2711, 3
    %v2726 = vrot.slane %v2713, 3
    %v2727 = vsel %vm251, %v2725, %v2726
    %v2728 = vrot.slane %v2714, 3
    %v2729 = vsel %vm251, %v2723, %v2728
    %v2730 = vrot.slane %v2715, 3
    %v2731 = vsel %vm251, %v2726, %v2730
    %v2736 = vadd.f32 %v2693, %v2724
    %v2737 = vadd.f32 %v2694, %v2727
    %v2738 = vadd.f32 %v2695, %v2729
    %v2739 = vadd.f32 %v2696, %v2731
    %s2740 = scalar_lea.vmem %s3, 64
    %v2741 = vld [vmem:[%s2740] ss:$8 sm:$0x3]
    %v2743 = vlaneseq
    %v2744 = vshrl.u32 %v2743, 7
    %v2745 = vsub.s32 0, %v2744
    %v2746 = vrot.slane %v2741, %v2745
    %v2747 = vlaneseq
    %v2748 = vshrl.u32 %v2747, 7
    %v2749 = vsub.s32 1, %v2748
    %v2750 = vrot.slane %v2741, %v2749
    %v2753 = vmul.f32 %v2746, %v1402
    %v2754 = vmul.f32 %v2750, %v1403
    %v2755 = vmul.f32 %v2746, %v1388
    %v2756 = vmul.f32 %v2750, %v1389
    %v2757 = vmul.f32 %v2746, %v1404
    %v2758 = vmul.f32 %v2750, %v1405
    %v2765 = vrot.slane %v2753, 4
    %v2766 = vrot.slane %v2755, 4
    %v2767 = vsel %vm320, %v2765, %v2766
    %v2768 = vrot.slane %v2754, 4
    %v2769 = vrot.slane %v2756, 4
    %v2770 = vsel %vm320, %v2768, %v2769
    %v2771 = vrot.slane %v2757, 4
    %v2772 = vsel %vm320, %v2766, %v2771
    %v2773 = vrot.slane %v2758, 4
    %v2774 = vsel %vm320, %v2769, %v2773
    %v2779 = vadd.f32 %v2736, %v2767
    %v2780 = vadd.f32 %v2737, %v2770
    %v2781 = vadd.f32 %v2738, %v2772
    %v2782 = vadd.f32 %v2739, %v2774
    %s2783 = scalar_lea.vmem %s3, 65
    %v2784 = vld [vmem:[%s2783] ss:$8 sm:$0x3]
    %v2786 = vlaneseq
    %v2787 = vshrl.u32 %v2786, 7
    %v2788 = vsub.s32 0, %v2787
    %v2789 = vrot.slane %v2784, %v2788
    %v2790 = vlaneseq
    %v2791 = vshrl.u32 %v2790, 7
    %v2792 = vsub.s32 1, %v2791
    %v2793 = vrot.slane %v2784, %v2792
    %v2796 = vmul.f32 %v2789, %v1406
    %v2797 = vmul.f32 %v2793, %v1407
    %v2798 = vmul.f32 %v2789, %v1388
    %v2799 = vmul.f32 %v2793, %v1389
    %v2800 = vmul.f32 %v2789, %v1408
    %v2801 = vmul.f32 %v2793, %v1409
    %v2808 = vrot.slane %v2796, 5
    %v2809 = vrot.slane %v2798, 5
    %v2810 = vsel %vm389, %v2808, %v2809
    %v2811 = vrot.slane %v2797, 5
    %v2812 = vrot.slane %v2799, 5
    %v2813 = vsel %vm389, %v2811, %v2812
    %v2814 = vrot.slane %v2800, 5
    %v2815 = vsel %vm389, %v2809, %v2814
    %v2816 = vrot.slane %v2801, 5
    %v2817 = vsel %vm389, %v2812, %v2816
    %v2822 = vadd.f32 %v2779, %v2810
    %v2823 = vadd.f32 %v2780, %v2813
    %v2824 = vadd.f32 %v2781, %v2815
    %v2825 = vadd.f32 %v2782, %v2817
    %s2826 = scalar_lea.vmem %s3, 66
    %v2827 = vld [vmem:[%s2826] ss:$8 sm:$0x3]
    %v2829 = vlaneseq
    %v2830 = vshrl.u32 %v2829, 7
    %v2831 = vsub.s32 0, %v2830
    %v2832 = vrot.slane %v2827, %v2831
    %v2833 = vlaneseq
    %v2834 = vshrl.u32 %v2833, 7
    %v2835 = vsub.s32 1, %v2834
    %v2836 = vrot.slane %v2827, %v2835
    %v2839 = vmul.f32 %v2832, %v1410
    %v2840 = vmul.f32 %v2836, %v1411
    %v2841 = vmul.f32 %v2832, %v1388
    %v2842 = vmul.f32 %v2836, %v1389
    %v2843 = vmul.f32 %v2832, %v1412
    %v2844 = vmul.f32 %v2836, %v1413
    %v2851 = vrot.slane %v2839, 6
    %v2852 = vrot.slane %v2841, 6
    %v2853 = vsel %vm1670, %v2851, %v2852
    %v2854 = vrot.slane %v2840, 6
    %v2855 = vrot.slane %v2842, 6
    %v2856 = vsel %vm1670, %v2854, %v2855
    %v2857 = vrot.slane %v2843, 6
    %v2858 = vsel %vm1670, %v2852, %v2857
    %v2859 = vrot.slane %v2844, 6
    %v2860 = vsel %vm1670, %v2855, %v2859
    %v2865 = vadd.f32 %v2822, %v2853
    %v2866 = vadd.f32 %v2823, %v2856
    %v2867 = vadd.f32 %v2824, %v2858
    %v2868 = vadd.f32 %v2825, %v2860
    %2873 = vrot.lane.b32.xlu0 %v2865, 127
    %v2874 = vpop.permute.xlu0 %2873
    %2875 = vrot.lane.b32.xlu0 %v2866, 127
    %v2876 = vpop.permute.xlu0 %2875
    %2877 = vrot.lane.b32.xlu0 %v2867, 127
    %v2878 = vpop.permute.xlu0 %2877
    %2879 = vrot.lane.b32.xlu0 %v2868, 127
    %v2880 = vpop.permute.xlu0 %2879
    %v2881 = vsel %vm144, %v2874, %v2876
    %v2882 = vsel %vm144, %v2878, %v2880
    %v2889 = vsel %vm144, %v2876, %v2874
    %v2890 = vsel %vm144, %v2880, %v2878
    %v2891 = vadd.f32 %v2590, %v2881
    %v2892 = vadd.f32 %v2591, %v2889
    %v2893 = vadd.f32 %v2592, %v2882
    %v2894 = vadd.f32 %v2593, %v2890
    %s2895 = scalar_lea.vmem %s3, 67
    %v2896 = vld [vmem:[%s2895] ss:$8 sm:$0x3]
    %v2898 = vlaneseq
    %v2899 = vshrl.u32 %v2898, 7
    %v2900 = vsub.s32 0, %v2899
    %v2901 = vrot.slane %v2896, %v2900
    %v2902 = vlaneseq
    %v2903 = vshrl.u32 %v2902, 7
    %v2904 = vsub.s32 1, %v2903
    %v2905 = vrot.slane %v2896, %v2904
    %v2908 = vmul.f32 %v2901, %v1386
    %v2909 = vmul.f32 %v2905, %v1387
    %v2910 = vmul.f32 %v2901, %v1388
    %v2911 = vmul.f32 %v2905, %v1389
    %s2912 = scalar_lea.vmem %s3, 68
    %v2913 = vld [vmem:[%s2912] ss:$8 sm:$0x3]
    %v2915 = vlaneseq
    %v2916 = vshrl.u32 %v2915, 7
    %v2917 = vsub.s32 0, %v2916
    %v2918 = vrot.slane %v2913, %v2917
    %v2919 = vlaneseq
    %v2920 = vshrl.u32 %v2919, 7
    %v2921 = vsub.s32 1, %v2920
    %v2922 = vrot.slane %v2913, %v2921
    %v2925 = vmul.f32 %v2918, %v1390
    %v2926 = vmul.f32 %v2922, %v1391
    %v2927 = vmul.f32 %v2918, %v1388
    %v2928 = vmul.f32 %v2922, %v1389
    %v2929 = vmul.f32 %v2918, %v1392
    %v2930 = vmul.f32 %v2922, %v1393
    %v2937 = vrot.slane %v2925, 1
    %v2938 = vrot.slane %v2927, 1
    %v2939 = vsel %vm116, %v2937, %v2938
    %v2940 = vrot.slane %v2926, 1
    %v2941 = vrot.slane %v2928, 1
    %v2942 = vsel %vm116, %v2940, %v2941
    %v2943 = vrot.slane %v2929, 1
    %v2944 = vsel %vm116, %v2938, %v2943
    %v2945 = vrot.slane %v2930, 1
    %v2946 = vsel %vm116, %v2941, %v2945
    %v2951 = vadd.f32 %v2908, %v2939
    %v2952 = vadd.f32 %v2909, %v2942
    %v2953 = vadd.f32 %v2910, %v2944
    %v2954 = vadd.f32 %v2911, %v2946
    %s2955 = scalar_lea.vmem %s3, 69
    %v2956 = vld [vmem:[%s2955] ss:$8 sm:$0x3]
    %v2958 = vlaneseq
    %v2959 = vshrl.u32 %v2958, 7
    %v2960 = vsub.s32 0, %v2959
    %v2961 = vrot.slane %v2956, %v2960
    %v2962 = vlaneseq
    %v2963 = vshrl.u32 %v2962, 7
    %v2964 = vsub.s32 1, %v2963
    %v2965 = vrot.slane %v2956, %v2964
    %v2968 = vmul.f32 %v2961, %v1394
    %v2969 = vmul.f32 %v2965, %v1395
    %v2970 = vmul.f32 %v2961, %v1388
    %v2971 = vmul.f32 %v2965, %v1389
    %v2972 = vmul.f32 %v2961, %v1396
    %v2973 = vmul.f32 %v2965, %v1397
    %v2980 = vrot.slane %v2968, 2
    %v2981 = vrot.slane %v2970, 2
    %v2982 = vsel %vm182, %v2980, %v2981
    %v2983 = vrot.slane %v2969, 2
    %v2984 = vrot.slane %v2971, 2
    %v2985 = vsel %vm182, %v2983, %v2984
    %v2986 = vrot.slane %v2972, 2
    %v2987 = vsel %vm182, %v2981, %v2986
    %v2988 = vrot.slane %v2973, 2
    %v2989 = vsel %vm182, %v2984, %v2988
    %v2994 = vadd.f32 %v2951, %v2982
    %v2995 = vadd.f32 %v2952, %v2985
    %v2996 = vadd.f32 %v2953, %v2987
    %v2997 = vadd.f32 %v2954, %v2989
    %s2998 = scalar_lea.vmem %s3, 70
    %v2999 = vld [vmem:[%s2998] ss:$8 sm:$0x3]
    %v3001 = vlaneseq
    %v3002 = vshrl.u32 %v3001, 7
    %v3003 = vsub.s32 0, %v3002
    %v3004 = vrot.slane %v2999, %v3003
    %v3005 = vlaneseq
    %v3006 = vshrl.u32 %v3005, 7
    %v3007 = vsub.s32 1, %v3006
    %v3008 = vrot.slane %v2999, %v3007
    %v3011 = vmul.f32 %v3004, %v1398
    %v3012 = vmul.f32 %v3008, %v1399
    %v3013 = vmul.f32 %v3004, %v1388
    %v3014 = vmul.f32 %v3008, %v1389
    %v3015 = vmul.f32 %v3004, %v1400
    %v3016 = vmul.f32 %v3008, %v1401
    %v3023 = vrot.slane %v3011, 3
    %v3024 = vrot.slane %v3013, 3
    %v3025 = vsel %vm251, %v3023, %v3024
    %v3026 = vrot.slane %v3012, 3
    %v3027 = vrot.slane %v3014, 3
    %v3028 = vsel %vm251, %v3026, %v3027
    %v3029 = vrot.slane %v3015, 3
    %v3030 = vsel %vm251, %v3024, %v3029
    %v3031 = vrot.slane %v3016, 3
    %v3032 = vsel %vm251, %v3027, %v3031
    %v3037 = vadd.f32 %v2994, %v3025
    %v3038 = vadd.f32 %v2995, %v3028
    %v3039 = vadd.f32 %v2996, %v3030
    %v3040 = vadd.f32 %v2997, %v3032
    %s3041 = scalar_lea.vmem %s3, 71
    %v3042 = vld [vmem:[%s3041] ss:$8 sm:$0x3]
    %v3044 = vlaneseq
    %v3045 = vshrl.u32 %v3044, 7
    %v3046 = vsub.s32 0, %v3045
    %v3047 = vrot.slane %v3042, %v3046
    %v3048 = vlaneseq
    %v3049 = vshrl.u32 %v3048, 7
    %v3050 = vsub.s32 1, %v3049
    %v3051 = vrot.slane %v3042, %v3050
    %v3054 = vmul.f32 %v3047, %v1402
    %v3055 = vmul.f32 %v3051, %v1403
    %v3056 = vmul.f32 %v3047, %v1388
    %v3057 = vmul.f32 %v3051, %v1389
    %v3058 = vmul.f32 %v3047, %v1404
    %v3059 = vmul.f32 %v3051, %v1405
    %v3066 = vrot.slane %v3054, 4
    %v3067 = vrot.slane %v3056, 4
    %v3068 = vsel %vm320, %v3066, %v3067
    %v3069 = vrot.slane %v3055, 4
    %v3070 = vrot.slane %v3057, 4
    %v3071 = vsel %vm320, %v3069, %v3070
    %v3072 = vrot.slane %v3058, 4
    %v3073 = vsel %vm320, %v3067, %v3072
    %v3074 = vrot.slane %v3059, 4
    %v3075 = vsel %vm320, %v3070, %v3074
    %v3080 = vadd.f32 %v3037, %v3068
    %v3081 = vadd.f32 %v3038, %v3071
    %v3082 = vadd.f32 %v3039, %v3073
    %v3083 = vadd.f32 %v3040, %v3075
    %s3084 = scalar_lea.vmem %s3, 80
    %v3085 = vld [vmem:[%s3084] ss:$8 sm:$0x3]
    %v3087 = vlaneseq
    %v3088 = vshrl.u32 %v3087, 7
    %v3089 = vsub.s32 0, %v3088
    %v3090 = vrot.slane %v3085, %v3089
    %v3091 = vlaneseq
    %v3092 = vshrl.u32 %v3091, 7
    %v3093 = vsub.s32 1, %v3092
    %v3094 = vrot.slane %v3085, %v3093
    %v3097 = vmul.f32 %v3090, %v1406
    %v3098 = vmul.f32 %v3094, %v1407
    %v3099 = vmul.f32 %v3090, %v1388
    %v3100 = vmul.f32 %v3094, %v1389
    %v3101 = vmul.f32 %v3090, %v1408
    %v3102 = vmul.f32 %v3094, %v1409
    %v3109 = vrot.slane %v3097, 5
    %v3110 = vrot.slane %v3099, 5
    %v3111 = vsel %vm389, %v3109, %v3110
    %v3112 = vrot.slane %v3098, 5
    %v3113 = vrot.slane %v3100, 5
    %v3114 = vsel %vm389, %v3112, %v3113
    %v3115 = vrot.slane %v3101, 5
    %v3116 = vsel %vm389, %v3110, %v3115
    %v3117 = vrot.slane %v3102, 5
    %v3118 = vsel %vm389, %v3113, %v3117
    %v3123 = vadd.f32 %v3080, %v3111
    %v3124 = vadd.f32 %v3081, %v3114
    %v3125 = vadd.f32 %v3082, %v3116
    %v3126 = vadd.f32 %v3083, %v3118
    %s3127 = scalar_lea.vmem %s3, 81
    %v3128 = vld [vmem:[%s3127] ss:$8 sm:$0x3]
    %v3130 = vlaneseq
    %v3131 = vshrl.u32 %v3130, 7
    %v3132 = vsub.s32 0, %v3131
    %v3133 = vrot.slane %v3128, %v3132
    %v3134 = vlaneseq
    %v3135 = vshrl.u32 %v3134, 7
    %v3136 = vsub.s32 1, %v3135
    %v3137 = vrot.slane %v3128, %v3136
    %v3140 = vmul.f32 %v3133, %v1410
    %v3141 = vmul.f32 %v3137, %v1411
    %v3142 = vmul.f32 %v3133, %v1388
    %v3143 = vmul.f32 %v3137, %v1389
    %v3144 = vmul.f32 %v3133, %v1412
    %v3145 = vmul.f32 %v3137, %v1413
    %v3152 = vrot.slane %v3140, 6
    %v3153 = vrot.slane %v3142, 6
    %v3154 = vsel %vm1670, %v3152, %v3153
    %v3155 = vrot.slane %v3141, 6
    %v3156 = vrot.slane %v3143, 6
    %v3157 = vsel %vm1670, %v3155, %v3156
    %v3158 = vrot.slane %v3144, 6
    %v3159 = vsel %vm1670, %v3153, %v3158
    %v3160 = vrot.slane %v3145, 6
    %v3161 = vsel %vm1670, %v3156, %v3160
    %v3166 = vadd.f32 %v3123, %v3154
    %v3167 = vadd.f32 %v3124, %v3157
    %v3168 = vadd.f32 %v3125, %v3159
    %v3169 = vadd.f32 %v3126, %v3161
    %3174 = vrot.lane.b32.xlu0 %v3166, 126
    %v3175 = vpop.permute.xlu0 %3174
    %3176 = vrot.lane.b32.xlu0 %v3167, 126
    %v3177 = vpop.permute.xlu0 %3176
    %3178 = vrot.lane.b32.xlu0 %v3168, 126
    %v3179 = vpop.permute.xlu0 %3178
    %3180 = vrot.lane.b32.xlu0 %v3169, 126
    %v3181 = vpop.permute.xlu0 %3180
    %v3182 = vsel %vm458, %v3175, %v3177
    %v3183 = vsel %vm458, %v3179, %v3181
    %v3190 = vsel %vm458, %v3177, %v3175
    %v3191 = vsel %vm458, %v3181, %v3179
    %v3192 = vadd.f32 %v2891, %v3182
    %v3193 = vadd.f32 %v2892, %v3190
    %v3194 = vadd.f32 %v2893, %v3183
    %v3195 = vadd.f32 %v2894, %v3191
    %s3196 = scalar_lea.vmem %s3, 82
    %v3197 = vld [vmem:[%s3196] ss:$8 sm:$0x3]
    %v3199 = vlaneseq
    %v3200 = vshrl.u32 %v3199, 7
    %v3201 = vsub.s32 0, %v3200
    %v3202 = vrot.slane %v3197, %v3201
    %v3203 = vlaneseq
    %v3204 = vshrl.u32 %v3203, 7
    %v3205 = vsub.s32 1, %v3204
    %v3206 = vrot.slane %v3197, %v3205
    %v3209 = vmul.f32 %v3202, %v1386
    %v3210 = vmul.f32 %v3206, %v1387
    %v3211 = vmul.f32 %v3202, %v1388
    %v3212 = vmul.f32 %v3206, %v1389
    %s3213 = scalar_lea.vmem %s3, 83
    %v3214 = vld [vmem:[%s3213] ss:$8 sm:$0x3]
    %v3216 = vlaneseq
    %v3217 = vshrl.u32 %v3216, 7
    %v3218 = vsub.s32 0, %v3217
    %v3219 = vrot.slane %v3214, %v3218
    %v3220 = vlaneseq
    %v3221 = vshrl.u32 %v3220, 7
    %v3222 = vsub.s32 1, %v3221
    %v3223 = vrot.slane %v3214, %v3222
    %v3226 = vmul.f32 %v3219, %v1390
    %v3227 = vmul.f32 %v3223, %v1391
    %v3228 = vmul.f32 %v3219, %v1388
    %v3229 = vmul.f32 %v3223, %v1389
    %v3230 = vmul.f32 %v3219, %v1392
    %v3231 = vmul.f32 %v3223, %v1393
    %v3238 = vrot.slane %v3226, 1
    %v3239 = vrot.slane %v3228, 1
    %v3240 = vsel %vm116, %v3238, %v3239
    %v3241 = vrot.slane %v3227, 1
    %v3242 = vrot.slane %v3229, 1
    %v3243 = vsel %vm116, %v3241, %v3242
    %v3244 = vrot.slane %v3230, 1
    %v3245 = vsel %vm116, %v3239, %v3244
    %v3246 = vrot.slane %v3231, 1
    %v3247 = vsel %vm116, %v3242, %v3246
    %v3252 = vadd.f32 %v3209, %v3240
    %v3253 = vadd.f32 %v3210, %v3243
    %v3254 = vadd.f32 %v3211, %v3245
    %v3255 = vadd.f32 %v3212, %v3247
    %s3256 = scalar_lea.vmem %s3, 84
    %v3257 = vld [vmem:[%s3256] ss:$8 sm:$0x3]
    %v3259 = vlaneseq
    %v3260 = vshrl.u32 %v3259, 7
    %v3261 = vsub.s32 0, %v3260
    %v3262 = vrot.slane %v3257, %v3261
    %v3263 = vlaneseq
    %v3264 = vshrl.u32 %v3263, 7
    %v3265 = vsub.s32 1, %v3264
    %v3266 = vrot.slane %v3257, %v3265
    %v3269 = vmul.f32 %v3262, %v1394
    %v3270 = vmul.f32 %v3266, %v1395
    %v3271 = vmul.f32 %v3262, %v1388
    %v3272 = vmul.f32 %v3266, %v1389
    %v3273 = vmul.f32 %v3262, %v1396
    %v3274 = vmul.f32 %v3266, %v1397
    %v3281 = vrot.slane %v3269, 2
    %v3282 = vrot.slane %v3271, 2
    %v3283 = vsel %vm182, %v3281, %v3282
    %v3284 = vrot.slane %v3270, 2
    %v3285 = vrot.slane %v3272, 2
    %v3286 = vsel %vm182, %v3284, %v3285
    %v3287 = vrot.slane %v3273, 2
    %v3288 = vsel %vm182, %v3282, %v3287
    %v3289 = vrot.slane %v3274, 2
    %v3290 = vsel %vm182, %v3285, %v3289
    %v3295 = vadd.f32 %v3252, %v3283
    %v3296 = vadd.f32 %v3253, %v3286
    %v3297 = vadd.f32 %v3254, %v3288
    %v3298 = vadd.f32 %v3255, %v3290
    %s3299 = scalar_lea.vmem %s3, 85
    %v3300 = vld [vmem:[%s3299] ss:$8 sm:$0x3]
    %v3302 = vlaneseq
    %v3303 = vshrl.u32 %v3302, 7
    %v3304 = vsub.s32 0, %v3303
    %v3305 = vrot.slane %v3300, %v3304
    %v3306 = vlaneseq
    %v3307 = vshrl.u32 %v3306, 7
    %v3308 = vsub.s32 1, %v3307
    %v3309 = vrot.slane %v3300, %v3308
    %v3312 = vmul.f32 %v3305, %v1398
    %v3313 = vmul.f32 %v3309, %v1399
    %v3314 = vmul.f32 %v3305, %v1388
    %v3315 = vmul.f32 %v3309, %v1389
    %v3316 = vmul.f32 %v3305, %v1400
    %v3317 = vmul.f32 %v3309, %v1401
    %v3324 = vrot.slane %v3312, 3
    %v3325 = vrot.slane %v3314, 3
    %v3326 = vsel %vm251, %v3324, %v3325
    %v3327 = vrot.slane %v3313, 3
    %v3328 = vrot.slane %v3315, 3
    %v3329 = vsel %vm251, %v3327, %v3328
    %v3330 = vrot.slane %v3316, 3
    %v3331 = vsel %vm251, %v3325, %v3330
    %v3332 = vrot.slane %v3317, 3
    %v3333 = vsel %vm251, %v3328, %v3332
    %v3338 = vadd.f32 %v3295, %v3326
    %v3339 = vadd.f32 %v3296, %v3329
    %v3340 = vadd.f32 %v3297, %v3331
    %v3341 = vadd.f32 %v3298, %v3333
    %s3342 = scalar_lea.vmem %s3, 86
    %v3343 = vld [vmem:[%s3342] ss:$8 sm:$0x3]
    %v3345 = vlaneseq
    %v3346 = vshrl.u32 %v3345, 7
    %v3347 = vsub.s32 0, %v3346
    %v3348 = vrot.slane %v3343, %v3347
    %v3349 = vlaneseq
    %v3350 = vshrl.u32 %v3349, 7
    %v3351 = vsub.s32 1, %v3350
    %v3352 = vrot.slane %v3343, %v3351
    %v3355 = vmul.f32 %v3348, %v1402
    %v3356 = vmul.f32 %v3352, %v1403
    %v3357 = vmul.f32 %v3348, %v1388
    %v3358 = vmul.f32 %v3352, %v1389
    %v3359 = vmul.f32 %v3348, %v1404
    %v3360 = vmul.f32 %v3352, %v1405
    %v3367 = vrot.slane %v3355, 4
    %v3368 = vrot.slane %v3357, 4
    %v3369 = vsel %vm320, %v3367, %v3368
    %v3370 = vrot.slane %v3356, 4
    %v3371 = vrot.slane %v3358, 4
    %v3372 = vsel %vm320, %v3370, %v3371
    %v3373 = vrot.slane %v3359, 4
    %v3374 = vsel %vm320, %v3368, %v3373
    %v3375 = vrot.slane %v3360, 4
    %v3376 = vsel %vm320, %v3371, %v3375
    %v3381 = vadd.f32 %v3338, %v3369
    %v3382 = vadd.f32 %v3339, %v3372
    %v3383 = vadd.f32 %v3340, %v3374
    %v3384 = vadd.f32 %v3341, %v3376
    %s3385 = scalar_lea.vmem %s3, 87
    %v3386 = vld [vmem:[%s3385] ss:$8 sm:$0x3]
    %v3388 = vlaneseq
    %v3389 = vshrl.u32 %v3388, 7
    %v3390 = vsub.s32 0, %v3389
    %v3391 = vrot.slane %v3386, %v3390
    %v3392 = vlaneseq
    %v3393 = vshrl.u32 %v3392, 7
    %v3394 = vsub.s32 1, %v3393
    %v3395 = vrot.slane %v3386, %v3394
    %v3398 = vmul.f32 %v3391, %v1406
    %v3399 = vmul.f32 %v3395, %v1407
    %v3400 = vmul.f32 %v3391, %v1388
    %v3401 = vmul.f32 %v3395, %v1389
    %v3402 = vmul.f32 %v3391, %v1408
    %v3403 = vmul.f32 %v3395, %v1409
    %v3410 = vrot.slane %v3398, 5
    %v3411 = vrot.slane %v3400, 5
    %v3412 = vsel %vm389, %v3410, %v3411
    %v3413 = vrot.slane %v3399, 5
    %v3414 = vrot.slane %v3401, 5
    %v3415 = vsel %vm389, %v3413, %v3414
    %v3416 = vrot.slane %v3402, 5
    %v3417 = vsel %vm389, %v3411, %v3416
    %v3418 = vrot.slane %v3403, 5
    %v3419 = vsel %vm389, %v3414, %v3418
    %v3424 = vadd.f32 %v3381, %v3412
    %v3425 = vadd.f32 %v3382, %v3415
    %v3426 = vadd.f32 %v3383, %v3417
    %v3427 = vadd.f32 %v3384, %v3419
    %s3428 = scalar_lea.vmem %s3, 96
    %v3429 = vld [vmem:[%s3428] ss:$8 sm:$0x3]
    %v3431 = vlaneseq
    %v3432 = vshrl.u32 %v3431, 7
    %v3433 = vsub.s32 0, %v3432
    %v3434 = vrot.slane %v3429, %v3433
    %v3435 = vlaneseq
    %v3436 = vshrl.u32 %v3435, 7
    %v3437 = vsub.s32 1, %v3436
    %v3438 = vrot.slane %v3429, %v3437
    %v3441 = vmul.f32 %v3434, %v1410
    %v3442 = vmul.f32 %v3438, %v1411
    %v3443 = vmul.f32 %v3434, %v1388
    %v3444 = vmul.f32 %v3438, %v1389
    %v3445 = vmul.f32 %v3434, %v1412
    %v3446 = vmul.f32 %v3438, %v1413
    %v3453 = vrot.slane %v3441, 6
    %v3454 = vrot.slane %v3443, 6
    %v3455 = vsel %vm1670, %v3453, %v3454
    %v3456 = vrot.slane %v3442, 6
    %v3457 = vrot.slane %v3444, 6
    %v3458 = vsel %vm1670, %v3456, %v3457
    %v3459 = vrot.slane %v3445, 6
    %v3460 = vsel %vm1670, %v3454, %v3459
    %v3461 = vrot.slane %v3446, 6
    %v3462 = vsel %vm1670, %v3457, %v3461
    %v3467 = vadd.f32 %v3424, %v3455
    %v3468 = vadd.f32 %v3425, %v3458
    %v3469 = vadd.f32 %v3426, %v3460
    %v3470 = vadd.f32 %v3427, %v3462
    %3475 = vrot.lane.b32.xlu0 %v3467, 125
    %v3476 = vpop.permute.xlu0 %3475
    %3477 = vrot.lane.b32.xlu0 %v3468, 125
    %v3478 = vpop.permute.xlu0 %3477
    %3479 = vrot.lane.b32.xlu0 %v3469, 125
    %v3480 = vpop.permute.xlu0 %3479
    %3481 = vrot.lane.b32.xlu0 %v3470, 125
    %v3482 = vpop.permute.xlu0 %3481
    %v3483 = vsel %vm664, %v3476, %v3478
    %v3484 = vsel %vm664, %v3480, %v3482
    %v3491 = vsel %vm664, %v3478, %v3476
    %v3492 = vsel %vm664, %v3482, %v3480
    %v3493 = vadd.f32 %v3192, %v3483
    %v3494 = vadd.f32 %v3193, %v3491
    %v3495 = vadd.f32 %v3194, %v3484
    %v3496 = vadd.f32 %v3195, %v3492
    %s3497 = scalar_lea.vmem %s3, 97
    %v3498 = vld [vmem:[%s3497] ss:$8 sm:$0x3]
    %v3500 = vlaneseq
    %v3501 = vshrl.u32 %v3500, 7
    %v3502 = vsub.s32 0, %v3501
    %v3503 = vrot.slane %v3498, %v3502
    %v3504 = vlaneseq
    %v3505 = vshrl.u32 %v3504, 7
    %v3506 = vsub.s32 1, %v3505
    %v3507 = vrot.slane %v3498, %v3506
    %v3510 = vmul.f32 %v3503, %v1386
    %v3511 = vmul.f32 %v3507, %v1387
    %v3512 = vmul.f32 %v3503, %v1388
    %v3513 = vmul.f32 %v3507, %v1389
    %s3514 = scalar_lea.vmem %s3, 98
    %v3515 = vld [vmem:[%s3514] ss:$8 sm:$0x3]
    %v3517 = vlaneseq
    %v3518 = vshrl.u32 %v3517, 7
    %v3519 = vsub.s32 0, %v3518
    %v3520 = vrot.slane %v3515, %v3519
    %v3521 = vlaneseq
    %v3522 = vshrl.u32 %v3521, 7
    %v3523 = vsub.s32 1, %v3522
    %v3524 = vrot.slane %v3515, %v3523
    %v3527 = vmul.f32 %v3520, %v1390
    %v3528 = vmul.f32 %v3524, %v1391
    %v3529 = vmul.f32 %v3520, %v1388
    %v3530 = vmul.f32 %v3524, %v1389
    %v3531 = vmul.f32 %v3520, %v1392
    %v3532 = vmul.f32 %v3524, %v1393
    %v3539 = vrot.slane %v3527, 1
    %v3540 = vrot.slane %v3529, 1
    %v3541 = vsel %vm116, %v3539, %v3540
    %v3542 = vrot.slane %v3528, 1
    %v3543 = vrot.slane %v3530, 1
    %v3544 = vsel %vm116, %v3542, %v3543
    %v3545 = vrot.slane %v3531, 1
    %v3546 = vsel %vm116, %v3540, %v3545
    %v3547 = vrot.slane %v3532, 1
    %v3548 = vsel %vm116, %v3543, %v3547
    %v3553 = vadd.f32 %v3510, %v3541
    %v3554 = vadd.f32 %v3511, %v3544
    %v3555 = vadd.f32 %v3512, %v3546
    %v3556 = vadd.f32 %v3513, %v3548
    %s3557 = scalar_lea.vmem %s3, 99
    %v3558 = vld [vmem:[%s3557] ss:$8 sm:$0x3]
    %v3560 = vlaneseq
    %v3561 = vshrl.u32 %v3560, 7
    %v3562 = vsub.s32 0, %v3561
    %v3563 = vrot.slane %v3558, %v3562
    %v3564 = vlaneseq
    %v3565 = vshrl.u32 %v3564, 7
    %v3566 = vsub.s32 1, %v3565
    %v3567 = vrot.slane %v3558, %v3566
    %v3570 = vmul.f32 %v3563, %v1394
    %v3571 = vmul.f32 %v3567, %v1395
    %v3572 = vmul.f32 %v3563, %v1388
    %v3573 = vmul.f32 %v3567, %v1389
    %v3574 = vmul.f32 %v3563, %v1396
    %v3575 = vmul.f32 %v3567, %v1397
    %v3582 = vrot.slane %v3570, 2
    %v3583 = vrot.slane %v3572, 2
    %v3584 = vsel %vm182, %v3582, %v3583
    %v3585 = vrot.slane %v3571, 2
    %v3586 = vrot.slane %v3573, 2
    %v3587 = vsel %vm182, %v3585, %v3586
    %v3588 = vrot.slane %v3574, 2
    %v3589 = vsel %vm182, %v3583, %v3588
    %v3590 = vrot.slane %v3575, 2
    %v3591 = vsel %vm182, %v3586, %v3590
    %v3596 = vadd.f32 %v3553, %v3584
    %v3597 = vadd.f32 %v3554, %v3587
    %v3598 = vadd.f32 %v3555, %v3589
    %v3599 = vadd.f32 %v3556, %v3591
    %s3600 = scalar_lea.vmem %s3, 100
    %v3601 = vld [vmem:[%s3600] ss:$8 sm:$0x3]
    %v3603 = vlaneseq
    %v3604 = vshrl.u32 %v3603, 7
    %v3605 = vsub.s32 0, %v3604
    %v3606 = vrot.slane %v3601, %v3605
    %v3607 = vlaneseq
    %v3608 = vshrl.u32 %v3607, 7
    %v3609 = vsub.s32 1, %v3608
    %v3610 = vrot.slane %v3601, %v3609
    %v3613 = vmul.f32 %v3606, %v1398
    %v3614 = vmul.f32 %v3610, %v1399
    %v3615 = vmul.f32 %v3606, %v1388
    %v3616 = vmul.f32 %v3610, %v1389
    %v3617 = vmul.f32 %v3606, %v1400
    %v3618 = vmul.f32 %v3610, %v1401
    %v3625 = vrot.slane %v3613, 3
    %v3626 = vrot.slane %v3615, 3
    %v3627 = vsel %vm251, %v3625, %v3626
    %v3628 = vrot.slane %v3614, 3
    %v3629 = vrot.slane %v3616, 3
    %v3630 = vsel %vm251, %v3628, %v3629
    %v3631 = vrot.slane %v3617, 3
    %v3632 = vsel %vm251, %v3626, %v3631
    %v3633 = vrot.slane %v3618, 3
    %v3634 = vsel %vm251, %v3629, %v3633
    %v3639 = vadd.f32 %v3596, %v3627
    %v3640 = vadd.f32 %v3597, %v3630
    %v3641 = vadd.f32 %v3598, %v3632
    %v3642 = vadd.f32 %v3599, %v3634
    %s3643 = scalar_lea.vmem %s3, 101
    %v3644 = vld [vmem:[%s3643] ss:$8 sm:$0x3]
    %v3646 = vlaneseq
    %v3647 = vshrl.u32 %v3646, 7
    %v3648 = vsub.s32 0, %v3647
    %v3649 = vrot.slane %v3644, %v3648
    %v3650 = vlaneseq
    %v3651 = vshrl.u32 %v3650, 7
    %v3652 = vsub.s32 1, %v3651
    %v3653 = vrot.slane %v3644, %v3652
    %v3656 = vmul.f32 %v3649, %v1402
    %v3657 = vmul.f32 %v3653, %v1403
    %v3658 = vmul.f32 %v3649, %v1388
    %v3659 = vmul.f32 %v3653, %v1389
    %v3660 = vmul.f32 %v3649, %v1404
    %v3661 = vmul.f32 %v3653, %v1405
    %v3668 = vrot.slane %v3656, 4
    %v3669 = vrot.slane %v3658, 4
    %v3670 = vsel %vm320, %v3668, %v3669
    %v3671 = vrot.slane %v3657, 4
    %v3672 = vrot.slane %v3659, 4
    %v3673 = vsel %vm320, %v3671, %v3672
    %v3674 = vrot.slane %v3660, 4
    %v3675 = vsel %vm320, %v3669, %v3674
    %v3676 = vrot.slane %v3661, 4
    %v3677 = vsel %vm320, %v3672, %v3676
    %v3682 = vadd.f32 %v3639, %v3670
    %v3683 = vadd.f32 %v3640, %v3673
    %v3684 = vadd.f32 %v3641, %v3675
    %v3685 = vadd.f32 %v3642, %v3677
    %s3686 = scalar_lea.vmem %s3, 102
    %v3687 = vld [vmem:[%s3686] ss:$8 sm:$0x3]
    %v3689 = vlaneseq
    %v3690 = vshrl.u32 %v3689, 7
    %v3691 = vsub.s32 0, %v3690
    %v3692 = vrot.slane %v3687, %v3691
    %v3693 = vlaneseq
    %v3694 = vshrl.u32 %v3693, 7
    %v3695 = vsub.s32 1, %v3694
    %v3696 = vrot.slane %v3687, %v3695
    %v3699 = vmul.f32 %v3692, %v1406
    %v3700 = vmul.f32 %v3696, %v1407
    %v3701 = vmul.f32 %v3692, %v1388
    %v3702 = vmul.f32 %v3696, %v1389
    %v3703 = vmul.f32 %v3692, %v1408
    %v3704 = vmul.f32 %v3696, %v1409
    %v3711 = vrot.slane %v3699, 5
    %v3712 = vrot.slane %v3701, 5
    %v3713 = vsel %vm389, %v3711, %v3712
    %v3714 = vrot.slane %v3700, 5
    %v3715 = vrot.slane %v3702, 5
    %v3716 = vsel %vm389, %v3714, %v3715
    %v3717 = vrot.slane %v3703, 5
    %v3718 = vsel %vm389, %v3712, %v3717
    %v3719 = vrot.slane %v3704, 5
    %v3720 = vsel %vm389, %v3715, %v3719
    %v3725 = vadd.f32 %v3682, %v3713
    %v3726 = vadd.f32 %v3683, %v3716
    %v3727 = vadd.f32 %v3684, %v3718
    %v3728 = vadd.f32 %v3685, %v3720
    %s3729 = scalar_lea.vmem %s3, 103
    %v3730 = vld [vmem:[%s3729] ss:$8 sm:$0x3]
    %v3732 = vlaneseq
    %v3733 = vshrl.u32 %v3732, 7
    %v3734 = vsub.s32 0, %v3733
    %v3735 = vrot.slane %v3730, %v3734
    %v3736 = vlaneseq
    %v3737 = vshrl.u32 %v3736, 7
    %v3738 = vsub.s32 1, %v3737
    %v3739 = vrot.slane %v3730, %v3738
    %v3742 = vmul.f32 %v3735, %v1410
    %v3743 = vmul.f32 %v3739, %v1411
    %v3744 = vmul.f32 %v3735, %v1388
    %v3745 = vmul.f32 %v3739, %v1389
    %v3746 = vmul.f32 %v3735, %v1412
    %v3747 = vmul.f32 %v3739, %v1413
    %v3754 = vrot.slane %v3742, 6
    %v3755 = vrot.slane %v3744, 6
    %v3756 = vsel %vm1670, %v3754, %v3755
    %v3757 = vrot.slane %v3743, 6
    %v3758 = vrot.slane %v3745, 6
    %v3759 = vsel %vm1670, %v3757, %v3758
    %v3760 = vrot.slane %v3746, 6
    %v3761 = vsel %vm1670, %v3755, %v3760
    %v3762 = vrot.slane %v3747, 6
    %v3763 = vsel %vm1670, %v3758, %v3762
    %v3768 = vadd.f32 %v3725, %v3756
    %v3769 = vadd.f32 %v3726, %v3759
    %v3770 = vadd.f32 %v3727, %v3761
    %v3771 = vadd.f32 %v3728, %v3763
    %3774 = vrot.lane.b32.xlu0 %v3769, 67
    %v3775 = vpop.permute.xlu0 %3774
    %3776 = vrot.lane.b32.xlu0 %v3771, 67
    %v3777 = vpop.permute.xlu0 %3776
    %3782 = vrot.lane.b32.xlu0 %v3768, 67
    %v3783 = vpop.permute.xlu0 %3782
    %3784 = vrot.lane.b32.xlu0 %v3770, 67
    %v3785 = vpop.permute.xlu0 %3784
    %vm3786 = vcmask 547840
    %v3787 = vsel %vm3786, %v3783, %v3775
    %v3788 = vsel %vm3786, %v3785, %v3777
    %v3793 = vsel %vm3786, %v3775, %v3783
    %v3794 = vsel %vm3786, %v3777, %v3785
    %v3795 = vadd.f32 %v3493, %v3793
    %v3796 = vadd.f32 %v3494, %v3787
    %v3797 = vadd.f32 %v3495, %v3794
    %v3798 = vadd.f32 %v3496, %v3788
    %s3799 = scalar_lea.vmem %s3, 112
    %v3800 = vld [vmem:[%s3799] ss:$8 sm:$0x3]
    %v3802 = vlaneseq
    %v3803 = vshrl.u32 %v3802, 7
    %v3804 = vsub.s32 0, %v3803
    %v3805 = vrot.slane %v3800, %v3804
    %v3806 = vlaneseq
    %v3807 = vshrl.u32 %v3806, 7
    %v3808 = vsub.s32 1, %v3807
    %v3809 = vrot.slane %v3800, %v3808
    %v3812 = vmul.f32 %v3805, %v1386
    %v3813 = vmul.f32 %v3809, %v1387
    %v3814 = vmul.f32 %v3805, %v1388
    %v3815 = vmul.f32 %v3809, %v1389
    %s3816 = scalar_lea.vmem %s3, 113
    %v3817 = vld [vmem:[%s3816] ss:$8 sm:$0x3]
    %v3819 = vlaneseq
    %v3820 = vshrl.u32 %v3819, 7
    %v3821 = vsub.s32 0, %v3820
    %v3822 = vrot.slane %v3817, %v3821
    %v3823 = vlaneseq
    %v3824 = vshrl.u32 %v3823, 7
    %v3825 = vsub.s32 1, %v3824
    %v3826 = vrot.slane %v3817, %v3825
    %v3829 = vmul.f32 %v3822, %v1390
    %v3830 = vmul.f32 %v3826, %v1391
    %v3831 = vmul.f32 %v3822, %v1388
    %v3832 = vmul.f32 %v3826, %v1389
    %v3833 = vmul.f32 %v3822, %v1392
    %v3834 = vmul.f32 %v3826, %v1393
    %v3841 = vrot.slane %v3829, 1
    %v3842 = vrot.slane %v3831, 1
    %v3843 = vsel %vm116, %v3841, %v3842
    %v3844 = vrot.slane %v3830, 1
    %v3845 = vrot.slane %v3832, 1
    %v3846 = vsel %vm116, %v3844, %v3845
    %v3847 = vrot.slane %v3833, 1
    %v3848 = vsel %vm116, %v3842, %v3847
    %v3849 = vrot.slane %v3834, 1
    %v3850 = vsel %vm116, %v3845, %v3849
    %v3855 = vadd.f32 %v3812, %v3843
    %v3856 = vadd.f32 %v3813, %v3846
    %v3857 = vadd.f32 %v3814, %v3848
    %v3858 = vadd.f32 %v3815, %v3850
    %s3859 = scalar_lea.vmem %s3, 114
    %v3860 = vld [vmem:[%s3859] ss:$8 sm:$0x3]
    %v3862 = vlaneseq
    %v3863 = vshrl.u32 %v3862, 7
    %v3864 = vsub.s32 0, %v3863
    %v3865 = vrot.slane %v3860, %v3864
    %v3866 = vlaneseq
    %v3867 = vshrl.u32 %v3866, 7
    %v3868 = vsub.s32 1, %v3867
    %v3869 = vrot.slane %v3860, %v3868
    %v3872 = vmul.f32 %v3865, %v1394
    %v3873 = vmul.f32 %v3869, %v1395
    %v3874 = vmul.f32 %v3865, %v1388
    %v3875 = vmul.f32 %v3869, %v1389
    %v3876 = vmul.f32 %v3865, %v1396
    %v3877 = vmul.f32 %v3869, %v1397
    %v3884 = vrot.slane %v3872, 2
    %v3885 = vrot.slane %v3874, 2
    %v3886 = vsel %vm182, %v3884, %v3885
    %v3887 = vrot.slane %v3873, 2
    %v3888 = vrot.slane %v3875, 2
    %v3889 = vsel %vm182, %v3887, %v3888
    %v3890 = vrot.slane %v3876, 2
    %v3891 = vsel %vm182, %v3885, %v3890
    %v3892 = vrot.slane %v3877, 2
    %v3893 = vsel %vm182, %v3888, %v3892
    %v3898 = vadd.f32 %v3855, %v3886
    %v3899 = vadd.f32 %v3856, %v3889
    %v3900 = vadd.f32 %v3857, %v3891
    %v3901 = vadd.f32 %v3858, %v3893
    %s3902 = scalar_lea.vmem %s3, 115
    %v3903 = vld [vmem:[%s3902] ss:$8 sm:$0x3]
    %v3905 = vlaneseq
    %v3906 = vshrl.u32 %v3905, 7
    %v3907 = vsub.s32 0, %v3906
    %v3908 = vrot.slane %v3903, %v3907
    %v3909 = vlaneseq
    %v3910 = vshrl.u32 %v3909, 7
    %v3911 = vsub.s32 1, %v3910
    %v3912 = vrot.slane %v3903, %v3911
    %v3915 = vmul.f32 %v3908, %v1398
    %v3916 = vmul.f32 %v3912, %v1399
    %v3917 = vmul.f32 %v3908, %v1388
    %v3918 = vmul.f32 %v3912, %v1389
    %v3919 = vmul.f32 %v3908, %v1400
    %v3920 = vmul.f32 %v3912, %v1401
    %v3927 = vrot.slane %v3915, 3
    %v3928 = vrot.slane %v3917, 3
    %v3929 = vsel %vm251, %v3927, %v3928
    %v3930 = vrot.slane %v3916, 3
    %v3931 = vrot.slane %v3918, 3
    %v3932 = vsel %vm251, %v3930, %v3931
    %v3933 = vrot.slane %v3919, 3
    %v3934 = vsel %vm251, %v3928, %v3933
    %v3935 = vrot.slane %v3920, 3
    %v3936 = vsel %vm251, %v3931, %v3935
    %v3941 = vadd.f32 %v3898, %v3929
    %v3942 = vadd.f32 %v3899, %v3932
    %v3943 = vadd.f32 %v3900, %v3934
    %v3944 = vadd.f32 %v3901, %v3936
    %s3945 = scalar_lea.vmem %s3, 116
    %v3946 = vld [vmem:[%s3945] ss:$8 sm:$0x3]
    %v3948 = vlaneseq
    %v3949 = vshrl.u32 %v3948, 7
    %v3950 = vsub.s32 0, %v3949
    %v3951 = vrot.slane %v3946, %v3950
    %v3952 = vlaneseq
    %v3953 = vshrl.u32 %v3952, 7
    %v3954 = vsub.s32 1, %v3953
    %v3955 = vrot.slane %v3946, %v3954
    %v3958 = vmul.f32 %v3951, %v1402
    %v3959 = vmul.f32 %v3955, %v1403
    %v3960 = vmul.f32 %v3951, %v1388
    %v3961 = vmul.f32 %v3955, %v1389
    %v3962 = vmul.f32 %v3951, %v1404
    %v3963 = vmul.f32 %v3955, %v1405
    %v3970 = vrot.slane %v3958, 4
    %v3971 = vrot.slane %v3960, 4
    %v3972 = vsel %vm320, %v3970, %v3971
    %v3973 = vrot.slane %v3959, 4
    %v3974 = vrot.slane %v3961, 4
    %v3975 = vsel %vm320, %v3973, %v3974
    %v3976 = vrot.slane %v3962, 4
    %v3977 = vsel %vm320, %v3971, %v3976
    %v3978 = vrot.slane %v3963, 4
    %v3979 = vsel %vm320, %v3974, %v3978
    %v3984 = vadd.f32 %v3941, %v3972
    %v3985 = vadd.f32 %v3942, %v3975
    %v3986 = vadd.f32 %v3943, %v3977
    %v3987 = vadd.f32 %v3944, %v3979
    %s3988 = scalar_lea.vmem %s3, 117
    %v3989 = vld [vmem:[%s3988] ss:$8 sm:$0x3]
    %v3991 = vlaneseq
    %v3992 = vshrl.u32 %v3991, 7
    %v3993 = vsub.s32 0, %v3992
    %v3994 = vrot.slane %v3989, %v3993
    %v3995 = vlaneseq
    %v3996 = vshrl.u32 %v3995, 7
    %v3997 = vsub.s32 1, %v3996
    %v3998 = vrot.slane %v3989, %v3997
    %v4001 = vmul.f32 %v3994, %v1406
    %v4002 = vmul.f32 %v3998, %v1407
    %v4003 = vmul.f32 %v3994, %v1388
    %v4004 = vmul.f32 %v3998, %v1389
    %v4005 = vmul.f32 %v3994, %v1408
    %v4006 = vmul.f32 %v3998, %v1409
    %v4013 = vrot.slane %v4001, 5
    %v4014 = vrot.slane %v4003, 5
    %v4015 = vsel %vm389, %v4013, %v4014
    %v4016 = vrot.slane %v4002, 5
    %v4017 = vrot.slane %v4004, 5
    %v4018 = vsel %vm389, %v4016, %v4017
    %v4019 = vrot.slane %v4005, 5
    %v4020 = vsel %vm389, %v4014, %v4019
    %v4021 = vrot.slane %v4006, 5
    %v4022 = vsel %vm389, %v4017, %v4021
    %v4027 = vadd.f32 %v3984, %v4015
    %v4028 = vadd.f32 %v3985, %v4018
    %v4029 = vadd.f32 %v3986, %v4020
    %v4030 = vadd.f32 %v3987, %v4022
    %s4031 = scalar_lea.vmem %s3, 118
    %v4032 = vld [vmem:[%s4031] ss:$8 sm:$0x3]
    %v4034 = vlaneseq
    %v4035 = vshrl.u32 %v4034, 7
    %v4036 = vsub.s32 0, %v4035
    %v4037 = vrot.slane %v4032, %v4036
    %v4038 = vlaneseq
    %v4039 = vshrl.u32 %v4038, 7
    %v4040 = vsub.s32 1, %v4039
    %v4041 = vrot.slane %v4032, %v4040
    %v4044 = vmul.f32 %v4037, %v1410
    %v4045 = vmul.f32 %v4041, %v1411
    %v4046 = vmul.f32 %v4037, %v1388
    %v4047 = vmul.f32 %v4041, %v1389
    %v4048 = vmul.f32 %v4037, %v1412
    %v4049 = vmul.f32 %v4041, %v1413
    %v4056 = vrot.slane %v4044, 6
    %v4057 = vrot.slane %v4046, 6
    %v4058 = vsel %vm1670, %v4056, %v4057
    %v4059 = vrot.slane %v4045, 6
    %v4060 = vrot.slane %v4047, 6
    %v4061 = vsel %vm1670, %v4059, %v4060
    %v4062 = vrot.slane %v4048, 6
    %v4063 = vsel %vm1670, %v4057, %v4062
    %v4064 = vrot.slane %v4049, 6
    %v4065 = vsel %vm1670, %v4060, %v4064
    %v4070 = vadd.f32 %v4027, %v4058
    %v4071 = vadd.f32 %v4028, %v4061
    %v4072 = vadd.f32 %v4029, %v4063
    %v4073 = vadd.f32 %v4030, %v4065
    %4076 = vrot.lane.b32.xlu0 %v4071, 66
    %v4077 = vpop.permute.xlu0 %4076
    %4078 = vrot.lane.b32.xlu0 %v4073, 66
    %v4079 = vpop.permute.xlu0 %4078
    %4084 = vrot.lane.b32.xlu0 %v4070, 66
    %v4085 = vpop.permute.xlu0 %4084
    %4086 = vrot.lane.b32.xlu0 %v4072, 66
    %v4087 = vpop.permute.xlu0 %4086
    %vm4088 = vcmask 539648
    %v4089 = vsel %vm4088, %v4085, %v4077
    %v4090 = vsel %vm4088, %v4087, %v4079
    %v4095 = vsel %vm4088, %v4077, %v4085
    %v4096 = vsel %vm4088, %v4079, %v4087
    %v4097 = vadd.f32 %v3795, %v4095
    %v4098 = vadd.f32 %v3796, %v4089
    %v4099 = vadd.f32 %v3797, %v4096
    %v4100 = vadd.f32 %v3798, %v4090
    %s4101 = scalar_lea.vmem %s3, 119
    %v4102 = vld [vmem:[%s4101] ss:$8 sm:$0x3]
    %v4104 = vlaneseq
    %v4105 = vshrl.u32 %v4104, 7
    %v4106 = vsub.s32 0, %v4105
    %v4107 = vrot.slane %v4102, %v4106
    %v4108 = vlaneseq
    %v4109 = vshrl.u32 %v4108, 7
    %v4110 = vsub.s32 1, %v4109
    %v4111 = vrot.slane %v4102, %v4110
    %v4114 = vmul.f32 %v4107, %v1386
    %v4115 = vmul.f32 %v4111, %v1387
    %v4116 = vmul.f32 %v4107, %v1388
    %v4117 = vmul.f32 %v4111, %v1389
    %s4118 = scalar_lea.vmem %s3, 128
    %v4119 = vld [vmem:[%s4118] ss:$8 sm:$0x3]
    %v4121 = vlaneseq
    %v4122 = vshrl.u32 %v4121, 7
    %v4123 = vsub.s32 0, %v4122
    %v4124 = vrot.slane %v4119, %v4123
    %v4125 = vlaneseq
    %v4126 = vshrl.u32 %v4125, 7
    %v4127 = vsub.s32 1, %v4126
    %v4128 = vrot.slane %v4119, %v4127
    %v4131 = vmul.f32 %v4124, %v1390
    %v4132 = vmul.f32 %v4128, %v1391
    %v4133 = vmul.f32 %v4124, %v1388
    %v4134 = vmul.f32 %v4128, %v1389
    %v4135 = vmul.f32 %v4124, %v1392
    %v4136 = vmul.f32 %v4128, %v1393
    %v4143 = vrot.slane %v4131, 1
    %v4144 = vrot.slane %v4133, 1
    %v4145 = vsel %vm116, %v4143, %v4144
    %v4146 = vrot.slane %v4132, 1
    %v4147 = vrot.slane %v4134, 1
    %v4148 = vsel %vm116, %v4146, %v4147
    %v4149 = vrot.slane %v4135, 1
    %v4150 = vsel %vm116, %v4144, %v4149
    %v4151 = vrot.slane %v4136, 1
    %v4152 = vsel %vm116, %v4147, %v4151
    %v4157 = vadd.f32 %v4114, %v4145
    %v4158 = vadd.f32 %v4115, %v4148
    %v4159 = vadd.f32 %v4116, %v4150
    %v4160 = vadd.f32 %v4117, %v4152
    %s4161 = scalar_lea.vmem %s3, 129
    %v4162 = vld [vmem:[%s4161] ss:$8 sm:$0x3]
    %v4164 = vlaneseq
    %v4165 = vshrl.u32 %v4164, 7
    %v4166 = vsub.s32 0, %v4165
    %v4167 = vrot.slane %v4162, %v4166
    %v4168 = vlaneseq
    %v4169 = vshrl.u32 %v4168, 7
    %v4170 = vsub.s32 1, %v4169
    %v4171 = vrot.slane %v4162, %v4170
    %v4174 = vmul.f32 %v4167, %v1394
    %v4175 = vmul.f32 %v4171, %v1395
    %v4176 = vmul.f32 %v4167, %v1388
    %v4177 = vmul.f32 %v4171, %v1389
    %v4178 = vmul.f32 %v4167, %v1396
    %v4179 = vmul.f32 %v4171, %v1397
    %v4186 = vrot.slane %v4174, 2
    %v4187 = vrot.slane %v4176, 2
    %v4188 = vsel %vm182, %v4186, %v4187
    %v4189 = vrot.slane %v4175, 2
    %v4190 = vrot.slane %v4177, 2
    %v4191 = vsel %vm182, %v4189, %v4190
    %v4192 = vrot.slane %v4178, 2
    %v4193 = vsel %vm182, %v4187, %v4192
    %v4194 = vrot.slane %v4179, 2
    %v4195 = vsel %vm182, %v4190, %v4194
    %v4200 = vadd.f32 %v4157, %v4188
    %v4201 = vadd.f32 %v4158, %v4191
    %v4202 = vadd.f32 %v4159, %v4193
    %v4203 = vadd.f32 %v4160, %v4195
    %s4204 = scalar_lea.vmem %s3, 130
    %v4205 = vld [vmem:[%s4204] ss:$8 sm:$0x3]
    %v4207 = vlaneseq
    %v4208 = vshrl.u32 %v4207, 7
    %v4209 = vsub.s32 0, %v4208
    %v4210 = vrot.slane %v4205, %v4209
    %v4211 = vlaneseq
    %v4212 = vshrl.u32 %v4211, 7
    %v4213 = vsub.s32 1, %v4212
    %v4214 = vrot.slane %v4205, %v4213
    %v4217 = vmul.f32 %v4210, %v1398
    %v4218 = vmul.f32 %v4214, %v1399
    %v4219 = vmul.f32 %v4210, %v1388
    %v4220 = vmul.f32 %v4214, %v1389
    %v4221 = vmul.f32 %v4210, %v1400
    %v4222 = vmul.f32 %v4214, %v1401
    %v4229 = vrot.slane %v4217, 3
    %v4230 = vrot.slane %v4219, 3
    %v4231 = vsel %vm251, %v4229, %v4230
    %v4232 = vrot.slane %v4218, 3
    %v4233 = vrot.slane %v4220, 3
    %v4234 = vsel %vm251, %v4232, %v4233
    %v4235 = vrot.slane %v4221, 3
    %v4236 = vsel %vm251, %v4230, %v4235
    %v4237 = vrot.slane %v4222, 3
    %v4238 = vsel %vm251, %v4233, %v4237
    %v4243 = vadd.f32 %v4200, %v4231
    %v4244 = vadd.f32 %v4201, %v4234
    %v4245 = vadd.f32 %v4202, %v4236
    %v4246 = vadd.f32 %v4203, %v4238
    %s4247 = scalar_lea.vmem %s3, 131
    %v4248 = vld [vmem:[%s4247] ss:$8 sm:$0x3]
    %v4250 = vlaneseq
    %v4251 = vshrl.u32 %v4250, 7
    %v4252 = vsub.s32 0, %v4251
    %v4253 = vrot.slane %v4248, %v4252
    %v4254 = vlaneseq
    %v4255 = vshrl.u32 %v4254, 7
    %v4256 = vsub.s32 1, %v4255
    %v4257 = vrot.slane %v4248, %v4256
    %v4260 = vmul.f32 %v4253, %v1402
    %v4261 = vmul.f32 %v4257, %v1403
    %v4262 = vmul.f32 %v4253, %v1388
    %v4263 = vmul.f32 %v4257, %v1389
    %v4264 = vmul.f32 %v4253, %v1404
    %v4265 = vmul.f32 %v4257, %v1405
    %v4272 = vrot.slane %v4260, 4
    %v4273 = vrot.slane %v4262, 4
    %v4274 = vsel %vm320, %v4272, %v4273
    %v4275 = vrot.slane %v4261, 4
    %v4276 = vrot.slane %v4263, 4
    %v4277 = vsel %vm320, %v4275, %v4276
    %v4278 = vrot.slane %v4264, 4
    %v4279 = vsel %vm320, %v4273, %v4278
    %v4280 = vrot.slane %v4265, 4
    %v4281 = vsel %vm320, %v4276, %v4280
    %v4286 = vadd.f32 %v4243, %v4274
    %v4287 = vadd.f32 %v4244, %v4277
    %v4288 = vadd.f32 %v4245, %v4279
    %v4289 = vadd.f32 %v4246, %v4281
    %s4290 = scalar_lea.vmem %s3, 132
    %v4291 = vld [vmem:[%s4290] ss:$8 sm:$0x3]
    %v4293 = vlaneseq
    %v4294 = vshrl.u32 %v4293, 7
    %v4295 = vsub.s32 0, %v4294
    %v4296 = vrot.slane %v4291, %v4295
    %v4297 = vlaneseq
    %v4298 = vshrl.u32 %v4297, 7
    %v4299 = vsub.s32 1, %v4298
    %v4300 = vrot.slane %v4291, %v4299
    %v4303 = vmul.f32 %v4296, %v1406
    %v4304 = vmul.f32 %v4300, %v1407
    %v4305 = vmul.f32 %v4296, %v1388
    %v4306 = vmul.f32 %v4300, %v1389
    %v4307 = vmul.f32 %v4296, %v1408
    %v4308 = vmul.f32 %v4300, %v1409
    %v4315 = vrot.slane %v4303, 5
    %v4316 = vrot.slane %v4305, 5
    %v4317 = vsel %vm389, %v4315, %v4316
    %v4318 = vrot.slane %v4304, 5
    %v4319 = vrot.slane %v4306, 5
    %v4320 = vsel %vm389, %v4318, %v4319
    %v4321 = vrot.slane %v4307, 5
    %v4322 = vsel %vm389, %v4316, %v4321
    %v4323 = vrot.slane %v4308, 5
    %v4324 = vsel %vm389, %v4319, %v4323
    %v4329 = vadd.f32 %v4286, %v4317
    %v4330 = vadd.f32 %v4287, %v4320
    %v4331 = vadd.f32 %v4288, %v4322
    %v4332 = vadd.f32 %v4289, %v4324
    %s4333 = scalar_lea.vmem %s3, 133
    %v4334 = vld [vmem:[%s4333] ss:$8 sm:$0x3]
    %v4336 = vlaneseq
    %v4337 = vshrl.u32 %v4336, 7
    %v4338 = vsub.s32 0, %v4337
    %v4339 = vrot.slane %v4334, %v4338
    %v4340 = vlaneseq
    %v4341 = vshrl.u32 %v4340, 7
    %v4342 = vsub.s32 1, %v4341
    %v4343 = vrot.slane %v4334, %v4342
    %v4346 = vmul.f32 %v4339, %v1410
    %v4347 = vmul.f32 %v4343, %v1411
    %v4348 = vmul.f32 %v4339, %v1388
    %v4349 = vmul.f32 %v4343, %v1389
    %v4350 = vmul.f32 %v4339, %v1412
    %v4351 = vmul.f32 %v4343, %v1413
    %v4358 = vrot.slane %v4346, 6
    %v4359 = vrot.slane %v4348, 6
    %v4360 = vsel %vm1670, %v4358, %v4359
    %v4361 = vrot.slane %v4347, 6
    %v4362 = vrot.slane %v4349, 6
    %v4363 = vsel %vm1670, %v4361, %v4362
    %v4364 = vrot.slane %v4350, 6
    %v4365 = vsel %vm1670, %v4359, %v4364
    %v4366 = vrot.slane %v4351, 6
    %v4367 = vsel %vm1670, %v4362, %v4366
    %v4372 = vadd.f32 %v4329, %v4360
    %v4373 = vadd.f32 %v4330, %v4363
    %v4374 = vadd.f32 %v4331, %v4365
    %v4375 = vadd.f32 %v4332, %v4367
    %4378 = vrot.lane.b32.xlu0 %v4373, 65
    %v4379 = vpop.permute.xlu0 %4378
    %4380 = vrot.lane.b32.xlu0 %v4375, 65
    %v4381 = vpop.permute.xlu0 %4380
    %4386 = vrot.lane.b32.xlu0 %v4372, 65
    %v4387 = vpop.permute.xlu0 %4386
    %4388 = vrot.lane.b32.xlu0 %v4374, 65
    %v4389 = vpop.permute.xlu0 %4388
    %vm4390 = vcmask 531456
    %v4391 = vsel %vm4390, %v4387, %v4379
    %v4392 = vsel %vm4390, %v4389, %v4381
    %v4397 = vsel %vm4390, %v4379, %v4387
    %v4398 = vsel %vm4390, %v4381, %v4389
    %v4399 = vadd.f32 %v4097, %v4397
    %v4400 = vadd.f32 %v4098, %v4391
    %v4401 = vadd.f32 %v4099, %v4398
    %v4402 = vadd.f32 %v4100, %v4392
    %s4403 = scalar_lea.vmem %s3, 134
    %v4404 = vld [vmem:[%s4403] ss:$8 sm:$0x3]
    %v4406 = vlaneseq
    %v4407 = vshrl.u32 %v4406, 7
    %v4408 = vsub.s32 0, %v4407
    %v4409 = vrot.slane %v4404, %v4408
    %v4410 = vlaneseq
    %v4411 = vshrl.u32 %v4410, 7
    %v4412 = vsub.s32 1, %v4411
    %v4413 = vrot.slane %v4404, %v4412
    %v4416 = vmul.f32 %v4409, %v1386
    %v4417 = vmul.f32 %v4413, %v1387
    %v4418 = vmul.f32 %v4409, %v1388
    %v4419 = vmul.f32 %v4413, %v1389
    %s4420 = scalar_lea.vmem %s3, 135
    %v4421 = vld [vmem:[%s4420] ss:$8 sm:$0x3]
    %v4423 = vlaneseq
    %v4424 = vshrl.u32 %v4423, 7
    %v4425 = vsub.s32 0, %v4424
    %v4426 = vrot.slane %v4421, %v4425
    %v4427 = vlaneseq
    %v4428 = vshrl.u32 %v4427, 7
    %v4429 = vsub.s32 1, %v4428
    %v4430 = vrot.slane %v4421, %v4429
    %v4433 = vmul.f32 %v4426, %v1390
    %v4434 = vmul.f32 %v4430, %v1391
    %v4435 = vmul.f32 %v4426, %v1388
    %v4436 = vmul.f32 %v4430, %v1389
    %v4437 = vmul.f32 %v4426, %v1392
    %v4438 = vmul.f32 %v4430, %v1393
    %v4445 = vrot.slane %v4433, 1
    %v4446 = vrot.slane %v4435, 1
    %v4447 = vsel %vm116, %v4445, %v4446
    %v4448 = vrot.slane %v4434, 1
    %v4449 = vrot.slane %v4436, 1
    %v4450 = vsel %vm116, %v4448, %v4449
    %v4451 = vrot.slane %v4437, 1
    %v4452 = vsel %vm116, %v4446, %v4451
    %v4453 = vrot.slane %v4438, 1
    %v4454 = vsel %vm116, %v4449, %v4453
    %v4459 = vadd.f32 %v4416, %v4447
    %v4460 = vadd.f32 %v4417, %v4450
    %v4461 = vadd.f32 %v4418, %v4452
    %v4462 = vadd.f32 %v4419, %v4454
    %s4463 = scalar_lea.vmem %s3, 144
    %v4464 = vld [vmem:[%s4463] ss:$8 sm:$0x3]
    %v4466 = vlaneseq
    %v4467 = vshrl.u32 %v4466, 7
    %v4468 = vsub.s32 0, %v4467
    %v4469 = vrot.slane %v4464, %v4468
    %v4470 = vlaneseq
    %v4471 = vshrl.u32 %v4470, 7
    %v4472 = vsub.s32 1, %v4471
    %v4473 = vrot.slane %v4464, %v4472
    %v4476 = vmul.f32 %v4469, %v1394
    %v4477 = vmul.f32 %v4473, %v1395
    %v4478 = vmul.f32 %v4469, %v1388
    %v4479 = vmul.f32 %v4473, %v1389
    %v4480 = vmul.f32 %v4469, %v1396
    %v4481 = vmul.f32 %v4473, %v1397
    %v4488 = vrot.slane %v4476, 2
    %v4489 = vrot.slane %v4478, 2
    %v4490 = vsel %vm182, %v4488, %v4489
    %v4491 = vrot.slane %v4477, 2
    %v4492 = vrot.slane %v4479, 2
    %v4493 = vsel %vm182, %v4491, %v4492
    %v4494 = vrot.slane %v4480, 2
    %v4495 = vsel %vm182, %v4489, %v4494
    %v4496 = vrot.slane %v4481, 2
    %v4497 = vsel %vm182, %v4492, %v4496
    %v4502 = vadd.f32 %v4459, %v4490
    %v4503 = vadd.f32 %v4460, %v4493
    %v4504 = vadd.f32 %v4461, %v4495
    %v4505 = vadd.f32 %v4462, %v4497
    %s4506 = scalar_lea.vmem %s3, 145
    %v4507 = vld [vmem:[%s4506] ss:$8 sm:$0x3]
    %v4509 = vlaneseq
    %v4510 = vshrl.u32 %v4509, 7
    %v4511 = vsub.s32 0, %v4510
    %v4512 = vrot.slane %v4507, %v4511
    %v4513 = vlaneseq
    %v4514 = vshrl.u32 %v4513, 7
    %v4515 = vsub.s32 1, %v4514
    %v4516 = vrot.slane %v4507, %v4515
    %v4519 = vmul.f32 %v4512, %v1398
    %v4520 = vmul.f32 %v4516, %v1399
    %v4521 = vmul.f32 %v4512, %v1388
    %v4522 = vmul.f32 %v4516, %v1389
    %v4523 = vmul.f32 %v4512, %v1400
    %v4524 = vmul.f32 %v4516, %v1401
    %v4531 = vrot.slane %v4519, 3
    %v4532 = vrot.slane %v4521, 3
    %v4533 = vsel %vm251, %v4531, %v4532
    %v4534 = vrot.slane %v4520, 3
    %v4535 = vrot.slane %v4522, 3
    %v4536 = vsel %vm251, %v4534, %v4535
    %v4537 = vrot.slane %v4523, 3
    %v4538 = vsel %vm251, %v4532, %v4537
    %v4539 = vrot.slane %v4524, 3
    %v4540 = vsel %vm251, %v4535, %v4539
    %v4545 = vadd.f32 %v4502, %v4533
    %v4546 = vadd.f32 %v4503, %v4536
    %v4547 = vadd.f32 %v4504, %v4538
    %v4548 = vadd.f32 %v4505, %v4540
    %s4549 = scalar_lea.vmem %s3, 146
    %v4550 = vld [vmem:[%s4549] ss:$8 sm:$0x3]
    %v4552 = vlaneseq
    %v4553 = vshrl.u32 %v4552, 7
    %v4554 = vsub.s32 0, %v4553
    %v4555 = vrot.slane %v4550, %v4554
    %v4556 = vlaneseq
    %v4557 = vshrl.u32 %v4556, 7
    %v4558 = vsub.s32 1, %v4557
    %v4559 = vrot.slane %v4550, %v4558
    %v4562 = vmul.f32 %v4555, %v1402
    %v4563 = vmul.f32 %v4559, %v1403
    %v4564 = vmul.f32 %v4555, %v1388
    %v4565 = vmul.f32 %v4559, %v1389
    %v4566 = vmul.f32 %v4555, %v1404
    %v4567 = vmul.f32 %v4559, %v1405
    %v4574 = vrot.slane %v4562, 4
    %v4575 = vrot.slane %v4564, 4
    %v4576 = vsel %vm320, %v4574, %v4575
    %v4577 = vrot.slane %v4563, 4
    %v4578 = vrot.slane %v4565, 4
    %v4579 = vsel %vm320, %v4577, %v4578
    %v4580 = vrot.slane %v4566, 4
    %v4581 = vsel %vm320, %v4575, %v4580
    %v4582 = vrot.slane %v4567, 4
    %v4583 = vsel %vm320, %v4578, %v4582
    %v4588 = vadd.f32 %v4545, %v4576
    %v4589 = vadd.f32 %v4546, %v4579
    %v4590 = vadd.f32 %v4547, %v4581
    %v4591 = vadd.f32 %v4548, %v4583
    %s4592 = scalar_lea.vmem %s3, 147
    %v4593 = vld [vmem:[%s4592] ss:$8 sm:$0x3]
    %v4595 = vlaneseq
    %v4596 = vshrl.u32 %v4595, 7
    %v4597 = vsub.s32 0, %v4596
    %v4598 = vrot.slane %v4593, %v4597
    %v4599 = vlaneseq
    %v4600 = vshrl.u32 %v4599, 7
    %v4601 = vsub.s32 1, %v4600
    %v4602 = vrot.slane %v4593, %v4601
    %v4605 = vmul.f32 %v4598, %v1406
    %v4606 = vmul.f32 %v4602, %v1407
    %v4607 = vmul.f32 %v4598, %v1388
    %v4608 = vmul.f32 %v4602, %v1389
    %v4609 = vmul.f32 %v4598, %v1408
    %v4610 = vmul.f32 %v4602, %v1409
    %v4617 = vrot.slane %v4605, 5
    %v4618 = vrot.slane %v4607, 5
    %v4619 = vsel %vm389, %v4617, %v4618
    %v4620 = vrot.slane %v4606, 5
    %v4621 = vrot.slane %v4608, 5
    %v4622 = vsel %vm389, %v4620, %v4621
    %v4623 = vrot.slane %v4609, 5
    %v4624 = vsel %vm389, %v4618, %v4623
    %v4625 = vrot.slane %v4610, 5
    %v4626 = vsel %vm389, %v4621, %v4625
    %v4631 = vadd.f32 %v4588, %v4619
    %v4632 = vadd.f32 %v4589, %v4622
    %v4633 = vadd.f32 %v4590, %v4624
    %v4634 = vadd.f32 %v4591, %v4626
    %s4635 = scalar_lea.vmem %s3, 148
    %v4636 = vld [vmem:[%s4635] ss:$8 sm:$0x3]
    %v4638 = vlaneseq
    %v4639 = vshrl.u32 %v4638, 7
    %v4640 = vsub.s32 0, %v4639
    %v4641 = vrot.slane %v4636, %v4640
    %v4642 = vlaneseq
    %v4643 = vshrl.u32 %v4642, 7
    %v4644 = vsub.s32 1, %v4643
    %v4645 = vrot.slane %v4636, %v4644
    %v4648 = vmul.f32 %v4641, %v1410
    %v4649 = vmul.f32 %v4645, %v1411
    %v4650 = vmul.f32 %v4641, %v1388
    %v4651 = vmul.f32 %v4645, %v1389
    %v4652 = vmul.f32 %v4641, %v1412
    %v4653 = vmul.f32 %v4645, %v1413
    %v4660 = vrot.slane %v4648, 6
    %v4661 = vrot.slane %v4650, 6
    %v4662 = vsel %vm1670, %v4660, %v4661
    %v4663 = vrot.slane %v4649, 6
    %v4664 = vrot.slane %v4651, 6
    %v4665 = vsel %vm1670, %v4663, %v4664
    %v4666 = vrot.slane %v4652, 6
    %v4667 = vsel %vm1670, %v4661, %v4666
    %v4668 = vrot.slane %v4653, 6
    %v4669 = vsel %vm1670, %v4664, %v4668
    %v4674 = vadd.f32 %v4631, %v4662
    %v4675 = vadd.f32 %v4632, %v4665
    %v4676 = vadd.f32 %v4633, %v4667
    %v4677 = vadd.f32 %v4634, %v4669
    %4680 = vrot.lane.b32.xlu0 %v4675, 64
    %v4681 = vpop.permute.xlu0 %4680
    %4682 = vrot.lane.b32.xlu0 %v4677, 64
    %v4683 = vpop.permute.xlu0 %4682
    %4688 = vrot.lane.b32.xlu0 %v4674, 64
    %v4689 = vpop.permute.xlu0 %4688
    %4690 = vrot.lane.b32.xlu0 %v4676, 64
    %v4691 = vpop.permute.xlu0 %4690
    %vm4692 = vcmask 523264
    %v4693 = vsel %vm4692, %v4689, %v4681
    %v4694 = vsel %vm4692, %v4691, %v4683
    %v4699 = vsel %vm4692, %v4681, %v4689
    %v4700 = vsel %vm4692, %v4683, %v4691
    %v4701 = vadd.f32 %v4399, %v4699
    %v4702 = vadd.f32 %v4400, %v4693
    %v4703 = vadd.f32 %v4401, %v4700
    %v4704 = vadd.f32 %v4402, %v4694
    %s4705 = scalar_lea.vmem %s3, 149
    %v4706 = vld [vmem:[%s4705] ss:$8 sm:$0x3]
    %v4708 = vlaneseq
    %v4709 = vshrl.u32 %v4708, 7
    %v4710 = vsub.s32 0, %v4709
    %v4711 = vrot.slane %v4706, %v4710
    %v4712 = vlaneseq
    %v4713 = vshrl.u32 %v4712, 7
    %v4714 = vsub.s32 1, %v4713
    %v4715 = vrot.slane %v4706, %v4714
    %v4718 = vmul.f32 %v4711, %v1386
    %v4719 = vmul.f32 %v4715, %v1387
    %v4720 = vmul.f32 %v4711, %v1388
    %v4721 = vmul.f32 %v4715, %v1389
    %s4722 = scalar_lea.vmem %s3, 150
    %v4723 = vld [vmem:[%s4722] ss:$8 sm:$0x3]
    %v4725 = vlaneseq
    %v4726 = vshrl.u32 %v4725, 7
    %v4727 = vsub.s32 0, %v4726
    %v4728 = vrot.slane %v4723, %v4727
    %v4729 = vlaneseq
    %v4730 = vshrl.u32 %v4729, 7
    %v4731 = vsub.s32 1, %v4730
    %v4732 = vrot.slane %v4723, %v4731
    %v4735 = vmul.f32 %v4728, %v1390
    %v4736 = vmul.f32 %v4732, %v1391
    %v4737 = vmul.f32 %v4728, %v1388
    %v4738 = vmul.f32 %v4732, %v1389
    %v4739 = vmul.f32 %v4728, %v1392
    %v4740 = vmul.f32 %v4732, %v1393
    %v4747 = vrot.slane %v4735, 1
    %v4748 = vrot.slane %v4737, 1
    %v4749 = vsel %vm116, %v4747, %v4748
    %v4750 = vrot.slane %v4736, 1
    %v4751 = vrot.slane %v4738, 1
    %v4752 = vsel %vm116, %v4750, %v4751
    %v4753 = vrot.slane %v4739, 1
    %v4754 = vsel %vm116, %v4748, %v4753
    %v4755 = vrot.slane %v4740, 1
    %v4756 = vsel %vm116, %v4751, %v4755
    %v4761 = vadd.f32 %v4718, %v4749
    %v4762 = vadd.f32 %v4719, %v4752
    %v4763 = vadd.f32 %v4720, %v4754
    %v4764 = vadd.f32 %v4721, %v4756
    %s4765 = scalar_lea.vmem %s3, 151
    %v4766 = vld [vmem:[%s4765] ss:$8 sm:$0x3]
    %v4768 = vlaneseq
    %v4769 = vshrl.u32 %v4768, 7
    %v4770 = vsub.s32 0, %v4769
    %v4771 = vrot.slane %v4766, %v4770
    %v4772 = vlaneseq
    %v4773 = vshrl.u32 %v4772, 7
    %v4774 = vsub.s32 1, %v4773
    %v4775 = vrot.slane %v4766, %v4774
    %v4778 = vmul.f32 %v4771, %v1394
    %v4779 = vmul.f32 %v4775, %v1395
    %v4780 = vmul.f32 %v4771, %v1388
    %v4781 = vmul.f32 %v4775, %v1389
    %v4782 = vmul.f32 %v4771, %v1396
    %v4783 = vmul.f32 %v4775, %v1397
    %v4790 = vrot.slane %v4778, 2
    %v4791 = vrot.slane %v4780, 2
    %v4792 = vsel %vm182, %v4790, %v4791
    %v4793 = vrot.slane %v4779, 2
    %v4794 = vrot.slane %v4781, 2
    %v4795 = vsel %vm182, %v4793, %v4794
    %v4796 = vrot.slane %v4782, 2
    %v4797 = vsel %vm182, %v4791, %v4796
    %v4798 = vrot.slane %v4783, 2
    %v4799 = vsel %vm182, %v4794, %v4798
    %v4804 = vadd.f32 %v4761, %v4792
    %v4805 = vadd.f32 %v4762, %v4795
    %v4806 = vadd.f32 %v4763, %v4797
    %v4807 = vadd.f32 %v4764, %v4799
    %s4808 = scalar_lea.vmem %s3, 160
    %v4809 = vld [vmem:[%s4808] ss:$8 sm:$0x3]
    %v4811 = vlaneseq
    %v4812 = vshrl.u32 %v4811, 7
    %v4813 = vsub.s32 0, %v4812
    %v4814 = vrot.slane %v4809, %v4813
    %v4815 = vlaneseq
    %v4816 = vshrl.u32 %v4815, 7
    %v4817 = vsub.s32 1, %v4816
    %v4818 = vrot.slane %v4809, %v4817
    %v4821 = vmul.f32 %v4814, %v1398
    %v4822 = vmul.f32 %v4818, %v1399
    %v4823 = vmul.f32 %v4814, %v1388
    %v4824 = vmul.f32 %v4818, %v1389
    %v4825 = vmul.f32 %v4814, %v1400
    %v4826 = vmul.f32 %v4818, %v1401
    %v4833 = vrot.slane %v4821, 3
    %v4834 = vrot.slane %v4823, 3
    %v4835 = vsel %vm251, %v4833, %v4834
    %v4836 = vrot.slane %v4822, 3
    %v4837 = vrot.slane %v4824, 3
    %v4838 = vsel %vm251, %v4836, %v4837
    %v4839 = vrot.slane %v4825, 3
    %v4840 = vsel %vm251, %v4834, %v4839
    %v4841 = vrot.slane %v4826, 3
    %v4842 = vsel %vm251, %v4837, %v4841
    %v4847 = vadd.f32 %v4804, %v4835
    %v4848 = vadd.f32 %v4805, %v4838
    %v4849 = vadd.f32 %v4806, %v4840
    %v4850 = vadd.f32 %v4807, %v4842
    %s4851 = scalar_lea.vmem %s3, 161
    %v4852 = vld [vmem:[%s4851] ss:$8 sm:$0x3]
    %v4854 = vlaneseq
    %v4855 = vshrl.u32 %v4854, 7
    %v4856 = vsub.s32 0, %v4855
    %v4857 = vrot.slane %v4852, %v4856
    %v4858 = vlaneseq
    %v4859 = vshrl.u32 %v4858, 7
    %v4860 = vsub.s32 1, %v4859
    %v4861 = vrot.slane %v4852, %v4860
    %v4864 = vmul.f32 %v4857, %v1402
    %v4865 = vmul.f32 %v4861, %v1403
    %v4866 = vmul.f32 %v4857, %v1388
    %v4867 = vmul.f32 %v4861, %v1389
    %v4868 = vmul.f32 %v4857, %v1404
    %v4869 = vmul.f32 %v4861, %v1405
    %v4876 = vrot.slane %v4864, 4
    %v4877 = vrot.slane %v4866, 4
    %v4878 = vsel %vm320, %v4876, %v4877
    %v4879 = vrot.slane %v4865, 4
    %v4880 = vrot.slane %v4867, 4
    %v4881 = vsel %vm320, %v4879, %v4880
    %v4882 = vrot.slane %v4868, 4
    %v4883 = vsel %vm320, %v4877, %v4882
    %v4884 = vrot.slane %v4869, 4
    %v4885 = vsel %vm320, %v4880, %v4884
    %v4890 = vadd.f32 %v4847, %v4878
    %v4891 = vadd.f32 %v4848, %v4881
    %v4892 = vadd.f32 %v4849, %v4883
    %v4893 = vadd.f32 %v4850, %v4885
    %s4894 = scalar_lea.vmem %s3, 162
    %v4895 = vld [vmem:[%s4894] ss:$8 sm:$0x3]
    %v4897 = vlaneseq
    %v4898 = vshrl.u32 %v4897, 7
    %v4899 = vsub.s32 0, %v4898
    %v4900 = vrot.slane %v4895, %v4899
    %v4901 = vlaneseq
    %v4902 = vshrl.u32 %v4901, 7
    %v4903 = vsub.s32 1, %v4902
    %v4904 = vrot.slane %v4895, %v4903
    %v4907 = vmul.f32 %v4900, %v1406
    %v4908 = vmul.f32 %v4904, %v1407
    %v4909 = vmul.f32 %v4900, %v1388
    %v4910 = vmul.f32 %v4904, %v1389
    %v4911 = vmul.f32 %v4900, %v1408
    %v4912 = vmul.f32 %v4904, %v1409
    %v4919 = vrot.slane %v4907, 5
    %v4920 = vrot.slane %v4909, 5
    %v4921 = vsel %vm389, %v4919, %v4920
    %v4922 = vrot.slane %v4908, 5
    %v4923 = vrot.slane %v4910, 5
    %v4924 = vsel %vm389, %v4922, %v4923
    %v4925 = vrot.slane %v4911, 5
    %v4926 = vsel %vm389, %v4920, %v4925
    %v4927 = vrot.slane %v4912, 5
    %v4928 = vsel %vm389, %v4923, %v4927
    %v4933 = vadd.f32 %v4890, %v4921
    %v4934 = vadd.f32 %v4891, %v4924
    %v4935 = vadd.f32 %v4892, %v4926
    %v4936 = vadd.f32 %v4893, %v4928
    %s4937 = scalar_lea.vmem %s3, 163
    %v4938 = vld [vmem:[%s4937] ss:$8 sm:$0x3]
    %v4940 = vlaneseq
    %v4941 = vshrl.u32 %v4940, 7
    %v4942 = vsub.s32 0, %v4941
    %v4943 = vrot.slane %v4938, %v4942
    %v4944 = vlaneseq
    %v4945 = vshrl.u32 %v4944, 7
    %v4946 = vsub.s32 1, %v4945
    %v4947 = vrot.slane %v4938, %v4946
    %v4950 = vmul.f32 %v4943, %v1410
    %v4951 = vmul.f32 %v4947, %v1411
    %v4952 = vmul.f32 %v4943, %v1388
    %v4953 = vmul.f32 %v4947, %v1389
    %v4954 = vmul.f32 %v4943, %v1412
    %v4955 = vmul.f32 %v4947, %v1413
    %v4962 = vrot.slane %v4950, 6
    %v4963 = vrot.slane %v4952, 6
    %v4964 = vsel %vm1670, %v4962, %v4963
    %v4965 = vrot.slane %v4951, 6
    %v4966 = vrot.slane %v4953, 6
    %v4967 = vsel %vm1670, %v4965, %v4966
    %v4968 = vrot.slane %v4954, 6
    %v4969 = vsel %vm1670, %v4963, %v4968
    %v4970 = vrot.slane %v4955, 6
    %v4971 = vsel %vm1670, %v4966, %v4970
    %v4976 = vadd.f32 %v4933, %v4964
    %v4977 = vadd.f32 %v4934, %v4967
    %v4978 = vadd.f32 %v4935, %v4969
    %v4979 = vadd.f32 %v4936, %v4971
    %4982 = vrot.lane.b32.xlu0 %v4977, 63
    %v4983 = vpop.permute.xlu0 %4982
    %4984 = vrot.lane.b32.xlu0 %v4979, 63
    %v4985 = vpop.permute.xlu0 %4984
    %4990 = vrot.lane.b32.xlu0 %v4976, 63
    %v4991 = vpop.permute.xlu0 %4990
    %4992 = vrot.lane.b32.xlu0 %v4978, 63
    %v4993 = vpop.permute.xlu0 %4992
    %vm4994 = vcmask 515072
    %v4995 = vsel %vm4994, %v4991, %v4983
    %v4996 = vsel %vm4994, %v4993, %v4985
    %v5001 = vsel %vm4994, %v4983, %v4991
    %v5002 = vsel %vm4994, %v4985, %v4993
    %v5003 = vadd.f32 %v4701, %v5001
    %v5004 = vadd.f32 %v4702, %v4995
    %v5005 = vadd.f32 %v4703, %v5002
    %v5006 = vadd.f32 %v4704, %v4996
    %s5007 = scalar_lea.vmem %s3, 164
    %v5008 = vld [vmem:[%s5007] ss:$8 sm:$0x3]
    %v5010 = vlaneseq
    %v5011 = vshrl.u32 %v5010, 7
    %v5012 = vsub.s32 0, %v5011
    %v5013 = vrot.slane %v5008, %v5012
    %v5014 = vlaneseq
    %v5015 = vshrl.u32 %v5014, 7
    %v5016 = vsub.s32 1, %v5015
    %v5017 = vrot.slane %v5008, %v5016
    %v5020 = vmul.f32 %v5013, %v1386
    %v5021 = vmul.f32 %v5017, %v1387
    %v5022 = vmul.f32 %v5013, %v1388
    %v5023 = vmul.f32 %v5017, %v1389
    %s5024 = scalar_lea.vmem %s3, 165
    %v5025 = vld [vmem:[%s5024] ss:$8 sm:$0x3]
    %v5027 = vlaneseq
    %v5028 = vshrl.u32 %v5027, 7
    %v5029 = vsub.s32 0, %v5028
    %v5030 = vrot.slane %v5025, %v5029
    %v5031 = vlaneseq
    %v5032 = vshrl.u32 %v5031, 7
    %v5033 = vsub.s32 1, %v5032
    %v5034 = vrot.slane %v5025, %v5033
    %v5037 = vmul.f32 %v5030, %v1390
    %v5038 = vmul.f32 %v5034, %v1391
    %v5039 = vmul.f32 %v5030, %v1388
    %v5040 = vmul.f32 %v5034, %v1389
    %v5041 = vmul.f32 %v5030, %v1392
    %v5042 = vmul.f32 %v5034, %v1393
    %v5049 = vrot.slane %v5037, 1
    %v5050 = vrot.slane %v5039, 1
    %v5051 = vsel %vm116, %v5049, %v5050
    %v5052 = vrot.slane %v5038, 1
    %v5053 = vrot.slane %v5040, 1
    %v5054 = vsel %vm116, %v5052, %v5053
    %v5055 = vrot.slane %v5041, 1
    %v5056 = vsel %vm116, %v5050, %v5055
    %v5057 = vrot.slane %v5042, 1
    %v5058 = vsel %vm116, %v5053, %v5057
    %v5063 = vadd.f32 %v5020, %v5051
    %v5064 = vadd.f32 %v5021, %v5054
    %v5065 = vadd.f32 %v5022, %v5056
    %v5066 = vadd.f32 %v5023, %v5058
    %s5067 = scalar_lea.vmem %s3, 166
    %v5068 = vld [vmem:[%s5067] ss:$8 sm:$0x3]
    %v5070 = vlaneseq
    %v5071 = vshrl.u32 %v5070, 7
    %v5072 = vsub.s32 0, %v5071
    %v5073 = vrot.slane %v5068, %v5072
    %v5074 = vlaneseq
    %v5075 = vshrl.u32 %v5074, 7
    %v5076 = vsub.s32 1, %v5075
    %v5077 = vrot.slane %v5068, %v5076
    %v5080 = vmul.f32 %v5073, %v1394
    %v5081 = vmul.f32 %v5077, %v1395
    %v5082 = vmul.f32 %v5073, %v1388
    %v5083 = vmul.f32 %v5077, %v1389
    %v5084 = vmul.f32 %v5073, %v1396
    %v5085 = vmul.f32 %v5077, %v1397
    %v5092 = vrot.slane %v5080, 2
    %v5093 = vrot.slane %v5082, 2
    %v5094 = vsel %vm182, %v5092, %v5093
    %v5095 = vrot.slane %v5081, 2
    %v5096 = vrot.slane %v5083, 2
    %v5097 = vsel %vm182, %v5095, %v5096
    %v5098 = vrot.slane %v5084, 2
    %v5099 = vsel %vm182, %v5093, %v5098
    %v5100 = vrot.slane %v5085, 2
    %v5101 = vsel %vm182, %v5096, %v5100
    %v5106 = vadd.f32 %v5063, %v5094
    %v5107 = vadd.f32 %v5064, %v5097
    %v5108 = vadd.f32 %v5065, %v5099
    %v5109 = vadd.f32 %v5066, %v5101
    %s5110 = scalar_lea.vmem %s3, 167
    %v5111 = vld [vmem:[%s5110] ss:$8 sm:$0x3]
    %v5113 = vlaneseq
    %v5114 = vshrl.u32 %v5113, 7
    %v5115 = vsub.s32 0, %v5114
    %v5116 = vrot.slane %v5111, %v5115
    %v5117 = vlaneseq
    %v5118 = vshrl.u32 %v5117, 7
    %v5119 = vsub.s32 1, %v5118
    %v5120 = vrot.slane %v5111, %v5119
    %v5123 = vmul.f32 %v5116, %v1398
    %v5124 = vmul.f32 %v5120, %v1399
    %v5125 = vmul.f32 %v5116, %v1388
    %v5126 = vmul.f32 %v5120, %v1389
    %v5127 = vmul.f32 %v5116, %v1400
    %v5128 = vmul.f32 %v5120, %v1401
    %v5135 = vrot.slane %v5123, 3
    %v5136 = vrot.slane %v5125, 3
    %v5137 = vsel %vm251, %v5135, %v5136
    %v5138 = vrot.slane %v5124, 3
    %v5139 = vrot.slane %v5126, 3
    %v5140 = vsel %vm251, %v5138, %v5139
    %v5141 = vrot.slane %v5127, 3
    %v5142 = vsel %vm251, %v5136, %v5141
    %v5143 = vrot.slane %v5128, 3
    %v5144 = vsel %vm251, %v5139, %v5143
    %v5149 = vadd.f32 %v5106, %v5137
    %v5150 = vadd.f32 %v5107, %v5140
    %v5151 = vadd.f32 %v5108, %v5142
    %v5152 = vadd.f32 %v5109, %v5144
    %s5153 = scalar_lea.vmem %s3, 176
    %v5154 = vld [vmem:[%s5153] ss:$8 sm:$0x3]
    %v5156 = vlaneseq
    %v5157 = vshrl.u32 %v5156, 7
    %v5158 = vsub.s32 0, %v5157
    %v5159 = vrot.slane %v5154, %v5158
    %v5160 = vlaneseq
    %v5161 = vshrl.u32 %v5160, 7
    %v5162 = vsub.s32 1, %v5161
    %v5163 = vrot.slane %v5154, %v5162
    %v5166 = vmul.f32 %v5159, %v1402
    %v5167 = vmul.f32 %v5163, %v1403
    %v5168 = vmul.f32 %v5159, %v1388
    %v5169 = vmul.f32 %v5163, %v1389
    %v5170 = vmul.f32 %v5159, %v1404
    %v5171 = vmul.f32 %v5163, %v1405
    %v5178 = vrot.slane %v5166, 4
    %v5179 = vrot.slane %v5168, 4
    %v5180 = vsel %vm320, %v5178, %v5179
    %v5181 = vrot.slane %v5167, 4
    %v5182 = vrot.slane %v5169, 4
    %v5183 = vsel %vm320, %v5181, %v5182
    %v5184 = vrot.slane %v5170, 4
    %v5185 = vsel %vm320, %v5179, %v5184
    %v5186 = vrot.slane %v5171, 4
    %v5187 = vsel %vm320, %v5182, %v5186
    %v5192 = vadd.f32 %v5149, %v5180
    %v5193 = vadd.f32 %v5150, %v5183
    %v5194 = vadd.f32 %v5151, %v5185
    %v5195 = vadd.f32 %v5152, %v5187
    %s5196 = scalar_lea.vmem %s3, 177
    %v5197 = vld [vmem:[%s5196] ss:$8 sm:$0x3]
    %v5199 = vlaneseq
    %v5200 = vshrl.u32 %v5199, 7
    %v5201 = vsub.s32 0, %v5200
    %v5202 = vrot.slane %v5197, %v5201
    %v5203 = vlaneseq
    %v5204 = vshrl.u32 %v5203, 7
    %v5205 = vsub.s32 1, %v5204
    %v5206 = vrot.slane %v5197, %v5205
    %v5209 = vmul.f32 %v5202, %v1406
    %v5210 = vmul.f32 %v5206, %v1407
    %v5211 = vmul.f32 %v5202, %v1388
    %v5212 = vmul.f32 %v5206, %v1389
    %v5213 = vmul.f32 %v5202, %v1408
    %v5214 = vmul.f32 %v5206, %v1409
    %v5221 = vrot.slane %v5209, 5
    %v5222 = vrot.slane %v5211, 5
    %v5223 = vsel %vm389, %v5221, %v5222
    %v5224 = vrot.slane %v5210, 5
    %v5225 = vrot.slane %v5212, 5
    %v5226 = vsel %vm389, %v5224, %v5225
    %v5227 = vrot.slane %v5213, 5
    %v5228 = vsel %vm389, %v5222, %v5227
    %v5229 = vrot.slane %v5214, 5
    %v5230 = vsel %vm389, %v5225, %v5229
    %v5235 = vadd.f32 %v5192, %v5223
    %v5236 = vadd.f32 %v5193, %v5226
    %v5237 = vadd.f32 %v5194, %v5228
    %v5238 = vadd.f32 %v5195, %v5230
    %s5239 = scalar_lea.vmem %s3, 178
    %v5240 = vld [vmem:[%s5239] ss:$8 sm:$0x3]
    %v5242 = vlaneseq
    %v5243 = vshrl.u32 %v5242, 7
    %v5244 = vsub.s32 0, %v5243
    %v5245 = vrot.slane %v5240, %v5244
    %v5246 = vlaneseq
    %v5247 = vshrl.u32 %v5246, 7
    %v5248 = vsub.s32 1, %v5247
    %v5249 = vrot.slane %v5240, %v5248
    %v5252 = vmul.f32 %v5245, %v1410
    %v5253 = vmul.f32 %v5249, %v1411
    %v5254 = vmul.f32 %v5245, %v1388
    %v5255 = vmul.f32 %v5249, %v1389
    %v5256 = vmul.f32 %v5245, %v1412
    %v5257 = vmul.f32 %v5249, %v1413
    %v5264 = vrot.slane %v5252, 6
    %v5265 = vrot.slane %v5254, 6
    %v5266 = vsel %vm1670, %v5264, %v5265
    %v5267 = vrot.slane %v5253, 6
    %v5268 = vrot.slane %v5255, 6
    %v5269 = vsel %vm1670, %v5267, %v5268
    %v5270 = vrot.slane %v5256, 6
    %v5271 = vsel %vm1670, %v5265, %v5270
    %v5272 = vrot.slane %v5257, 6
    %v5273 = vsel %vm1670, %v5268, %v5272
    %v5278 = vadd.f32 %v5235, %v5266
    %v5279 = vadd.f32 %v5236, %v5269
    %v5280 = vadd.f32 %v5237, %v5271
    %v5281 = vadd.f32 %v5238, %v5273
    %5284 = vrot.lane.b32.xlu0 %v5279, 62
    %v5285 = vpop.permute.xlu0 %5284
    %5286 = vrot.lane.b32.xlu0 %v5281, 62
    %v5287 = vpop.permute.xlu0 %5286
    %5292 = vrot.lane.b32.xlu0 %v5278, 62
    %v5293 = vpop.permute.xlu0 %5292
    %5294 = vrot.lane.b32.xlu0 %v5280, 62
    %v5295 = vpop.permute.xlu0 %5294
    %vm5296 = vcmask 506880
    %v5297 = vsel %vm5296, %v5293, %v5285
    %v5298 = vsel %vm5296, %v5295, %v5287
    %v5303 = vsel %vm5296, %v5285, %v5293
    %v5304 = vsel %vm5296, %v5287, %v5295
    %v5305 = vadd.f32 %v5003, %v5303
    %v5306 = vadd.f32 %v5004, %v5297
    %v5307 = vadd.f32 %v5005, %v5304
    %v5308 = vadd.f32 %v5006, %v5298
    %s5309 = scalar_lea.vmem %s3, 179
    %v5310 = vld [vmem:[%s5309] ss:$8 sm:$0x3]
    %v5312 = vlaneseq
    %v5313 = vshrl.u32 %v5312, 7
    %v5314 = vsub.s32 0, %v5313
    %v5315 = vrot.slane %v5310, %v5314
    %v5316 = vlaneseq
    %v5317 = vshrl.u32 %v5316, 7
    %v5318 = vsub.s32 1, %v5317
    %v5319 = vrot.slane %v5310, %v5318
    %v5322 = vmul.f32 %v5315, %v1386
    %v5323 = vmul.f32 %v5319, %v1387
    %v5324 = vmul.f32 %v5315, %v1388
    %v5325 = vmul.f32 %v5319, %v1389
    %s5326 = scalar_lea.vmem %s3, 180
    %v5327 = vld [vmem:[%s5326] ss:$8 sm:$0x3]
    %v5329 = vlaneseq
    %v5330 = vshrl.u32 %v5329, 7
    %v5331 = vsub.s32 0, %v5330
    %v5332 = vrot.slane %v5327, %v5331
    %v5333 = vlaneseq
    %v5334 = vshrl.u32 %v5333, 7
    %v5335 = vsub.s32 1, %v5334
    %v5336 = vrot.slane %v5327, %v5335
    %v5339 = vmul.f32 %v5332, %v1390
    %v5340 = vmul.f32 %v5336, %v1391
    %v5341 = vmul.f32 %v5332, %v1388
    %v5342 = vmul.f32 %v5336, %v1389
    %v5343 = vmul.f32 %v5332, %v1392
    %v5344 = vmul.f32 %v5336, %v1393
    %v5351 = vrot.slane %v5339, 1
    %v5352 = vrot.slane %v5341, 1
    %v5353 = vsel %vm116, %v5351, %v5352
    %v5354 = vrot.slane %v5340, 1
    %v5355 = vrot.slane %v5342, 1
    %v5356 = vsel %vm116, %v5354, %v5355
    %v5357 = vrot.slane %v5343, 1
    %v5358 = vsel %vm116, %v5352, %v5357
    %v5359 = vrot.slane %v5344, 1
    %v5360 = vsel %vm116, %v5355, %v5359
    %v5365 = vadd.f32 %v5322, %v5353
    %v5366 = vadd.f32 %v5323, %v5356
    %v5367 = vadd.f32 %v5324, %v5358
    %v5368 = vadd.f32 %v5325, %v5360
    %s5369 = scalar_lea.vmem %s3, 181
    %v5370 = vld [vmem:[%s5369] ss:$8 sm:$0x3]
    %v5372 = vlaneseq
    %v5373 = vshrl.u32 %v5372, 7
    %v5374 = vsub.s32 0, %v5373
    %v5375 = vrot.slane %v5370, %v5374
    %v5376 = vlaneseq
    %v5377 = vshrl.u32 %v5376, 7
    %v5378 = vsub.s32 1, %v5377
    %v5379 = vrot.slane %v5370, %v5378
    %v5382 = vmul.f32 %v5375, %v1394
    %v5383 = vmul.f32 %v5379, %v1395
    %v5384 = vmul.f32 %v5375, %v1388
    %v5385 = vmul.f32 %v5379, %v1389
    %v5386 = vmul.f32 %v5375, %v1396
    %v5387 = vmul.f32 %v5379, %v1397
    %v5394 = vrot.slane %v5382, 2
    %v5395 = vrot.slane %v5384, 2
    %v5396 = vsel %vm182, %v5394, %v5395
    %v5397 = vrot.slane %v5383, 2
    %v5398 = vrot.slane %v5385, 2
    %v5399 = vsel %vm182, %v5397, %v5398
    %v5400 = vrot.slane %v5386, 2
    %v5401 = vsel %vm182, %v5395, %v5400
    %v5402 = vrot.slane %v5387, 2
    %v5403 = vsel %vm182, %v5398, %v5402
    %v5408 = vadd.f32 %v5365, %v5396
    %v5409 = vadd.f32 %v5366, %v5399
    %v5410 = vadd.f32 %v5367, %v5401
    %v5411 = vadd.f32 %v5368, %v5403
    %s5412 = scalar_lea.vmem %s3, 182
    %v5413 = vld [vmem:[%s5412] ss:$8 sm:$0x3]
    %v5415 = vlaneseq
    %v5416 = vshrl.u32 %v5415, 7
    %v5417 = vsub.s32 0, %v5416
    %v5418 = vrot.slane %v5413, %v5417
    %v5419 = vlaneseq
    %v5420 = vshrl.u32 %v5419, 7
    %v5421 = vsub.s32 1, %v5420
    %v5422 = vrot.slane %v5413, %v5421
    %v5425 = vmul.f32 %v5418, %v1398
    %v5426 = vmul.f32 %v5422, %v1399
    %v5427 = vmul.f32 %v5418, %v1388
    %v5428 = vmul.f32 %v5422, %v1389
    %v5429 = vmul.f32 %v5418, %v1400
    %v5430 = vmul.f32 %v5422, %v1401
    %v5437 = vrot.slane %v5425, 3
    %v5438 = vrot.slane %v5427, 3
    %v5439 = vsel %vm251, %v5437, %v5438
    %v5440 = vrot.slane %v5426, 3
    %v5441 = vrot.slane %v5428, 3
    %v5442 = vsel %vm251, %v5440, %v5441
    %v5443 = vrot.slane %v5429, 3
    %v5444 = vsel %vm251, %v5438, %v5443
    %v5445 = vrot.slane %v5430, 3
    %v5446 = vsel %vm251, %v5441, %v5445
    %v5451 = vadd.f32 %v5408, %v5439
    %v5452 = vadd.f32 %v5409, %v5442
    %v5453 = vadd.f32 %v5410, %v5444
    %v5454 = vadd.f32 %v5411, %v5446
    %s5455 = scalar_lea.vmem %s3, 183
    %v5456 = vld [vmem:[%s5455] ss:$8 sm:$0x3]
    %v5458 = vlaneseq
    %v5459 = vshrl.u32 %v5458, 7
    %v5460 = vsub.s32 0, %v5459
    %v5461 = vrot.slane %v5456, %v5460
    %v5462 = vlaneseq
    %v5463 = vshrl.u32 %v5462, 7
    %v5464 = vsub.s32 1, %v5463
    %v5465 = vrot.slane %v5456, %v5464
    %v5468 = vmul.f32 %v5461, %v1402
    %v5469 = vmul.f32 %v5465, %v1403
    %v5470 = vmul.f32 %v5461, %v1388
    %v5471 = vmul.f32 %v5465, %v1389
    %v5472 = vmul.f32 %v5461, %v1404
    %v5473 = vmul.f32 %v5465, %v1405
    %v5480 = vrot.slane %v5468, 4
    %v5481 = vrot.slane %v5470, 4
    %v5482 = vsel %vm320, %v5480, %v5481
    %v5483 = vrot.slane %v5469, 4
    %v5484 = vrot.slane %v5471, 4
    %v5485 = vsel %vm320, %v5483, %v5484
    %v5486 = vrot.slane %v5472, 4
    %v5487 = vsel %vm320, %v5481, %v5486
    %v5488 = vrot.slane %v5473, 4
    %v5489 = vsel %vm320, %v5484, %v5488
    %v5494 = vadd.f32 %v5451, %v5482
    %v5495 = vadd.f32 %v5452, %v5485
    %v5496 = vadd.f32 %v5453, %v5487
    %v5497 = vadd.f32 %v5454, %v5489
    %s5498 = scalar_lea.vmem %s3, 192
    %v5499 = vld [vmem:[%s5498] ss:$8 sm:$0x3]
    %v5501 = vlaneseq
    %v5502 = vshrl.u32 %v5501, 7
    %v5503 = vsub.s32 0, %v5502
    %v5504 = vrot.slane %v5499, %v5503
    %v5505 = vlaneseq
    %v5506 = vshrl.u32 %v5505, 7
    %v5507 = vsub.s32 1, %v5506
    %v5508 = vrot.slane %v5499, %v5507
    %v5511 = vmul.f32 %v5504, %v1406
    %v5512 = vmul.f32 %v5508, %v1407
    %v5513 = vmul.f32 %v5504, %v1388
    %v5514 = vmul.f32 %v5508, %v1389
    %v5515 = vmul.f32 %v5504, %v1408
    %v5516 = vmul.f32 %v5508, %v1409
    %v5523 = vrot.slane %v5511, 5
    %v5524 = vrot.slane %v5513, 5
    %v5525 = vsel %vm389, %v5523, %v5524
    %v5526 = vrot.slane %v5512, 5
    %v5527 = vrot.slane %v5514, 5
    %v5528 = vsel %vm389, %v5526, %v5527
    %v5529 = vrot.slane %v5515, 5
    %v5530 = vsel %vm389, %v5524, %v5529
    %v5531 = vrot.slane %v5516, 5
    %v5532 = vsel %vm389, %v5527, %v5531
    %v5537 = vadd.f32 %v5494, %v5525
    %v5538 = vadd.f32 %v5495, %v5528
    %v5539 = vadd.f32 %v5496, %v5530
    %v5540 = vadd.f32 %v5497, %v5532
    %s5541 = scalar_lea.vmem %s3, 193
    %v5542 = vld [vmem:[%s5541] ss:$8 sm:$0x3]
    %v5544 = vlaneseq
    %v5545 = vshrl.u32 %v5544, 7
    %v5546 = vsub.s32 0, %v5545
    %v5547 = vrot.slane %v5542, %v5546
    %v5548 = vlaneseq
    %v5549 = vshrl.u32 %v5548, 7
    %v5550 = vsub.s32 1, %v5549
    %v5551 = vrot.slane %v5542, %v5550
    %v5554 = vmul.f32 %v5547, %v1410
    %v5555 = vmul.f32 %v5551, %v1411
    %v5556 = vmul.f32 %v5547, %v1388
    %v5557 = vmul.f32 %v5551, %v1389
    %v5558 = vmul.f32 %v5547, %v1412
    %v5559 = vmul.f32 %v5551, %v1413
    %v5566 = vrot.slane %v5554, 6
    %v5567 = vrot.slane %v5556, 6
    %v5568 = vsel %vm1670, %v5566, %v5567
    %v5569 = vrot.slane %v5555, 6
    %v5570 = vrot.slane %v5557, 6
    %v5571 = vsel %vm1670, %v5569, %v5570
    %v5572 = vrot.slane %v5558, 6
    %v5573 = vsel %vm1670, %v5567, %v5572
    %v5574 = vrot.slane %v5559, 6
    %v5575 = vsel %vm1670, %v5570, %v5574
    %v5580 = vadd.f32 %v5537, %v5568
    %v5581 = vadd.f32 %v5538, %v5571
    %v5582 = vadd.f32 %v5539, %v5573
    %v5583 = vadd.f32 %v5540, %v5575
    %5586 = vrot.lane.b32.xlu0 %v5581, 61
    %v5587 = vpop.permute.xlu0 %5586
    %5588 = vrot.lane.b32.xlu0 %v5583, 61
    %v5589 = vpop.permute.xlu0 %5588
    %5594 = vrot.lane.b32.xlu0 %v5580, 61
    %v5595 = vpop.permute.xlu0 %5594
    %5596 = vrot.lane.b32.xlu0 %v5582, 61
    %v5597 = vpop.permute.xlu0 %5596
    %vm5598 = vcmask 498688
    %v5599 = vsel %vm5598, %v5595, %v5587
    %v5600 = vsel %vm5598, %v5597, %v5589
    %v5605 = vsel %vm5598, %v5587, %v5595
    %v5606 = vsel %vm5598, %v5589, %v5597
    %v5607 = vadd.f32 %v5305, %v5605
    %v5608 = vadd.f32 %v5306, %v5599
    %v5609 = vadd.f32 %v5307, %v5606
    %v5610 = vadd.f32 %v5308, %v5600
    %s5611 = scalar_lea.vmem %s3, 194
    %v5612 = vld [vmem:[%s5611] ss:$8 sm:$0x3]
    %v5614 = vlaneseq
    %v5615 = vshrl.u32 %v5614, 7
    %v5616 = vsub.s32 0, %v5615
    %v5617 = vrot.slane %v5612, %v5616
    %v5618 = vlaneseq
    %v5619 = vshrl.u32 %v5618, 7
    %v5620 = vsub.s32 1, %v5619
    %v5621 = vrot.slane %v5612, %v5620
    %v5624 = vmul.f32 %v5617, %v1386
    %v5625 = vmul.f32 %v5621, %v1387
    %v5626 = vmul.f32 %v5617, %v1388
    %v5627 = vmul.f32 %v5621, %v1389
    %s5628 = scalar_lea.vmem %s3, 195
    %v5629 = vld [vmem:[%s5628] ss:$8 sm:$0x3]
    %v5631 = vlaneseq
    %v5632 = vshrl.u32 %v5631, 7
    %v5633 = vsub.s32 0, %v5632
    %v5634 = vrot.slane %v5629, %v5633
    %v5635 = vlaneseq
    %v5636 = vshrl.u32 %v5635, 7
    %v5637 = vsub.s32 1, %v5636
    %v5638 = vrot.slane %v5629, %v5637
    %v5641 = vmul.f32 %v5634, %v1390
    %v5642 = vmul.f32 %v5638, %v1391
    %v5643 = vmul.f32 %v5634, %v1388
    %v5644 = vmul.f32 %v5638, %v1389
    %v5645 = vmul.f32 %v5634, %v1392
    %v5646 = vmul.f32 %v5638, %v1393
    %v5653 = vrot.slane %v5641, 1
    %v5654 = vrot.slane %v5643, 1
    %v5655 = vsel %vm116, %v5653, %v5654
    %v5656 = vrot.slane %v5642, 1
    %v5657 = vrot.slane %v5644, 1
    %v5658 = vsel %vm116, %v5656, %v5657
    %v5659 = vrot.slane %v5645, 1
    %v5660 = vsel %vm116, %v5654, %v5659
    %v5661 = vrot.slane %v5646, 1
    %v5662 = vsel %vm116, %v5657, %v5661
    %v5667 = vadd.f32 %v5624, %v5655
    %v5668 = vadd.f32 %v5625, %v5658
    %v5669 = vadd.f32 %v5626, %v5660
    %v5670 = vadd.f32 %v5627, %v5662
    %s5671 = scalar_lea.vmem %s3, 196
    %v5672 = vld [vmem:[%s5671] ss:$8 sm:$0x3]
    %v5674 = vlaneseq
    %v5675 = vshrl.u32 %v5674, 7
    %v5676 = vsub.s32 0, %v5675
    %v5677 = vrot.slane %v5672, %v5676
    %v5678 = vlaneseq
    %v5679 = vshrl.u32 %v5678, 7
    %v5680 = vsub.s32 1, %v5679
    %v5681 = vrot.slane %v5672, %v5680
    %v5684 = vmul.f32 %v5677, %v1394
    %v5685 = vmul.f32 %v5681, %v1395
    %v5686 = vmul.f32 %v5677, %v1388
    %v5687 = vmul.f32 %v5681, %v1389
    %v5688 = vmul.f32 %v5677, %v1396
    %v5689 = vmul.f32 %v5681, %v1397
    %v5696 = vrot.slane %v5684, 2
    %v5697 = vrot.slane %v5686, 2
    %v5698 = vsel %vm182, %v5696, %v5697
    %v5699 = vrot.slane %v5685, 2
    %v5700 = vrot.slane %v5687, 2
    %v5701 = vsel %vm182, %v5699, %v5700
    %v5702 = vrot.slane %v5688, 2
    %v5703 = vsel %vm182, %v5697, %v5702
    %v5704 = vrot.slane %v5689, 2
    %v5705 = vsel %vm182, %v5700, %v5704
    %v5710 = vadd.f32 %v5667, %v5698
    %v5711 = vadd.f32 %v5668, %v5701
    %v5712 = vadd.f32 %v5669, %v5703
    %v5713 = vadd.f32 %v5670, %v5705
    %s5714 = scalar_lea.vmem %s3, 197
    %v5715 = vld [vmem:[%s5714] ss:$8 sm:$0x3]
    %v5717 = vlaneseq
    %v5718 = vshrl.u32 %v5717, 7
    %v5719 = vsub.s32 0, %v5718
    %v5720 = vrot.slane %v5715, %v5719
    %v5721 = vlaneseq
    %v5722 = vshrl.u32 %v5721, 7
    %v5723 = vsub.s32 1, %v5722
    %v5724 = vrot.slane %v5715, %v5723
    %v5727 = vmul.f32 %v5720, %v1398
    %v5728 = vmul.f32 %v5724, %v1399
    %v5729 = vmul.f32 %v5720, %v1388
    %v5730 = vmul.f32 %v5724, %v1389
    %v5731 = vmul.f32 %v5720, %v1400
    %v5732 = vmul.f32 %v5724, %v1401
    %v5739 = vrot.slane %v5727, 3
    %v5740 = vrot.slane %v5729, 3
    %v5741 = vsel %vm251, %v5739, %v5740
    %v5742 = vrot.slane %v5728, 3
    %v5743 = vrot.slane %v5730, 3
    %v5744 = vsel %vm251, %v5742, %v5743
    %v5745 = vrot.slane %v5731, 3
    %v5746 = vsel %vm251, %v5740, %v5745
    %v5747 = vrot.slane %v5732, 3
    %v5748 = vsel %vm251, %v5743, %v5747
    %v5753 = vadd.f32 %v5710, %v5741
    %v5754 = vadd.f32 %v5711, %v5744
    %v5755 = vadd.f32 %v5712, %v5746
    %v5756 = vadd.f32 %v5713, %v5748
    %s5757 = scalar_lea.vmem %s3, 198
    %v5758 = vld [vmem:[%s5757] ss:$8 sm:$0x3]
    %v5760 = vlaneseq
    %v5761 = vshrl.u32 %v5760, 7
    %v5762 = vsub.s32 0, %v5761
    %v5763 = vrot.slane %v5758, %v5762
    %v5764 = vlaneseq
    %v5765 = vshrl.u32 %v5764, 7
    %v5766 = vsub.s32 1, %v5765
    %v5767 = vrot.slane %v5758, %v5766
    %v5770 = vmul.f32 %v5763, %v1402
    %v5771 = vmul.f32 %v5767, %v1403
    %v5772 = vmul.f32 %v5763, %v1388
    %v5773 = vmul.f32 %v5767, %v1389
    %v5774 = vmul.f32 %v5763, %v1404
    %v5775 = vmul.f32 %v5767, %v1405
    %v5782 = vrot.slane %v5770, 4
    %v5783 = vrot.slane %v5772, 4
    %v5784 = vsel %vm320, %v5782, %v5783
    %v5785 = vrot.slane %v5771, 4
    %v5786 = vrot.slane %v5773, 4
    %v5787 = vsel %vm320, %v5785, %v5786
    %v5788 = vrot.slane %v5774, 4
    %v5789 = vsel %vm320, %v5783, %v5788
    %v5790 = vrot.slane %v5775, 4
    %v5791 = vsel %vm320, %v5786, %v5790
    %v5796 = vadd.f32 %v5753, %v5784
    %v5797 = vadd.f32 %v5754, %v5787
    %v5798 = vadd.f32 %v5755, %v5789
    %v5799 = vadd.f32 %v5756, %v5791
    %s5800 = scalar_lea.vmem %s3, 199
    %v5801 = vld [vmem:[%s5800] ss:$8 sm:$0x3]
    %v5803 = vlaneseq
    %v5804 = vshrl.u32 %v5803, 7
    %v5805 = vsub.s32 0, %v5804
    %v5806 = vrot.slane %v5801, %v5805
    %v5807 = vlaneseq
    %v5808 = vshrl.u32 %v5807, 7
    %v5809 = vsub.s32 1, %v5808
    %v5810 = vrot.slane %v5801, %v5809
    %v5813 = vmul.f32 %v5806, %v1406
    %v5814 = vmul.f32 %v5810, %v1407
    %v5815 = vmul.f32 %v5806, %v1388
    %v5816 = vmul.f32 %v5810, %v1389
    %v5817 = vmul.f32 %v5806, %v1408
    %v5818 = vmul.f32 %v5810, %v1409
    %v5825 = vrot.slane %v5813, 5
    %v5826 = vrot.slane %v5815, 5
    %v5827 = vsel %vm389, %v5825, %v5826
    %v5828 = vrot.slane %v5814, 5
    %v5829 = vrot.slane %v5816, 5
    %v5830 = vsel %vm389, %v5828, %v5829
    %v5831 = vrot.slane %v5817, 5
    %v5832 = vsel %vm389, %v5826, %v5831
    %v5833 = vrot.slane %v5818, 5
    %v5834 = vsel %vm389, %v5829, %v5833
    %v5839 = vadd.f32 %v5796, %v5827
    %v5840 = vadd.f32 %v5797, %v5830
    %v5841 = vadd.f32 %v5798, %v5832
    %v5842 = vadd.f32 %v5799, %v5834
    %s5843 = scalar_lea.vmem %s3, 208
    %v5844 = vld [vmem:[%s5843] ss:$8 sm:$0x3]
    %v5846 = vlaneseq
    %v5847 = vshrl.u32 %v5846, 7
    %v5848 = vsub.s32 0, %v5847
    %v5849 = vrot.slane %v5844, %v5848
    %v5850 = vlaneseq
    %v5851 = vshrl.u32 %v5850, 7
    %v5852 = vsub.s32 1, %v5851
    %v5853 = vrot.slane %v5844, %v5852
    %v5856 = vmul.f32 %v5849, %v1410
    %v5857 = vmul.f32 %v5853, %v1411
    %v5858 = vmul.f32 %v5849, %v1388
    %v5859 = vmul.f32 %v5853, %v1389
    %v5860 = vmul.f32 %v5849, %v1412
    %v5861 = vmul.f32 %v5853, %v1413
    %v5868 = vrot.slane %v5856, 6
    %v5869 = vrot.slane %v5858, 6
    %v5870 = vsel %vm1670, %v5868, %v5869
    %v5871 = vrot.slane %v5857, 6
    %v5872 = vrot.slane %v5859, 6
    %v5873 = vsel %vm1670, %v5871, %v5872
    %v5874 = vrot.slane %v5860, 6
    %v5875 = vsel %vm1670, %v5869, %v5874
    %v5876 = vrot.slane %v5861, 6
    %v5877 = vsel %vm1670, %v5872, %v5876
    %v5882 = vadd.f32 %v5839, %v5870
    %v5883 = vadd.f32 %v5840, %v5873
    %v5884 = vadd.f32 %v5841, %v5875
    %v5885 = vadd.f32 %v5842, %v5877
    %5890 = vrot.lane.b32.xlu0 %v5882, 3
    %v5891 = vpop.permute.xlu0 %5890
    %5892 = vrot.lane.b32.xlu0 %v5883, 3
    %v5893 = vpop.permute.xlu0 %5892
    %5894 = vrot.lane.b32.xlu0 %v5884, 3
    %v5895 = vpop.permute.xlu0 %5894
    %5896 = vrot.lane.b32.xlu0 %v5885, 3
    %v5897 = vpop.permute.xlu0 %5896
    %v5898 = vsel %vm1315, %v5891, %v5893
    %v5899 = vsel %vm1315, %v5895, %v5897
    %v5906 = vsel %vm1315, %v5893, %v5891
    %v5907 = vsel %vm1315, %v5897, %v5895
    %v5908 = vadd.f32 %v5607, %v5898
    %v5909 = vadd.f32 %v5608, %v5906
    %v5910 = vadd.f32 %v5609, %v5899
    %v5911 = vadd.f32 %v5610, %v5907
    %s5912 = scalar_lea.vmem %s3, 209
    %v5913 = vld [vmem:[%s5912] ss:$8 sm:$0x3]
    %v5915 = vlaneseq
    %v5916 = vshrl.u32 %v5915, 7
    %v5917 = vsub.s32 0, %v5916
    %v5918 = vrot.slane %v5913, %v5917
    %v5919 = vlaneseq
    %v5920 = vshrl.u32 %v5919, 7
    %v5921 = vsub.s32 1, %v5920
    %v5922 = vrot.slane %v5913, %v5921
    %v5925 = vmul.f32 %v5918, %v1386
    %v5926 = vmul.f32 %v5922, %v1387
    %v5927 = vmul.f32 %v5918, %v1388
    %v5928 = vmul.f32 %v5922, %v1389
    %s5929 = scalar_lea.vmem %s3, 210
    %v5930 = vld [vmem:[%s5929] ss:$8 sm:$0x3]
    %v5932 = vlaneseq
    %v5933 = vshrl.u32 %v5932, 7
    %v5934 = vsub.s32 0, %v5933
    %v5935 = vrot.slane %v5930, %v5934
    %v5936 = vlaneseq
    %v5937 = vshrl.u32 %v5936, 7
    %v5938 = vsub.s32 1, %v5937
    %v5939 = vrot.slane %v5930, %v5938
    %v5942 = vmul.f32 %v5935, %v1390
    %v5943 = vmul.f32 %v5939, %v1391
    %v5944 = vmul.f32 %v5935, %v1388
    %v5945 = vmul.f32 %v5939, %v1389
    %v5946 = vmul.f32 %v5935, %v1392
    %v5947 = vmul.f32 %v5939, %v1393
    %v5954 = vrot.slane %v5942, 1
    %v5955 = vrot.slane %v5944, 1
    %v5956 = vsel %vm116, %v5954, %v5955
    %v5957 = vrot.slane %v5943, 1
    %v5958 = vrot.slane %v5945, 1
    %v5959 = vsel %vm116, %v5957, %v5958
    %v5960 = vrot.slane %v5946, 1
    %v5961 = vsel %vm116, %v5955, %v5960
    %v5962 = vrot.slane %v5947, 1
    %v5963 = vsel %vm116, %v5958, %v5962
    %v5968 = vadd.f32 %v5925, %v5956
    %v5969 = vadd.f32 %v5926, %v5959
    %v5970 = vadd.f32 %v5927, %v5961
    %v5971 = vadd.f32 %v5928, %v5963
    %s5972 = scalar_lea.vmem %s3, 211
    %v5973 = vld [vmem:[%s5972] ss:$8 sm:$0x3]
    %v5975 = vlaneseq
    %v5976 = vshrl.u32 %v5975, 7
    %v5977 = vsub.s32 0, %v5976
    %v5978 = vrot.slane %v5973, %v5977
    %v5979 = vlaneseq
    %v5980 = vshrl.u32 %v5979, 7
    %v5981 = vsub.s32 1, %v5980
    %v5982 = vrot.slane %v5973, %v5981
    %v5985 = vmul.f32 %v5978, %v1394
    %v5986 = vmul.f32 %v5982, %v1395
    %v5987 = vmul.f32 %v5978, %v1388
    %v5988 = vmul.f32 %v5982, %v1389
    %v5989 = vmul.f32 %v5978, %v1396
    %v5990 = vmul.f32 %v5982, %v1397
    %v5997 = vrot.slane %v5985, 2
    %v5998 = vrot.slane %v5987, 2
    %v5999 = vsel %vm182, %v5997, %v5998
    %v6000 = vrot.slane %v5986, 2
    %v6001 = vrot.slane %v5988, 2
    %v6002 = vsel %vm182, %v6000, %v6001
    %v6003 = vrot.slane %v5989, 2
    %v6004 = vsel %vm182, %v5998, %v6003
    %v6005 = vrot.slane %v5990, 2
    %v6006 = vsel %vm182, %v6001, %v6005
    %v6011 = vadd.f32 %v5968, %v5999
    %v6012 = vadd.f32 %v5969, %v6002
    %v6013 = vadd.f32 %v5970, %v6004
    %v6014 = vadd.f32 %v5971, %v6006
    %s6015 = scalar_lea.vmem %s3, 212
    %v6016 = vld [vmem:[%s6015] ss:$8 sm:$0x3]
    %v6018 = vlaneseq
    %v6019 = vshrl.u32 %v6018, 7
    %v6020 = vsub.s32 0, %v6019
    %v6021 = vrot.slane %v6016, %v6020
    %v6022 = vlaneseq
    %v6023 = vshrl.u32 %v6022, 7
    %v6024 = vsub.s32 1, %v6023
    %v6025 = vrot.slane %v6016, %v6024
    %v6028 = vmul.f32 %v6021, %v1398
    %v6029 = vmul.f32 %v6025, %v1399
    %v6030 = vmul.f32 %v6021, %v1388
    %v6031 = vmul.f32 %v6025, %v1389
    %v6032 = vmul.f32 %v6021, %v1400
    %v6033 = vmul.f32 %v6025, %v1401
    %v6040 = vrot.slane %v6028, 3
    %v6041 = vrot.slane %v6030, 3
    %v6042 = vsel %vm251, %v6040, %v6041
    %v6043 = vrot.slane %v6029, 3
    %v6044 = vrot.slane %v6031, 3
    %v6045 = vsel %vm251, %v6043, %v6044
    %v6046 = vrot.slane %v6032, 3
    %v6047 = vsel %vm251, %v6041, %v6046
    %v6048 = vrot.slane %v6033, 3
    %v6049 = vsel %vm251, %v6044, %v6048
    %v6054 = vadd.f32 %v6011, %v6042
    %v6055 = vadd.f32 %v6012, %v6045
    %v6056 = vadd.f32 %v6013, %v6047
    %v6057 = vadd.f32 %v6014, %v6049
    %s6058 = scalar_lea.vmem %s3, 213
    %v6059 = vld [vmem:[%s6058] ss:$8 sm:$0x3]
    %v6061 = vlaneseq
    %v6062 = vshrl.u32 %v6061, 7
    %v6063 = vsub.s32 0, %v6062
    %v6064 = vrot.slane %v6059, %v6063
    %v6065 = vlaneseq
    %v6066 = vshrl.u32 %v6065, 7
    %v6067 = vsub.s32 1, %v6066
    %v6068 = vrot.slane %v6059, %v6067
    %v6071 = vmul.f32 %v6064, %v1402
    %v6072 = vmul.f32 %v6068, %v1403
    %v6073 = vmul.f32 %v6064, %v1388
    %v6074 = vmul.f32 %v6068, %v1389
    %v6075 = vmul.f32 %v6064, %v1404
    %v6076 = vmul.f32 %v6068, %v1405
    %v6083 = vrot.slane %v6071, 4
    %v6084 = vrot.slane %v6073, 4
    %v6085 = vsel %vm320, %v6083, %v6084
    %v6086 = vrot.slane %v6072, 4
    %v6087 = vrot.slane %v6074, 4
    %v6088 = vsel %vm320, %v6086, %v6087
    %v6089 = vrot.slane %v6075, 4
    %v6090 = vsel %vm320, %v6084, %v6089
    %v6091 = vrot.slane %v6076, 4
    %v6092 = vsel %vm320, %v6087, %v6091
    %v6097 = vadd.f32 %v6054, %v6085
    %v6098 = vadd.f32 %v6055, %v6088
    %v6099 = vadd.f32 %v6056, %v6090
    %v6100 = vadd.f32 %v6057, %v6092
    %s6101 = scalar_lea.vmem %s3, 214
    %v6102 = vld [vmem:[%s6101] ss:$8 sm:$0x3]
    %v6104 = vlaneseq
    %v6105 = vshrl.u32 %v6104, 7
    %v6106 = vsub.s32 0, %v6105
    %v6107 = vrot.slane %v6102, %v6106
    %v6108 = vlaneseq
    %v6109 = vshrl.u32 %v6108, 7
    %v6110 = vsub.s32 1, %v6109
    %v6111 = vrot.slane %v6102, %v6110
    %v6114 = vmul.f32 %v6107, %v1406
    %v6115 = vmul.f32 %v6111, %v1407
    %v6116 = vmul.f32 %v6107, %v1388
    %v6117 = vmul.f32 %v6111, %v1389
    %v6118 = vmul.f32 %v6107, %v1408
    %v6119 = vmul.f32 %v6111, %v1409
    %v6126 = vrot.slane %v6114, 5
    %v6127 = vrot.slane %v6116, 5
    %v6128 = vsel %vm389, %v6126, %v6127
    %v6129 = vrot.slane %v6115, 5
    %v6130 = vrot.slane %v6117, 5
    %v6131 = vsel %vm389, %v6129, %v6130
    %v6132 = vrot.slane %v6118, 5
    %v6133 = vsel %vm389, %v6127, %v6132
    %v6134 = vrot.slane %v6119, 5
    %v6135 = vsel %vm389, %v6130, %v6134
    %v6140 = vadd.f32 %v6097, %v6128
    %v6141 = vadd.f32 %v6098, %v6131
    %v6142 = vadd.f32 %v6099, %v6133
    %v6143 = vadd.f32 %v6100, %v6135
    %s6144 = scalar_lea.vmem %s3, 215
    %v6145 = vld [vmem:[%s6144] ss:$8 sm:$0x3]
    %v6147 = vlaneseq
    %v6148 = vshrl.u32 %v6147, 7
    %v6149 = vsub.s32 0, %v6148
    %v6150 = vrot.slane %v6145, %v6149
    %v6151 = vlaneseq
    %v6152 = vshrl.u32 %v6151, 7
    %v6153 = vsub.s32 1, %v6152
    %v6154 = vrot.slane %v6145, %v6153
    %v6157 = vmul.f32 %v6150, %v1410
    %v6158 = vmul.f32 %v6154, %v1411
    %v6159 = vmul.f32 %v6150, %v1388
    %v6160 = vmul.f32 %v6154, %v1389
    %v6161 = vmul.f32 %v6150, %v1412
    %v6162 = vmul.f32 %v6154, %v1413
    %v6169 = vrot.slane %v6157, 6
    %v6170 = vrot.slane %v6159, 6
    %v6171 = vsel %vm1670, %v6169, %v6170
    %v6172 = vrot.slane %v6158, 6
    %v6173 = vrot.slane %v6160, 6
    %v6174 = vsel %vm1670, %v6172, %v6173
    %v6175 = vrot.slane %v6161, 6
    %v6176 = vsel %vm1670, %v6170, %v6175
    %v6177 = vrot.slane %v6162, 6
    %v6178 = vsel %vm1670, %v6173, %v6177
    %v6183 = vadd.f32 %v6140, %v6171
    %v6184 = vadd.f32 %v6141, %v6174
    %v6185 = vadd.f32 %v6142, %v6176
    %v6186 = vadd.f32 %v6143, %v6178
    %6191 = vrot.lane.b32.xlu0 %v6183, 2
    %v6192 = vpop.permute.xlu0 %6191
    %6193 = vrot.lane.b32.xlu0 %v6184, 2
    %v6194 = vpop.permute.xlu0 %6193
    %6195 = vrot.lane.b32.xlu0 %v6185, 2
    %v6196 = vpop.permute.xlu0 %6195
    %6197 = vrot.lane.b32.xlu0 %v6186, 2
    %v6198 = vpop.permute.xlu0 %6197
    %v6199 = vsel %vm2000, %v6192, %v6194
    %v6200 = vsel %vm2000, %v6196, %v6198
    %v6207 = vsel %vm2000, %v6194, %v6192
    %v6208 = vsel %vm2000, %v6198, %v6196
    %v6209 = vadd.f32 %v5908, %v6199
    %v6210 = vadd.f32 %v5909, %v6207
    %v6211 = vadd.f32 %v5910, %v6200
    %v6212 = vadd.f32 %v5911, %v6208
    %s6213 = scalar_lea.vmem %s3, 224
    %v6214 = vld [vmem:[%s6213] ss:$8 sm:$0x3]
    %v6216 = vlaneseq
    %v6217 = vshrl.u32 %v6216, 7
    %v6218 = vsub.s32 0, %v6217
    %v6219 = vrot.slane %v6214, %v6218
    %v6220 = vlaneseq
    %v6221 = vshrl.u32 %v6220, 7
    %v6222 = vsub.s32 1, %v6221
    %v6223 = vrot.slane %v6214, %v6222
    %v6226 = vmul.f32 %v6219, %v1386
    %v6227 = vmul.f32 %v6223, %v1387
    %v6228 = vmul.f32 %v6219, %v1388
    %v6229 = vmul.f32 %v6223, %v1389
    %s6230 = scalar_lea.vmem %s3, 225
    %v6231 = vld [vmem:[%s6230] ss:$8 sm:$0x3]
    %v6233 = vlaneseq
    %v6234 = vshrl.u32 %v6233, 7
    %v6235 = vsub.s32 0, %v6234
    %v6236 = vrot.slane %v6231, %v6235
    %v6237 = vlaneseq
    %v6238 = vshrl.u32 %v6237, 7
    %v6239 = vsub.s32 1, %v6238
    %v6240 = vrot.slane %v6231, %v6239
    %v6243 = vmul.f32 %v6236, %v1390
    %v6244 = vmul.f32 %v6240, %v1391
    %v6245 = vmul.f32 %v6236, %v1388
    %v6246 = vmul.f32 %v6240, %v1389
    %v6247 = vmul.f32 %v6236, %v1392
    %v6248 = vmul.f32 %v6240, %v1393
    %v6255 = vrot.slane %v6243, 1
    %v6256 = vrot.slane %v6245, 1
    %v6257 = vsel %vm116, %v6255, %v6256
    %v6258 = vrot.slane %v6244, 1
    %v6259 = vrot.slane %v6246, 1
    %v6260 = vsel %vm116, %v6258, %v6259
    %v6261 = vrot.slane %v6247, 1
    %v6262 = vsel %vm116, %v6256, %v6261
    %v6263 = vrot.slane %v6248, 1
    %v6264 = vsel %vm116, %v6259, %v6263
    %v6269 = vadd.f32 %v6226, %v6257
    %v6270 = vadd.f32 %v6227, %v6260
    %v6271 = vadd.f32 %v6228, %v6262
    %v6272 = vadd.f32 %v6229, %v6264
    %s6273 = scalar_lea.vmem %s3, 226
    %v6274 = vld [vmem:[%s6273] ss:$8 sm:$0x3]
    %v6276 = vlaneseq
    %v6277 = vshrl.u32 %v6276, 7
    %v6278 = vsub.s32 0, %v6277
    %v6279 = vrot.slane %v6274, %v6278
    %v6280 = vlaneseq
    %v6281 = vshrl.u32 %v6280, 7
    %v6282 = vsub.s32 1, %v6281
    %v6283 = vrot.slane %v6274, %v6282
    %v6286 = vmul.f32 %v6279, %v1394
    %v6287 = vmul.f32 %v6283, %v1395
    %v6288 = vmul.f32 %v6279, %v1388
    %v6289 = vmul.f32 %v6283, %v1389
    %v6290 = vmul.f32 %v6279, %v1396
    %v6291 = vmul.f32 %v6283, %v1397
    %v6298 = vrot.slane %v6286, 2
    %v6299 = vrot.slane %v6288, 2
    %v6300 = vsel %vm182, %v6298, %v6299
    %v6301 = vrot.slane %v6287, 2
    %v6302 = vrot.slane %v6289, 2
    %v6303 = vsel %vm182, %v6301, %v6302
    %v6304 = vrot.slane %v6290, 2
    %v6305 = vsel %vm182, %v6299, %v6304
    %v6306 = vrot.slane %v6291, 2
    %v6307 = vsel %vm182, %v6302, %v6306
    %v6312 = vadd.f32 %v6269, %v6300
    %v6313 = vadd.f32 %v6270, %v6303
    %v6314 = vadd.f32 %v6271, %v6305
    %v6315 = vadd.f32 %v6272, %v6307
    %s6316 = scalar_lea.vmem %s3, 227
    %v6317 = vld [vmem:[%s6316] ss:$8 sm:$0x3]
    %v6319 = vlaneseq
    %v6320 = vshrl.u32 %v6319, 7
    %v6321 = vsub.s32 0, %v6320
    %v6322 = vrot.slane %v6317, %v6321
    %v6323 = vlaneseq
    %v6324 = vshrl.u32 %v6323, 7
    %v6325 = vsub.s32 1, %v6324
    %v6326 = vrot.slane %v6317, %v6325
    %v6329 = vmul.f32 %v6322, %v1398
    %v6330 = vmul.f32 %v6326, %v1399
    %v6331 = vmul.f32 %v6322, %v1388
    %v6332 = vmul.f32 %v6326, %v1389
    %v6333 = vmul.f32 %v6322, %v1400
    %v6334 = vmul.f32 %v6326, %v1401
    %v6341 = vrot.slane %v6329, 3
    %v6342 = vrot.slane %v6331, 3
    %v6343 = vsel %vm251, %v6341, %v6342
    %v6344 = vrot.slane %v6330, 3
    %v6345 = vrot.slane %v6332, 3
    %v6346 = vsel %vm251, %v6344, %v6345
    %v6347 = vrot.slane %v6333, 3
    %v6348 = vsel %vm251, %v6342, %v6347
    %v6349 = vrot.slane %v6334, 3
    %v6350 = vsel %vm251, %v6345, %v6349
    %v6355 = vadd.f32 %v6312, %v6343
    %v6356 = vadd.f32 %v6313, %v6346
    %v6357 = vadd.f32 %v6314, %v6348
    %v6358 = vadd.f32 %v6315, %v6350
    %s6359 = scalar_lea.vmem %s3, 228
    %v6360 = vld [vmem:[%s6359] ss:$8 sm:$0x3]
    %v6362 = vlaneseq
    %v6363 = vshrl.u32 %v6362, 7
    %v6364 = vsub.s32 0, %v6363
    %v6365 = vrot.slane %v6360, %v6364
    %v6366 = vlaneseq
    %v6367 = vshrl.u32 %v6366, 7
    %v6368 = vsub.s32 1, %v6367
    %v6369 = vrot.slane %v6360, %v6368
    %v6372 = vmul.f32 %v6365, %v1402
    %v6373 = vmul.f32 %v6369, %v1403
    %v6374 = vmul.f32 %v6365, %v1388
    %v6375 = vmul.f32 %v6369, %v1389
    %v6376 = vmul.f32 %v6365, %v1404
    %v6377 = vmul.f32 %v6369, %v1405
    %v6384 = vrot.slane %v6372, 4
    %v6385 = vrot.slane %v6374, 4
    %v6386 = vsel %vm320, %v6384, %v6385
    %v6387 = vrot.slane %v6373, 4
    %v6388 = vrot.slane %v6375, 4
    %v6389 = vsel %vm320, %v6387, %v6388
    %v6390 = vrot.slane %v6376, 4
    %v6391 = vsel %vm320, %v6385, %v6390
    %v6392 = vrot.slane %v6377, 4
    %v6393 = vsel %vm320, %v6388, %v6392
    %v6398 = vadd.f32 %v6355, %v6386
    %v6399 = vadd.f32 %v6356, %v6389
    %v6400 = vadd.f32 %v6357, %v6391
    %v6401 = vadd.f32 %v6358, %v6393
    %s6402 = scalar_lea.vmem %s3, 229
    %v6403 = vld [vmem:[%s6402] ss:$8 sm:$0x3]
    %v6405 = vlaneseq
    %v6406 = vshrl.u32 %v6405, 7
    %v6407 = vsub.s32 0, %v6406
    %v6408 = vrot.slane %v6403, %v6407
    %v6409 = vlaneseq
    %v6410 = vshrl.u32 %v6409, 7
    %v6411 = vsub.s32 1, %v6410
    %v6412 = vrot.slane %v6403, %v6411
    %v6415 = vmul.f32 %v6408, %v1406
    %v6416 = vmul.f32 %v6412, %v1407
    %v6417 = vmul.f32 %v6408, %v1388
    %v6418 = vmul.f32 %v6412, %v1389
    %v6419 = vmul.f32 %v6408, %v1408
    %v6420 = vmul.f32 %v6412, %v1409
    %v6427 = vrot.slane %v6415, 5
    %v6428 = vrot.slane %v6417, 5
    %v6429 = vsel %vm389, %v6427, %v6428
    %v6430 = vrot.slane %v6416, 5
    %v6431 = vrot.slane %v6418, 5
    %v6432 = vsel %vm389, %v6430, %v6431
    %v6433 = vrot.slane %v6419, 5
    %v6434 = vsel %vm389, %v6428, %v6433
    %v6435 = vrot.slane %v6420, 5
    %v6436 = vsel %vm389, %v6431, %v6435
    %v6441 = vadd.f32 %v6398, %v6429
    %v6442 = vadd.f32 %v6399, %v6432
    %v6443 = vadd.f32 %v6400, %v6434
    %v6444 = vadd.f32 %v6401, %v6436
    %s6445 = scalar_lea.vmem %s3, 230
    %v6446 = vld [vmem:[%s6445] ss:$8 sm:$0x3]
    %v6448 = vlaneseq
    %v6449 = vshrl.u32 %v6448, 7
    %v6450 = vsub.s32 0, %v6449
    %v6451 = vrot.slane %v6446, %v6450
    %v6452 = vlaneseq
    %v6453 = vshrl.u32 %v6452, 7
    %v6454 = vsub.s32 1, %v6453
    %v6455 = vrot.slane %v6446, %v6454
    %v6458 = vmul.f32 %v6451, %v1410
    %v6459 = vmul.f32 %v6455, %v1411
    %v6460 = vmul.f32 %v6451, %v1388
    %v6461 = vmul.f32 %v6455, %v1389
    %v6462 = vmul.f32 %v6451, %v1412
    %v6463 = vmul.f32 %v6455, %v1413
    %v6470 = vrot.slane %v6458, 6
    %v6471 = vrot.slane %v6460, 6
    %v6472 = vsel %vm1670, %v6470, %v6471
    %v6473 = vrot.slane %v6459, 6
    %v6474 = vrot.slane %v6461, 6
    %v6475 = vsel %vm1670, %v6473, %v6474
    %v6476 = vrot.slane %v6462, 6
    %v6477 = vsel %vm1670, %v6471, %v6476
    %v6478 = vrot.slane %v6463, 6
    %v6479 = vsel %vm1670, %v6474, %v6478
    %v6484 = vadd.f32 %v6441, %v6472
    %v6485 = vadd.f32 %v6442, %v6475
    %v6486 = vadd.f32 %v6443, %v6477
    %v6487 = vadd.f32 %v6444, %v6479
    %6492 = vrot.lane.b32.xlu0 %v6484, 1
    %v6493 = vpop.permute.xlu0 %6492
    %6494 = vrot.lane.b32.xlu0 %v6485, 1
    %v6495 = vpop.permute.xlu0 %6494
    %6496 = vrot.lane.b32.xlu0 %v6486, 1
    %v6497 = vpop.permute.xlu0 %6496
    %6498 = vrot.lane.b32.xlu0 %v6487, 1
    %v6499 = vpop.permute.xlu0 %6498
    %v6500 = vsel %vm2302, %v6493, %v6495
    %v6501 = vsel %vm2302, %v6497, %v6499
    %v6508 = vsel %vm2302, %v6495, %v6493
    %v6509 = vsel %vm2302, %v6499, %v6497
    %v6510 = vadd.f32 %v6209, %v6500
    %v6511 = vadd.f32 %v6210, %v6508
    %v6512 = vadd.f32 %v6211, %v6501
    %v6513 = vadd.f32 %v6212, %v6509
    %s6514 = scalar_lea.vmem %s3, 231
    %v6515 = vld [vmem:[%s6514] ss:$8 sm:$0x3]
    %v6517 = vlaneseq
    %v6518 = vshrl.u32 %v6517, 7
    %v6519 = vsub.s32 0, %v6518
    %v6520 = vrot.slane %v6515, %v6519
    %v6521 = vlaneseq
    %v6522 = vshrl.u32 %v6521, 7
    %v6523 = vsub.s32 1, %v6522
    %v6524 = vrot.slane %v6515, %v6523
    %v6527 = vmul.f32 %v6520, %v1386
    %v6528 = vmul.f32 %v6524, %v1387
    %v6529 = vmul.f32 %v6520, %v1388
    %v6530 = vmul.f32 %v6524, %v1389
    %s6531 = scalar_lea.vmem %s3, 240
    %v6532 = vld [vmem:[%s6531] ss:$8 sm:$0x3]
    %v6534 = vlaneseq
    %v6535 = vshrl.u32 %v6534, 7
    %v6536 = vsub.s32 0, %v6535
    %v6537 = vrot.slane %v6532, %v6536
    %v6538 = vlaneseq
    %v6539 = vshrl.u32 %v6538, 7
    %v6540 = vsub.s32 1, %v6539
    %v6541 = vrot.slane %v6532, %v6540
    %v6544 = vmul.f32 %v6537, %v1390
    %v6545 = vmul.f32 %v6541, %v1391
    %v6546 = vmul.f32 %v6537, %v1388
    %v6547 = vmul.f32 %v6541, %v1389
    %v6548 = vmul.f32 %v6537, %v1392
    %v6549 = vmul.f32 %v6541, %v1393
    %v6556 = vrot.slane %v6544, 1
    %v6557 = vrot.slane %v6546, 1
    %v6558 = vsel %vm116, %v6556, %v6557
    %v6559 = vrot.slane %v6545, 1
    %v6560 = vrot.slane %v6547, 1
    %v6561 = vsel %vm116, %v6559, %v6560
    %v6562 = vrot.slane %v6548, 1
    %v6563 = vsel %vm116, %v6557, %v6562
    %v6564 = vrot.slane %v6549, 1
    %v6565 = vsel %vm116, %v6560, %v6564
    %v6570 = vadd.f32 %v6527, %v6558
    %v6571 = vadd.f32 %v6528, %v6561
    %v6572 = vadd.f32 %v6529, %v6563
    %v6573 = vadd.f32 %v6530, %v6565
    %s6574 = scalar_lea.vmem %s3, 241
    %v6575 = vld [vmem:[%s6574] ss:$8 sm:$0x3]
    %v6577 = vlaneseq
    %v6578 = vshrl.u32 %v6577, 7
    %v6579 = vsub.s32 0, %v6578
    %v6580 = vrot.slane %v6575, %v6579
    %v6581 = vlaneseq
    %v6582 = vshrl.u32 %v6581, 7
    %v6583 = vsub.s32 1, %v6582
    %v6584 = vrot.slane %v6575, %v6583
    %v6587 = vmul.f32 %v6580, %v1394
    %v6588 = vmul.f32 %v6584, %v1395
    %v6589 = vmul.f32 %v6580, %v1388
    %v6590 = vmul.f32 %v6584, %v1389
    %v6591 = vmul.f32 %v6580, %v1396
    %v6592 = vmul.f32 %v6584, %v1397
    %v6599 = vrot.slane %v6587, 2
    %v6600 = vrot.slane %v6589, 2
    %v6601 = vsel %vm182, %v6599, %v6600
    %v6602 = vrot.slane %v6588, 2
    %v6603 = vrot.slane %v6590, 2
    %v6604 = vsel %vm182, %v6602, %v6603
    %v6605 = vrot.slane %v6591, 2
    %v6606 = vsel %vm182, %v6600, %v6605
    %v6607 = vrot.slane %v6592, 2
    %v6608 = vsel %vm182, %v6603, %v6607
    %v6613 = vadd.f32 %v6570, %v6601
    %v6614 = vadd.f32 %v6571, %v6604
    %v6615 = vadd.f32 %v6572, %v6606
    %v6616 = vadd.f32 %v6573, %v6608
    %s6617 = scalar_lea.vmem %s3, 242
    %v6618 = vld [vmem:[%s6617] ss:$8 sm:$0x3]
    %v6620 = vlaneseq
    %v6621 = vshrl.u32 %v6620, 7
    %v6622 = vsub.s32 0, %v6621
    %v6623 = vrot.slane %v6618, %v6622
    %v6624 = vlaneseq
    %v6625 = vshrl.u32 %v6624, 7
    %v6626 = vsub.s32 1, %v6625
    %v6627 = vrot.slane %v6618, %v6626
    %v6630 = vmul.f32 %v6623, %v1398
    %v6631 = vmul.f32 %v6627, %v1399
    %v6632 = vmul.f32 %v6623, %v1388
    %v6633 = vmul.f32 %v6627, %v1389
    %v6634 = vmul.f32 %v6623, %v1400
    %v6635 = vmul.f32 %v6627, %v1401
    %v6642 = vrot.slane %v6630, 3
    %v6643 = vrot.slane %v6632, 3
    %v6644 = vsel %vm251, %v6642, %v6643
    %v6645 = vrot.slane %v6631, 3
    %v6646 = vrot.slane %v6633, 3
    %v6647 = vsel %vm251, %v6645, %v6646
    %v6648 = vrot.slane %v6634, 3
    %v6649 = vsel %vm251, %v6643, %v6648
    %v6650 = vrot.slane %v6635, 3
    %v6651 = vsel %vm251, %v6646, %v6650
    %v6656 = vadd.f32 %v6613, %v6644
    %v6657 = vadd.f32 %v6614, %v6647
    %v6658 = vadd.f32 %v6615, %v6649
    %v6659 = vadd.f32 %v6616, %v6651
    %s6660 = scalar_lea.vmem %s3, 243
    %v6661 = vld [vmem:[%s6660] ss:$8 sm:$0x3]
    %v6663 = vlaneseq
    %v6664 = vshrl.u32 %v6663, 7
    %v6665 = vsub.s32 0, %v6664
    %v6666 = vrot.slane %v6661, %v6665
    %v6667 = vlaneseq
    %v6668 = vshrl.u32 %v6667, 7
    %v6669 = vsub.s32 1, %v6668
    %v6670 = vrot.slane %v6661, %v6669
    %v6673 = vmul.f32 %v6666, %v1402
    %v6674 = vmul.f32 %v6670, %v1403
    %v6675 = vmul.f32 %v6666, %v1388
    %v6676 = vmul.f32 %v6670, %v1389
    %v6677 = vmul.f32 %v6666, %v1404
    %v6678 = vmul.f32 %v6670, %v1405
    %v6685 = vrot.slane %v6673, 4
    %v6686 = vrot.slane %v6675, 4
    %v6687 = vsel %vm320, %v6685, %v6686
    %v6688 = vrot.slane %v6674, 4
    %v6689 = vrot.slane %v6676, 4
    %v6690 = vsel %vm320, %v6688, %v6689
    %v6691 = vrot.slane %v6677, 4
    %v6692 = vsel %vm320, %v6686, %v6691
    %v6693 = vrot.slane %v6678, 4
    %v6694 = vsel %vm320, %v6689, %v6693
    %v6699 = vadd.f32 %v6656, %v6687
    %v6700 = vadd.f32 %v6657, %v6690
    %v6701 = vadd.f32 %v6658, %v6692
    %v6702 = vadd.f32 %v6659, %v6694
    %s6703 = scalar_lea.vmem %s3, 244
    %v6704 = vld [vmem:[%s6703] ss:$8 sm:$0x3]
    %v6706 = vlaneseq
    %v6707 = vshrl.u32 %v6706, 7
    %v6708 = vsub.s32 0, %v6707
    %v6709 = vrot.slane %v6704, %v6708
    %v6710 = vlaneseq
    %v6711 = vshrl.u32 %v6710, 7
    %v6712 = vsub.s32 1, %v6711
    %v6713 = vrot.slane %v6704, %v6712
    %v6716 = vmul.f32 %v6709, %v1406
    %v6717 = vmul.f32 %v6713, %v1407
    %v6718 = vmul.f32 %v6709, %v1388
    %v6719 = vmul.f32 %v6713, %v1389
    %v6720 = vmul.f32 %v6709, %v1408
    %v6721 = vmul.f32 %v6713, %v1409
    %v6728 = vrot.slane %v6716, 5
    %v6729 = vrot.slane %v6718, 5
    %v6730 = vsel %vm389, %v6728, %v6729
    %v6731 = vrot.slane %v6717, 5
    %v6732 = vrot.slane %v6719, 5
    %v6733 = vsel %vm389, %v6731, %v6732
    %v6734 = vrot.slane %v6720, 5
    %v6735 = vsel %vm389, %v6729, %v6734
    %v6736 = vrot.slane %v6721, 5
    %v6737 = vsel %vm389, %v6732, %v6736
    %v6742 = vadd.f32 %v6699, %v6730
    %v6743 = vadd.f32 %v6700, %v6733
    %v6744 = vadd.f32 %v6701, %v6735
    %v6745 = vadd.f32 %v6702, %v6737
    %s6746 = scalar_lea.vmem %s3, 245
    %v6747 = vld [vmem:[%s6746] ss:$8 sm:$0x3]
    %v6749 = vlaneseq
    %v6750 = vshrl.u32 %v6749, 7
    %v6751 = vsub.s32 0, %v6750
    %v6752 = vrot.slane %v6747, %v6751
    %v6753 = vlaneseq
    %v6754 = vshrl.u32 %v6753, 7
    %v6755 = vsub.s32 1, %v6754
    %v6756 = vrot.slane %v6747, %v6755
    %v6759 = vmul.f32 %v6752, %v1410
    %v6760 = vmul.f32 %v6756, %v1411
    %v6761 = vmul.f32 %v6752, %v1388
    %v6762 = vmul.f32 %v6756, %v1389
    %v6763 = vmul.f32 %v6752, %v1412
    %v6764 = vmul.f32 %v6756, %v1413
    %v6771 = vrot.slane %v6759, 6
    %v6772 = vrot.slane %v6761, 6
    %v6773 = vsel %vm1670, %v6771, %v6772
    %v6774 = vrot.slane %v6760, 6
    %v6775 = vrot.slane %v6762, 6
    %v6776 = vsel %vm1670, %v6774, %v6775
    %v6777 = vrot.slane %v6763, 6
    %v6778 = vsel %vm1670, %v6772, %v6777
    %v6779 = vrot.slane %v6764, 6
    %v6780 = vsel %vm1670, %v6775, %v6779
    %v6785 = vadd.f32 %v6742, %v6773
    %v6786 = vadd.f32 %v6743, %v6776
    %v6787 = vadd.f32 %v6744, %v6778
    %v6788 = vadd.f32 %v6745, %v6780
    %v6789 = vadd.f32 %v6510, %v6786
    %v6790 = vadd.f32 %v6511, %v6785
    %v6791 = vadd.f32 %v6512, %v6788
    %v6792 = vadd.f32 %v6513, %v6787
    %s6793 = scalar_lea.vmem %s3, 246
    %v6794 = vld [vmem:[%s6793] ss:$8 sm:$0x3]
    %v6796 = vlaneseq
    %v6797 = vshrl.u32 %v6796, 7
    %v6798 = vsub.s32 0, %v6797
    %v6799 = vrot.slane %v6794, %v6798
    %v6800 = vlaneseq
    %v6801 = vshrl.u32 %v6800, 7
    %v6802 = vsub.s32 1, %v6801
    %v6803 = vrot.slane %v6794, %v6802
    %v6806 = vmul.f32 %v6799, %v1386
    %v6807 = vmul.f32 %v6803, %v1387
    %v6808 = vmul.f32 %v6799, %v1388
    %v6809 = vmul.f32 %v6803, %v1389
    %s6810 = scalar_lea.vmem %s3, 247
    %v6811 = vld [vmem:[%s6810] ss:$8 sm:$0x3]
    %v6813 = vlaneseq
    %v6814 = vshrl.u32 %v6813, 7
    %v6815 = vsub.s32 0, %v6814
    %v6816 = vrot.slane %v6811, %v6815
    %v6817 = vlaneseq
    %v6818 = vshrl.u32 %v6817, 7
    %v6819 = vsub.s32 1, %v6818
    %v6820 = vrot.slane %v6811, %v6819
    %v6823 = vmul.f32 %v6816, %v1390
    %v6824 = vmul.f32 %v6820, %v1391
    %v6825 = vmul.f32 %v6816, %v1388
    %v6826 = vmul.f32 %v6820, %v1389
    %v6827 = vmul.f32 %v6816, %v1392
    %v6828 = vmul.f32 %v6820, %v1393
    %v6835 = vrot.slane %v6823, 1
    %v6836 = vrot.slane %v6825, 1
    %v6837 = vsel %vm116, %v6835, %v6836
    %v6838 = vrot.slane %v6824, 1
    %v6839 = vrot.slane %v6826, 1
    %v6840 = vsel %vm116, %v6838, %v6839
    %v6841 = vrot.slane %v6827, 1
    %v6842 = vsel %vm116, %v6836, %v6841
    %v6843 = vrot.slane %v6828, 1
    %v6844 = vsel %vm116, %v6839, %v6843
    %v6849 = vadd.f32 %v6806, %v6837
    %v6850 = vadd.f32 %v6807, %v6840
    %v6851 = vadd.f32 %v6808, %v6842
    %v6852 = vadd.f32 %v6809, %v6844
    %s6853 = scalar_lea.vmem %s3, 256
    %v6854 = vld [vmem:[%s6853] ss:$8 sm:$0x3]
    %v6856 = vlaneseq
    %v6857 = vshrl.u32 %v6856, 7
    %v6858 = vsub.s32 0, %v6857
    %v6859 = vrot.slane %v6854, %v6858
    %v6860 = vlaneseq
    %v6861 = vshrl.u32 %v6860, 7
    %v6862 = vsub.s32 1, %v6861
    %v6863 = vrot.slane %v6854, %v6862
    %v6866 = vmul.f32 %v6859, %v1394
    %v6867 = vmul.f32 %v6863, %v1395
    %v6868 = vmul.f32 %v6859, %v1388
    %v6869 = vmul.f32 %v6863, %v1389
    %v6870 = vmul.f32 %v6859, %v1396
    %v6871 = vmul.f32 %v6863, %v1397
    %v6878 = vrot.slane %v6866, 2
    %v6879 = vrot.slane %v6868, 2
    %v6880 = vsel %vm182, %v6878, %v6879
    %v6881 = vrot.slane %v6867, 2
    %v6882 = vrot.slane %v6869, 2
    %v6883 = vsel %vm182, %v6881, %v6882
    %v6884 = vrot.slane %v6870, 2
    %v6885 = vsel %vm182, %v6879, %v6884
    %v6886 = vrot.slane %v6871, 2
    %v6887 = vsel %vm182, %v6882, %v6886
    %v6892 = vadd.f32 %v6849, %v6880
    %v6893 = vadd.f32 %v6850, %v6883
    %v6894 = vadd.f32 %v6851, %v6885
    %v6895 = vadd.f32 %v6852, %v6887
    %s6896 = scalar_lea.vmem %s3, 257
    %v6897 = vld [vmem:[%s6896] ss:$8 sm:$0x3]
    %v6899 = vlaneseq
    %v6900 = vshrl.u32 %v6899, 7
    %v6901 = vsub.s32 0, %v6900
    %v6902 = vrot.slane %v6897, %v6901
    %v6903 = vlaneseq
    %v6904 = vshrl.u32 %v6903, 7
    %v6905 = vsub.s32 1, %v6904
    %v6906 = vrot.slane %v6897, %v6905
    %v6909 = vmul.f32 %v6902, %v1398
    %v6910 = vmul.f32 %v6906, %v1399
    %v6911 = vmul.f32 %v6902, %v1388
    %v6912 = vmul.f32 %v6906, %v1389
    %v6913 = vmul.f32 %v6902, %v1400
    %v6914 = vmul.f32 %v6906, %v1401
    %v6921 = vrot.slane %v6909, 3
    %v6922 = vrot.slane %v6911, 3
    %v6923 = vsel %vm251, %v6921, %v6922
    %v6924 = vrot.slane %v6910, 3
    %v6925 = vrot.slane %v6912, 3
    %v6926 = vsel %vm251, %v6924, %v6925
    %v6927 = vrot.slane %v6913, 3
    %v6928 = vsel %vm251, %v6922, %v6927
    %v6929 = vrot.slane %v6914, 3
    %v6930 = vsel %vm251, %v6925, %v6929
    %v6935 = vadd.f32 %v6892, %v6923
    %v6936 = vadd.f32 %v6893, %v6926
    %v6937 = vadd.f32 %v6894, %v6928
    %v6938 = vadd.f32 %v6895, %v6930
    %s6939 = scalar_lea.vmem %s3, 258
    %v6940 = vld [vmem:[%s6939] ss:$8 sm:$0x3]
    %v6942 = vlaneseq
    %v6943 = vshrl.u32 %v6942, 7
    %v6944 = vsub.s32 0, %v6943
    %v6945 = vrot.slane %v6940, %v6944
    %v6946 = vlaneseq
    %v6947 = vshrl.u32 %v6946, 7
    %v6948 = vsub.s32 1, %v6947
    %v6949 = vrot.slane %v6940, %v6948
    %v6952 = vmul.f32 %v6945, %v1402
    %v6953 = vmul.f32 %v6949, %v1403
    %v6954 = vmul.f32 %v6945, %v1388
    %v6955 = vmul.f32 %v6949, %v1389
    %v6956 = vmul.f32 %v6945, %v1404
    %v6957 = vmul.f32 %v6949, %v1405
    %v6964 = vrot.slane %v6952, 4
    %v6965 = vrot.slane %v6954, 4
    %v6966 = vsel %vm320, %v6964, %v6965
    %v6967 = vrot.slane %v6953, 4
    %v6968 = vrot.slane %v6955, 4
    %v6969 = vsel %vm320, %v6967, %v6968
    %v6970 = vrot.slane %v6956, 4
    %v6971 = vsel %vm320, %v6965, %v6970
    %v6972 = vrot.slane %v6957, 4
    %v6973 = vsel %vm320, %v6968, %v6972
    %v6978 = vadd.f32 %v6935, %v6966
    %v6979 = vadd.f32 %v6936, %v6969
    %v6980 = vadd.f32 %v6937, %v6971
    %v6981 = vadd.f32 %v6938, %v6973
    %s6982 = scalar_lea.vmem %s3, 259
    %v6983 = vld [vmem:[%s6982] ss:$8 sm:$0x3]
    %v6985 = vlaneseq
    %v6986 = vshrl.u32 %v6985, 7
    %v6987 = vsub.s32 0, %v6986
    %v6988 = vrot.slane %v6983, %v6987
    %v6989 = vlaneseq
    %v6990 = vshrl.u32 %v6989, 7
    %v6991 = vsub.s32 1, %v6990
    %v6992 = vrot.slane %v6983, %v6991
    %v6995 = vmul.f32 %v6988, %v1406
    %v6996 = vmul.f32 %v6992, %v1407
    %v6997 = vmul.f32 %v6988, %v1388
    %v6998 = vmul.f32 %v6992, %v1389
    %v6999 = vmul.f32 %v6988, %v1408
    %v7000 = vmul.f32 %v6992, %v1409
    %v7007 = vrot.slane %v6995, 5
    %v7008 = vrot.slane %v6997, 5
    %v7009 = vsel %vm389, %v7007, %v7008
    %v7010 = vrot.slane %v6996, 5
    %v7011 = vrot.slane %v6998, 5
    %v7012 = vsel %vm389, %v7010, %v7011
    %v7013 = vrot.slane %v6999, 5
    %v7014 = vsel %vm389, %v7008, %v7013
    %v7015 = vrot.slane %v7000, 5
    %v7016 = vsel %vm389, %v7011, %v7015
    %v7021 = vadd.f32 %v6978, %v7009
    %v7022 = vadd.f32 %v6979, %v7012
    %v7023 = vadd.f32 %v6980, %v7014
    %v7024 = vadd.f32 %v6981, %v7016
    %s7025 = scalar_lea.vmem %s3, 260
    %v7026 = vld [vmem:[%s7025] ss:$8 sm:$0x3]
    %v7028 = vlaneseq
    %v7029 = vshrl.u32 %v7028, 7
    %v7030 = vsub.s32 0, %v7029
    %v7031 = vrot.slane %v7026, %v7030
    %v7032 = vlaneseq
    %v7033 = vshrl.u32 %v7032, 7
    %v7034 = vsub.s32 1, %v7033
    %v7035 = vrot.slane %v7026, %v7034
    %v7038 = vmul.f32 %v7031, %v1410
    %v7039 = vmul.f32 %v7035, %v1411
    %v7040 = vmul.f32 %v7031, %v1388
    %v7041 = vmul.f32 %v7035, %v1389
    %v7042 = vmul.f32 %v7031, %v1412
    %v7043 = vmul.f32 %v7035, %v1413
    %v7050 = vrot.slane %v7038, 6
    %v7051 = vrot.slane %v7040, 6
    %v7052 = vsel %vm1670, %v7050, %v7051
    %v7053 = vrot.slane %v7039, 6
    %v7054 = vrot.slane %v7041, 6
    %v7055 = vsel %vm1670, %v7053, %v7054
    %v7056 = vrot.slane %v7042, 6
    %v7057 = vsel %vm1670, %v7051, %v7056
    %v7058 = vrot.slane %v7043, 6
    %v7059 = vsel %vm1670, %v7054, %v7058
    %v7064 = vadd.f32 %v7021, %v7052
    %v7065 = vadd.f32 %v7022, %v7055
    %v7066 = vadd.f32 %v7023, %v7057
    %v7067 = vadd.f32 %v7024, %v7059
    %7070 = vrot.lane.b32.xlu0 %v7065, 127
    %v7071 = vpop.permute.xlu0 %7070
    %7072 = vrot.lane.b32.xlu0 %v7067, 127
    %v7073 = vpop.permute.xlu0 %7072
    %7078 = vrot.lane.b32.xlu0 %v7064, 127
    %v7079 = vpop.permute.xlu0 %7078
    %7080 = vrot.lane.b32.xlu0 %v7066, 127
    %v7081 = vpop.permute.xlu0 %7080
    %v7082 = vsel %vm144, %v7079, %v7071
    %v7083 = vsel %vm144, %v7081, %v7073
    %v7088 = vsel %vm144, %v7071, %v7079
    %v7089 = vsel %vm144, %v7073, %v7081
    %v7090 = vadd.f32 %v6789, %v7088
    %v7091 = vadd.f32 %v6790, %v7082
    %v7092 = vadd.f32 %v6791, %v7089
    %v7093 = vadd.f32 %v6792, %v7083
    %s7094 = scalar_lea.vmem %s3, 261
    %v7095 = vld [vmem:[%s7094] ss:$8 sm:$0x3]
    %v7097 = vlaneseq
    %v7098 = vshrl.u32 %v7097, 7
    %v7099 = vsub.s32 0, %v7098
    %v7100 = vrot.slane %v7095, %v7099
    %v7101 = vlaneseq
    %v7102 = vshrl.u32 %v7101, 7
    %v7103 = vsub.s32 1, %v7102
    %v7104 = vrot.slane %v7095, %v7103
    %v7107 = vmul.f32 %v7100, %v1386
    %v7108 = vmul.f32 %v7104, %v1387
    %v7109 = vmul.f32 %v7100, %v1388
    %v7110 = vmul.f32 %v7104, %v1389
    %s7111 = scalar_lea.vmem %s3, 262
    %v7112 = vld [vmem:[%s7111] ss:$8 sm:$0x3]
    %v7114 = vlaneseq
    %v7115 = vshrl.u32 %v7114, 7
    %v7116 = vsub.s32 0, %v7115
    %v7117 = vrot.slane %v7112, %v7116
    %v7118 = vlaneseq
    %v7119 = vshrl.u32 %v7118, 7
    %v7120 = vsub.s32 1, %v7119
    %v7121 = vrot.slane %v7112, %v7120
    %v7124 = vmul.f32 %v7117, %v1390
    %v7125 = vmul.f32 %v7121, %v1391
    %v7126 = vmul.f32 %v7117, %v1388
    %v7127 = vmul.f32 %v7121, %v1389
    %v7128 = vmul.f32 %v7117, %v1392
    %v7129 = vmul.f32 %v7121, %v1393
    %v7136 = vrot.slane %v7124, 1
    %v7137 = vrot.slane %v7126, 1
    %v7138 = vsel %vm116, %v7136, %v7137
    %v7139 = vrot.slane %v7125, 1
    %v7140 = vrot.slane %v7127, 1
    %v7141 = vsel %vm116, %v7139, %v7140
    %v7142 = vrot.slane %v7128, 1
    %v7143 = vsel %vm116, %v7137, %v7142
    %v7144 = vrot.slane %v7129, 1
    %v7145 = vsel %vm116, %v7140, %v7144
    %v7150 = vadd.f32 %v7107, %v7138
    %v7151 = vadd.f32 %v7108, %v7141
    %v7152 = vadd.f32 %v7109, %v7143
    %v7153 = vadd.f32 %v7110, %v7145
    %s7154 = scalar_lea.vmem %s3, 263
    %v7155 = vld [vmem:[%s7154] ss:$8 sm:$0x3]
    %v7157 = vlaneseq
    %v7158 = vshrl.u32 %v7157, 7
    %v7159 = vsub.s32 0, %v7158
    %v7160 = vrot.slane %v7155, %v7159
    %v7161 = vlaneseq
    %v7162 = vshrl.u32 %v7161, 7
    %v7163 = vsub.s32 1, %v7162
    %v7164 = vrot.slane %v7155, %v7163
    %v7167 = vmul.f32 %v7160, %v1394
    %v7168 = vmul.f32 %v7164, %v1395
    %v7169 = vmul.f32 %v7160, %v1388
    %v7170 = vmul.f32 %v7164, %v1389
    %v7171 = vmul.f32 %v7160, %v1396
    %v7172 = vmul.f32 %v7164, %v1397
    %v7179 = vrot.slane %v7167, 2
    %v7180 = vrot.slane %v7169, 2
    %v7181 = vsel %vm182, %v7179, %v7180
    %v7182 = vrot.slane %v7168, 2
    %v7183 = vrot.slane %v7170, 2
    %v7184 = vsel %vm182, %v7182, %v7183
    %v7185 = vrot.slane %v7171, 2
    %v7186 = vsel %vm182, %v7180, %v7185
    %v7187 = vrot.slane %v7172, 2
    %v7188 = vsel %vm182, %v7183, %v7187
    %v7193 = vadd.f32 %v7150, %v7181
    %v7194 = vadd.f32 %v7151, %v7184
    %v7195 = vadd.f32 %v7152, %v7186
    %v7196 = vadd.f32 %v7153, %v7188
    %s7197 = scalar_lea.vmem %s3, 272
    %v7198 = vld [vmem:[%s7197] ss:$8 sm:$0x3]
    %v7200 = vlaneseq
    %v7201 = vshrl.u32 %v7200, 7
    %v7202 = vsub.s32 0, %v7201
    %v7203 = vrot.slane %v7198, %v7202
    %v7204 = vlaneseq
    %v7205 = vshrl.u32 %v7204, 7
    %v7206 = vsub.s32 1, %v7205
    %v7207 = vrot.slane %v7198, %v7206
    %v7210 = vmul.f32 %v7203, %v1398
    %v7211 = vmul.f32 %v7207, %v1399
    %v7212 = vmul.f32 %v7203, %v1388
    %v7213 = vmul.f32 %v7207, %v1389
    %v7214 = vmul.f32 %v7203, %v1400
    %v7215 = vmul.f32 %v7207, %v1401
    %v7222 = vrot.slane %v7210, 3
    %v7223 = vrot.slane %v7212, 3
    %v7224 = vsel %vm251, %v7222, %v7223
    %v7225 = vrot.slane %v7211, 3
    %v7226 = vrot.slane %v7213, 3
    %v7227 = vsel %vm251, %v7225, %v7226
    %v7228 = vrot.slane %v7214, 3
    %v7229 = vsel %vm251, %v7223, %v7228
    %v7230 = vrot.slane %v7215, 3
    %v7231 = vsel %vm251, %v7226, %v7230
    %v7236 = vadd.f32 %v7193, %v7224
    %v7237 = vadd.f32 %v7194, %v7227
    %v7238 = vadd.f32 %v7195, %v7229
    %v7239 = vadd.f32 %v7196, %v7231
    %s7240 = scalar_lea.vmem %s3, 273
    %v7241 = vld [vmem:[%s7240] ss:$8 sm:$0x3]
    %v7243 = vlaneseq
    %v7244 = vshrl.u32 %v7243, 7
    %v7245 = vsub.s32 0, %v7244
    %v7246 = vrot.slane %v7241, %v7245
    %v7247 = vlaneseq
    %v7248 = vshrl.u32 %v7247, 7
    %v7249 = vsub.s32 1, %v7248
    %v7250 = vrot.slane %v7241, %v7249
    %v7253 = vmul.f32 %v7246, %v1402
    %v7254 = vmul.f32 %v7250, %v1403
    %v7255 = vmul.f32 %v7246, %v1388
    %v7256 = vmul.f32 %v7250, %v1389
    %v7257 = vmul.f32 %v7246, %v1404
    %v7258 = vmul.f32 %v7250, %v1405
    %v7265 = vrot.slane %v7253, 4
    %v7266 = vrot.slane %v7255, 4
    %v7267 = vsel %vm320, %v7265, %v7266
    %v7268 = vrot.slane %v7254, 4
    %v7269 = vrot.slane %v7256, 4
    %v7270 = vsel %vm320, %v7268, %v7269
    %v7271 = vrot.slane %v7257, 4
    %v7272 = vsel %vm320, %v7266, %v7271
    %v7273 = vrot.slane %v7258, 4
    %v7274 = vsel %vm320, %v7269, %v7273
    %v7279 = vadd.f32 %v7236, %v7267
    %v7280 = vadd.f32 %v7237, %v7270
    %v7281 = vadd.f32 %v7238, %v7272
    %v7282 = vadd.f32 %v7239, %v7274
    %s7283 = scalar_lea.vmem %s3, 274
    %v7284 = vld [vmem:[%s7283] ss:$8 sm:$0x3]
    %v7286 = vlaneseq
    %v7287 = vshrl.u32 %v7286, 7
    %v7288 = vsub.s32 0, %v7287
    %v7289 = vrot.slane %v7284, %v7288
    %v7290 = vlaneseq
    %v7291 = vshrl.u32 %v7290, 7
    %v7292 = vsub.s32 1, %v7291
    %v7293 = vrot.slane %v7284, %v7292
    %v7296 = vmul.f32 %v7289, %v1406
    %v7297 = vmul.f32 %v7293, %v1407
    %v7298 = vmul.f32 %v7289, %v1388
    %v7299 = vmul.f32 %v7293, %v1389
    %v7300 = vmul.f32 %v7289, %v1408
    %v7301 = vmul.f32 %v7293, %v1409
    %v7308 = vrot.slane %v7296, 5
    %v7309 = vrot.slane %v7298, 5
    %v7310 = vsel %vm389, %v7308, %v7309
    %v7311 = vrot.slane %v7297, 5
    %v7312 = vrot.slane %v7299, 5
    %v7313 = vsel %vm389, %v7311, %v7312
    %v7314 = vrot.slane %v7300, 5
    %v7315 = vsel %vm389, %v7309, %v7314
    %v7316 = vrot.slane %v7301, 5
    %v7317 = vsel %vm389, %v7312, %v7316
    %v7322 = vadd.f32 %v7279, %v7310
    %v7323 = vadd.f32 %v7280, %v7313
    %v7324 = vadd.f32 %v7281, %v7315
    %v7325 = vadd.f32 %v7282, %v7317
    %s7326 = scalar_lea.vmem %s3, 275
    %v7327 = vld [vmem:[%s7326] ss:$8 sm:$0x3]
    %v7329 = vlaneseq
    %v7330 = vshrl.u32 %v7329, 7
    %v7331 = vsub.s32 0, %v7330
    %v7332 = vrot.slane %v7327, %v7331
    %v7333 = vlaneseq
    %v7334 = vshrl.u32 %v7333, 7
    %v7335 = vsub.s32 1, %v7334
    %v7336 = vrot.slane %v7327, %v7335
    %v7339 = vmul.f32 %v7332, %v1410
    %v7340 = vmul.f32 %v7336, %v1411
    %v7341 = vmul.f32 %v7332, %v1388
    %v7342 = vmul.f32 %v7336, %v1389
    %v7343 = vmul.f32 %v7332, %v1412
    %v7344 = vmul.f32 %v7336, %v1413
    %v7351 = vrot.slane %v7339, 6
    %v7352 = vrot.slane %v7341, 6
    %v7353 = vsel %vm1670, %v7351, %v7352
    %v7354 = vrot.slane %v7340, 6
    %v7355 = vrot.slane %v7342, 6
    %v7356 = vsel %vm1670, %v7354, %v7355
    %v7357 = vrot.slane %v7343, 6
    %v7358 = vsel %vm1670, %v7352, %v7357
    %v7359 = vrot.slane %v7344, 6
    %v7360 = vsel %vm1670, %v7355, %v7359
    %v7365 = vadd.f32 %v7322, %v7353
    %v7366 = vadd.f32 %v7323, %v7356
    %v7367 = vadd.f32 %v7324, %v7358
    %v7368 = vadd.f32 %v7325, %v7360
    %7371 = vrot.lane.b32.xlu0 %v7366, 126
    %v7372 = vpop.permute.xlu0 %7371
    %7373 = vrot.lane.b32.xlu0 %v7368, 126
    %v7374 = vpop.permute.xlu0 %7373
    %7379 = vrot.lane.b32.xlu0 %v7365, 126
    %v7380 = vpop.permute.xlu0 %7379
    %7381 = vrot.lane.b32.xlu0 %v7367, 126
    %v7382 = vpop.permute.xlu0 %7381
    %v7383 = vsel %vm458, %v7380, %v7372
    %v7384 = vsel %vm458, %v7382, %v7374
    %v7389 = vsel %vm458, %v7372, %v7380
    %v7390 = vsel %vm458, %v7374, %v7382
    %v7391 = vadd.f32 %v7090, %v7389
    %v7392 = vadd.f32 %v7091, %v7383
    %v7393 = vadd.f32 %v7092, %v7390
    %v7394 = vadd.f32 %v7093, %v7384
    %s7395 = scalar_lea.vmem %s3, 276
    %v7396 = vld [vmem:[%s7395] ss:$8 sm:$0x3]
    %v7398 = vlaneseq
    %v7399 = vshrl.u32 %v7398, 7
    %v7400 = vsub.s32 0, %v7399
    %v7401 = vrot.slane %v7396, %v7400
    %v7402 = vlaneseq
    %v7403 = vshrl.u32 %v7402, 7
    %v7404 = vsub.s32 1, %v7403
    %v7405 = vrot.slane %v7396, %v7404
    %v7408 = vmul.f32 %v7401, %v1386
    %v7409 = vmul.f32 %v7405, %v1387
    %v7410 = vmul.f32 %v7401, %v1388
    %v7411 = vmul.f32 %v7405, %v1389
    %s7412 = scalar_lea.vmem %s3, 277
    %v7413 = vld [vmem:[%s7412] ss:$8 sm:$0x3]
    %v7415 = vlaneseq
    %v7416 = vshrl.u32 %v7415, 7
    %v7417 = vsub.s32 0, %v7416
    %v7418 = vrot.slane %v7413, %v7417
    %v7419 = vlaneseq
    %v7420 = vshrl.u32 %v7419, 7
    %v7421 = vsub.s32 1, %v7420
    %v7422 = vrot.slane %v7413, %v7421
    %v7425 = vmul.f32 %v7418, %v1390
    %v7426 = vmul.f32 %v7422, %v1391
    %v7427 = vmul.f32 %v7418, %v1388
    %v7428 = vmul.f32 %v7422, %v1389
    %v7429 = vmul.f32 %v7418, %v1392
    %v7430 = vmul.f32 %v7422, %v1393
    %v7437 = vrot.slane %v7425, 1
    %v7438 = vrot.slane %v7427, 1
    %v7439 = vsel %vm116, %v7437, %v7438
    %v7440 = vrot.slane %v7426, 1
    %v7441 = vrot.slane %v7428, 1
    %v7442 = vsel %vm116, %v7440, %v7441
    %v7443 = vrot.slane %v7429, 1
    %v7444 = vsel %vm116, %v7438, %v7443
    %v7445 = vrot.slane %v7430, 1
    %v7446 = vsel %vm116, %v7441, %v7445
    %v7451 = vadd.f32 %v7408, %v7439
    %v7452 = vadd.f32 %v7409, %v7442
    %v7453 = vadd.f32 %v7410, %v7444
    %v7454 = vadd.f32 %v7411, %v7446
    %s7455 = scalar_lea.vmem %s3, 278
    %v7456 = vld [vmem:[%s7455] ss:$8 sm:$0x3]
    %v7458 = vlaneseq
    %v7459 = vshrl.u32 %v7458, 7
    %v7460 = vsub.s32 0, %v7459
    %v7461 = vrot.slane %v7456, %v7460
    %v7462 = vlaneseq
    %v7463 = vshrl.u32 %v7462, 7
    %v7464 = vsub.s32 1, %v7463
    %v7465 = vrot.slane %v7456, %v7464
    %v7468 = vmul.f32 %v7461, %v1394
    %v7469 = vmul.f32 %v7465, %v1395
    %v7470 = vmul.f32 %v7461, %v1388
    %v7471 = vmul.f32 %v7465, %v1389
    %v7472 = vmul.f32 %v7461, %v1396
    %v7473 = vmul.f32 %v7465, %v1397
    %v7480 = vrot.slane %v7468, 2
    %v7481 = vrot.slane %v7470, 2
    %v7482 = vsel %vm182, %v7480, %v7481
    %v7483 = vrot.slane %v7469, 2
    %v7484 = vrot.slane %v7471, 2
    %v7485 = vsel %vm182, %v7483, %v7484
    %v7486 = vrot.slane %v7472, 2
    %v7487 = vsel %vm182, %v7481, %v7486
    %v7488 = vrot.slane %v7473, 2
    %v7489 = vsel %vm182, %v7484, %v7488
    %v7494 = vadd.f32 %v7451, %v7482
    %v7495 = vadd.f32 %v7452, %v7485
    %v7496 = vadd.f32 %v7453, %v7487
    %v7497 = vadd.f32 %v7454, %v7489
    %s7498 = scalar_lea.vmem %s3, 279
    %v7499 = vld [vmem:[%s7498] ss:$8 sm:$0x3]
    %v7501 = vlaneseq
    %v7502 = vshrl.u32 %v7501, 7
    %v7503 = vsub.s32 0, %v7502
    %v7504 = vrot.slane %v7499, %v7503
    %v7505 = vlaneseq
    %v7506 = vshrl.u32 %v7505, 7
    %v7507 = vsub.s32 1, %v7506
    %v7508 = vrot.slane %v7499, %v7507
    %v7511 = vmul.f32 %v7504, %v1398
    %v7512 = vmul.f32 %v7508, %v1399
    %v7513 = vmul.f32 %v7504, %v1388
    %v7514 = vmul.f32 %v7508, %v1389
    %v7515 = vmul.f32 %v7504, %v1400
    %v7516 = vmul.f32 %v7508, %v1401
    %v7523 = vrot.slane %v7511, 3
    %v7524 = vrot.slane %v7513, 3
    %v7525 = vsel %vm251, %v7523, %v7524
    %v7526 = vrot.slane %v7512, 3
    %v7527 = vrot.slane %v7514, 3
    %v7528 = vsel %vm251, %v7526, %v7527
    %v7529 = vrot.slane %v7515, 3
    %v7530 = vsel %vm251, %v7524, %v7529
    %v7531 = vrot.slane %v7516, 3
    %v7532 = vsel %vm251, %v7527, %v7531
    %v7537 = vadd.f32 %v7494, %v7525
    %v7538 = vadd.f32 %v7495, %v7528
    %v7539 = vadd.f32 %v7496, %v7530
    %v7540 = vadd.f32 %v7497, %v7532
    %s7541 = scalar_lea.vmem %s3, 288
    %v7542 = vld [vmem:[%s7541] ss:$8 sm:$0x3]
    %v7544 = vlaneseq
    %v7545 = vshrl.u32 %v7544, 7
    %v7546 = vsub.s32 0, %v7545
    %v7547 = vrot.slane %v7542, %v7546
    %v7548 = vlaneseq
    %v7549 = vshrl.u32 %v7548, 7
    %v7550 = vsub.s32 1, %v7549
    %v7551 = vrot.slane %v7542, %v7550
    %v7554 = vmul.f32 %v7547, %v1402
    %v7555 = vmul.f32 %v7551, %v1403
    %v7556 = vmul.f32 %v7547, %v1388
    %v7557 = vmul.f32 %v7551, %v1389
    %v7558 = vmul.f32 %v7547, %v1404
    %v7559 = vmul.f32 %v7551, %v1405
    %v7566 = vrot.slane %v7554, 4
    %v7567 = vrot.slane %v7556, 4
    %v7568 = vsel %vm320, %v7566, %v7567
    %v7569 = vrot.slane %v7555, 4
    %v7570 = vrot.slane %v7557, 4
    %v7571 = vsel %vm320, %v7569, %v7570
    %v7572 = vrot.slane %v7558, 4
    %v7573 = vsel %vm320, %v7567, %v7572
    %v7574 = vrot.slane %v7559, 4
    %v7575 = vsel %vm320, %v7570, %v7574
    %v7580 = vadd.f32 %v7537, %v7568
    %v7581 = vadd.f32 %v7538, %v7571
    %v7582 = vadd.f32 %v7539, %v7573
    %v7583 = vadd.f32 %v7540, %v7575
    %s7584 = scalar_lea.vmem %s3, 289
    %v7585 = vld [vmem:[%s7584] ss:$8 sm:$0x3]
    %v7587 = vlaneseq
    %v7588 = vshrl.u32 %v7587, 7
    %v7589 = vsub.s32 0, %v7588
    %v7590 = vrot.slane %v7585, %v7589
    %v7591 = vlaneseq
    %v7592 = vshrl.u32 %v7591, 7
    %v7593 = vsub.s32 1, %v7592
    %v7594 = vrot.slane %v7585, %v7593
    %v7597 = vmul.f32 %v7590, %v1406
    %v7598 = vmul.f32 %v7594, %v1407
    %v7599 = vmul.f32 %v7590, %v1388
    %v7600 = vmul.f32 %v7594, %v1389
    %v7601 = vmul.f32 %v7590, %v1408
    %v7602 = vmul.f32 %v7594, %v1409
    %v7609 = vrot.slane %v7597, 5
    %v7610 = vrot.slane %v7599, 5
    %v7611 = vsel %vm389, %v7609, %v7610
    %v7612 = vrot.slane %v7598, 5
    %v7613 = vrot.slane %v7600, 5
    %v7614 = vsel %vm389, %v7612, %v7613
    %v7615 = vrot.slane %v7601, 5
    %v7616 = vsel %vm389, %v7610, %v7615
    %v7617 = vrot.slane %v7602, 5
    %v7618 = vsel %vm389, %v7613, %v7617
    %v7623 = vadd.f32 %v7580, %v7611
    %v7624 = vadd.f32 %v7581, %v7614
    %v7625 = vadd.f32 %v7582, %v7616
    %v7626 = vadd.f32 %v7583, %v7618
    %s7627 = scalar_lea.vmem %s3, 290
    %v7628 = vld [vmem:[%s7627] ss:$8 sm:$0x3]
    %v7630 = vlaneseq
    %v7631 = vshrl.u32 %v7630, 7
    %v7632 = vsub.s32 0, %v7631
    %v7633 = vrot.slane %v7628, %v7632
    %v7634 = vlaneseq
    %v7635 = vshrl.u32 %v7634, 7
    %v7636 = vsub.s32 1, %v7635
    %v7637 = vrot.slane %v7628, %v7636
    %v7640 = vmul.f32 %v7633, %v1410
    %v7641 = vmul.f32 %v7637, %v1411
    %v7642 = vmul.f32 %v7633, %v1388
    %v7643 = vmul.f32 %v7637, %v1389
    %v7644 = vmul.f32 %v7633, %v1412
    %v7645 = vmul.f32 %v7637, %v1413
    %v7652 = vrot.slane %v7640, 6
    %v7653 = vrot.slane %v7642, 6
    %v7654 = vsel %vm1670, %v7652, %v7653
    %v7655 = vrot.slane %v7641, 6
    %v7656 = vrot.slane %v7643, 6
    %v7657 = vsel %vm1670, %v7655, %v7656
    %v7658 = vrot.slane %v7644, 6
    %v7659 = vsel %vm1670, %v7653, %v7658
    %v7660 = vrot.slane %v7645, 6
    %v7661 = vsel %vm1670, %v7656, %v7660
    %v7666 = vadd.f32 %v7623, %v7654
    %v7667 = vadd.f32 %v7624, %v7657
    %v7668 = vadd.f32 %v7625, %v7659
    %v7669 = vadd.f32 %v7626, %v7661
    %7672 = vrot.lane.b32.xlu0 %v7667, 125
    %v7673 = vpop.permute.xlu0 %7672
    %7674 = vrot.lane.b32.xlu0 %v7669, 125
    %v7675 = vpop.permute.xlu0 %7674
    %7680 = vrot.lane.b32.xlu0 %v7666, 125
    %v7681 = vpop.permute.xlu0 %7680
    %7682 = vrot.lane.b32.xlu0 %v7668, 125
    %v7683 = vpop.permute.xlu0 %7682
    %v7684 = vsel %vm664, %v7681, %v7673
    %v7685 = vsel %vm664, %v7683, %v7675
    %v7690 = vsel %vm664, %v7673, %v7681
    %v7691 = vsel %vm664, %v7675, %v7683
    %v7692 = vadd.f32 %v7391, %v7690
    %v7693 = vadd.f32 %v7392, %v7684
    %v7694 = vadd.f32 %v7393, %v7691
    %v7695 = vadd.f32 %v7394, %v7685
    %s7696 = scalar_lea.vmem %s3, 291
    %v7697 = vld [vmem:[%s7696] ss:$8 sm:$0x3]
    %v7699 = vlaneseq
    %v7700 = vshrl.u32 %v7699, 7
    %v7701 = vsub.s32 0, %v7700
    %v7702 = vrot.slane %v7697, %v7701
    %v7703 = vlaneseq
    %v7704 = vshrl.u32 %v7703, 7
    %v7705 = vsub.s32 1, %v7704
    %v7706 = vrot.slane %v7697, %v7705
    %v7709 = vmul.f32 %v7702, %v1386
    %v7710 = vmul.f32 %v7706, %v1387
    %v7711 = vmul.f32 %v7702, %v1388
    %v7712 = vmul.f32 %v7706, %v1389
    %s7713 = scalar_lea.vmem %s3, 292
    %v7714 = vld [vmem:[%s7713] ss:$8 sm:$0x3]
    %v7716 = vlaneseq
    %v7717 = vshrl.u32 %v7716, 7
    %v7718 = vsub.s32 0, %v7717
    %v7719 = vrot.slane %v7714, %v7718
    %v7720 = vlaneseq
    %v7721 = vshrl.u32 %v7720, 7
    %v7722 = vsub.s32 1, %v7721
    %v7723 = vrot.slane %v7714, %v7722
    %v7726 = vmul.f32 %v7719, %v1390
    %v7727 = vmul.f32 %v7723, %v1391
    %v7728 = vmul.f32 %v7719, %v1388
    %v7729 = vmul.f32 %v7723, %v1389
    %v7730 = vmul.f32 %v7719, %v1392
    %v7731 = vmul.f32 %v7723, %v1393
    %v7738 = vrot.slane %v7726, 1
    %v7739 = vrot.slane %v7728, 1
    %v7740 = vsel %vm116, %v7738, %v7739
    %v7741 = vrot.slane %v7727, 1
    %v7742 = vrot.slane %v7729, 1
    %v7743 = vsel %vm116, %v7741, %v7742
    %v7744 = vrot.slane %v7730, 1
    %v7745 = vsel %vm116, %v7739, %v7744
    %v7746 = vrot.slane %v7731, 1
    %v7747 = vsel %vm116, %v7742, %v7746
    %v7752 = vadd.f32 %v7709, %v7740
    %v7753 = vadd.f32 %v7710, %v7743
    %v7754 = vadd.f32 %v7711, %v7745
    %v7755 = vadd.f32 %v7712, %v7747
    %s7756 = scalar_lea.vmem %s3, 293
    %v7757 = vld [vmem:[%s7756] ss:$8 sm:$0x3]
    %v7759 = vlaneseq
    %v7760 = vshrl.u32 %v7759, 7
    %v7761 = vsub.s32 0, %v7760
    %v7762 = vrot.slane %v7757, %v7761
    %v7763 = vlaneseq
    %v7764 = vshrl.u32 %v7763, 7
    %v7765 = vsub.s32 1, %v7764
    %v7766 = vrot.slane %v7757, %v7765
    %v7769 = vmul.f32 %v7762, %v1394
    %v7770 = vmul.f32 %v7766, %v1395
    %v7771 = vmul.f32 %v7762, %v1388
    %v7772 = vmul.f32 %v7766, %v1389
    %v7773 = vmul.f32 %v7762, %v1396
    %v7774 = vmul.f32 %v7766, %v1397
    %v7781 = vrot.slane %v7769, 2
    %v7782 = vrot.slane %v7771, 2
    %v7783 = vsel %vm182, %v7781, %v7782
    %v7784 = vrot.slane %v7770, 2
    %v7785 = vrot.slane %v7772, 2
    %v7786 = vsel %vm182, %v7784, %v7785
    %v7787 = vrot.slane %v7773, 2
    %v7788 = vsel %vm182, %v7782, %v7787
    %v7789 = vrot.slane %v7774, 2
    %v7790 = vsel %vm182, %v7785, %v7789
    %v7795 = vadd.f32 %v7752, %v7783
    %v7796 = vadd.f32 %v7753, %v7786
    %v7797 = vadd.f32 %v7754, %v7788
    %v7798 = vadd.f32 %v7755, %v7790
    %s7799 = scalar_lea.vmem %s3, 294
    %v7800 = vld [vmem:[%s7799] ss:$8 sm:$0x3]
    %v7802 = vlaneseq
    %v7803 = vshrl.u32 %v7802, 7
    %v7804 = vsub.s32 0, %v7803
    %v7805 = vrot.slane %v7800, %v7804
    %v7806 = vlaneseq
    %v7807 = vshrl.u32 %v7806, 7
    %v7808 = vsub.s32 1, %v7807
    %v7809 = vrot.slane %v7800, %v7808
    %v7812 = vmul.f32 %v7805, %v1398
    %v7813 = vmul.f32 %v7809, %v1399
    %v7814 = vmul.f32 %v7805, %v1388
    %v7815 = vmul.f32 %v7809, %v1389
    %v7816 = vmul.f32 %v7805, %v1400
    %v7817 = vmul.f32 %v7809, %v1401
    %v7824 = vrot.slane %v7812, 3
    %v7825 = vrot.slane %v7814, 3
    %v7826 = vsel %vm251, %v7824, %v7825
    %v7827 = vrot.slane %v7813, 3
    %v7828 = vrot.slane %v7815, 3
    %v7829 = vsel %vm251, %v7827, %v7828
    %v7830 = vrot.slane %v7816, 3
    %v7831 = vsel %vm251, %v7825, %v7830
    %v7832 = vrot.slane %v7817, 3
    %v7833 = vsel %vm251, %v7828, %v7832
    %v7838 = vadd.f32 %v7795, %v7826
    %v7839 = vadd.f32 %v7796, %v7829
    %v7840 = vadd.f32 %v7797, %v7831
    %v7841 = vadd.f32 %v7798, %v7833
    %s7842 = scalar_lea.vmem %s3, 295
    %v7843 = vld [vmem:[%s7842] ss:$8 sm:$0x3]
    %v7845 = vlaneseq
    %v7846 = vshrl.u32 %v7845, 7
    %v7847 = vsub.s32 0, %v7846
    %v7848 = vrot.slane %v7843, %v7847
    %v7849 = vlaneseq
    %v7850 = vshrl.u32 %v7849, 7
    %v7851 = vsub.s32 1, %v7850
    %v7852 = vrot.slane %v7843, %v7851
    %v7855 = vmul.f32 %v7848, %v1402
    %v7856 = vmul.f32 %v7852, %v1403
    %v7857 = vmul.f32 %v7848, %v1388
    %v7858 = vmul.f32 %v7852, %v1389
    %v7859 = vmul.f32 %v7848, %v1404
    %v7860 = vmul.f32 %v7852, %v1405
    %v7867 = vrot.slane %v7855, 4
    %v7868 = vrot.slane %v7857, 4
    %v7869 = vsel %vm320, %v7867, %v7868
    %v7870 = vrot.slane %v7856, 4
    %v7871 = vrot.slane %v7858, 4
    %v7872 = vsel %vm320, %v7870, %v7871
    %v7873 = vrot.slane %v7859, 4
    %v7874 = vsel %vm320, %v7868, %v7873
    %v7875 = vrot.slane %v7860, 4
    %v7876 = vsel %vm320, %v7871, %v7875
    %v7881 = vadd.f32 %v7838, %v7869
    %v7882 = vadd.f32 %v7839, %v7872
    %v7883 = vadd.f32 %v7840, %v7874
    %v7884 = vadd.f32 %v7841, %v7876
    %s7885 = scalar_lea.vmem %s3, 304
    %v7886 = vld [vmem:[%s7885] ss:$8 sm:$0x3]
    %v7888 = vlaneseq
    %v7889 = vshrl.u32 %v7888, 7
    %v7890 = vsub.s32 0, %v7889
    %v7891 = vrot.slane %v7886, %v7890
    %v7892 = vlaneseq
    %v7893 = vshrl.u32 %v7892, 7
    %v7894 = vsub.s32 1, %v7893
    %v7895 = vrot.slane %v7886, %v7894
    %v7898 = vmul.f32 %v7891, %v1406
    %v7899 = vmul.f32 %v7895, %v1407
    %v7900 = vmul.f32 %v7891, %v1388
    %v7901 = vmul.f32 %v7895, %v1389
    %v7902 = vmul.f32 %v7891, %v1408
    %v7903 = vmul.f32 %v7895, %v1409
    %v7910 = vrot.slane %v7898, 5
    %v7911 = vrot.slane %v7900, 5
    %v7912 = vsel %vm389, %v7910, %v7911
    %v7913 = vrot.slane %v7899, 5
    %v7914 = vrot.slane %v7901, 5
    %v7915 = vsel %vm389, %v7913, %v7914
    %v7916 = vrot.slane %v7902, 5
    %v7917 = vsel %vm389, %v7911, %v7916
    %v7918 = vrot.slane %v7903, 5
    %v7919 = vsel %vm389, %v7914, %v7918
    %v7924 = vadd.f32 %v7881, %v7912
    %v7925 = vadd.f32 %v7882, %v7915
    %v7926 = vadd.f32 %v7883, %v7917
    %v7927 = vadd.f32 %v7884, %v7919
    %s7928 = scalar_lea.vmem %s3, 305
    %v7929 = vld [vmem:[%s7928] ss:$8 sm:$0x3]
    %v7931 = vlaneseq
    %v7932 = vshrl.u32 %v7931, 7
    %v7933 = vsub.s32 0, %v7932
    %v7934 = vrot.slane %v7929, %v7933
    %v7935 = vlaneseq
    %v7936 = vshrl.u32 %v7935, 7
    %v7937 = vsub.s32 1, %v7936
    %v7938 = vrot.slane %v7929, %v7937
    %v7941 = vmul.f32 %v7934, %v1410
    %v7942 = vmul.f32 %v7938, %v1411
    %v7943 = vmul.f32 %v7934, %v1388
    %v7944 = vmul.f32 %v7938, %v1389
    %v7945 = vmul.f32 %v7934, %v1412
    %v7946 = vmul.f32 %v7938, %v1413
    %v7953 = vrot.slane %v7941, 6
    %v7954 = vrot.slane %v7943, 6
    %v7955 = vsel %vm1670, %v7953, %v7954
    %v7956 = vrot.slane %v7942, 6
    %v7957 = vrot.slane %v7944, 6
    %v7958 = vsel %vm1670, %v7956, %v7957
    %v7959 = vrot.slane %v7945, 6
    %v7960 = vsel %vm1670, %v7954, %v7959
    %v7961 = vrot.slane %v7946, 6
    %v7962 = vsel %vm1670, %v7957, %v7961
    %v7967 = vadd.f32 %v7924, %v7955
    %v7968 = vadd.f32 %v7925, %v7958
    %v7969 = vadd.f32 %v7926, %v7960
    %v7970 = vadd.f32 %v7927, %v7962
    %7975 = vrot.lane.b32.xlu0 %v7967, 67
    %v7976 = vpop.permute.xlu0 %7975
    %7977 = vrot.lane.b32.xlu0 %v7968, 67
    %v7978 = vpop.permute.xlu0 %7977
    %7979 = vrot.lane.b32.xlu0 %v7969, 67
    %v7980 = vpop.permute.xlu0 %7979
    %7981 = vrot.lane.b32.xlu0 %v7970, 67
    %v7982 = vpop.permute.xlu0 %7981
    %v7983 = vsel %vm3786, %v7976, %v7978
    %v7984 = vsel %vm3786, %v7980, %v7982
    %v7991 = vsel %vm3786, %v7978, %v7976
    %v7992 = vsel %vm3786, %v7982, %v7980
    %v7993 = vadd.f32 %v7692, %v7983
    %v7994 = vadd.f32 %v7693, %v7991
    %v7995 = vadd.f32 %v7694, %v7984
    %v7996 = vadd.f32 %v7695, %v7992
    %s7997 = scalar_lea.vmem %s3, 306
    %v7998 = vld [vmem:[%s7997] ss:$8 sm:$0x3]
    %v8000 = vlaneseq
    %v8001 = vshrl.u32 %v8000, 7
    %v8002 = vsub.s32 0, %v8001
    %v8003 = vrot.slane %v7998, %v8002
    %v8004 = vlaneseq
    %v8005 = vshrl.u32 %v8004, 7
    %v8006 = vsub.s32 1, %v8005
    %v8007 = vrot.slane %v7998, %v8006
    %v8010 = vmul.f32 %v8003, %v1386
    %v8011 = vmul.f32 %v8007, %v1387
    %v8012 = vmul.f32 %v8003, %v1388
    %v8013 = vmul.f32 %v8007, %v1389
    %s8014 = scalar_lea.vmem %s3, 307
    %v8015 = vld [vmem:[%s8014] ss:$8 sm:$0x3]
    %v8017 = vlaneseq
    %v8018 = vshrl.u32 %v8017, 7
    %v8019 = vsub.s32 0, %v8018
    %v8020 = vrot.slane %v8015, %v8019
    %v8021 = vlaneseq
    %v8022 = vshrl.u32 %v8021, 7
    %v8023 = vsub.s32 1, %v8022
    %v8024 = vrot.slane %v8015, %v8023
    %v8027 = vmul.f32 %v8020, %v1390
    %v8028 = vmul.f32 %v8024, %v1391
    %v8029 = vmul.f32 %v8020, %v1388
    %v8030 = vmul.f32 %v8024, %v1389
    %v8031 = vmul.f32 %v8020, %v1392
    %v8032 = vmul.f32 %v8024, %v1393
    %v8039 = vrot.slane %v8027, 1
    %v8040 = vrot.slane %v8029, 1
    %v8041 = vsel %vm116, %v8039, %v8040
    %v8042 = vrot.slane %v8028, 1
    %v8043 = vrot.slane %v8030, 1
    %v8044 = vsel %vm116, %v8042, %v8043
    %v8045 = vrot.slane %v8031, 1
    %v8046 = vsel %vm116, %v8040, %v8045
    %v8047 = vrot.slane %v8032, 1
    %v8048 = vsel %vm116, %v8043, %v8047
    %v8053 = vadd.f32 %v8010, %v8041
    %v8054 = vadd.f32 %v8011, %v8044
    %v8055 = vadd.f32 %v8012, %v8046
    %v8056 = vadd.f32 %v8013, %v8048
    %s8057 = scalar_lea.vmem %s3, 308
    %v8058 = vld [vmem:[%s8057] ss:$8 sm:$0x3]
    %v8060 = vlaneseq
    %v8061 = vshrl.u32 %v8060, 7
    %v8062 = vsub.s32 0, %v8061
    %v8063 = vrot.slane %v8058, %v8062
    %v8064 = vlaneseq
    %v8065 = vshrl.u32 %v8064, 7
    %v8066 = vsub.s32 1, %v8065
    %v8067 = vrot.slane %v8058, %v8066
    %v8070 = vmul.f32 %v8063, %v1394
    %v8071 = vmul.f32 %v8067, %v1395
    %v8072 = vmul.f32 %v8063, %v1388
    %v8073 = vmul.f32 %v8067, %v1389
    %v8074 = vmul.f32 %v8063, %v1396
    %v8075 = vmul.f32 %v8067, %v1397
    %v8082 = vrot.slane %v8070, 2
    %v8083 = vrot.slane %v8072, 2
    %v8084 = vsel %vm182, %v8082, %v8083
    %v8085 = vrot.slane %v8071, 2
    %v8086 = vrot.slane %v8073, 2
    %v8087 = vsel %vm182, %v8085, %v8086
    %v8088 = vrot.slane %v8074, 2
    %v8089 = vsel %vm182, %v8083, %v8088
    %v8090 = vrot.slane %v8075, 2
    %v8091 = vsel %vm182, %v8086, %v8090
    %v8096 = vadd.f32 %v8053, %v8084
    %v8097 = vadd.f32 %v8054, %v8087
    %v8098 = vadd.f32 %v8055, %v8089
    %v8099 = vadd.f32 %v8056, %v8091
    %s8100 = scalar_lea.vmem %s3, 309
    %v8101 = vld [vmem:[%s8100] ss:$8 sm:$0x3]
    %v8103 = vlaneseq
    %v8104 = vshrl.u32 %v8103, 7
    %v8105 = vsub.s32 0, %v8104
    %v8106 = vrot.slane %v8101, %v8105
    %v8107 = vlaneseq
    %v8108 = vshrl.u32 %v8107, 7
    %v8109 = vsub.s32 1, %v8108
    %v8110 = vrot.slane %v8101, %v8109
    %v8113 = vmul.f32 %v8106, %v1398
    %v8114 = vmul.f32 %v8110, %v1399
    %v8115 = vmul.f32 %v8106, %v1388
    %v8116 = vmul.f32 %v8110, %v1389
    %v8117 = vmul.f32 %v8106, %v1400
    %v8118 = vmul.f32 %v8110, %v1401
    %v8125 = vrot.slane %v8113, 3
    %v8126 = vrot.slane %v8115, 3
    %v8127 = vsel %vm251, %v8125, %v8126
    %v8128 = vrot.slane %v8114, 3
    %v8129 = vrot.slane %v8116, 3
    %v8130 = vsel %vm251, %v8128, %v8129
    %v8131 = vrot.slane %v8117, 3
    %v8132 = vsel %vm251, %v8126, %v8131
    %v8133 = vrot.slane %v8118, 3
    %v8134 = vsel %vm251, %v8129, %v8133
    %v8139 = vadd.f32 %v8096, %v8127
    %v8140 = vadd.f32 %v8097, %v8130
    %v8141 = vadd.f32 %v8098, %v8132
    %v8142 = vadd.f32 %v8099, %v8134
    %s8143 = scalar_lea.vmem %s3, 310
    %v8144 = vld [vmem:[%s8143] ss:$8 sm:$0x3]
    %v8146 = vlaneseq
    %v8147 = vshrl.u32 %v8146, 7
    %v8148 = vsub.s32 0, %v8147
    %v8149 = vrot.slane %v8144, %v8148
    %v8150 = vlaneseq
    %v8151 = vshrl.u32 %v8150, 7
    %v8152 = vsub.s32 1, %v8151
    %v8153 = vrot.slane %v8144, %v8152
    %v8156 = vmul.f32 %v8149, %v1402
    %v8157 = vmul.f32 %v8153, %v1403
    %v8158 = vmul.f32 %v8149, %v1388
    %v8159 = vmul.f32 %v8153, %v1389
    %v8160 = vmul.f32 %v8149, %v1404
    %v8161 = vmul.f32 %v8153, %v1405
    %v8168 = vrot.slane %v8156, 4
    %v8169 = vrot.slane %v8158, 4
    %v8170 = vsel %vm320, %v8168, %v8169
    %v8171 = vrot.slane %v8157, 4
    %v8172 = vrot.slane %v8159, 4
    %v8173 = vsel %vm320, %v8171, %v8172
    %v8174 = vrot.slane %v8160, 4
    %v8175 = vsel %vm320, %v8169, %v8174
    %v8176 = vrot.slane %v8161, 4
    %v8177 = vsel %vm320, %v8172, %v8176
    %v8182 = vadd.f32 %v8139, %v8170
    %v8183 = vadd.f32 %v8140, %v8173
    %v8184 = vadd.f32 %v8141, %v8175
    %v8185 = vadd.f32 %v8142, %v8177
    %s8186 = scalar_lea.vmem %s3, 311
    %v8187 = vld [vmem:[%s8186] ss:$8 sm:$0x3]
    %v8189 = vlaneseq
    %v8190 = vshrl.u32 %v8189, 7
    %v8191 = vsub.s32 0, %v8190
    %v8192 = vrot.slane %v8187, %v8191
    %v8193 = vlaneseq
    %v8194 = vshrl.u32 %v8193, 7
    %v8195 = vsub.s32 1, %v8194
    %v8196 = vrot.slane %v8187, %v8195
    %v8199 = vmul.f32 %v8192, %v1406
    %v8200 = vmul.f32 %v8196, %v1407
    %v8201 = vmul.f32 %v8192, %v1388
    %v8202 = vmul.f32 %v8196, %v1389
    %v8203 = vmul.f32 %v8192, %v1408
    %v8204 = vmul.f32 %v8196, %v1409
    %v8211 = vrot.slane %v8199, 5
    %v8212 = vrot.slane %v8201, 5
    %v8213 = vsel %vm389, %v8211, %v8212
    %v8214 = vrot.slane %v8200, 5
    %v8215 = vrot.slane %v8202, 5
    %v8216 = vsel %vm389, %v8214, %v8215
    %v8217 = vrot.slane %v8203, 5
    %v8218 = vsel %vm389, %v8212, %v8217
    %v8219 = vrot.slane %v8204, 5
    %v8220 = vsel %vm389, %v8215, %v8219
    %v8225 = vadd.f32 %v8182, %v8213
    %v8226 = vadd.f32 %v8183, %v8216
    %v8227 = vadd.f32 %v8184, %v8218
    %v8228 = vadd.f32 %v8185, %v8220
    %s8229 = scalar_lea.vmem %s3, 320
    %v8230 = vld [vmem:[%s8229] ss:$8 sm:$0x3]
    %v8232 = vlaneseq
    %v8233 = vshrl.u32 %v8232, 7
    %v8234 = vsub.s32 0, %v8233
    %v8235 = vrot.slane %v8230, %v8234
    %v8236 = vlaneseq
    %v8237 = vshrl.u32 %v8236, 7
    %v8238 = vsub.s32 1, %v8237
    %v8239 = vrot.slane %v8230, %v8238
    %v8242 = vmul.f32 %v8235, %v1410
    %v8243 = vmul.f32 %v8239, %v1411
    %v8244 = vmul.f32 %v8235, %v1388
    %v8245 = vmul.f32 %v8239, %v1389
    %v8246 = vmul.f32 %v8235, %v1412
    %v8247 = vmul.f32 %v8239, %v1413
    %v8254 = vrot.slane %v8242, 6
    %v8255 = vrot.slane %v8244, 6
    %v8256 = vsel %vm1670, %v8254, %v8255
    %v8257 = vrot.slane %v8243, 6
    %v8258 = vrot.slane %v8245, 6
    %v8259 = vsel %vm1670, %v8257, %v8258
    %v8260 = vrot.slane %v8246, 6
    %v8261 = vsel %vm1670, %v8255, %v8260
    %v8262 = vrot.slane %v8247, 6
    %v8263 = vsel %vm1670, %v8258, %v8262
    %v8268 = vadd.f32 %v8225, %v8256
    %v8269 = vadd.f32 %v8226, %v8259
    %v8270 = vadd.f32 %v8227, %v8261
    %v8271 = vadd.f32 %v8228, %v8263
    %8276 = vrot.lane.b32.xlu0 %v8268, 66
    %v8277 = vpop.permute.xlu0 %8276
    %8278 = vrot.lane.b32.xlu0 %v8269, 66
    %v8279 = vpop.permute.xlu0 %8278
    %8280 = vrot.lane.b32.xlu0 %v8270, 66
    %v8281 = vpop.permute.xlu0 %8280
    %8282 = vrot.lane.b32.xlu0 %v8271, 66
    %v8283 = vpop.permute.xlu0 %8282
    %v8284 = vsel %vm4088, %v8277, %v8279
    %v8285 = vsel %vm4088, %v8281, %v8283
    %v8292 = vsel %vm4088, %v8279, %v8277
    %v8293 = vsel %vm4088, %v8283, %v8281
    %v8294 = vadd.f32 %v7993, %v8284
    %v8295 = vadd.f32 %v7994, %v8292
    %v8296 = vadd.f32 %v7995, %v8285
    %v8297 = vadd.f32 %v7996, %v8293
    %s8298 = scalar_lea.vmem %s3, 321
    %v8299 = vld [vmem:[%s8298] ss:$8 sm:$0x3]
    %v8301 = vlaneseq
    %v8302 = vshrl.u32 %v8301, 7
    %v8303 = vsub.s32 0, %v8302
    %v8304 = vrot.slane %v8299, %v8303
    %v8305 = vlaneseq
    %v8306 = vshrl.u32 %v8305, 7
    %v8307 = vsub.s32 1, %v8306
    %v8308 = vrot.slane %v8299, %v8307
    %v8311 = vmul.f32 %v8304, %v1386
    %v8312 = vmul.f32 %v8308, %v1387
    %v8313 = vmul.f32 %v8304, %v1388
    %v8314 = vmul.f32 %v8308, %v1389
    %s8315 = scalar_lea.vmem %s3, 322
    %v8316 = vld [vmem:[%s8315] ss:$8 sm:$0x3]
    %v8318 = vlaneseq
    %v8319 = vshrl.u32 %v8318, 7
    %v8320 = vsub.s32 0, %v8319
    %v8321 = vrot.slane %v8316, %v8320
    %v8322 = vlaneseq
    %v8323 = vshrl.u32 %v8322, 7
    %v8324 = vsub.s32 1, %v8323
    %v8325 = vrot.slane %v8316, %v8324
    %v8328 = vmul.f32 %v8321, %v1390
    %v8329 = vmul.f32 %v8325, %v1391
    %v8330 = vmul.f32 %v8321, %v1388
    %v8331 = vmul.f32 %v8325, %v1389
    %v8332 = vmul.f32 %v8321, %v1392
    %v8333 = vmul.f32 %v8325, %v1393
    %v8340 = vrot.slane %v8328, 1
    %v8341 = vrot.slane %v8330, 1
    %v8342 = vsel %vm116, %v8340, %v8341
    %v8343 = vrot.slane %v8329, 1
    %v8344 = vrot.slane %v8331, 1
    %v8345 = vsel %vm116, %v8343, %v8344
    %v8346 = vrot.slane %v8332, 1
    %v8347 = vsel %vm116, %v8341, %v8346
    %v8348 = vrot.slane %v8333, 1
    %v8349 = vsel %vm116, %v8344, %v8348
    %v8354 = vadd.f32 %v8311, %v8342
    %v8355 = vadd.f32 %v8312, %v8345
    %v8356 = vadd.f32 %v8313, %v8347
    %v8357 = vadd.f32 %v8314, %v8349
    %s8358 = scalar_lea.vmem %s3, 323
    %v8359 = vld [vmem:[%s8358] ss:$8 sm:$0x3]
    %v8361 = vlaneseq
    %v8362 = vshrl.u32 %v8361, 7
    %v8363 = vsub.s32 0, %v8362
    %v8364 = vrot.slane %v8359, %v8363
    %v8365 = vlaneseq
    %v8366 = vshrl.u32 %v8365, 7
    %v8367 = vsub.s32 1, %v8366
    %v8368 = vrot.slane %v8359, %v8367
    %v8371 = vmul.f32 %v8364, %v1394
    %v8372 = vmul.f32 %v8368, %v1395
    %v8373 = vmul.f32 %v8364, %v1388
    %v8374 = vmul.f32 %v8368, %v1389
    %v8375 = vmul.f32 %v8364, %v1396
    %v8376 = vmul.f32 %v8368, %v1397
    %v8383 = vrot.slane %v8371, 2
    %v8384 = vrot.slane %v8373, 2
    %v8385 = vsel %vm182, %v8383, %v8384
    %v8386 = vrot.slane %v8372, 2
    %v8387 = vrot.slane %v8374, 2
    %v8388 = vsel %vm182, %v8386, %v8387
    %v8389 = vrot.slane %v8375, 2
    %v8390 = vsel %vm182, %v8384, %v8389
    %v8391 = vrot.slane %v8376, 2
    %v8392 = vsel %vm182, %v8387, %v8391
    %v8397 = vadd.f32 %v8354, %v8385
    %v8398 = vadd.f32 %v8355, %v8388
    %v8399 = vadd.f32 %v8356, %v8390
    %v8400 = vadd.f32 %v8357, %v8392
    %s8401 = scalar_lea.vmem %s3, 324
    %v8402 = vld [vmem:[%s8401] ss:$8 sm:$0x3]
    %v8404 = vlaneseq
    %v8405 = vshrl.u32 %v8404, 7
    %v8406 = vsub.s32 0, %v8405
    %v8407 = vrot.slane %v8402, %v8406
    %v8408 = vlaneseq
    %v8409 = vshrl.u32 %v8408, 7
    %v8410 = vsub.s32 1, %v8409
    %v8411 = vrot.slane %v8402, %v8410
    %v8414 = vmul.f32 %v8407, %v1398
    %v8415 = vmul.f32 %v8411, %v1399
    %v8416 = vmul.f32 %v8407, %v1388
    %v8417 = vmul.f32 %v8411, %v1389
    %v8418 = vmul.f32 %v8407, %v1400
    %v8419 = vmul.f32 %v8411, %v1401
    %v8426 = vrot.slane %v8414, 3
    %v8427 = vrot.slane %v8416, 3
    %v8428 = vsel %vm251, %v8426, %v8427
    %v8429 = vrot.slane %v8415, 3
    %v8430 = vrot.slane %v8417, 3
    %v8431 = vsel %vm251, %v8429, %v8430
    %v8432 = vrot.slane %v8418, 3
    %v8433 = vsel %vm251, %v8427, %v8432
    %v8434 = vrot.slane %v8419, 3
    %v8435 = vsel %vm251, %v8430, %v8434
    %v8440 = vadd.f32 %v8397, %v8428
    %v8441 = vadd.f32 %v8398, %v8431
    %v8442 = vadd.f32 %v8399, %v8433
    %v8443 = vadd.f32 %v8400, %v8435
    %s8444 = scalar_lea.vmem %s3, 325
    %v8445 = vld [vmem:[%s8444] ss:$8 sm:$0x3]
    %v8447 = vlaneseq
    %v8448 = vshrl.u32 %v8447, 7
    %v8449 = vsub.s32 0, %v8448
    %v8450 = vrot.slane %v8445, %v8449
    %v8451 = vlaneseq
    %v8452 = vshrl.u32 %v8451, 7
    %v8453 = vsub.s32 1, %v8452
    %v8454 = vrot.slane %v8445, %v8453
    %v8457 = vmul.f32 %v8450, %v1402
    %v8458 = vmul.f32 %v8454, %v1403
    %v8459 = vmul.f32 %v8450, %v1388
    %v8460 = vmul.f32 %v8454, %v1389
    %v8461 = vmul.f32 %v8450, %v1404
    %v8462 = vmul.f32 %v8454, %v1405
    %v8469 = vrot.slane %v8457, 4
    %v8470 = vrot.slane %v8459, 4
    %v8471 = vsel %vm320, %v8469, %v8470
    %v8472 = vrot.slane %v8458, 4
    %v8473 = vrot.slane %v8460, 4
    %v8474 = vsel %vm320, %v8472, %v8473
    %v8475 = vrot.slane %v8461, 4
    %v8476 = vsel %vm320, %v8470, %v8475
    %v8477 = vrot.slane %v8462, 4
    %v8478 = vsel %vm320, %v8473, %v8477
    %v8483 = vadd.f32 %v8440, %v8471
    %v8484 = vadd.f32 %v8441, %v8474
    %v8485 = vadd.f32 %v8442, %v8476
    %v8486 = vadd.f32 %v8443, %v8478
    %s8487 = scalar_lea.vmem %s3, 326
    %v8488 = vld [vmem:[%s8487] ss:$8 sm:$0x3]
    %v8490 = vlaneseq
    %v8491 = vshrl.u32 %v8490, 7
    %v8492 = vsub.s32 0, %v8491
    %v8493 = vrot.slane %v8488, %v8492
    %v8494 = vlaneseq
    %v8495 = vshrl.u32 %v8494, 7
    %v8496 = vsub.s32 1, %v8495
    %v8497 = vrot.slane %v8488, %v8496
    %v8500 = vmul.f32 %v8493, %v1406
    %v8501 = vmul.f32 %v8497, %v1407
    %v8502 = vmul.f32 %v8493, %v1388
    %v8503 = vmul.f32 %v8497, %v1389
    %v8504 = vmul.f32 %v8493, %v1408
    %v8505 = vmul.f32 %v8497, %v1409
    %v8512 = vrot.slane %v8500, 5
    %v8513 = vrot.slane %v8502, 5
    %v8514 = vsel %vm389, %v8512, %v8513
    %v8515 = vrot.slane %v8501, 5
    %v8516 = vrot.slane %v8503, 5
    %v8517 = vsel %vm389, %v8515, %v8516
    %v8518 = vrot.slane %v8504, 5
    %v8519 = vsel %vm389, %v8513, %v8518
    %v8520 = vrot.slane %v8505, 5
    %v8521 = vsel %vm389, %v8516, %v8520
    %v8526 = vadd.f32 %v8483, %v8514
    %v8527 = vadd.f32 %v8484, %v8517
    %v8528 = vadd.f32 %v8485, %v8519
    %v8529 = vadd.f32 %v8486, %v8521
    %s8530 = scalar_lea.vmem %s3, 327
    %v8531 = vld [vmem:[%s8530] ss:$8 sm:$0x3]
    %v8533 = vlaneseq
    %v8534 = vshrl.u32 %v8533, 7
    %v8535 = vsub.s32 0, %v8534
    %v8536 = vrot.slane %v8531, %v8535
    %v8537 = vlaneseq
    %v8538 = vshrl.u32 %v8537, 7
    %v8539 = vsub.s32 1, %v8538
    %v8540 = vrot.slane %v8531, %v8539
    %v8543 = vmul.f32 %v8536, %v1410
    %v8544 = vmul.f32 %v8540, %v1411
    %v8545 = vmul.f32 %v8536, %v1388
    %v8546 = vmul.f32 %v8540, %v1389
    %v8547 = vmul.f32 %v8536, %v1412
    %v8548 = vmul.f32 %v8540, %v1413
    %v8555 = vrot.slane %v8543, 6
    %v8556 = vrot.slane %v8545, 6
    %v8557 = vsel %vm1670, %v8555, %v8556
    %v8558 = vrot.slane %v8544, 6
    %v8559 = vrot.slane %v8546, 6
    %v8560 = vsel %vm1670, %v8558, %v8559
    %v8561 = vrot.slane %v8547, 6
    %v8562 = vsel %vm1670, %v8556, %v8561
    %v8563 = vrot.slane %v8548, 6
    %v8564 = vsel %vm1670, %v8559, %v8563
    %v8569 = vadd.f32 %v8526, %v8557
    %v8570 = vadd.f32 %v8527, %v8560
    %v8571 = vadd.f32 %v8528, %v8562
    %v8572 = vadd.f32 %v8529, %v8564
    %8577 = vrot.lane.b32.xlu0 %v8569, 65
    %v8578 = vpop.permute.xlu0 %8577
    %8579 = vrot.lane.b32.xlu0 %v8570, 65
    %v8580 = vpop.permute.xlu0 %8579
    %8581 = vrot.lane.b32.xlu0 %v8571, 65
    %v8582 = vpop.permute.xlu0 %8581
    %8583 = vrot.lane.b32.xlu0 %v8572, 65
    %v8584 = vpop.permute.xlu0 %8583
    %v8585 = vsel %vm4390, %v8578, %v8580
    %v8586 = vsel %vm4390, %v8582, %v8584
    %v8593 = vsel %vm4390, %v8580, %v8578
    %v8594 = vsel %vm4390, %v8584, %v8582
    %v8595 = vadd.f32 %v8294, %v8585
    %v8596 = vadd.f32 %v8295, %v8593
    %v8597 = vadd.f32 %v8296, %v8586
    %v8598 = vadd.f32 %v8297, %v8594
    %s8599 = scalar_lea.vmem %s3, 336
    %v8600 = vld [vmem:[%s8599] ss:$8 sm:$0x3]
    %v8602 = vlaneseq
    %v8603 = vshrl.u32 %v8602, 7
    %v8604 = vsub.s32 0, %v8603
    %v8605 = vrot.slane %v8600, %v8604
    %v8606 = vlaneseq
    %v8607 = vshrl.u32 %v8606, 7
    %v8608 = vsub.s32 1, %v8607
    %v8609 = vrot.slane %v8600, %v8608
    %v8612 = vmul.f32 %v8605, %v1386
    %v8613 = vmul.f32 %v8609, %v1387
    %v8614 = vmul.f32 %v8605, %v1388
    %v8615 = vmul.f32 %v8609, %v1389
    %s8616 = scalar_lea.vmem %s3, 337
    %v8617 = vld [vmem:[%s8616] ss:$8 sm:$0x3]
    %v8619 = vlaneseq
    %v8620 = vshrl.u32 %v8619, 7
    %v8621 = vsub.s32 0, %v8620
    %v8622 = vrot.slane %v8617, %v8621
    %v8623 = vlaneseq
    %v8624 = vshrl.u32 %v8623, 7
    %v8625 = vsub.s32 1, %v8624
    %v8626 = vrot.slane %v8617, %v8625
    %v8629 = vmul.f32 %v8622, %v1390
    %v8630 = vmul.f32 %v8626, %v1391
    %v8631 = vmul.f32 %v8622, %v1388
    %v8632 = vmul.f32 %v8626, %v1389
    %v8633 = vmul.f32 %v8622, %v1392
    %v8634 = vmul.f32 %v8626, %v1393
    %v8641 = vrot.slane %v8629, 1
    %v8642 = vrot.slane %v8631, 1
    %v8643 = vsel %vm116, %v8641, %v8642
    %v8644 = vrot.slane %v8630, 1
    %v8645 = vrot.slane %v8632, 1
    %v8646 = vsel %vm116, %v8644, %v8645
    %v8647 = vrot.slane %v8633, 1
    %v8648 = vsel %vm116, %v8642, %v8647
    %v8649 = vrot.slane %v8634, 1
    %v8650 = vsel %vm116, %v8645, %v8649
    %v8655 = vadd.f32 %v8612, %v8643
    %v8656 = vadd.f32 %v8613, %v8646
    %v8657 = vadd.f32 %v8614, %v8648
    %v8658 = vadd.f32 %v8615, %v8650
    %s8659 = scalar_lea.vmem %s3, 338
    %v8660 = vld [vmem:[%s8659] ss:$8 sm:$0x3]
    %v8662 = vlaneseq
    %v8663 = vshrl.u32 %v8662, 7
    %v8664 = vsub.s32 0, %v8663
    %v8665 = vrot.slane %v8660, %v8664
    %v8666 = vlaneseq
    %v8667 = vshrl.u32 %v8666, 7
    %v8668 = vsub.s32 1, %v8667
    %v8669 = vrot.slane %v8660, %v8668
    %v8672 = vmul.f32 %v8665, %v1394
    %v8673 = vmul.f32 %v8669, %v1395
    %v8674 = vmul.f32 %v8665, %v1388
    %v8675 = vmul.f32 %v8669, %v1389
    %v8676 = vmul.f32 %v8665, %v1396
    %v8677 = vmul.f32 %v8669, %v1397
    %v8684 = vrot.slane %v8672, 2
    %v8685 = vrot.slane %v8674, 2
    %v8686 = vsel %vm182, %v8684, %v8685
    %v8687 = vrot.slane %v8673, 2
    %v8688 = vrot.slane %v8675, 2
    %v8689 = vsel %vm182, %v8687, %v8688
    %v8690 = vrot.slane %v8676, 2
    %v8691 = vsel %vm182, %v8685, %v8690
    %v8692 = vrot.slane %v8677, 2
    %v8693 = vsel %vm182, %v8688, %v8692
    %v8698 = vadd.f32 %v8655, %v8686
    %v8699 = vadd.f32 %v8656, %v8689
    %v8700 = vadd.f32 %v8657, %v8691
    %v8701 = vadd.f32 %v8658, %v8693
    %s8702 = scalar_lea.vmem %s3, 339
    %v8703 = vld [vmem:[%s8702] ss:$8 sm:$0x3]
    %v8705 = vlaneseq
    %v8706 = vshrl.u32 %v8705, 7
    %v8707 = vsub.s32 0, %v8706
    %v8708 = vrot.slane %v8703, %v8707
    %v8709 = vlaneseq
    %v8710 = vshrl.u32 %v8709, 7
    %v8711 = vsub.s32 1, %v8710
    %v8712 = vrot.slane %v8703, %v8711
    %v8715 = vmul.f32 %v8708, %v1398
    %v8716 = vmul.f32 %v8712, %v1399
    %v8717 = vmul.f32 %v8708, %v1388
    %v8718 = vmul.f32 %v8712, %v1389
    %v8719 = vmul.f32 %v8708, %v1400
    %v8720 = vmul.f32 %v8712, %v1401
    %v8727 = vrot.slane %v8715, 3
    %v8728 = vrot.slane %v8717, 3
    %v8729 = vsel %vm251, %v8727, %v8728
    %v8730 = vrot.slane %v8716, 3
    %v8731 = vrot.slane %v8718, 3
    %v8732 = vsel %vm251, %v8730, %v8731
    %v8733 = vrot.slane %v8719, 3
    %v8734 = vsel %vm251, %v8728, %v8733
    %v8735 = vrot.slane %v8720, 3
    %v8736 = vsel %vm251, %v8731, %v8735
    %v8741 = vadd.f32 %v8698, %v8729
    %v8742 = vadd.f32 %v8699, %v8732
    %v8743 = vadd.f32 %v8700, %v8734
    %v8744 = vadd.f32 %v8701, %v8736
    %s8745 = scalar_lea.vmem %s3, 340
    %v8746 = vld [vmem:[%s8745] ss:$8 sm:$0x3]
    %v8748 = vlaneseq
    %v8749 = vshrl.u32 %v8748, 7
    %v8750 = vsub.s32 0, %v8749
    %v8751 = vrot.slane %v8746, %v8750
    %v8752 = vlaneseq
    %v8753 = vshrl.u32 %v8752, 7
    %v8754 = vsub.s32 1, %v8753
    %v8755 = vrot.slane %v8746, %v8754
    %v8758 = vmul.f32 %v8751, %v1402
    %v8759 = vmul.f32 %v8755, %v1403
    %v8760 = vmul.f32 %v8751, %v1388
    %v8761 = vmul.f32 %v8755, %v1389
    %v8762 = vmul.f32 %v8751, %v1404
    %v8763 = vmul.f32 %v8755, %v1405
    %v8770 = vrot.slane %v8758, 4
    %v8771 = vrot.slane %v8760, 4
    %v8772 = vsel %vm320, %v8770, %v8771
    %v8773 = vrot.slane %v8759, 4
    %v8774 = vrot.slane %v8761, 4
    %v8775 = vsel %vm320, %v8773, %v8774
    %v8776 = vrot.slane %v8762, 4
    %v8777 = vsel %vm320, %v8771, %v8776
    %v8778 = vrot.slane %v8763, 4
    %v8779 = vsel %vm320, %v8774, %v8778
    %v8784 = vadd.f32 %v8741, %v8772
    %v8785 = vadd.f32 %v8742, %v8775
    %v8786 = vadd.f32 %v8743, %v8777
    %v8787 = vadd.f32 %v8744, %v8779
    %s8788 = scalar_lea.vmem %s3, 341
    %v8789 = vld [vmem:[%s8788] ss:$8 sm:$0x3]
    %v8791 = vlaneseq
    %v8792 = vshrl.u32 %v8791, 7
    %v8793 = vsub.s32 0, %v8792
    %v8794 = vrot.slane %v8789, %v8793
    %v8795 = vlaneseq
    %v8796 = vshrl.u32 %v8795, 7
    %v8797 = vsub.s32 1, %v8796
    %v8798 = vrot.slane %v8789, %v8797
    %v8801 = vmul.f32 %v8794, %v1406
    %v8802 = vmul.f32 %v8798, %v1407
    %v8803 = vmul.f32 %v8794, %v1388
    %v8804 = vmul.f32 %v8798, %v1389
    %v8805 = vmul.f32 %v8794, %v1408
    %v8806 = vmul.f32 %v8798, %v1409
    %v8813 = vrot.slane %v8801, 5
    %v8814 = vrot.slane %v8803, 5
    %v8815 = vsel %vm389, %v8813, %v8814
    %v8816 = vrot.slane %v8802, 5
    %v8817 = vrot.slane %v8804, 5
    %v8818 = vsel %vm389, %v8816, %v8817
    %v8819 = vrot.slane %v8805, 5
    %v8820 = vsel %vm389, %v8814, %v8819
    %v8821 = vrot.slane %v8806, 5
    %v8822 = vsel %vm389, %v8817, %v8821
    %v8827 = vadd.f32 %v8784, %v8815
    %v8828 = vadd.f32 %v8785, %v8818
    %v8829 = vadd.f32 %v8786, %v8820
    %v8830 = vadd.f32 %v8787, %v8822
    %s8831 = scalar_lea.vmem %s3, 342
    %v8832 = vld [vmem:[%s8831] ss:$8 sm:$0x3]
    %v8834 = vlaneseq
    %v8835 = vshrl.u32 %v8834, 7
    %v8836 = vsub.s32 0, %v8835
    %v8837 = vrot.slane %v8832, %v8836
    %v8838 = vlaneseq
    %v8839 = vshrl.u32 %v8838, 7
    %v8840 = vsub.s32 1, %v8839
    %v8841 = vrot.slane %v8832, %v8840
    %v8844 = vmul.f32 %v8837, %v1410
    %v8845 = vmul.f32 %v8841, %v1411
    %v8846 = vmul.f32 %v8837, %v1388
    %v8847 = vmul.f32 %v8841, %v1389
    %v8848 = vmul.f32 %v8837, %v1412
    %v8849 = vmul.f32 %v8841, %v1413
    %v8856 = vrot.slane %v8844, 6
    %v8857 = vrot.slane %v8846, 6
    %v8858 = vsel %vm1670, %v8856, %v8857
    %v8859 = vrot.slane %v8845, 6
    %v8860 = vrot.slane %v8847, 6
    %v8861 = vsel %vm1670, %v8859, %v8860
    %v8862 = vrot.slane %v8848, 6
    %v8863 = vsel %vm1670, %v8857, %v8862
    %v8864 = vrot.slane %v8849, 6
    %v8865 = vsel %vm1670, %v8860, %v8864
    %v8870 = vadd.f32 %v8827, %v8858
    %v8871 = vadd.f32 %v8828, %v8861
    %v8872 = vadd.f32 %v8829, %v8863
    %v8873 = vadd.f32 %v8830, %v8865
    %8878 = vrot.lane.b32.xlu0 %v8870, 64
    %v8879 = vpop.permute.xlu0 %8878
    %8880 = vrot.lane.b32.xlu0 %v8871, 64
    %v8881 = vpop.permute.xlu0 %8880
    %8882 = vrot.lane.b32.xlu0 %v8872, 64
    %v8883 = vpop.permute.xlu0 %8882
    %8884 = vrot.lane.b32.xlu0 %v8873, 64
    %v8885 = vpop.permute.xlu0 %8884
    %v8886 = vsel %vm4692, %v8879, %v8881
    %v8887 = vsel %vm4692, %v8883, %v8885
    %v8894 = vsel %vm4692, %v8881, %v8879
    %v8895 = vsel %vm4692, %v8885, %v8883
    %v8896 = vadd.f32 %v8595, %v8886
    %v8897 = vadd.f32 %v8596, %v8894
    %v8898 = vadd.f32 %v8597, %v8887
    %v8899 = vadd.f32 %v8598, %v8895
    %s8900 = scalar_lea.vmem %s3, 343
    %v8901 = vld [vmem:[%s8900] ss:$8 sm:$0x3]
    %v8903 = vlaneseq
    %v8904 = vshrl.u32 %v8903, 7
    %v8905 = vsub.s32 0, %v8904
    %v8906 = vrot.slane %v8901, %v8905
    %v8907 = vlaneseq
    %v8908 = vshrl.u32 %v8907, 7
    %v8909 = vsub.s32 1, %v8908
    %v8910 = vrot.slane %v8901, %v8909
    %v8913 = vmul.f32 %v8906, %v1386
    %v8914 = vmul.f32 %v8910, %v1387
    %v8915 = vmul.f32 %v8906, %v1388
    %v8916 = vmul.f32 %v8910, %v1389
    %s8917 = scalar_lea.vmem %s3, 352
    %v8918 = vld [vmem:[%s8917] ss:$8 sm:$0x3]
    %v8920 = vlaneseq
    %v8921 = vshrl.u32 %v8920, 7
    %v8922 = vsub.s32 0, %v8921
    %v8923 = vrot.slane %v8918, %v8922
    %v8924 = vlaneseq
    %v8925 = vshrl.u32 %v8924, 7
    %v8926 = vsub.s32 1, %v8925
    %v8927 = vrot.slane %v8918, %v8926
    %v8930 = vmul.f32 %v8923, %v1390
    %v8931 = vmul.f32 %v8927, %v1391
    %v8932 = vmul.f32 %v8923, %v1388
    %v8933 = vmul.f32 %v8927, %v1389
    %v8934 = vmul.f32 %v8923, %v1392
    %v8935 = vmul.f32 %v8927, %v1393
    %v8942 = vrot.slane %v8930, 1
    %v8943 = vrot.slane %v8932, 1
    %v8944 = vsel %vm116, %v8942, %v8943
    %v8945 = vrot.slane %v8931, 1
    %v8946 = vrot.slane %v8933, 1
    %v8947 = vsel %vm116, %v8945, %v8946
    %v8948 = vrot.slane %v8934, 1
    %v8949 = vsel %vm116, %v8943, %v8948
    %v8950 = vrot.slane %v8935, 1
    %v8951 = vsel %vm116, %v8946, %v8950
    %v8956 = vadd.f32 %v8913, %v8944
    %v8957 = vadd.f32 %v8914, %v8947
    %v8958 = vadd.f32 %v8915, %v8949
    %v8959 = vadd.f32 %v8916, %v8951
    %s8960 = scalar_lea.vmem %s3, 353
    %v8961 = vld [vmem:[%s8960] ss:$8 sm:$0x3]
    %v8963 = vlaneseq
    %v8964 = vshrl.u32 %v8963, 7
    %v8965 = vsub.s32 0, %v8964
    %v8966 = vrot.slane %v8961, %v8965
    %v8967 = vlaneseq
    %v8968 = vshrl.u32 %v8967, 7
    %v8969 = vsub.s32 1, %v8968
    %v8970 = vrot.slane %v8961, %v8969
    %v8973 = vmul.f32 %v8966, %v1394
    %v8974 = vmul.f32 %v8970, %v1395
    %v8975 = vmul.f32 %v8966, %v1388
    %v8976 = vmul.f32 %v8970, %v1389
    %v8977 = vmul.f32 %v8966, %v1396
    %v8978 = vmul.f32 %v8970, %v1397
    %v8985 = vrot.slane %v8973, 2
    %v8986 = vrot.slane %v8975, 2
    %v8987 = vsel %vm182, %v8985, %v8986
    %v8988 = vrot.slane %v8974, 2
    %v8989 = vrot.slane %v8976, 2
    %v8990 = vsel %vm182, %v8988, %v8989
    %v8991 = vrot.slane %v8977, 2
    %v8992 = vsel %vm182, %v8986, %v8991
    %v8993 = vrot.slane %v8978, 2
    %v8994 = vsel %vm182, %v8989, %v8993
    %v8999 = vadd.f32 %v8956, %v8987
    %v9000 = vadd.f32 %v8957, %v8990
    %v9001 = vadd.f32 %v8958, %v8992
    %v9002 = vadd.f32 %v8959, %v8994
    %s9003 = scalar_lea.vmem %s3, 354
    %v9004 = vld [vmem:[%s9003] ss:$8 sm:$0x3]
    %v9006 = vlaneseq
    %v9007 = vshrl.u32 %v9006, 7
    %v9008 = vsub.s32 0, %v9007
    %v9009 = vrot.slane %v9004, %v9008
    %v9010 = vlaneseq
    %v9011 = vshrl.u32 %v9010, 7
    %v9012 = vsub.s32 1, %v9011
    %v9013 = vrot.slane %v9004, %v9012
    %v9016 = vmul.f32 %v9009, %v1398
    %v9017 = vmul.f32 %v9013, %v1399
    %v9018 = vmul.f32 %v9009, %v1388
    %v9019 = vmul.f32 %v9013, %v1389
    %v9020 = vmul.f32 %v9009, %v1400
    %v9021 = vmul.f32 %v9013, %v1401
    %v9028 = vrot.slane %v9016, 3
    %v9029 = vrot.slane %v9018, 3
    %v9030 = vsel %vm251, %v9028, %v9029
    %v9031 = vrot.slane %v9017, 3
    %v9032 = vrot.slane %v9019, 3
    %v9033 = vsel %vm251, %v9031, %v9032
    %v9034 = vrot.slane %v9020, 3
    %v9035 = vsel %vm251, %v9029, %v9034
    %v9036 = vrot.slane %v9021, 3
    %v9037 = vsel %vm251, %v9032, %v9036
    %v9042 = vadd.f32 %v8999, %v9030
    %v9043 = vadd.f32 %v9000, %v9033
    %v9044 = vadd.f32 %v9001, %v9035
    %v9045 = vadd.f32 %v9002, %v9037
    %s9046 = scalar_lea.vmem %s3, 355
    %v9047 = vld [vmem:[%s9046] ss:$8 sm:$0x3]
    %v9049 = vlaneseq
    %v9050 = vshrl.u32 %v9049, 7
    %v9051 = vsub.s32 0, %v9050
    %v9052 = vrot.slane %v9047, %v9051
    %v9053 = vlaneseq
    %v9054 = vshrl.u32 %v9053, 7
    %v9055 = vsub.s32 1, %v9054
    %v9056 = vrot.slane %v9047, %v9055
    %v9059 = vmul.f32 %v9052, %v1402
    %v9060 = vmul.f32 %v9056, %v1403
    %v9061 = vmul.f32 %v9052, %v1388
    %v9062 = vmul.f32 %v9056, %v1389
    %v9063 = vmul.f32 %v9052, %v1404
    %v9064 = vmul.f32 %v9056, %v1405
    %v9071 = vrot.slane %v9059, 4
    %v9072 = vrot.slane %v9061, 4
    %v9073 = vsel %vm320, %v9071, %v9072
    %v9074 = vrot.slane %v9060, 4
    %v9075 = vrot.slane %v9062, 4
    %v9076 = vsel %vm320, %v9074, %v9075
    %v9077 = vrot.slane %v9063, 4
    %v9078 = vsel %vm320, %v9072, %v9077
    %v9079 = vrot.slane %v9064, 4
    %v9080 = vsel %vm320, %v9075, %v9079
    %v9085 = vadd.f32 %v9042, %v9073
    %v9086 = vadd.f32 %v9043, %v9076
    %v9087 = vadd.f32 %v9044, %v9078
    %v9088 = vadd.f32 %v9045, %v9080
    %s9089 = scalar_lea.vmem %s3, 356
    %v9090 = vld [vmem:[%s9089] ss:$8 sm:$0x3]
    %v9092 = vlaneseq
    %v9093 = vshrl.u32 %v9092, 7
    %v9094 = vsub.s32 0, %v9093
    %v9095 = vrot.slane %v9090, %v9094
    %v9096 = vlaneseq
    %v9097 = vshrl.u32 %v9096, 7
    %v9098 = vsub.s32 1, %v9097
    %v9099 = vrot.slane %v9090, %v9098
    %v9102 = vmul.f32 %v9095, %v1406
    %v9103 = vmul.f32 %v9099, %v1407
    %v9104 = vmul.f32 %v9095, %v1388
    %v9105 = vmul.f32 %v9099, %v1389
    %v9106 = vmul.f32 %v9095, %v1408
    %v9107 = vmul.f32 %v9099, %v1409
    %v9114 = vrot.slane %v9102, 5
    %v9115 = vrot.slane %v9104, 5
    %v9116 = vsel %vm389, %v9114, %v9115
    %v9117 = vrot.slane %v9103, 5
    %v9118 = vrot.slane %v9105, 5
    %v9119 = vsel %vm389, %v9117, %v9118
    %v9120 = vrot.slane %v9106, 5
    %v9121 = vsel %vm389, %v9115, %v9120
    %v9122 = vrot.slane %v9107, 5
    %v9123 = vsel %vm389, %v9118, %v9122
    %v9128 = vadd.f32 %v9085, %v9116
    %v9129 = vadd.f32 %v9086, %v9119
    %v9130 = vadd.f32 %v9087, %v9121
    %v9131 = vadd.f32 %v9088, %v9123
    %s9132 = scalar_lea.vmem %s3, 357
    %v9133 = vld [vmem:[%s9132] ss:$8 sm:$0x3]
    %v9135 = vlaneseq
    %v9136 = vshrl.u32 %v9135, 7
    %v9137 = vsub.s32 0, %v9136
    %v9138 = vrot.slane %v9133, %v9137
    %v9139 = vlaneseq
    %v9140 = vshrl.u32 %v9139, 7
    %v9141 = vsub.s32 1, %v9140
    %v9142 = vrot.slane %v9133, %v9141
    %v9145 = vmul.f32 %v9138, %v1410
    %v9146 = vmul.f32 %v9142, %v1411
    %v9147 = vmul.f32 %v9138, %v1388
    %v9148 = vmul.f32 %v9142, %v1389
    %v9149 = vmul.f32 %v9138, %v1412
    %v9150 = vmul.f32 %v9142, %v1413
    %v9157 = vrot.slane %v9145, 6
    %v9158 = vrot.slane %v9147, 6
    %v9159 = vsel %vm1670, %v9157, %v9158
    %v9160 = vrot.slane %v9146, 6
    %v9161 = vrot.slane %v9148, 6
    %v9162 = vsel %vm1670, %v9160, %v9161
    %v9163 = vrot.slane %v9149, 6
    %v9164 = vsel %vm1670, %v9158, %v9163
    %v9165 = vrot.slane %v9150, 6
    %v9166 = vsel %vm1670, %v9161, %v9165
    %v9171 = vadd.f32 %v9128, %v9159
    %v9172 = vadd.f32 %v9129, %v9162
    %v9173 = vadd.f32 %v9130, %v9164
    %v9174 = vadd.f32 %v9131, %v9166
    %9179 = vrot.lane.b32.xlu0 %v9171, 63
    %v9180 = vpop.permute.xlu0 %9179
    %9181 = vrot.lane.b32.xlu0 %v9172, 63
    %v9182 = vpop.permute.xlu0 %9181
    %9183 = vrot.lane.b32.xlu0 %v9173, 63
    %v9184 = vpop.permute.xlu0 %9183
    %9185 = vrot.lane.b32.xlu0 %v9174, 63
    %v9186 = vpop.permute.xlu0 %9185
    %v9187 = vsel %vm4994, %v9180, %v9182
    %v9188 = vsel %vm4994, %v9184, %v9186
    %v9195 = vsel %vm4994, %v9182, %v9180
    %v9196 = vsel %vm4994, %v9186, %v9184
    %v9197 = vadd.f32 %v8896, %v9187
    %v9198 = vadd.f32 %v8897, %v9195
    %v9199 = vadd.f32 %v8898, %v9188
    %v9200 = vadd.f32 %v8899, %v9196
    %s9201 = scalar_lea.vmem %s3, 358
    %v9202 = vld [vmem:[%s9201] ss:$8 sm:$0x3]
    %v9204 = vlaneseq
    %v9205 = vshrl.u32 %v9204, 7
    %v9206 = vsub.s32 0, %v9205
    %v9207 = vrot.slane %v9202, %v9206
    %v9208 = vlaneseq
    %v9209 = vshrl.u32 %v9208, 7
    %v9210 = vsub.s32 1, %v9209
    %v9211 = vrot.slane %v9202, %v9210
    %v9214 = vmul.f32 %v9207, %v1386
    %v9215 = vmul.f32 %v9211, %v1387
    %v9216 = vmul.f32 %v9207, %v1388
    %v9217 = vmul.f32 %v9211, %v1389
    %s9218 = scalar_lea.vmem %s3, 359
    %v9219 = vld [vmem:[%s9218] ss:$8 sm:$0x3]
    %v9221 = vlaneseq
    %v9222 = vshrl.u32 %v9221, 7
    %v9223 = vsub.s32 0, %v9222
    %v9224 = vrot.slane %v9219, %v9223
    %v9225 = vlaneseq
    %v9226 = vshrl.u32 %v9225, 7
    %v9227 = vsub.s32 1, %v9226
    %v9228 = vrot.slane %v9219, %v9227
    %v9231 = vmul.f32 %v9224, %v1390
    %v9232 = vmul.f32 %v9228, %v1391
    %v9233 = vmul.f32 %v9224, %v1388
    %v9234 = vmul.f32 %v9228, %v1389
    %v9235 = vmul.f32 %v9224, %v1392
    %v9236 = vmul.f32 %v9228, %v1393
    %v9243 = vrot.slane %v9231, 1
    %v9244 = vrot.slane %v9233, 1
    %v9245 = vsel %vm116, %v9243, %v9244
    %v9246 = vrot.slane %v9232, 1
    %v9247 = vrot.slane %v9234, 1
    %v9248 = vsel %vm116, %v9246, %v9247
    %v9249 = vrot.slane %v9235, 1
    %v9250 = vsel %vm116, %v9244, %v9249
    %v9251 = vrot.slane %v9236, 1
    %v9252 = vsel %vm116, %v9247, %v9251
    %v9257 = vadd.f32 %v9214, %v9245
    %v9258 = vadd.f32 %v9215, %v9248
    %v9259 = vadd.f32 %v9216, %v9250
    %v9260 = vadd.f32 %v9217, %v9252
    %s9261 = scalar_lea.vmem %s3, 368
    %v9262 = vld [vmem:[%s9261] ss:$8 sm:$0x3]
    %v9264 = vlaneseq
    %v9265 = vshrl.u32 %v9264, 7
    %v9266 = vsub.s32 0, %v9265
    %v9267 = vrot.slane %v9262, %v9266
    %v9268 = vlaneseq
    %v9269 = vshrl.u32 %v9268, 7
    %v9270 = vsub.s32 1, %v9269
    %v9271 = vrot.slane %v9262, %v9270
    %v9274 = vmul.f32 %v9267, %v1394
    %v9275 = vmul.f32 %v9271, %v1395
    %v9276 = vmul.f32 %v9267, %v1388
    %v9277 = vmul.f32 %v9271, %v1389
    %v9278 = vmul.f32 %v9267, %v1396
    %v9279 = vmul.f32 %v9271, %v1397
    %v9286 = vrot.slane %v9274, 2
    %v9287 = vrot.slane %v9276, 2
    %v9288 = vsel %vm182, %v9286, %v9287
    %v9289 = vrot.slane %v9275, 2
    %v9290 = vrot.slane %v9277, 2
    %v9291 = vsel %vm182, %v9289, %v9290
    %v9292 = vrot.slane %v9278, 2
    %v9293 = vsel %vm182, %v9287, %v9292
    %v9294 = vrot.slane %v9279, 2
    %v9295 = vsel %vm182, %v9290, %v9294
    %v9300 = vadd.f32 %v9257, %v9288
    %v9301 = vadd.f32 %v9258, %v9291
    %v9302 = vadd.f32 %v9259, %v9293
    %v9303 = vadd.f32 %v9260, %v9295
    %s9304 = scalar_lea.vmem %s3, 369
    %v9305 = vld [vmem:[%s9304] ss:$8 sm:$0x3]
    %v9307 = vlaneseq
    %v9308 = vshrl.u32 %v9307, 7
    %v9309 = vsub.s32 0, %v9308
    %v9310 = vrot.slane %v9305, %v9309
    %v9311 = vlaneseq
    %v9312 = vshrl.u32 %v9311, 7
    %v9313 = vsub.s32 1, %v9312
    %v9314 = vrot.slane %v9305, %v9313
    %v9317 = vmul.f32 %v9310, %v1398
    %v9318 = vmul.f32 %v9314, %v1399
    %v9319 = vmul.f32 %v9310, %v1388
    %v9320 = vmul.f32 %v9314, %v1389
    %v9321 = vmul.f32 %v9310, %v1400
    %v9322 = vmul.f32 %v9314, %v1401
    %v9329 = vrot.slane %v9317, 3
    %v9330 = vrot.slane %v9319, 3
    %v9331 = vsel %vm251, %v9329, %v9330
    %v9332 = vrot.slane %v9318, 3
    %v9333 = vrot.slane %v9320, 3
    %v9334 = vsel %vm251, %v9332, %v9333
    %v9335 = vrot.slane %v9321, 3
    %v9336 = vsel %vm251, %v9330, %v9335
    %v9337 = vrot.slane %v9322, 3
    %v9338 = vsel %vm251, %v9333, %v9337
    %v9343 = vadd.f32 %v9300, %v9331
    %v9344 = vadd.f32 %v9301, %v9334
    %v9345 = vadd.f32 %v9302, %v9336
    %v9346 = vadd.f32 %v9303, %v9338
    %s9347 = scalar_lea.vmem %s3, 370
    %v9348 = vld [vmem:[%s9347] ss:$8 sm:$0x3]
    %v9350 = vlaneseq
    %v9351 = vshrl.u32 %v9350, 7
    %v9352 = vsub.s32 0, %v9351
    %v9353 = vrot.slane %v9348, %v9352
    %v9354 = vlaneseq
    %v9355 = vshrl.u32 %v9354, 7
    %v9356 = vsub.s32 1, %v9355
    %v9357 = vrot.slane %v9348, %v9356
    %v9360 = vmul.f32 %v9353, %v1402
    %v9361 = vmul.f32 %v9357, %v1403
    %v9362 = vmul.f32 %v9353, %v1388
    %v9363 = vmul.f32 %v9357, %v1389
    %v9364 = vmul.f32 %v9353, %v1404
    %v9365 = vmul.f32 %v9357, %v1405
    %v9372 = vrot.slane %v9360, 4
    %v9373 = vrot.slane %v9362, 4
    %v9374 = vsel %vm320, %v9372, %v9373
    %v9375 = vrot.slane %v9361, 4
    %v9376 = vrot.slane %v9363, 4
    %v9377 = vsel %vm320, %v9375, %v9376
    %v9378 = vrot.slane %v9364, 4
    %v9379 = vsel %vm320, %v9373, %v9378
    %v9380 = vrot.slane %v9365, 4
    %v9381 = vsel %vm320, %v9376, %v9380
    %v9386 = vadd.f32 %v9343, %v9374
    %v9387 = vadd.f32 %v9344, %v9377
    %v9388 = vadd.f32 %v9345, %v9379
    %v9389 = vadd.f32 %v9346, %v9381
    %s9390 = scalar_lea.vmem %s3, 371
    %v9391 = vld [vmem:[%s9390] ss:$8 sm:$0x3]
    %v9393 = vlaneseq
    %v9394 = vshrl.u32 %v9393, 7
    %v9395 = vsub.s32 0, %v9394
    %v9396 = vrot.slane %v9391, %v9395
    %v9397 = vlaneseq
    %v9398 = vshrl.u32 %v9397, 7
    %v9399 = vsub.s32 1, %v9398
    %v9400 = vrot.slane %v9391, %v9399
    %v9403 = vmul.f32 %v9396, %v1406
    %v9404 = vmul.f32 %v9400, %v1407
    %v9405 = vmul.f32 %v9396, %v1388
    %v9406 = vmul.f32 %v9400, %v1389
    %v9407 = vmul.f32 %v9396, %v1408
    %v9408 = vmul.f32 %v9400, %v1409
    %v9415 = vrot.slane %v9403, 5
    %v9416 = vrot.slane %v9405, 5
    %v9417 = vsel %vm389, %v9415, %v9416
    %v9418 = vrot.slane %v9404, 5
    %v9419 = vrot.slane %v9406, 5
    %v9420 = vsel %vm389, %v9418, %v9419
    %v9421 = vrot.slane %v9407, 5
    %v9422 = vsel %vm389, %v9416, %v9421
    %v9423 = vrot.slane %v9408, 5
    %v9424 = vsel %vm389, %v9419, %v9423
    %v9429 = vadd.f32 %v9386, %v9417
    %v9430 = vadd.f32 %v9387, %v9420
    %v9431 = vadd.f32 %v9388, %v9422
    %v9432 = vadd.f32 %v9389, %v9424
    %s9433 = scalar_lea.vmem %s3, 372
    %v9434 = vld [vmem:[%s9433] ss:$8 sm:$0x3]
    %v9436 = vlaneseq
    %v9437 = vshrl.u32 %v9436, 7
    %v9438 = vsub.s32 0, %v9437
    %v9439 = vrot.slane %v9434, %v9438
    %v9440 = vlaneseq
    %v9441 = vshrl.u32 %v9440, 7
    %v9442 = vsub.s32 1, %v9441
    %v9443 = vrot.slane %v9434, %v9442
    %v9446 = vmul.f32 %v9439, %v1410
    %v9447 = vmul.f32 %v9443, %v1411
    %v9448 = vmul.f32 %v9439, %v1388
    %v9449 = vmul.f32 %v9443, %v1389
    %v9450 = vmul.f32 %v9439, %v1412
    %v9451 = vmul.f32 %v9443, %v1413
    %v9458 = vrot.slane %v9446, 6
    %v9459 = vrot.slane %v9448, 6
    %v9460 = vsel %vm1670, %v9458, %v9459
    %v9461 = vrot.slane %v9447, 6
    %v9462 = vrot.slane %v9449, 6
    %v9463 = vsel %vm1670, %v9461, %v9462
    %v9464 = vrot.slane %v9450, 6
    %v9465 = vsel %vm1670, %v9459, %v9464
    %v9466 = vrot.slane %v9451, 6
    %v9467 = vsel %vm1670, %v9462, %v9466
    %v9472 = vadd.f32 %v9429, %v9460
    %v9473 = vadd.f32 %v9430, %v9463
    %v9474 = vadd.f32 %v9431, %v9465
    %v9475 = vadd.f32 %v9432, %v9467
    %9480 = vrot.lane.b32.xlu0 %v9472, 62
    %v9481 = vpop.permute.xlu0 %9480
    %9482 = vrot.lane.b32.xlu0 %v9473, 62
    %v9483 = vpop.permute.xlu0 %9482
    %9484 = vrot.lane.b32.xlu0 %v9474, 62
    %v9485 = vpop.permute.xlu0 %9484
    %9486 = vrot.lane.b32.xlu0 %v9475, 62
    %v9487 = vpop.permute.xlu0 %9486
    %v9488 = vsel %vm5296, %v9481, %v9483
    %v9489 = vsel %vm5296, %v9485, %v9487
    %v9496 = vsel %vm5296, %v9483, %v9481
    %v9497 = vsel %vm5296, %v9487, %v9485
    %v9498 = vadd.f32 %v9197, %v9488
    %v9499 = vadd.f32 %v9198, %v9496
    %v9500 = vadd.f32 %v9199, %v9489
    %v9501 = vadd.f32 %v9200, %v9497
    %s9502 = scalar_lea.vmem %s3, 373
    %v9503 = vld [vmem:[%s9502] ss:$8 sm:$0x3]
    %v9505 = vlaneseq
    %v9506 = vshrl.u32 %v9505, 7
    %v9507 = vsub.s32 0, %v9506
    %v9508 = vrot.slane %v9503, %v9507
    %v9509 = vlaneseq
    %v9510 = vshrl.u32 %v9509, 7
    %v9511 = vsub.s32 1, %v9510
    %v9512 = vrot.slane %v9503, %v9511
    %v9515 = vmul.f32 %v9508, %v1386
    %v9516 = vmul.f32 %v9512, %v1387
    %v9517 = vmul.f32 %v9508, %v1388
    %v9518 = vmul.f32 %v9512, %v1389
    %s9519 = scalar_lea.vmem %s3, 374
    %v9520 = vld [vmem:[%s9519] ss:$8 sm:$0x3]
    %v9522 = vlaneseq
    %v9523 = vshrl.u32 %v9522, 7
    %v9524 = vsub.s32 0, %v9523
    %v9525 = vrot.slane %v9520, %v9524
    %v9526 = vlaneseq
    %v9527 = vshrl.u32 %v9526, 7
    %v9528 = vsub.s32 1, %v9527
    %v9529 = vrot.slane %v9520, %v9528
    %v9532 = vmul.f32 %v9525, %v1390
    %v9533 = vmul.f32 %v9529, %v1391
    %v9534 = vmul.f32 %v9525, %v1388
    %v9535 = vmul.f32 %v9529, %v1389
    %v9536 = vmul.f32 %v9525, %v1392
    %v9537 = vmul.f32 %v9529, %v1393
    %v9544 = vrot.slane %v9532, 1
    %v9545 = vrot.slane %v9534, 1
    %v9546 = vsel %vm116, %v9544, %v9545
    %v9547 = vrot.slane %v9533, 1
    %v9548 = vrot.slane %v9535, 1
    %v9549 = vsel %vm116, %v9547, %v9548
    %v9550 = vrot.slane %v9536, 1
    %v9551 = vsel %vm116, %v9545, %v9550
    %v9552 = vrot.slane %v9537, 1
    %v9553 = vsel %vm116, %v9548, %v9552
    %v9558 = vadd.f32 %v9515, %v9546
    %v9559 = vadd.f32 %v9516, %v9549
    %v9560 = vadd.f32 %v9517, %v9551
    %v9561 = vadd.f32 %v9518, %v9553
    %s9562 = scalar_lea.vmem %s3, 375
    %v9563 = vld [vmem:[%s9562] ss:$8 sm:$0x3]
    %v9565 = vlaneseq
    %v9566 = vshrl.u32 %v9565, 7
    %v9567 = vsub.s32 0, %v9566
    %v9568 = vrot.slane %v9563, %v9567
    %v9569 = vlaneseq
    %v9570 = vshrl.u32 %v9569, 7
    %v9571 = vsub.s32 1, %v9570
    %v9572 = vrot.slane %v9563, %v9571
    %v9575 = vmul.f32 %v9568, %v1394
    %v9576 = vmul.f32 %v9572, %v1395
    %v9577 = vmul.f32 %v9568, %v1388
    %v9578 = vmul.f32 %v9572, %v1389
    %v9579 = vmul.f32 %v9568, %v1396
    %v9580 = vmul.f32 %v9572, %v1397
    %v9587 = vrot.slane %v9575, 2
    %v9588 = vrot.slane %v9577, 2
    %v9589 = vsel %vm182, %v9587, %v9588
    %v9590 = vrot.slane %v9576, 2
    %v9591 = vrot.slane %v9578, 2
    %v9592 = vsel %vm182, %v9590, %v9591
    %v9593 = vrot.slane %v9579, 2
    %v9594 = vsel %vm182, %v9588, %v9593
    %v9595 = vrot.slane %v9580, 2
    %v9596 = vsel %vm182, %v9591, %v9595
    %v9601 = vadd.f32 %v9558, %v9589
    %v9602 = vadd.f32 %v9559, %v9592
    %v9603 = vadd.f32 %v9560, %v9594
    %v9604 = vadd.f32 %v9561, %v9596
    %s9605 = scalar_lea.vmem %s3, 384
    %v9606 = vld [vmem:[%s9605] ss:$8 sm:$0x3]
    %v9608 = vlaneseq
    %v9609 = vshrl.u32 %v9608, 7
    %v9610 = vsub.s32 0, %v9609
    %v9611 = vrot.slane %v9606, %v9610
    %v9612 = vlaneseq
    %v9613 = vshrl.u32 %v9612, 7
    %v9614 = vsub.s32 1, %v9613
    %v9615 = vrot.slane %v9606, %v9614
    %v9618 = vmul.f32 %v9611, %v1398
    %v9619 = vmul.f32 %v9615, %v1399
    %v9620 = vmul.f32 %v9611, %v1388
    %v9621 = vmul.f32 %v9615, %v1389
    %v9622 = vmul.f32 %v9611, %v1400
    %v9623 = vmul.f32 %v9615, %v1401
    %v9630 = vrot.slane %v9618, 3
    %v9631 = vrot.slane %v9620, 3
    %v9632 = vsel %vm251, %v9630, %v9631
    %v9633 = vrot.slane %v9619, 3
    %v9634 = vrot.slane %v9621, 3
    %v9635 = vsel %vm251, %v9633, %v9634
    %v9636 = vrot.slane %v9622, 3
    %v9637 = vsel %vm251, %v9631, %v9636
    %v9638 = vrot.slane %v9623, 3
    %v9639 = vsel %vm251, %v9634, %v9638
    %v9644 = vadd.f32 %v9601, %v9632
    %v9645 = vadd.f32 %v9602, %v9635
    %v9646 = vadd.f32 %v9603, %v9637
    %v9647 = vadd.f32 %v9604, %v9639
    %s9648 = scalar_lea.vmem %s3, 385
    %v9649 = vld [vmem:[%s9648] ss:$8 sm:$0x3]
    %v9651 = vlaneseq
    %v9652 = vshrl.u32 %v9651, 7
    %v9653 = vsub.s32 0, %v9652
    %v9654 = vrot.slane %v9649, %v9653
    %v9655 = vlaneseq
    %v9656 = vshrl.u32 %v9655, 7
    %v9657 = vsub.s32 1, %v9656
    %v9658 = vrot.slane %v9649, %v9657
    %v9661 = vmul.f32 %v9654, %v1402
    %v9662 = vmul.f32 %v9658, %v1403
    %v9663 = vmul.f32 %v9654, %v1388
    %v9664 = vmul.f32 %v9658, %v1389
    %v9665 = vmul.f32 %v9654, %v1404
    %v9666 = vmul.f32 %v9658, %v1405
    %v9673 = vrot.slane %v9661, 4
    %v9674 = vrot.slane %v9663, 4
    %v9675 = vsel %vm320, %v9673, %v9674
    %v9676 = vrot.slane %v9662, 4
    %v9677 = vrot.slane %v9664, 4
    %v9678 = vsel %vm320, %v9676, %v9677
    %v9679 = vrot.slane %v9665, 4
    %v9680 = vsel %vm320, %v9674, %v9679
    %v9681 = vrot.slane %v9666, 4
    %v9682 = vsel %vm320, %v9677, %v9681
    %v9687 = vadd.f32 %v9644, %v9675
    %v9688 = vadd.f32 %v9645, %v9678
    %v9689 = vadd.f32 %v9646, %v9680
    %v9690 = vadd.f32 %v9647, %v9682
    %s9691 = scalar_lea.vmem %s3, 386
    %v9692 = vld [vmem:[%s9691] ss:$8 sm:$0x3]
    %v9694 = vlaneseq
    %v9695 = vshrl.u32 %v9694, 7
    %v9696 = vsub.s32 0, %v9695
    %v9697 = vrot.slane %v9692, %v9696
    %v9698 = vlaneseq
    %v9699 = vshrl.u32 %v9698, 7
    %v9700 = vsub.s32 1, %v9699
    %v9701 = vrot.slane %v9692, %v9700
    %v9704 = vmul.f32 %v9697, %v1406
    %v9705 = vmul.f32 %v9701, %v1407
    %v9706 = vmul.f32 %v9697, %v1388
    %v9707 = vmul.f32 %v9701, %v1389
    %v9708 = vmul.f32 %v9697, %v1408
    %v9709 = vmul.f32 %v9701, %v1409
    %v9716 = vrot.slane %v9704, 5
    %v9717 = vrot.slane %v9706, 5
    %v9718 = vsel %vm389, %v9716, %v9717
    %v9719 = vrot.slane %v9705, 5
    %v9720 = vrot.slane %v9707, 5
    %v9721 = vsel %vm389, %v9719, %v9720
    %v9722 = vrot.slane %v9708, 5
    %v9723 = vsel %vm389, %v9717, %v9722
    %v9724 = vrot.slane %v9709, 5
    %v9725 = vsel %vm389, %v9720, %v9724
    %v9730 = vadd.f32 %v9687, %v9718
    %v9731 = vadd.f32 %v9688, %v9721
    %v9732 = vadd.f32 %v9689, %v9723
    %v9733 = vadd.f32 %v9690, %v9725
    %s9734 = scalar_lea.vmem %s3, 387
    %v9735 = vld [vmem:[%s9734] ss:$8 sm:$0x3]
    %v9737 = vlaneseq
    %v9738 = vshrl.u32 %v9737, 7
    %v9739 = vsub.s32 0, %v9738
    %v9740 = vrot.slane %v9735, %v9739
    %v9741 = vlaneseq
    %v9742 = vshrl.u32 %v9741, 7
    %v9743 = vsub.s32 1, %v9742
    %v9744 = vrot.slane %v9735, %v9743
    %v9747 = vmul.f32 %v9740, %v1410
    %v9748 = vmul.f32 %v9744, %v1411
    %v9749 = vmul.f32 %v9740, %v1388
    %v9750 = vmul.f32 %v9744, %v1389
    %v9751 = vmul.f32 %v9740, %v1412
    %v9752 = vmul.f32 %v9744, %v1413
    %v9759 = vrot.slane %v9747, 6
    %v9760 = vrot.slane %v9749, 6
    %v9761 = vsel %vm1670, %v9759, %v9760
    %v9762 = vrot.slane %v9748, 6
    %v9763 = vrot.slane %v9750, 6
    %v9764 = vsel %vm1670, %v9762, %v9763
    %v9765 = vrot.slane %v9751, 6
    %v9766 = vsel %vm1670, %v9760, %v9765
    %v9767 = vrot.slane %v9752, 6
    %v9768 = vsel %vm1670, %v9763, %v9767
    %v9773 = vadd.f32 %v9730, %v9761
    %v9774 = vadd.f32 %v9731, %v9764
    %v9775 = vadd.f32 %v9732, %v9766
    %v9776 = vadd.f32 %v9733, %v9768
    %9781 = vrot.lane.b32.xlu0 %v9773, 61
    %v9782 = vpop.permute.xlu0 %9781
    %9783 = vrot.lane.b32.xlu0 %v9774, 61
    %v9784 = vpop.permute.xlu0 %9783
    %9785 = vrot.lane.b32.xlu0 %v9775, 61
    %v9786 = vpop.permute.xlu0 %9785
    %9787 = vrot.lane.b32.xlu0 %v9776, 61
    %v9788 = vpop.permute.xlu0 %9787
    %v9789 = vsel %vm5598, %v9782, %v9784
    %v9790 = vsel %vm5598, %v9786, %v9788
    %v9797 = vsel %vm5598, %v9784, %v9782
    %v9798 = vsel %vm5598, %v9788, %v9786
    %v9799 = vadd.f32 %v9498, %v9789
    %v9800 = vadd.f32 %v9499, %v9797
    %v9801 = vadd.f32 %v9500, %v9790
    %v9802 = vadd.f32 %v9501, %v9798
    %v9807 = vrot.slane %v9799, 5
    %v9808 = vrot.slane %v9800, 5
    %v9809 = vrot.slane %v9801, 5
    %v9810 = vsel %vm389, %v9807, %v9809
    %v9811 = vrot.slane %v9802, 5
    %v9812 = vsel %vm389, %v9808, %v9811
    %v9819 = vadd.f32 %v1398, %v9807
    %v9820 = vadd.f32 %v1399, %v9808
    %v9821 = vadd.f32 %v1388, %v9810
    %v9822 = vadd.f32 %v1389, %v9812
    %v9823 = vadd.f32 %v1400, %v9809
    %v9824 = vadd.f32 %v1401, %v9811
    %v9825 = vld [vmem:[%s5] sm:$0xff]
    %v9826 = vld [vmem:[%s5 + $0x8] sm:$0xff]
    %v9827 = vld [vmem:[%s5 + $0x10] sm:$0xff]
    %v9828 = vld [vmem:[%s5 + $0x18] sm:$0xff]
    %v9833 = vrot.slane %v9825, 5
    %v9834 = vrot.slane %v9826, 5
    %v9835 = vrot.slane %v9827, 5
    %v9836 = vsel %vm389, %v9833, %v9835
    %v9837 = vrot.slane %v9828, 5
    %v9838 = vsel %vm389, %v9834, %v9837
    %v9845 = vadd.f32 %v9819, %v9833
    %v9846 = vadd.f32 %v9820, %v9834
    %v9847 = vadd.f32 %v9821, %v9836
    %v9848 = vadd.f32 %v9822, %v9838
    %v9849 = vadd.f32 %v9823, %v9835
    %v9850 = vadd.f32 %v9824, %v9837
    %v9857 = vrot.slane %v9845, 3
    %v9858 = vrot.slane %v9847, 3
    %v9859 = vsel %vm251, %v9857, %v9858
    %v9860 = vrot.slane %v9846, 3
    %v9861 = vrot.slane %v9848, 3
    %v9862 = vsel %vm251, %v9860, %v9861
    %v9863 = vrot.slane %v9849, 3
    %v9864 = vsel %vm251, %v9858, %v9863
    %v9865 = vrot.slane %v9850, 3
    %v9866 = vsel %vm251, %v9861, %v9865
    %v9871 = vadd.f32 %v9859, %v9864
    %v9872 = vrot.slane %v9871, 4
    %v9873 = vadd.f32 %v9871, %v9872
    %v9874 = vrot.slane %v9873, 2
    %v9875 = vadd.f32 %v9873, %v9874
    %v9876 = vrot.slane %v9875, 1
    %v9877 = vadd.f32 %v9875, %v9876
    %v9878 = vadd.f32 %v9862, %v9866
    %v9879 = vrot.slane %v9878, 4
    %v9880 = vadd.f32 %v9878, %v9879
    %v9881 = vrot.slane %v9880, 2
    %v9882 = vadd.f32 %v9880, %v9881
    %v9883 = vrot.slane %v9882, 1
    %v9884 = vadd.f32 %v9882, %v9883
    %v9885 = vmul.f32 %v9845, %v9845
    %v9886 = vmul.f32 %v9846, %v9846
    %v9887 = vmul.f32 %v9847, %v9847
    %v9888 = vmul.f32 %v9848, %v9848
    %v9889 = vmul.f32 %v9849, %v9849
    %v9890 = vmul.f32 %v9850, %v9850
    %v9897 = vrot.slane %v9885, 3
    %v9898 = vrot.slane %v9887, 3
    %v9899 = vsel %vm251, %v9897, %v9898
    %v9900 = vrot.slane %v9886, 3
    %v9901 = vrot.slane %v9888, 3
    %v9902 = vsel %vm251, %v9900, %v9901
    %v9903 = vrot.slane %v9889, 3
    %v9904 = vsel %vm251, %v9898, %v9903
    %v9905 = vrot.slane %v9890, 3
    %v9906 = vsel %vm251, %v9901, %v9905
    %v9911 = vadd.f32 %v9899, %v9904
    %v9912 = vrot.slane %v9911, 4
    %v9913 = vadd.f32 %v9911, %v9912
    %v9914 = vrot.slane %v9913, 2
    %v9915 = vadd.f32 %v9913, %v9914
    %v9916 = vrot.slane %v9915, 1
    %v9917 = vadd.f32 %v9915, %v9916
    %v9918 = vadd.f32 %v9902, %v9906
    %v9919 = vrot.slane %v9918, 4
    %v9920 = vadd.f32 %v9918, %v9919
    %v9921 = vrot.slane %v9920, 2
    %v9922 = vadd.f32 %v9920, %v9921
    %v9923 = vrot.slane %v9922, 1
    %v9924 = vadd.f32 %v9922, %v9923
    %v9925 = vld [vmem:[%s6] ss:$4 sm:$0x3]
    %v9927 = vlaneseq
    %v9928 = vshrl.u32 %v9927, 7
    %v9929 = vsub.s32 0, %v9928
    %v9930 = vrot.slane %v9925, %v9929
    %v9931 = vlaneseq
    %v9932 = vshrl.u32 %v9931, 7
    %v9933 = vsub.s32 1, %v9932
    %v9934 = vrot.slane %v9925, %v9933
    %v9937 = vmul.f32 %v9877, %v9930
    %v9938 = vmul.f32 %v9884, %v9934
    %vm9939 = vcmask 1040384
    %v9940 = vsel %vm9939, %v9937, 0.0
    %v9941 = vsel %vm9939, %v9938, 0.0
    %v9942 = vadd.f32 %v9940, %v9941
    %9943 = vadd.xlane.f32.xlu0 %v9942
    %v9944 = vpop.xlane.xlu0 %9943
    %s9945 = vtos %v9944
    %s9946 = smul.f32 %s9945, 0.001953125
    %v9947 = vmul.f32 %v9917, %v9930
    %v9948 = vmul.f32 %v9924, %v9934
    %v9949 = vsel %vm9939, %v9947, 0.0
    %v9950 = vsel %vm9939, %v9948, 0.0
    %v9951 = vadd.f32 %v9949, %v9950
    %9952 = vadd.xlane.f32.xlu0 %v9951
    %v9953 = vpop.xlane.xlu0 %9952
    %s9954 = vtos %v9953
    %s9955 = smul.f32 %s9954, 0.001953125
    %s9956 = smul.f32 %s9946, %s9946
    %s9957 = ssub.f32 %s9955, %s9956
    %s9958 = sld [smem:[#allocation4]]
    %s9959 = sadd.f32 %s9957, 1e-05
    %v9960 = vstv %s9959
    %v9961 = vrsqrt.pop %v9960
    %s9962 = vtos %v9961
    %s9963 = smul.f32 %s9958, %s9962
    %v9964 = vstv %s9963
    %v9965 = vmul.f32 %v9964, %v9925
    %v9966 = vadd.f32 %v9965, 0.0
    %s9967 = sld [smem:[#allocation6]]
    %s9968 = smul.f32 %s9946, %s9963
    %s9969 = ssub.f32 %s9967, %s9968
    %v9970 = vstv %s9969
    %v9971 = vmul.f32 %v9970, %v9925
    %v9972 = vadd.f32 %v9971, 0.0
    %s9973 = scalar_lea.vmem %s6, 1
    %v9974 = vld [vmem:[%s9973] ss:$4 sm:$0x3]
    %v9976 = vlaneseq
    %v9977 = vshrl.u32 %v9976, 7
    %v9978 = vsub.s32 0, %v9977
    %v9979 = vrot.slane %v9974, %v9978
    %v9980 = vlaneseq
    %v9981 = vshrl.u32 %v9980, 7
    %v9982 = vsub.s32 1, %v9981
    %v9983 = vrot.slane %v9974, %v9982
    %v9986 = vmul.f32 %v9877, %v9979
    %v9987 = vmul.f32 %v9884, %v9983
    %v9988 = vsel %vm9939, %v9986, 0.0
    %v9989 = vsel %vm9939, %v9987, 0.0
    %v9990 = vadd.f32 %v9988, %v9989
    %9991 = vadd.xlane.f32.xlu0 %v9990
    %v9992 = vpop.xlane.xlu0 %9991
    %s9993 = vtos %v9992
    %s9994 = smul.f32 %s9993, 0.001953125
    %v9995 = vmul.f32 %v9917, %v9979
    %v9996 = vmul.f32 %v9924, %v9983
    %v9997 = vsel %vm9939, %v9995, 0.0
    %v9998 = vsel %vm9939, %v9996, 0.0
    %v9999 = vadd.f32 %v9997, %v9998
    %10000 = vadd.xlane.f32.xlu0 %v9999
    %v10001 = vpop.xlane.xlu0 %10000
    %s10002 = vtos %v10001
    %s10003 = smul.f32 %s10002, 0.001953125
    %s10004 = smul.f32 %s9994, %s9994
    %s10005 = ssub.f32 %s10003, %s10004
    %s10006 = sld [smem:[#allocation4 + $0x1]]
    %s10007 = sadd.f32 %s10005, 1e-05
    %v10008 = vstv %s10007
    %v10009 = vrsqrt.pop %v10008
    %s10010 = vtos %v10009
    %s10011 = smul.f32 %s10006, %s10010
    %v10012 = vstv %s10011
    %v10013 = vmul.f32 %v10012, %v9974
    %v10014 = vadd.f32 %v9966, %v10013
    %s10015 = sld [smem:[#allocation6 + $0x1]]
    %s10016 = smul.f32 %s9994, %s10011
    %s10017 = ssub.f32 %s10015, %s10016
    %v10018 = vstv %s10017
    %v10019 = vmul.f32 %v10018, %v9974
    %v10020 = vadd.f32 %v9972, %v10019
    %s10021 = scalar_lea.vmem %s6, 2
    %v10022 = vld [vmem:[%s10021] ss:$4 sm:$0x3]
    %v10024 = vlaneseq
    %v10025 = vshrl.u32 %v10024, 7
    %v10026 = vsub.s32 0, %v10025
    %v10027 = vrot.slane %v10022, %v10026
    %v10028 = vlaneseq
    %v10029 = vshrl.u32 %v10028, 7
    %v10030 = vsub.s32 1, %v10029
    %v10031 = vrot.slane %v10022, %v10030
    %v10034 = vmul.f32 %v9877, %v10027
    %v10035 = vmul.f32 %v9884, %v10031
    %v10036 = vsel %vm9939, %v10034, 0.0
    %v10037 = vsel %vm9939, %v10035, 0.0
    %v10038 = vadd.f32 %v10036, %v10037
    %10039 = vadd.xlane.f32.xlu0 %v10038
    %v10040 = vpop.xlane.xlu0 %10039
    %s10041 = vtos %v10040
    %s10042 = smul.f32 %s10041, 0.001953125
    %v10043 = vmul.f32 %v9917, %v10027
    %v10044 = vmul.f32 %v9924, %v10031
    %v10045 = vsel %vm9939, %v10043, 0.0
    %v10046 = vsel %vm9939, %v10044, 0.0
    %v10047 = vadd.f32 %v10045, %v10046
    %10048 = vadd.xlane.f32.xlu0 %v10047
    %v10049 = vpop.xlane.xlu0 %10048
    %s10050 = vtos %v10049
    %s10051 = smul.f32 %s10050, 0.001953125
    %s10052 = smul.f32 %s10042, %s10042
    %s10053 = ssub.f32 %s10051, %s10052
    %s10054 = sld [smem:[#allocation4 + $0x2]]
    %s10055 = sadd.f32 %s10053, 1e-05
    %v10056 = vstv %s10055
    %v10057 = vrsqrt.pop %v10056
    %s10058 = vtos %v10057
    %s10059 = smul.f32 %s10054, %s10058
    %v10060 = vstv %s10059
    %v10061 = vmul.f32 %v10060, %v10022
    %v10062 = vadd.f32 %v10014, %v10061
    %s10063 = sld [smem:[#allocation6 + $0x2]]
    %s10064 = smul.f32 %s10042, %s10059
    %s10065 = ssub.f32 %s10063, %s10064
    %v10066 = vstv %s10065
    %v10067 = vmul.f32 %v10066, %v10022
    %v10068 = vadd.f32 %v10020, %v10067
    %s10069 = scalar_lea.vmem %s6, 3
    %v10070 = vld [vmem:[%s10069] ss:$4 sm:$0x3]
    %v10072 = vlaneseq
    %v10073 = vshrl.u32 %v10072, 7
    %v10074 = vsub.s32 0, %v10073
    %v10075 = vrot.slane %v10070, %v10074
    %v10076 = vlaneseq
    %v10077 = vshrl.u32 %v10076, 7
    %v10078 = vsub.s32 1, %v10077
    %v10079 = vrot.slane %v10070, %v10078
    %v10082 = vmul.f32 %v9877, %v10075
    %v10083 = vmul.f32 %v9884, %v10079
    %v10084 = vsel %vm9939, %v10082, 0.0
    %v10085 = vsel %vm9939, %v10083, 0.0
    %v10086 = vadd.f32 %v10084, %v10085
    %10087 = vadd.xlane.f32.xlu0 %v10086
    %v10088 = vpop.xlane.xlu0 %10087
    %s10089 = vtos %v10088
    %s10090 = smul.f32 %s10089, 0.001953125
    %v10091 = vmul.f32 %v9917, %v10075
    %v10092 = vmul.f32 %v9924, %v10079
    %v10093 = vsel %vm9939, %v10091, 0.0
    %v10094 = vsel %vm9939, %v10092, 0.0
    %v10095 = vadd.f32 %v10093, %v10094
    %10096 = vadd.xlane.f32.xlu0 %v10095
    %v10097 = vpop.xlane.xlu0 %10096
    %s10098 = vtos %v10097
    %s10099 = smul.f32 %s10098, 0.001953125
    %s10100 = smul.f32 %s10090, %s10090
    %s10101 = ssub.f32 %s10099, %s10100
    %s10102 = sld [smem:[#allocation4 + $0x3]]
    %s10103 = sadd.f32 %s10101, 1e-05
    %v10104 = vstv %s10103
    %v10105 = vrsqrt.pop %v10104
    %s10106 = vtos %v10105
    %s10107 = smul.f32 %s10102, %s10106
    %v10108 = vstv %s10107
    %v10109 = vmul.f32 %v10108, %v10070
    %v10110 = vadd.f32 %v10062, %v10109
    %s10111 = sld [smem:[#allocation6 + $0x3]]
    %s10112 = smul.f32 %s10090, %s10107
    %s10113 = ssub.f32 %s10111, %s10112
    %v10114 = vstv %s10113
    %v10115 = vmul.f32 %v10114, %v10070
    %v10116 = vadd.f32 %v10068, %v10115
    %v10118 = vlaneseq
    %v10119 = vshrl.u32 %v10118, 7
    %v10120 = vsub.s32 0, %v10119
    %v10121 = vrot.slane %v10110, %v10120
    %v10122 = vlaneseq
    %v10123 = vshrl.u32 %v10122, 7
    %v10124 = vsub.s32 1, %v10123
    %v10125 = vrot.slane %v10110, %v10124
    %v10128 = vmul.f32 %v9845, %v10121
    %v10129 = vmul.f32 %v9846, %v10125
    %v10130 = vmul.f32 %v9847, %v10121
    %v10131 = vmul.f32 %v9848, %v10125
    %v10132 = vmul.f32 %v9849, %v10121
    %v10133 = vmul.f32 %v9850, %v10125
    %v10135 = vlaneseq
    %v10136 = vshrl.u32 %v10135, 7
    %v10137 = vsub.s32 0, %v10136
    %v10138 = vrot.slane %v10116, %v10137
    %v10139 = vlaneseq
    %v10140 = vshrl.u32 %v10139, 7
    %v10141 = vsub.s32 1, %v10140
    %v10142 = vrot.slane %v10116, %v10141
    %v10145 = vadd.f32 %v10128, %v10138
    %v10146 = vadd.f32 %v10129, %v10142
    %v10147 = vadd.f32 %v10130, %v10138
    %v10148 = vadd.f32 %v10131, %v10142
    %v10149 = vadd.f32 %v10132, %v10138
    %v10150 = vadd.f32 %v10133, %v10142
    %v10151 = vld [vmem:[%s1] sm:$0xff]
    %v10152 = vld [vmem:[%s1 + $0x8] sm:$0xff]
    %v10153 = vld [vmem:[%s1 + $0x10] sm:$0xff]
    %v10154 = vld [vmem:[%s1 + $0x18] sm:$0xff]
    %v10159 = vrot.slane %v10151, 5
    %v10160 = vrot.slane %v10152, 5
    %v10161 = vrot.slane %v10153, 5
    %v10162 = vsel %vm389, %v10159, %v10161
    %v10163 = vrot.slane %v10154, 5
    %v10164 = vsel %vm389, %v10160, %v10163
    %v10171 = vadd.f32 %v10145, %v10159
    %v10172 = vadd.f32 %v10146, %v10160
    %v10173 = vadd.f32 %v10147, %v10162
    %v10174 = vadd.f32 %v10148, %v10164
    %v10175 = vadd.f32 %v10149, %v10161
    %v10176 = vadd.f32 %v10150, %v10163
    %v10177 = vmax.f32 %v10171, 0.0
    %v10178 = vmax.f32 %v10172, 0.0
    %v10179 = vmax.f32 %v10173, 0.0
    %v10180 = vmax.f32 %v10174, 0.0
    %v10181 = vmax.f32 %v10175, 0.0
    %v10182 = vmax.f32 %v10176, 0.0
    %v10189 = vrot.slane %v10177, 3
    %v10190 = vrot.slane %v10179, 3
    %v10191 = vsel %vm251, %v10189, %v10190
    %v10192 = vrot.slane %v10178, 3
    %v10193 = vrot.slane %v10180, 3
    %v10194 = vsel %vm251, %v10192, %v10193
    %v10195 = vrot.slane %v10181, 3
    %v10196 = vsel %vm251, %v10190, %v10195
    %v10197 = vrot.slane %v10182, 3
    %v10198 = vsel %vm251, %v10193, %v10197
    %10203 = vst [vmem:[%s9] sm:$0xff] %v10191
    %10204 = vst [vmem:[%s9 + $0x8] sm:$0xff] %v10194
    %10205 = vst [vmem:[%s9 + $0x10] sm:$0xff] %v10196
    %10206 = vst [vmem:[%s9 + $0x18] sm:$0xff] %v10198
    // Predicated region
    $region46: #{_divnorm_impl.1} parent=1 // pred_check
      _
    $region47: #{_divnorm_impl.1} parent=1 // pred_check_branch
      %10208 = sbr.rel (0) target = $region49
    $region48: #{_divnorm_impl.1} parent=1 // pred_region
      _
    $region49: #{_divnorm_impl.1} parent=1 // pred_fallthru
      _
    // Predicated region
    $region50: #{_divnorm_impl.1} parent=1 // pred_check
      _
    $region51: #{_divnorm_impl.1} parent=1 // pred_check_branch
      %10210 = sbr.rel (0) target = $region53
    $region52: #{_divnorm_impl.1} parent=1 // pred_region
      _
    $region53: #{_divnorm_impl.1} parent=1 // pred_fallthru
      _
    %10211 = vsyncpa [#allocation5], 1
    %10212 = vsyncpa [#allocation7], 1

</llo_original>
